<compile_context>
chip_gen: v5e
topology: v5e:2x2
jax: 0.10.0
libtpu: 0.0.40
codegen_flags: <defaults>
</compile_context>

<pallas_src>
import math

import jax
import jax.numpy as jnp
import numpy as np
from jax import lax
from jax.experimental import pallas as pl
from jax.experimental.pallas import tpu as pltpu

M = 7000                                   # hidden width from the PyTorch module
LANE = 128
SUBLANE = 8
M_PAD = ((M + LANE - 1) // LANE) * LANE    # 7040 = 55 * 128
INV_SQRT_M = 1.0 / math.sqrt(M)


def _ntk_kernel(xt_ref, w1_ref, w2t_ref, b2_ref, ot_ref):
    # xt:  (IN_PAD, TB)    x^T tile, batch on lanes; row `in_size` holds 1.0 (bias).
    # w1:  (M_PAD, IN_PAD) [W1^T | b1 | 0], hidden rows padded with zeros.
    # w2t: (out, M_PAD)    (W2 / sqrt(M))^T, hidden cols padded with zeros.
    # b2:  (out, 1)        f32, pre-scaled by 1/sqrt(M).
    # ot:  (out, TB)       y^T tile (lane-dense store).
    ht = jnp.dot(w1_ref[...], xt_ref[...],
                 preferred_element_type=jnp.float32,
                 precision=lax.Precision.DEFAULT)            # (M_PAD, TB) f32 acc
    ht = jnp.tanh(ht)                                        # f32 EUP (v5e-safe)
    ht = ht.astype(w2t_ref.dtype)                            # bf16 MXU operand
    yt = jnp.dot(w2t_ref[...], ht,
                 preferred_element_type=jnp.float32,
                 precision=lax.Precision.DEFAULT)            # (out, TB) f32 acc
    ot_ref[...] = (yt + b2_ref[...]).astype(ot_ref.dtype)


def prepare_ntk_params(w1, b1, w2, b2, dtype=jnp.bfloat16):
    """One-time parameter transform (do NOT call per forward pass).

    w1: (input_size, M)  b1: (M,)  w2: (M, output_size)  b2: (output_size,)
    Returns (w1_aug, w2t, b2_col) for ntk_forward:
      w1_aug: (M_PAD, IN_PAD) == [W1^T | b1 | 0], hidden rows padded with 0
      w2t:    (output_size, M_PAD) == (W2 / sqrt(M))^T, hidden cols padded 0
      b2_col: (output_size, 1) f32 == b2 / sqrt(M)
    """
    in_size = w1.shape[0]
    out_size = w2.shape[1]
    in_pad = ((in_size + 1 + SUBLANE - 1) // SUBLANE) * SUBLANE
    pad_m = M_PAD - M
    w1_aug = jnp.concatenate(
        [w1.T, b1.reshape(M, 1),
         jnp.zeros((M, in_pad - in_size - 1), w1.dtype)], axis=1)
    w1_aug = jnp.pad(w1_aug, ((0, pad_m), (0, 0))).astype(dtype)
    w2t = jnp.pad((w2 * INV_SQRT_M).T, ((0, 0), (0, pad_m))).astype(dtype)
    b2_col = (b2 * INV_SQRT_M).reshape(out_size, 1).astype(jnp.float32)
    return w1_aug, w2t, b2_col


def _batch_tiling(batch, batch_tile):
    """Pick a lane-aligned batch tile.

    Batch lives on the lane axis, so tiles are multiples of 128.  Splits into
    >= 2 grid steps whenever the batch spans >= 2 lane chunks (v7x megacore)
    and adapts the tile size so padding waste is at most one lane chunk/tile.
    """
    n_chunks = pl.cdiv(max(batch, 1), LANE)
    max_chunks = max(batch_tile // LANE, 1)
    if n_chunks <= max_chunks:
        chunks_per_tile = max(n_chunks // 2, 1)
    else:
        chunks_per_tile = max_chunks
    n_tiles = pl.cdiv(n_chunks, chunks_per_tile)
    tb = chunks_per_tile * LANE
    return tb, n_tiles * tb, n_tiles


def ntk_forward(x, params, batch_tile=512):
    """x: (B, input_size); params from prepare_ntk_params.  Returns (B, out)."""
    w1_aug, w2t, b2_col = params
    batch, in_size = x.shape
    m_pad, in_pad = w1_aug.shape
    out_size = w2t.shape[0]
    wdtype = w1_aug.dtype

    tb, b_pad, n_tiles = _batch_tiling(batch, batch_tile)

    # Augmented, transposed, bf16 input (built once per call, cheap XLA ops):
    #   rows [0:in) = x^T, row `in` = 1.0 (bias row), remaining rows = 0.
    xt = jnp.concatenate(
        [x.T.astype(wdtype),
         jnp.ones((1, batch), wdtype),
         jnp.zeros((in_pad - in_size - 1, batch), wdtype)], axis=0)
    xt = jnp.pad(xt, ((0, 0), (0, b_pad - batch)))

    cost = pl.CostEstimate(
        flops=2 * b_pad * in_pad * m_pad + 2 * b_pad * m_pad * out_size,
        transcendentals=b_pad * m_pad,
        bytes_accessed=(xt.size * xt.dtype.itemsize
                        + w1_aug.size * w1_aug.dtype.itemsize
                        + w2t.size * w2t.dtype.itemsize
                        + b2_col.size * b2_col.dtype.itemsize
                        + b_pad * out_size * x.dtype.itemsize),
    )

    out_t = pl.pallas_call(
        _ntk_kernel,
        out_shape=jax.ShapeDtypeStruct((out_size, b_pad), x.dtype),
        grid_spec=pltpu.PrefetchScalarGridSpec(
            num_scalar_prefetch=0,
            grid=(n_tiles,),
            in_specs=[
                pl.BlockSpec((in_pad, tb), lambda b: (0, b)),        # x^T tile
                pl.BlockSpec((m_pad, in_pad), lambda b: (0, 0)),     # W1_aug (resident)
                pl.BlockSpec((out_size, m_pad), lambda b: (0, 0)),   # W2^T (resident)
                pl.BlockSpec((out_size, 1), lambda b: (0, 0)),       # b2 (resident)
            ],
            out_specs=pl.BlockSpec((out_size, tb), lambda b: (0, b)),
        ),
        compiler_params=pltpu.CompilerParams(
            dimension_semantics=("parallel",),
            vmem_limit_bytes=48 * 1024 * 1024,
        ),
        cost_estimate=cost,
    )(xt, w1_aug, w2t, b2_col)

    return out_t[:, :batch].T


if __name__ == "__main__":
    # Small deterministic example consistent with Ntk(input_size, output_size).
    batch = 2
    input_size = 32
    output_size = 8

    key = jax.random.PRNGKey(0)
    kx, kw1, kb1, kw2, kb2 = jax.random.split(key, 5)

    # PyTorch nn.Linear-style init scales (deterministic synthetic params).
    bound1 = 1.0 / math.sqrt(input_size)
    bound2 = 1.0 / math.sqrt(M)
    x = jax.random.normal(kx, (batch, input_size), dtype=jnp.float32)
    w1 = jax.random.uniform(kw1, (input_size, M), jnp.float32, -bound1, bound1)
    b1 = jax.random.uniform(kb1, (M,), jnp.float32, -bound1, bound1)
    w2 = jax.random.uniform(kw2, (M, output_size), jnp.float32, -bound2, bound2)
    b2 = jax.random.uniform(kb2, (output_size,), jnp.float32, -bound2, bound2)

    # One-time parameter preparation (pad / transpose / fold b1 and 1/sqrt(M)).
    # Weights stored in bf16: MXU-native operands, half the HBM traffic.
    params = prepare_ntk_params(w1, b1, w2, b2, dtype=jnp.bfloat16)

    out = jax.block_until_ready(ntk_forward(x, params))

    # Pure-JAX f32 reference (original, unscaled parameters).  Tolerance is
    # loosened for bf16 matmul operands (f32 accumulation keeps it ~1e-2 rel).
    ref = (jnp.tanh(x @ w1 + b1) @ w2 + b2) / np.sqrt(M)
    assert out.shape == (batch, output_size)
    np.testing.assert_allclose(np.asarray(out), np.asarray(ref),
                               rtol=5e-2, atol=1e-3)

    print("KERNEL_OK")
</pallas_src>

<mosaic_0001>
module attributes {stable_mosaic.version = 11 : i64} {
  func.func @_ntk_kernel(%arg0: i32, %arg1: memref<40x128xbf16, #tpu.memory_space<vmem>>, %arg2: memref<7040x40xbf16, #tpu.memory_space<vmem>>, %arg3: memref<8x7040xbf16, #tpu.memory_space<vmem>>, %arg4: memref<8x1xf32, #tpu.memory_space<vmem>>, %arg5: memref<8x128xf32, #tpu.memory_space<vmem>>) attributes {dimension_semantics = [#tpu.dimension_semantics<parallel>], iteration_bounds = array<i64: 1>, scalar_prefetch = 0 : i64, scratch_operands = 0 : i64, tpu.core_type = #tpu.core_type<tc>, window_params = [{transform_indices = @transform_0, window_bounds = array<i64: 40, 128>}, {pipeline_mode = #tpu.pipeline_mode<synchronous>, transform_indices = @transform_1, window_bounds = array<i64: 7040, 40>}, {pipeline_mode = #tpu.pipeline_mode<synchronous>, transform_indices = @transform_2, window_bounds = array<i64: 8, 7040>}, {pipeline_mode = #tpu.pipeline_mode<synchronous>, transform_indices = @transform_3, window_bounds = array<i64: 8, 1>}, {transform_indices = @transform_4, window_bounds = array<i64: 8, 128>}]} {
    %c0 = arith.constant 0 : index
    %c0_0 = arith.constant 0 : index
    %0 = vector.load %arg2[%c0, %c0_0] : memref<7040x40xbf16, #tpu.memory_space<vmem>>, vector<7040x40xbf16>
    %c0_1 = arith.constant 0 : index
    %c0_2 = arith.constant 0 : index
    %1 = vector.load %arg1[%c0_1, %c0_2] : memref<40x128xbf16, #tpu.memory_space<vmem>>, vector<40x128xbf16>
    %cst = arith.constant dense<0.000000e+00> : vector<7040x128xf32>
    %2 = tpu.matmul %0, %1, %cst {dimension_numbers = #tpu.dot_dimension_numbers<[1], [0], [0], [1], [0, 0, 1, 1], [], []>} : vector<7040x40xbf16>, vector<40x128xbf16>, vector<7040x128xf32> -> vector<7040x128xf32>
    %3 = math.tanh %2 : vector<7040x128xf32>
    %4 = arith.truncf %3 : vector<7040x128xf32> to vector<7040x128xbf16>
    %c0_3 = arith.constant 0 : index
    %c0_4 = arith.constant 0 : index
    %5 = vector.load %arg3[%c0_3, %c0_4] : memref<8x7040xbf16, #tpu.memory_space<vmem>>, vector<8x7040xbf16>
    %cst_5 = arith.constant dense<0.000000e+00> : vector<8x128xf32>
    %6 = tpu.matmul %5, %4, %cst_5 {dimension_numbers = #tpu.dot_dimension_numbers<[1], [0], [0], [1], [0, 0, 1, 1], [], []>} : vector<8x7040xbf16>, vector<7040x128xbf16>, vector<8x128xf32> -> vector<8x128xf32>
    %c0_6 = arith.constant 0 : index
    %c0_7 = arith.constant 0 : index
    %7 = vector.load %arg4[%c0_6, %c0_7] : memref<8x1xf32, #tpu.memory_space<vmem>>, vector<8x1xf32>
    %8 = vector.broadcast %7 : vector<8x1xf32> to vector<8x128xf32>
    %9 = arith.addf %6, %8 : vector<8x128xf32>
    %c0_8 = arith.constant 0 : index
    %c0_9 = arith.constant 0 : index
    %10 = vector.load %arg5[%c0_8, %c0_9] : memref<8x128xf32, #tpu.memory_space<vmem>>, vector<8x128xf32>
    tpu.vector_store %arg5[%c0_8, %c0_9], %9 {strides = array<i32>} : memref<8x128xf32, #tpu.memory_space<vmem>>, vector<8x128xf32>,
    return
  }
  func.func @transform_0(%arg0: i32) -> (i32, i32) {
    %c0_i32 = arith.constant 0 : i32
    %c0_i32_0 = arith.constant 0 : i32
    return %c0_i32, %arg0 : i32, i32
  }
  func.func @transform_1(%arg0: i32) -> (i32, i32) {
    %c0_i32 = arith.constant 0 : i32
    %c0_i32_0 = arith.constant 0 : i32
    %c0_i32_1 = arith.constant 0 : i32
    return %c0_i32, %c0_i32_0 : i32, i32
  }
  func.func @transform_2(%arg0: i32) -> (i32, i32) {
    %c0_i32 = arith.constant 0 : i32
    %c0_i32_0 = arith.constant 0 : i32
    %c0_i32_1 = arith.constant 0 : i32
    return %c0_i32, %c0_i32_0 : i32, i32
  }
  func.func @transform_3(%arg0: i32) -> (i32, i32) {
    %c0_i32 = arith.constant 0 : i32
    %c0_i32_0 = arith.constant 0 : i32
    %c0_i32_1 = arith.constant 0 : i32
    return %c0_i32, %c0_i32_0 : i32, i32
  }
  func.func @transform_4(%arg0: i32) -> (i32, i32) {
    %c0_i32 = arith.constant 0 : i32
    %c0_i32_0 = arith.constant 0 : i32
    return %c0_i32, %arg0 : i32, i32
  }
}

</mosaic_0001>

<llo_original>
// kernel: tpu_custom_call.1
$region0: #{tpu_custom_call.1}
  #allocation0 [shape = 'u32[]', space=smem, size = 0x4, offset = 0x4, fixed_abs, tag = 'smem constant byte address 0x4 - core index']
  #allocation1 [shape = 'u32[72,128]{1,0:T(1,128)}', space=vmem, size = 0x9000, scoped, tag = 'internal scratch']
  %s0 = inlined_call_operand.vmem [shape: bf16[40,128], index: 0, kind: input, shape index: {}]
  %s1 = inlined_call_operand.vmem [shape: bf16[7040,40], index: 1, kind: input, shape index: {}]
  %s2 = inlined_call_operand.vmem [shape: bf16[8,7040], index: 2, kind: input, shape index: {}]
  %s3 = inlined_call_operand.vmem [shape: f32[8,1], index: 3, kind: input, shape index: {}]
  %s4 = inlined_call_operand.hbm [shape: f32[8,128], index: 4, kind: output, shape index: {}]
  %s5 = sld [smem:[#allocation0]]
  $region26: #{tpu_custom_call.1} parent=0
    _
  %s7 = ssub.s32 1, %s5
  %s8 = scalar_select 0, %s7, %s5
  $region1: #{tpu_custom_call.1} parent=0
    #allocation2 [shape = 'u8[4096]{0}', space=vmem, size = 0x1000, scoped, tag = 'output window, operand 0, single buffered']
    #allocation3 [shape = 's32[1]{0}', space=sflag, size = 0x4, scoped, tag = 'scoped memory for tpu_custom_call.1']
    %9 = vsyncpa [#allocation3], 0
    // Predicated region
    $region2: #{tpu_custom_call.1} parent=1 // pred_check
      _
    $region3: #{tpu_custom_call.1} parent=1 // pred_check_branch
      %11 = sbr.rel (0) target = $region5
    $region4: #{tpu_custom_call.1} parent=1 // pred_region
      _
    $region5: #{tpu_custom_call.1} parent=1 // pred_fallthru
      _
    // Predicated region
    $region6: #{tpu_custom_call.1} parent=1 // pred_check
      _
    $region7: #{tpu_custom_call.1} parent=1 // pred_check_branch
      %13 = sbr.rel (0) target = $region9
    $region8: #{tpu_custom_call.1} parent=1 // pred_region
      _
    $region9: #{tpu_custom_call.1} parent=1 // pred_fallthru
      _
    // Predicated region
    $region10: #{tpu_custom_call.1} parent=1 // pred_check
      _
    $region11: #{tpu_custom_call.1} parent=1 // pred_check_branch
      %15 = sbr.rel (0) target = $region13
    $region12: #{tpu_custom_call.1} parent=1 // pred_region
      _
    $region13: #{tpu_custom_call.1} parent=1 // pred_fallthru
      _
    // Predicated region
    $region14: #{tpu_custom_call.1} parent=1 // pred_check
      _
    $region15: #{tpu_custom_call.1} parent=1 // pred_check_branch
      %17 = sbr.rel (0) target = $region17
    $region16: #{tpu_custom_call.1} parent=1 // pred_region
      _
    $region17: #{tpu_custom_call.1} parent=1 // pred_fallthru
      _
    %v19 = vld [vmem:[%s1] sm:$0xf]
    %v20 = vld [vmem:[%s1 + $0x4] sm:$0xf]
    %v21 = vld [vmem:[%s1 + $0x8] sm:$0xf]
    %v22 = vld [vmem:[%s1 + $0xc] sm:$0xf]
    %v23 = vld [vmem:[%s1 + $0x10] sm:$0xf]
    %v24 = vld [vmem:[%s1 + $0x14] sm:$0xf]
    %v25 = vld [vmem:[%s1 + $0x18] sm:$0xf]
    %v26 = vld [vmem:[%s1 + $0x1c] sm:$0xf]
    %v27 = vld [vmem:[%s1 + $0x20] sm:$0xf]
    %v28 = vld [vmem:[%s1 + $0x24] sm:$0xf]
    %v29 = vld [vmem:[%s1 + $0x28] sm:$0xf]
    %v30 = vld [vmem:[%s1 + $0x2c] sm:$0xf]
    %v31 = vld [vmem:[%s1 + $0x30] sm:$0xf]
    %v32 = vld [vmem:[%s1 + $0x34] sm:$0xf]
    %v33 = vld [vmem:[%s1 + $0x38] sm:$0xf]
    %v34 = vld [vmem:[%s1 + $0x3c] sm:$0xf]
    %v35 = vld [vmem:[%s1 + $0x40] sm:$0xf]
    %v36 = vld [vmem:[%s1 + $0x44] sm:$0xf]
    %v37 = vld [vmem:[%s1 + $0x48] sm:$0xf]
    %v38 = vld [vmem:[%s1 + $0x4c] sm:$0xf]
    %v39 = vld [vmem:[%s1 + $0x50] sm:$0xf]
    %v40 = vld [vmem:[%s1 + $0x54] sm:$0xf]
    %v41 = vld [vmem:[%s1 + $0x58] sm:$0xf]
    %v42 = vld [vmem:[%s1 + $0x5c] sm:$0xf]
    %v43 = vld [vmem:[%s1 + $0x60] sm:$0xf]
    %v44 = vld [vmem:[%s1 + $0x64] sm:$0xf]
    %v45 = vld [vmem:[%s1 + $0x68] sm:$0xf]
    %v46 = vld [vmem:[%s1 + $0x6c] sm:$0xf]
    %v47 = vld [vmem:[%s1 + $0x70] sm:$0xf]
    %v48 = vld [vmem:[%s1 + $0x74] sm:$0xf]
    %v49 = vld [vmem:[%s1 + $0x78] sm:$0xf]
    %v50 = vld [vmem:[%s1 + $0x7c] sm:$0xf]
    %v51 = vld [vmem:[%s1 + $0x80] sm:$0xf]
    %v52 = vld [vmem:[%s1 + $0x84] sm:$0xf]
    %v53 = vld [vmem:[%s1 + $0x88] sm:$0xf]
    %v54 = vld [vmem:[%s1 + $0x8c] sm:$0xf]
    %v55 = vld [vmem:[%s1 + $0x90] sm:$0xf]
    %v56 = vld [vmem:[%s1 + $0x94] sm:$0xf]
    %v57 = vld [vmem:[%s1 + $0x98] sm:$0xf]
    %v58 = vld [vmem:[%s1 + $0x9c] sm:$0xf]
    %v59 = vld [vmem:[%s1 + $0xa0] sm:$0xf]
    %v60 = vld [vmem:[%s1 + $0xa4] sm:$0xf]
    %v61 = vld [vmem:[%s1 + $0xa8] sm:$0xf]
    %v62 = vld [vmem:[%s1 + $0xac] sm:$0xf]
    %v63 = vld [vmem:[%s1 + $0xb0] sm:$0xf]
    %v64 = vld [vmem:[%s1 + $0xb4] sm:$0xf]
    %v65 = vld [vmem:[%s1 + $0xb8] sm:$0xf]
    %v66 = vld [vmem:[%s1 + $0xbc] sm:$0xf]
    %v67 = vld [vmem:[%s1 + $0xc0] sm:$0xf]
    %v68 = vld [vmem:[%s1 + $0xc4] sm:$0xf]
    %v69 = vld [vmem:[%s1 + $0xc8] sm:$0xf]
    %v70 = vld [vmem:[%s1 + $0xcc] sm:$0xf]
    %v71 = vld [vmem:[%s1 + $0xd0] sm:$0xf]
    %v72 = vld [vmem:[%s1 + $0xd4] sm:$0xf]
    %v73 = vld [vmem:[%s1 + $0xd8] sm:$0xf]
    %v74 = vld [vmem:[%s1 + $0xdc] sm:$0xf]
    %v75 = vld [vmem:[%s1 + $0xe0] sm:$0xf]
    %v76 = vld [vmem:[%s1 + $0xe4] sm:$0xf]
    %v77 = vld [vmem:[%s1 + $0xe8] sm:$0xf]
    %v78 = vld [vmem:[%s1 + $0xec] sm:$0xf]
    %v79 = vld [vmem:[%s1 + $0xf0] sm:$0xf]
    %v80 = vld [vmem:[%s1 + $0xf4] sm:$0xf]
    %v81 = vld [vmem:[%s1 + $0xf8] sm:$0xf]
    %v82 = vld [vmem:[%s1 + $0xfc] sm:$0xf]
    %v83 = vld [vmem:[%s1 + $0x100] sm:$0xf]
    %v84 = vld [vmem:[%s1 + $0x104] sm:$0xf]
    %v85 = vld [vmem:[%s1 + $0x108] sm:$0xf]
    %v86 = vld [vmem:[%s1 + $0x10c] sm:$0xf]
    %v87 = vld [vmem:[%s1 + $0x110] sm:$0xf]
    %v88 = vld [vmem:[%s1 + $0x114] sm:$0xf]
    %v89 = vld [vmem:[%s1 + $0x118] sm:$0xf]
    %v90 = vld [vmem:[%s1 + $0x11c] sm:$0xf]
    %v91 = vld [vmem:[%s1 + $0x120] sm:$0xf]
    %v92 = vld [vmem:[%s1 + $0x124] sm:$0xf]
    %v93 = vld [vmem:[%s1 + $0x128] sm:$0xf]
    %v94 = vld [vmem:[%s1 + $0x12c] sm:$0xf]
    %v95 = vld [vmem:[%s1 + $0x130] sm:$0xf]
    %v96 = vld [vmem:[%s1 + $0x134] sm:$0xf]
    %v97 = vld [vmem:[%s1 + $0x138] sm:$0xf]
    %v98 = vld [vmem:[%s1 + $0x13c] sm:$0xf]
    %v99 = vld [vmem:[%s1 + $0x140] sm:$0xf]
    %v100 = vld [vmem:[%s1 + $0x144] sm:$0xf]
    %v101 = vld [vmem:[%s1 + $0x148] sm:$0xf]
    %v102 = vld [vmem:[%s1 + $0x14c] sm:$0xf]
    %v103 = vld [vmem:[%s1 + $0x150] sm:$0xf]
    %v104 = vld [vmem:[%s1 + $0x154] sm:$0xf]
    %v105 = vld [vmem:[%s1 + $0x158] sm:$0xf]
    %v106 = vld [vmem:[%s1 + $0x15c] sm:$0xf]
    %v107 = vld [vmem:[%s1 + $0x160] sm:$0xf]
    %v108 = vld [vmem:[%s1 + $0x164] sm:$0xf]
    %v109 = vld [vmem:[%s1 + $0x168] sm:$0xf]
    %v110 = vld [vmem:[%s1 + $0x16c] sm:$0xf]
    %v111 = vld [vmem:[%s1 + $0x170] sm:$0xf]
    %v112 = vld [vmem:[%s1 + $0x174] sm:$0xf]
    %v113 = vld [vmem:[%s1 + $0x178] sm:$0xf]
    %v114 = vld [vmem:[%s1 + $0x17c] sm:$0xf]
    %v115 = vld [vmem:[%s1 + $0x180] sm:$0xf]
    %v116 = vld [vmem:[%s1 + $0x184] sm:$0xf]
    %v117 = vld [vmem:[%s1 + $0x188] sm:$0xf]
    %v118 = vld [vmem:[%s1 + $0x18c] sm:$0xf]
    %v119 = vld [vmem:[%s1 + $0x190] sm:$0xf]
    %v120 = vld [vmem:[%s1 + $0x194] sm:$0xf]
    %v121 = vld [vmem:[%s1 + $0x198] sm:$0xf]
    %v122 = vld [vmem:[%s1 + $0x19c] sm:$0xf]
    %v123 = vld [vmem:[%s1 + $0x1a0] sm:$0xf]
    %v124 = vld [vmem:[%s1 + $0x1a4] sm:$0xf]
    %v125 = vld [vmem:[%s1 + $0x1a8] sm:$0xf]
    %v126 = vld [vmem:[%s1 + $0x1ac] sm:$0xf]
    %v127 = vld [vmem:[%s1 + $0x1b0] sm:$0xf]
    %v128 = vld [vmem:[%s1 + $0x1b4] sm:$0xf]
    %v129 = vld [vmem:[%s1 + $0x1b8] sm:$0xf]
    %v130 = vld [vmem:[%s1 + $0x1bc] sm:$0xf]
    %v131 = vld [vmem:[%s1 + $0x1c0] sm:$0xf]
    %v132 = vld [vmem:[%s1 + $0x1c4] sm:$0xf]
    %v133 = vld [vmem:[%s1 + $0x1c8] sm:$0xf]
    %v134 = vld [vmem:[%s1 + $0x1cc] sm:$0xf]
    %v135 = vld [vmem:[%s1 + $0x1d0] sm:$0xf]
    %v136 = vld [vmem:[%s1 + $0x1d4] sm:$0xf]
    %v137 = vld [vmem:[%s1 + $0x1d8] sm:$0xf]
    %v138 = vld [vmem:[%s1 + $0x1dc] sm:$0xf]
    %v139 = vld [vmem:[%s1 + $0x1e0] sm:$0xf]
    %v140 = vld [vmem:[%s1 + $0x1e4] sm:$0xf]
    %v141 = vld [vmem:[%s1 + $0x1e8] sm:$0xf]
    %v142 = vld [vmem:[%s1 + $0x1ec] sm:$0xf]
    %v143 = vld [vmem:[%s1 + $0x1f0] sm:$0xf]
    %v144 = vld [vmem:[%s1 + $0x1f4] sm:$0xf]
    %v145 = vld [vmem:[%s1 + $0x1f8] sm:$0xf]
    %v146 = vld [vmem:[%s1 + $0x1fc] sm:$0xf]
    %v147 = vld [vmem:[%s1 + $0x200] sm:$0xf]
    %v148 = vld [vmem:[%s1 + $0x204] sm:$0xf]
    %v149 = vld [vmem:[%s1 + $0x208] sm:$0xf]
    %v150 = vld [vmem:[%s1 + $0x20c] sm:$0xf]
    %v151 = vld [vmem:[%s1 + $0x210] sm:$0xf]
    %v152 = vld [vmem:[%s1 + $0x214] sm:$0xf]
    %v153 = vld [vmem:[%s1 + $0x218] sm:$0xf]
    %v154 = vld [vmem:[%s1 + $0x21c] sm:$0xf]
    %v155 = vld [vmem:[%s1 + $0x220] sm:$0xf]
    %v156 = vld [vmem:[%s1 + $0x224] sm:$0xf]
    %v157 = vld [vmem:[%s1 + $0x228] sm:$0xf]
    %v158 = vld [vmem:[%s1 + $0x22c] sm:$0xf]
    %v159 = vld [vmem:[%s1 + $0x230] sm:$0xf]
    %v160 = vld [vmem:[%s1 + $0x234] sm:$0xf]
    %v161 = vld [vmem:[%s1 + $0x238] sm:$0xf]
    %v162 = vld [vmem:[%s1 + $0x23c] sm:$0xf]
    %v163 = vld [vmem:[%s1 + $0x240] sm:$0xf]
    %v164 = vld [vmem:[%s1 + $0x244] sm:$0xf]
    %v165 = vld [vmem:[%s1 + $0x248] sm:$0xf]
    %v166 = vld [vmem:[%s1 + $0x24c] sm:$0xf]
    %v167 = vld [vmem:[%s1 + $0x250] sm:$0xf]
    %v168 = vld [vmem:[%s1 + $0x254] sm:$0xf]
    %v169 = vld [vmem:[%s1 + $0x258] sm:$0xf]
    %v170 = vld [vmem:[%s1 + $0x25c] sm:$0xf]
    %v171 = vld [vmem:[%s1 + $0x260] sm:$0xf]
    %v172 = vld [vmem:[%s1 + $0x264] sm:$0xf]
    %v173 = vld [vmem:[%s1 + $0x268] sm:$0xf]
    %v174 = vld [vmem:[%s1 + $0x26c] sm:$0xf]
    %v175 = vld [vmem:[%s1 + $0x270] sm:$0xf]
    %v176 = vld [vmem:[%s1 + $0x274] sm:$0xf]
    %v177 = vld [vmem:[%s1 + $0x278] sm:$0xf]
    %v178 = vld [vmem:[%s1 + $0x27c] sm:$0xf]
    %v179 = vld [vmem:[%s1 + $0x280] sm:$0xf]
    %v180 = vld [vmem:[%s1 + $0x284] sm:$0xf]
    %v181 = vld [vmem:[%s1 + $0x288] sm:$0xf]
    %v182 = vld [vmem:[%s1 + $0x28c] sm:$0xf]
    %v183 = vld [vmem:[%s1 + $0x290] sm:$0xf]
    %v184 = vld [vmem:[%s1 + $0x294] sm:$0xf]
    %v185 = vld [vmem:[%s1 + $0x298] sm:$0xf]
    %v186 = vld [vmem:[%s1 + $0x29c] sm:$0xf]
    %v187 = vld [vmem:[%s1 + $0x2a0] sm:$0xf]
    %v188 = vld [vmem:[%s1 + $0x2a4] sm:$0xf]
    %v189 = vld [vmem:[%s1 + $0x2a8] sm:$0xf]
    %v190 = vld [vmem:[%s1 + $0x2ac] sm:$0xf]
    %v191 = vld [vmem:[%s1 + $0x2b0] sm:$0xf]
    %v192 = vld [vmem:[%s1 + $0x2b4] sm:$0xf]
    %v193 = vld [vmem:[%s1 + $0x2b8] sm:$0xf]
    %v194 = vld [vmem:[%s1 + $0x2bc] sm:$0xf]
    %v195 = vld [vmem:[%s1 + $0x2c0] sm:$0xf]
    %v196 = vld [vmem:[%s1 + $0x2c4] sm:$0xf]
    %v197 = vld [vmem:[%s1 + $0x2c8] sm:$0xf]
    %v198 = vld [vmem:[%s1 + $0x2cc] sm:$0xf]
    %v199 = vld [vmem:[%s1 + $0x2d0] sm:$0xf]
    %v200 = vld [vmem:[%s1 + $0x2d4] sm:$0xf]
    %v201 = vld [vmem:[%s1 + $0x2d8] sm:$0xf]
    %v202 = vld [vmem:[%s1 + $0x2dc] sm:$0xf]
    %v203 = vld [vmem:[%s1 + $0x2e0] sm:$0xf]
    %v204 = vld [vmem:[%s1 + $0x2e4] sm:$0xf]
    %v205 = vld [vmem:[%s1 + $0x2e8] sm:$0xf]
    %v206 = vld [vmem:[%s1 + $0x2ec] sm:$0xf]
    %v207 = vld [vmem:[%s1 + $0x2f0] sm:$0xf]
    %v208 = vld [vmem:[%s1 + $0x2f4] sm:$0xf]
    %v209 = vld [vmem:[%s1 + $0x2f8] sm:$0xf]
    %v210 = vld [vmem:[%s1 + $0x2fc] sm:$0xf]
    %v211 = vld [vmem:[%s1 + $0x300] sm:$0xf]
    %v212 = vld [vmem:[%s1 + $0x304] sm:$0xf]
    %v213 = vld [vmem:[%s1 + $0x308] sm:$0xf]
    %v214 = vld [vmem:[%s1 + $0x30c] sm:$0xf]
    %v215 = vld [vmem:[%s1 + $0x310] sm:$0xf]
    %v216 = vld [vmem:[%s1 + $0x314] sm:$0xf]
    %v217 = vld [vmem:[%s1 + $0x318] sm:$0xf]
    %v218 = vld [vmem:[%s1 + $0x31c] sm:$0xf]
    %v219 = vld [vmem:[%s1 + $0x320] sm:$0xf]
    %v220 = vld [vmem:[%s1 + $0x324] sm:$0xf]
    %v221 = vld [vmem:[%s1 + $0x328] sm:$0xf]
    %v222 = vld [vmem:[%s1 + $0x32c] sm:$0xf]
    %v223 = vld [vmem:[%s1 + $0x330] sm:$0xf]
    %v224 = vld [vmem:[%s1 + $0x334] sm:$0xf]
    %v225 = vld [vmem:[%s1 + $0x338] sm:$0xf]
    %v226 = vld [vmem:[%s1 + $0x33c] sm:$0xf]
    %v227 = vld [vmem:[%s1 + $0x340] sm:$0xf]
    %v228 = vld [vmem:[%s1 + $0x344] sm:$0xf]
    %v229 = vld [vmem:[%s1 + $0x348] sm:$0xf]
    %v230 = vld [vmem:[%s1 + $0x34c] sm:$0xf]
    %v231 = vld [vmem:[%s1 + $0x350] sm:$0xf]
    %v232 = vld [vmem:[%s1 + $0x354] sm:$0xf]
    %v233 = vld [vmem:[%s1 + $0x358] sm:$0xf]
    %v234 = vld [vmem:[%s1 + $0x35c] sm:$0xf]
    %v235 = vld [vmem:[%s1 + $0x360] sm:$0xf]
    %v236 = vld [vmem:[%s1 + $0x364] sm:$0xf]
    %v237 = vld [vmem:[%s1 + $0x368] sm:$0xf]
    %v238 = vld [vmem:[%s1 + $0x36c] sm:$0xf]
    %v239 = vld [vmem:[%s1 + $0x370] sm:$0xf]
    %v240 = vld [vmem:[%s1 + $0x374] sm:$0xf]
    %v241 = vld [vmem:[%s1 + $0x378] sm:$0xf]
    %v242 = vld [vmem:[%s1 + $0x37c] sm:$0xf]
    %v243 = vld [vmem:[%s1 + $0x380] sm:$0xf]
    %v244 = vld [vmem:[%s1 + $0x384] sm:$0xf]
    %v245 = vld [vmem:[%s1 + $0x388] sm:$0xf]
    %v246 = vld [vmem:[%s1 + $0x38c] sm:$0xf]
    %v247 = vld [vmem:[%s1 + $0x390] sm:$0xf]
    %v248 = vld [vmem:[%s1 + $0x394] sm:$0xf]
    %v249 = vld [vmem:[%s1 + $0x398] sm:$0xf]
    %v250 = vld [vmem:[%s1 + $0x39c] sm:$0xf]
    %v251 = vld [vmem:[%s1 + $0x3a0] sm:$0xf]
    %v252 = vld [vmem:[%s1 + $0x3a4] sm:$0xf]
    %v253 = vld [vmem:[%s1 + $0x3a8] sm:$0xf]
    %v254 = vld [vmem:[%s1 + $0x3ac] sm:$0xf]
    %v255 = vld [vmem:[%s1 + $0x3b0] sm:$0xf]
    %v256 = vld [vmem:[%s1 + $0x3b4] sm:$0xf]
    %v257 = vld [vmem:[%s1 + $0x3b8] sm:$0xf]
    %v258 = vld [vmem:[%s1 + $0x3bc] sm:$0xf]
    %v259 = vld [vmem:[%s1 + $0x3c0] sm:$0xf]
    %v260 = vld [vmem:[%s1 + $0x3c4] sm:$0xf]
    %v261 = vld [vmem:[%s1 + $0x3c8] sm:$0xf]
    %v262 = vld [vmem:[%s1 + $0x3cc] sm:$0xf]
    %v263 = vld [vmem:[%s1 + $0x3d0] sm:$0xf]
    %v264 = vld [vmem:[%s1 + $0x3d4] sm:$0xf]
    %v265 = vld [vmem:[%s1 + $0x3d8] sm:$0xf]
    %v266 = vld [vmem:[%s1 + $0x3dc] sm:$0xf]
    %v267 = vld [vmem:[%s1 + $0x3e0] sm:$0xf]
    %v268 = vld [vmem:[%s1 + $0x3e4] sm:$0xf]
    %v269 = vld [vmem:[%s1 + $0x3e8] sm:$0xf]
    %v270 = vld [vmem:[%s1 + $0x3ec] sm:$0xf]
    %v271 = vld [vmem:[%s1 + $0x3f0] sm:$0xf]
    %v272 = vld [vmem:[%s1 + $0x3f4] sm:$0xf]
    %v273 = vld [vmem:[%s1 + $0x3f8] sm:$0xf]
    %v274 = vld [vmem:[%s1 + $0x3fc] sm:$0xf]
    %v275 = vld [vmem:[%s1 + $0x400] sm:$0xf]
    %v276 = vld [vmem:[%s1 + $0x404] sm:$0xf]
    %v277 = vld [vmem:[%s1 + $0x408] sm:$0xf]
    %v278 = vld [vmem:[%s1 + $0x40c] sm:$0xf]
    %v279 = vld [vmem:[%s1 + $0x410] sm:$0xf]
    %v280 = vld [vmem:[%s1 + $0x414] sm:$0xf]
    %v281 = vld [vmem:[%s1 + $0x418] sm:$0xf]
    %v282 = vld [vmem:[%s1 + $0x41c] sm:$0xf]
    %v283 = vld [vmem:[%s1 + $0x420] sm:$0xf]
    %v284 = vld [vmem:[%s1 + $0x424] sm:$0xf]
    %v285 = vld [vmem:[%s1 + $0x428] sm:$0xf]
    %v286 = vld [vmem:[%s1 + $0x42c] sm:$0xf]
    %v287 = vld [vmem:[%s1 + $0x430] sm:$0xf]
    %v288 = vld [vmem:[%s1 + $0x434] sm:$0xf]
    %v289 = vld [vmem:[%s1 + $0x438] sm:$0xf]
    %v290 = vld [vmem:[%s1 + $0x43c] sm:$0xf]
    %v291 = vld [vmem:[%s1 + $0x440] sm:$0xf]
    %v292 = vld [vmem:[%s1 + $0x444] sm:$0xf]
    %v293 = vld [vmem:[%s1 + $0x448] sm:$0xf]
    %v294 = vld [vmem:[%s1 + $0x44c] sm:$0xf]
    %v295 = vld [vmem:[%s1 + $0x450] sm:$0xf]
    %v296 = vld [vmem:[%s1 + $0x454] sm:$0xf]
    %v297 = vld [vmem:[%s1 + $0x458] sm:$0xf]
    %v298 = vld [vmem:[%s1 + $0x45c] sm:$0xf]
    %v299 = vld [vmem:[%s1 + $0x460] sm:$0xf]
    %v300 = vld [vmem:[%s1 + $0x464] sm:$0xf]
    %v301 = vld [vmem:[%s1 + $0x468] sm:$0xf]
    %v302 = vld [vmem:[%s1 + $0x46c] sm:$0xf]
    %v303 = vld [vmem:[%s1 + $0x470] sm:$0xf]
    %v304 = vld [vmem:[%s1 + $0x474] sm:$0xf]
    %v305 = vld [vmem:[%s1 + $0x478] sm:$0xf]
    %v306 = vld [vmem:[%s1 + $0x47c] sm:$0xf]
    %v307 = vld [vmem:[%s1 + $0x480] sm:$0xf]
    %v308 = vld [vmem:[%s1 + $0x484] sm:$0xf]
    %v309 = vld [vmem:[%s1 + $0x488] sm:$0xf]
    %v310 = vld [vmem:[%s1 + $0x48c] sm:$0xf]
    %v311 = vld [vmem:[%s1 + $0x490] sm:$0xf]
    %v312 = vld [vmem:[%s1 + $0x494] sm:$0xf]
    %v313 = vld [vmem:[%s1 + $0x498] sm:$0xf]
    %v314 = vld [vmem:[%s1 + $0x49c] sm:$0xf]
    %v315 = vld [vmem:[%s1 + $0x4a0] sm:$0xf]
    %v316 = vld [vmem:[%s1 + $0x4a4] sm:$0xf]
    %v317 = vld [vmem:[%s1 + $0x4a8] sm:$0xf]
    %v318 = vld [vmem:[%s1 + $0x4ac] sm:$0xf]
    %v319 = vld [vmem:[%s1 + $0x4b0] sm:$0xf]
    %v320 = vld [vmem:[%s1 + $0x4b4] sm:$0xf]
    %v321 = vld [vmem:[%s1 + $0x4b8] sm:$0xf]
    %v322 = vld [vmem:[%s1 + $0x4bc] sm:$0xf]
    %v323 = vld [vmem:[%s1 + $0x4c0] sm:$0xf]
    %v324 = vld [vmem:[%s1 + $0x4c4] sm:$0xf]
    %v325 = vld [vmem:[%s1 + $0x4c8] sm:$0xf]
    %v326 = vld [vmem:[%s1 + $0x4cc] sm:$0xf]
    %v327 = vld [vmem:[%s1 + $0x4d0] sm:$0xf]
    %v328 = vld [vmem:[%s1 + $0x4d4] sm:$0xf]
    %v329 = vld [vmem:[%s1 + $0x4d8] sm:$0xf]
    %v330 = vld [vmem:[%s1 + $0x4dc] sm:$0xf]
    %v331 = vld [vmem:[%s1 + $0x4e0] sm:$0xf]
    %v332 = vld [vmem:[%s1 + $0x4e4] sm:$0xf]
    %v333 = vld [vmem:[%s1 + $0x4e8] sm:$0xf]
    %v334 = vld [vmem:[%s1 + $0x4ec] sm:$0xf]
    %v335 = vld [vmem:[%s1 + $0x4f0] sm:$0xf]
    %v336 = vld [vmem:[%s1 + $0x4f4] sm:$0xf]
    %v337 = vld [vmem:[%s1 + $0x4f8] sm:$0xf]
    %v338 = vld [vmem:[%s1 + $0x4fc] sm:$0xf]
    %v339 = vld [vmem:[%s1 + $0x500] sm:$0xf]
    %v340 = vld [vmem:[%s1 + $0x504] sm:$0xf]
    %v341 = vld [vmem:[%s1 + $0x508] sm:$0xf]
    %v342 = vld [vmem:[%s1 + $0x50c] sm:$0xf]
    %v343 = vld [vmem:[%s1 + $0x510] sm:$0xf]
    %v344 = vld [vmem:[%s1 + $0x514] sm:$0xf]
    %v345 = vld [vmem:[%s1 + $0x518] sm:$0xf]
    %v346 = vld [vmem:[%s1 + $0x51c] sm:$0xf]
    %v347 = vld [vmem:[%s1 + $0x520] sm:$0xf]
    %v348 = vld [vmem:[%s1 + $0x524] sm:$0xf]
    %v349 = vld [vmem:[%s1 + $0x528] sm:$0xf]
    %v350 = vld [vmem:[%s1 + $0x52c] sm:$0xf]
    %v351 = vld [vmem:[%s1 + $0x530] sm:$0xf]
    %v352 = vld [vmem:[%s1 + $0x534] sm:$0xf]
    %v353 = vld [vmem:[%s1 + $0x538] sm:$0xf]
    %v354 = vld [vmem:[%s1 + $0x53c] sm:$0xf]
    %v355 = vld [vmem:[%s1 + $0x540] sm:$0xf]
    %v356 = vld [vmem:[%s1 + $0x544] sm:$0xf]
    %v357 = vld [vmem:[%s1 + $0x548] sm:$0xf]
    %v358 = vld [vmem:[%s1 + $0x54c] sm:$0xf]
    %v359 = vld [vmem:[%s1 + $0x550] sm:$0xf]
    %v360 = vld [vmem:[%s1 + $0x554] sm:$0xf]
    %v361 = vld [vmem:[%s1 + $0x558] sm:$0xf]
    %v362 = vld [vmem:[%s1 + $0x55c] sm:$0xf]
    %v363 = vld [vmem:[%s1 + $0x560] sm:$0xf]
    %v364 = vld [vmem:[%s1 + $0x564] sm:$0xf]
    %v365 = vld [vmem:[%s1 + $0x568] sm:$0xf]
    %v366 = vld [vmem:[%s1 + $0x56c] sm:$0xf]
    %v367 = vld [vmem:[%s1 + $0x570] sm:$0xf]
    %v368 = vld [vmem:[%s1 + $0x574] sm:$0xf]
    %v369 = vld [vmem:[%s1 + $0x578] sm:$0xf]
    %v370 = vld [vmem:[%s1 + $0x57c] sm:$0xf]
    %v371 = vld [vmem:[%s1 + $0x580] sm:$0xf]
    %v372 = vld [vmem:[%s1 + $0x584] sm:$0xf]
    %v373 = vld [vmem:[%s1 + $0x588] sm:$0xf]
    %v374 = vld [vmem:[%s1 + $0x58c] sm:$0xf]
    %v375 = vld [vmem:[%s1 + $0x590] sm:$0xf]
    %v376 = vld [vmem:[%s1 + $0x594] sm:$0xf]
    %v377 = vld [vmem:[%s1 + $0x598] sm:$0xf]
    %v378 = vld [vmem:[%s1 + $0x59c] sm:$0xf]
    %v379 = vld [vmem:[%s1 + $0x5a0] sm:$0xf]
    %v380 = vld [vmem:[%s1 + $0x5a4] sm:$0xf]
    %v381 = vld [vmem:[%s1 + $0x5a8] sm:$0xf]
    %v382 = vld [vmem:[%s1 + $0x5ac] sm:$0xf]
    %v383 = vld [vmem:[%s1 + $0x5b0] sm:$0xf]
    %v384 = vld [vmem:[%s1 + $0x5b4] sm:$0xf]
    %v385 = vld [vmem:[%s1 + $0x5b8] sm:$0xf]
    %v386 = vld [vmem:[%s1 + $0x5bc] sm:$0xf]
    %v387 = vld [vmem:[%s1 + $0x5c0] sm:$0xf]
    %v388 = vld [vmem:[%s1 + $0x5c4] sm:$0xf]
    %v389 = vld [vmem:[%s1 + $0x5c8] sm:$0xf]
    %v390 = vld [vmem:[%s1 + $0x5cc] sm:$0xf]
    %v391 = vld [vmem:[%s1 + $0x5d0] sm:$0xf]
    %v392 = vld [vmem:[%s1 + $0x5d4] sm:$0xf]
    %v393 = vld [vmem:[%s1 + $0x5d8] sm:$0xf]
    %v394 = vld [vmem:[%s1 + $0x5dc] sm:$0xf]
    %v395 = vld [vmem:[%s1 + $0x5e0] sm:$0xf]
    %v396 = vld [vmem:[%s1 + $0x5e4] sm:$0xf]
    %v397 = vld [vmem:[%s1 + $0x5e8] sm:$0xf]
    %v398 = vld [vmem:[%s1 + $0x5ec] sm:$0xf]
    %v399 = vld [vmem:[%s1 + $0x5f0] sm:$0xf]
    %v400 = vld [vmem:[%s1 + $0x5f4] sm:$0xf]
    %v401 = vld [vmem:[%s1 + $0x5f8] sm:$0xf]
    %v402 = vld [vmem:[%s1 + $0x5fc] sm:$0xf]
    %v403 = vld [vmem:[%s1 + $0x600] sm:$0xf]
    %v404 = vld [vmem:[%s1 + $0x604] sm:$0xf]
    %v405 = vld [vmem:[%s1 + $0x608] sm:$0xf]
    %v406 = vld [vmem:[%s1 + $0x60c] sm:$0xf]
    %v407 = vld [vmem:[%s1 + $0x610] sm:$0xf]
    %v408 = vld [vmem:[%s1 + $0x614] sm:$0xf]
    %v409 = vld [vmem:[%s1 + $0x618] sm:$0xf]
    %v410 = vld [vmem:[%s1 + $0x61c] sm:$0xf]
    %v411 = vld [vmem:[%s1 + $0x620] sm:$0xf]
    %v412 = vld [vmem:[%s1 + $0x624] sm:$0xf]
    %v413 = vld [vmem:[%s1 + $0x628] sm:$0xf]
    %v414 = vld [vmem:[%s1 + $0x62c] sm:$0xf]
    %v415 = vld [vmem:[%s1 + $0x630] sm:$0xf]
    %v416 = vld [vmem:[%s1 + $0x634] sm:$0xf]
    %v417 = vld [vmem:[%s1 + $0x638] sm:$0xf]
    %v418 = vld [vmem:[%s1 + $0x63c] sm:$0xf]
    %v419 = vld [vmem:[%s1 + $0x640] sm:$0xf]
    %v420 = vld [vmem:[%s1 + $0x644] sm:$0xf]
    %v421 = vld [vmem:[%s1 + $0x648] sm:$0xf]
    %v422 = vld [vmem:[%s1 + $0x64c] sm:$0xf]
    %v423 = vld [vmem:[%s1 + $0x650] sm:$0xf]
    %v424 = vld [vmem:[%s1 + $0x654] sm:$0xf]
    %v425 = vld [vmem:[%s1 + $0x658] sm:$0xf]
    %v426 = vld [vmem:[%s1 + $0x65c] sm:$0xf]
    %v427 = vld [vmem:[%s1 + $0x660] sm:$0xf]
    %v428 = vld [vmem:[%s1 + $0x664] sm:$0xf]
    %v429 = vld [vmem:[%s1 + $0x668] sm:$0xf]
    %v430 = vld [vmem:[%s1 + $0x66c] sm:$0xf]
    %v431 = vld [vmem:[%s1 + $0x670] sm:$0xf]
    %v432 = vld [vmem:[%s1 + $0x674] sm:$0xf]
    %v433 = vld [vmem:[%s1 + $0x678] sm:$0xf]
    %v434 = vld [vmem:[%s1 + $0x67c] sm:$0xf]
    %v435 = vld [vmem:[%s1 + $0x680] sm:$0xf]
    %v436 = vld [vmem:[%s1 + $0x684] sm:$0xf]
    %v437 = vld [vmem:[%s1 + $0x688] sm:$0xf]
    %v438 = vld [vmem:[%s1 + $0x68c] sm:$0xf]
    %v439 = vld [vmem:[%s1 + $0x690] sm:$0xf]
    %v440 = vld [vmem:[%s1 + $0x694] sm:$0xf]
    %v441 = vld [vmem:[%s1 + $0x698] sm:$0xf]
    %v442 = vld [vmem:[%s1 + $0x69c] sm:$0xf]
    %v443 = vld [vmem:[%s1 + $0x6a0] sm:$0xf]
    %v444 = vld [vmem:[%s1 + $0x6a4] sm:$0xf]
    %v445 = vld [vmem:[%s1 + $0x6a8] sm:$0xf]
    %v446 = vld [vmem:[%s1 + $0x6ac] sm:$0xf]
    %v447 = vld [vmem:[%s1 + $0x6b0] sm:$0xf]
    %v448 = vld [vmem:[%s1 + $0x6b4] sm:$0xf]
    %v449 = vld [vmem:[%s1 + $0x6b8] sm:$0xf]
    %v450 = vld [vmem:[%s1 + $0x6bc] sm:$0xf]
    %v451 = vld [vmem:[%s1 + $0x6c0] sm:$0xf]
    %v452 = vld [vmem:[%s1 + $0x6c4] sm:$0xf]
    %v453 = vld [vmem:[%s1 + $0x6c8] sm:$0xf]
    %v454 = vld [vmem:[%s1 + $0x6cc] sm:$0xf]
    %v455 = vld [vmem:[%s1 + $0x6d0] sm:$0xf]
    %v456 = vld [vmem:[%s1 + $0x6d4] sm:$0xf]
    %v457 = vld [vmem:[%s1 + $0x6d8] sm:$0xf]
    %v458 = vld [vmem:[%s1 + $0x6dc] sm:$0xf]
    %v459 = vld [vmem:[%s1 + $0x6e0] sm:$0xf]
    %v460 = vld [vmem:[%s1 + $0x6e4] sm:$0xf]
    %v461 = vld [vmem:[%s1 + $0x6e8] sm:$0xf]
    %v462 = vld [vmem:[%s1 + $0x6ec] sm:$0xf]
    %v463 = vld [vmem:[%s1 + $0x6f0] sm:$0xf]
    %v464 = vld [vmem:[%s1 + $0x6f4] sm:$0xf]
    %v465 = vld [vmem:[%s1 + $0x6f8] sm:$0xf]
    %v466 = vld [vmem:[%s1 + $0x6fc] sm:$0xf]
    %v467 = vld [vmem:[%s1 + $0x700] sm:$0xf]
    %v468 = vld [vmem:[%s1 + $0x704] sm:$0xf]
    %v469 = vld [vmem:[%s1 + $0x708] sm:$0xf]
    %v470 = vld [vmem:[%s1 + $0x70c] sm:$0xf]
    %v471 = vld [vmem:[%s1 + $0x710] sm:$0xf]
    %v472 = vld [vmem:[%s1 + $0x714] sm:$0xf]
    %v473 = vld [vmem:[%s1 + $0x718] sm:$0xf]
    %v474 = vld [vmem:[%s1 + $0x71c] sm:$0xf]
    %v475 = vld [vmem:[%s1 + $0x720] sm:$0xf]
    %v476 = vld [vmem:[%s1 + $0x724] sm:$0xf]
    %v477 = vld [vmem:[%s1 + $0x728] sm:$0xf]
    %v478 = vld [vmem:[%s1 + $0x72c] sm:$0xf]
    %v479 = vld [vmem:[%s1 + $0x730] sm:$0xf]
    %v480 = vld [vmem:[%s1 + $0x734] sm:$0xf]
    %v481 = vld [vmem:[%s1 + $0x738] sm:$0xf]
    %v482 = vld [vmem:[%s1 + $0x73c] sm:$0xf]
    %v483 = vld [vmem:[%s1 + $0x740] sm:$0xf]
    %v484 = vld [vmem:[%s1 + $0x744] sm:$0xf]
    %v485 = vld [vmem:[%s1 + $0x748] sm:$0xf]
    %v486 = vld [vmem:[%s1 + $0x74c] sm:$0xf]
    %v487 = vld [vmem:[%s1 + $0x750] sm:$0xf]
    %v488 = vld [vmem:[%s1 + $0x754] sm:$0xf]
    %v489 = vld [vmem:[%s1 + $0x758] sm:$0xf]
    %v490 = vld [vmem:[%s1 + $0x75c] sm:$0xf]
    %v491 = vld [vmem:[%s1 + $0x760] sm:$0xf]
    %v492 = vld [vmem:[%s1 + $0x764] sm:$0xf]
    %v493 = vld [vmem:[%s1 + $0x768] sm:$0xf]
    %v494 = vld [vmem:[%s1 + $0x76c] sm:$0xf]
    %v495 = vld [vmem:[%s1 + $0x770] sm:$0xf]
    %v496 = vld [vmem:[%s1 + $0x774] sm:$0xf]
    %v497 = vld [vmem:[%s1 + $0x778] sm:$0xf]
    %v498 = vld [vmem:[%s1 + $0x77c] sm:$0xf]
    %v499 = vld [vmem:[%s1 + $0x780] sm:$0xf]
    %v500 = vld [vmem:[%s1 + $0x784] sm:$0xf]
    %v501 = vld [vmem:[%s1 + $0x788] sm:$0xf]
    %v502 = vld [vmem:[%s1 + $0x78c] sm:$0xf]
    %v503 = vld [vmem:[%s1 + $0x790] sm:$0xf]
    %v504 = vld [vmem:[%s1 + $0x794] sm:$0xf]
    %v505 = vld [vmem:[%s1 + $0x798] sm:$0xf]
    %v506 = vld [vmem:[%s1 + $0x79c] sm:$0xf]
    %v507 = vld [vmem:[%s1 + $0x7a0] sm:$0xf]
    %v508 = vld [vmem:[%s1 + $0x7a4] sm:$0xf]
    %v509 = vld [vmem:[%s1 + $0x7a8] sm:$0xf]
    %v510 = vld [vmem:[%s1 + $0x7ac] sm:$0xf]
    %v511 = vld [vmem:[%s1 + $0x7b0] sm:$0xf]
    %v512 = vld [vmem:[%s1 + $0x7b4] sm:$0xf]
    %v513 = vld [vmem:[%s1 + $0x7b8] sm:$0xf]
    %v514 = vld [vmem:[%s1 + $0x7bc] sm:$0xf]
    %v515 = vld [vmem:[%s1 + $0x7c0] sm:$0xf]
    %v516 = vld [vmem:[%s1 + $0x7c4] sm:$0xf]
    %v517 = vld [vmem:[%s1 + $0x7c8] sm:$0xf]
    %v518 = vld [vmem:[%s1 + $0x7cc] sm:$0xf]
    %v519 = vld [vmem:[%s1 + $0x7d0] sm:$0xf]
    %v520 = vld [vmem:[%s1 + $0x7d4] sm:$0xf]
    %v521 = vld [vmem:[%s1 + $0x7d8] sm:$0xf]
    %v522 = vld [vmem:[%s1 + $0x7dc] sm:$0xf]
    %v523 = vld [vmem:[%s1 + $0x7e0] sm:$0xf]
    %v524 = vld [vmem:[%s1 + $0x7e4] sm:$0xf]
    %v525 = vld [vmem:[%s1 + $0x7e8] sm:$0xf]
    %v526 = vld [vmem:[%s1 + $0x7ec] sm:$0xf]
    %v527 = vld [vmem:[%s1 + $0x7f0] sm:$0xf]
    %v528 = vld [vmem:[%s1 + $0x7f4] sm:$0xf]
    %v529 = vld [vmem:[%s1 + $0x7f8] sm:$0xf]
    %v530 = vld [vmem:[%s1 + $0x7fc] sm:$0xf]
    %v531 = vld [vmem:[%s1 + $0x800] sm:$0xf]
    %v532 = vld [vmem:[%s1 + $0x804] sm:$0xf]
    %v533 = vld [vmem:[%s1 + $0x808] sm:$0xf]
    %v534 = vld [vmem:[%s1 + $0x80c] sm:$0xf]
    %v535 = vld [vmem:[%s1 + $0x810] sm:$0xf]
    %v536 = vld [vmem:[%s1 + $0x814] sm:$0xf]
    %v537 = vld [vmem:[%s1 + $0x818] sm:$0xf]
    %v538 = vld [vmem:[%s1 + $0x81c] sm:$0xf]
    %v539 = vld [vmem:[%s1 + $0x820] sm:$0xf]
    %v540 = vld [vmem:[%s1 + $0x824] sm:$0xf]
    %v541 = vld [vmem:[%s1 + $0x828] sm:$0xf]
    %v542 = vld [vmem:[%s1 + $0x82c] sm:$0xf]
    %v543 = vld [vmem:[%s1 + $0x830] sm:$0xf]
    %v544 = vld [vmem:[%s1 + $0x834] sm:$0xf]
    %v545 = vld [vmem:[%s1 + $0x838] sm:$0xf]
    %v546 = vld [vmem:[%s1 + $0x83c] sm:$0xf]
    %v547 = vld [vmem:[%s1 + $0x840] sm:$0xf]
    %v548 = vld [vmem:[%s1 + $0x844] sm:$0xf]
    %v549 = vld [vmem:[%s1 + $0x848] sm:$0xf]
    %v550 = vld [vmem:[%s1 + $0x84c] sm:$0xf]
    %v551 = vld [vmem:[%s1 + $0x850] sm:$0xf]
    %v552 = vld [vmem:[%s1 + $0x854] sm:$0xf]
    %v553 = vld [vmem:[%s1 + $0x858] sm:$0xf]
    %v554 = vld [vmem:[%s1 + $0x85c] sm:$0xf]
    %v555 = vld [vmem:[%s1 + $0x860] sm:$0xf]
    %v556 = vld [vmem:[%s1 + $0x864] sm:$0xf]
    %v557 = vld [vmem:[%s1 + $0x868] sm:$0xf]
    %v558 = vld [vmem:[%s1 + $0x86c] sm:$0xf]
    %v559 = vld [vmem:[%s1 + $0x870] sm:$0xf]
    %v560 = vld [vmem:[%s1 + $0x874] sm:$0xf]
    %v561 = vld [vmem:[%s1 + $0x878] sm:$0xf]
    %v562 = vld [vmem:[%s1 + $0x87c] sm:$0xf]
    %v563 = vld [vmem:[%s1 + $0x880] sm:$0xf]
    %v564 = vld [vmem:[%s1 + $0x884] sm:$0xf]
    %v565 = vld [vmem:[%s1 + $0x888] sm:$0xf]
    %v566 = vld [vmem:[%s1 + $0x88c] sm:$0xf]
    %v567 = vld [vmem:[%s1 + $0x890] sm:$0xf]
    %v568 = vld [vmem:[%s1 + $0x894] sm:$0xf]
    %v569 = vld [vmem:[%s1 + $0x898] sm:$0xf]
    %v570 = vld [vmem:[%s1 + $0x89c] sm:$0xf]
    %v571 = vld [vmem:[%s1 + $0x8a0] sm:$0xf]
    %v572 = vld [vmem:[%s1 + $0x8a4] sm:$0xf]
    %v573 = vld [vmem:[%s1 + $0x8a8] sm:$0xf]
    %v574 = vld [vmem:[%s1 + $0x8ac] sm:$0xf]
    %v575 = vld [vmem:[%s1 + $0x8b0] sm:$0xf]
    %v576 = vld [vmem:[%s1 + $0x8b4] sm:$0xf]
    %v577 = vld [vmem:[%s1 + $0x8b8] sm:$0xf]
    %v578 = vld [vmem:[%s1 + $0x8bc] sm:$0xf]
    %v579 = vld [vmem:[%s1 + $0x8c0] sm:$0xf]
    %v580 = vld [vmem:[%s1 + $0x8c4] sm:$0xf]
    %v581 = vld [vmem:[%s1 + $0x8c8] sm:$0xf]
    %v582 = vld [vmem:[%s1 + $0x8cc] sm:$0xf]
    %v583 = vld [vmem:[%s1 + $0x8d0] sm:$0xf]
    %v584 = vld [vmem:[%s1 + $0x8d4] sm:$0xf]
    %v585 = vld [vmem:[%s1 + $0x8d8] sm:$0xf]
    %v586 = vld [vmem:[%s1 + $0x8dc] sm:$0xf]
    %v587 = vld [vmem:[%s1 + $0x8e0] sm:$0xf]
    %v588 = vld [vmem:[%s1 + $0x8e4] sm:$0xf]
    %v589 = vld [vmem:[%s1 + $0x8e8] sm:$0xf]
    %v590 = vld [vmem:[%s1 + $0x8ec] sm:$0xf]
    %v591 = vld [vmem:[%s1 + $0x8f0] sm:$0xf]
    %v592 = vld [vmem:[%s1 + $0x8f4] sm:$0xf]
    %v593 = vld [vmem:[%s1 + $0x8f8] sm:$0xf]
    %v594 = vld [vmem:[%s1 + $0x8fc] sm:$0xf]
    %v595 = vld [vmem:[%s1 + $0x900] sm:$0xf]
    %v596 = vld [vmem:[%s1 + $0x904] sm:$0xf]
    %v597 = vld [vmem:[%s1 + $0x908] sm:$0xf]
    %v598 = vld [vmem:[%s1 + $0x90c] sm:$0xf]
    %v599 = vld [vmem:[%s1 + $0x910] sm:$0xf]
    %v600 = vld [vmem:[%s1 + $0x914] sm:$0xf]
    %v601 = vld [vmem:[%s1 + $0x918] sm:$0xf]
    %v602 = vld [vmem:[%s1 + $0x91c] sm:$0xf]
    %v603 = vld [vmem:[%s1 + $0x920] sm:$0xf]
    %v604 = vld [vmem:[%s1 + $0x924] sm:$0xf]
    %v605 = vld [vmem:[%s1 + $0x928] sm:$0xf]
    %v606 = vld [vmem:[%s1 + $0x92c] sm:$0xf]
    %v607 = vld [vmem:[%s1 + $0x930] sm:$0xf]
    %v608 = vld [vmem:[%s1 + $0x934] sm:$0xf]
    %v609 = vld [vmem:[%s1 + $0x938] sm:$0xf]
    %v610 = vld [vmem:[%s1 + $0x93c] sm:$0xf]
    %v611 = vld [vmem:[%s1 + $0x940] sm:$0xf]
    %v612 = vld [vmem:[%s1 + $0x944] sm:$0xf]
    %v613 = vld [vmem:[%s1 + $0x948] sm:$0xf]
    %v614 = vld [vmem:[%s1 + $0x94c] sm:$0xf]
    %v615 = vld [vmem:[%s1 + $0x950] sm:$0xf]
    %v616 = vld [vmem:[%s1 + $0x954] sm:$0xf]
    %v617 = vld [vmem:[%s1 + $0x958] sm:$0xf]
    %v618 = vld [vmem:[%s1 + $0x95c] sm:$0xf]
    %v619 = vld [vmem:[%s1 + $0x960] sm:$0xf]
    %v620 = vld [vmem:[%s1 + $0x964] sm:$0xf]
    %v621 = vld [vmem:[%s1 + $0x968] sm:$0xf]
    %v622 = vld [vmem:[%s1 + $0x96c] sm:$0xf]
    %v623 = vld [vmem:[%s1 + $0x970] sm:$0xf]
    %v624 = vld [vmem:[%s1 + $0x974] sm:$0xf]
    %v625 = vld [vmem:[%s1 + $0x978] sm:$0xf]
    %v626 = vld [vmem:[%s1 + $0x97c] sm:$0xf]
    %v627 = vld [vmem:[%s1 + $0x980] sm:$0xf]
    %v628 = vld [vmem:[%s1 + $0x984] sm:$0xf]
    %v629 = vld [vmem:[%s1 + $0x988] sm:$0xf]
    %v630 = vld [vmem:[%s1 + $0x98c] sm:$0xf]
    %v631 = vld [vmem:[%s1 + $0x990] sm:$0xf]
    %v632 = vld [vmem:[%s1 + $0x994] sm:$0xf]
    %v633 = vld [vmem:[%s1 + $0x998] sm:$0xf]
    %v634 = vld [vmem:[%s1 + $0x99c] sm:$0xf]
    %v635 = vld [vmem:[%s1 + $0x9a0] sm:$0xf]
    %v636 = vld [vmem:[%s1 + $0x9a4] sm:$0xf]
    %v637 = vld [vmem:[%s1 + $0x9a8] sm:$0xf]
    %v638 = vld [vmem:[%s1 + $0x9ac] sm:$0xf]
    %v639 = vld [vmem:[%s1 + $0x9b0] sm:$0xf]
    %v640 = vld [vmem:[%s1 + $0x9b4] sm:$0xf]
    %v641 = vld [vmem:[%s1 + $0x9b8] sm:$0xf]
    %v642 = vld [vmem:[%s1 + $0x9bc] sm:$0xf]
    %v643 = vld [vmem:[%s1 + $0x9c0] sm:$0xf]
    %v644 = vld [vmem:[%s1 + $0x9c4] sm:$0xf]
    %v645 = vld [vmem:[%s1 + $0x9c8] sm:$0xf]
    %v646 = vld [vmem:[%s1 + $0x9cc] sm:$0xf]
    %v647 = vld [vmem:[%s1 + $0x9d0] sm:$0xf]
    %v648 = vld [vmem:[%s1 + $0x9d4] sm:$0xf]
    %v649 = vld [vmem:[%s1 + $0x9d8] sm:$0xf]
    %v650 = vld [vmem:[%s1 + $0x9dc] sm:$0xf]
    %v651 = vld [vmem:[%s1 + $0x9e0] sm:$0xf]
    %v652 = vld [vmem:[%s1 + $0x9e4] sm:$0xf]
    %v653 = vld [vmem:[%s1 + $0x9e8] sm:$0xf]
    %v654 = vld [vmem:[%s1 + $0x9ec] sm:$0xf]
    %v655 = vld [vmem:[%s1 + $0x9f0] sm:$0xf]
    %v656 = vld [vmem:[%s1 + $0x9f4] sm:$0xf]
    %v657 = vld [vmem:[%s1 + $0x9f8] sm:$0xf]
    %v658 = vld [vmem:[%s1 + $0x9fc] sm:$0xf]
    %v659 = vld [vmem:[%s1 + $0xa00] sm:$0xf]
    %v660 = vld [vmem:[%s1 + $0xa04] sm:$0xf]
    %v661 = vld [vmem:[%s1 + $0xa08] sm:$0xf]
    %v662 = vld [vmem:[%s1 + $0xa0c] sm:$0xf]
    %v663 = vld [vmem:[%s1 + $0xa10] sm:$0xf]
    %v664 = vld [vmem:[%s1 + $0xa14] sm:$0xf]
    %v665 = vld [vmem:[%s1 + $0xa18] sm:$0xf]
    %v666 = vld [vmem:[%s1 + $0xa1c] sm:$0xf]
    %v667 = vld [vmem:[%s1 + $0xa20] sm:$0xf]
    %v668 = vld [vmem:[%s1 + $0xa24] sm:$0xf]
    %v669 = vld [vmem:[%s1 + $0xa28] sm:$0xf]
    %v670 = vld [vmem:[%s1 + $0xa2c] sm:$0xf]
    %v671 = vld [vmem:[%s1 + $0xa30] sm:$0xf]
    %v672 = vld [vmem:[%s1 + $0xa34] sm:$0xf]
    %v673 = vld [vmem:[%s1 + $0xa38] sm:$0xf]
    %v674 = vld [vmem:[%s1 + $0xa3c] sm:$0xf]
    %v675 = vld [vmem:[%s1 + $0xa40] sm:$0xf]
    %v676 = vld [vmem:[%s1 + $0xa44] sm:$0xf]
    %v677 = vld [vmem:[%s1 + $0xa48] sm:$0xf]
    %v678 = vld [vmem:[%s1 + $0xa4c] sm:$0xf]
    %v679 = vld [vmem:[%s1 + $0xa50] sm:$0xf]
    %v680 = vld [vmem:[%s1 + $0xa54] sm:$0xf]
    %v681 = vld [vmem:[%s1 + $0xa58] sm:$0xf]
    %v682 = vld [vmem:[%s1 + $0xa5c] sm:$0xf]
    %v683 = vld [vmem:[%s1 + $0xa60] sm:$0xf]
    %v684 = vld [vmem:[%s1 + $0xa64] sm:$0xf]
    %v685 = vld [vmem:[%s1 + $0xa68] sm:$0xf]
    %v686 = vld [vmem:[%s1 + $0xa6c] sm:$0xf]
    %v687 = vld [vmem:[%s1 + $0xa70] sm:$0xf]
    %v688 = vld [vmem:[%s1 + $0xa74] sm:$0xf]
    %v689 = vld [vmem:[%s1 + $0xa78] sm:$0xf]
    %v690 = vld [vmem:[%s1 + $0xa7c] sm:$0xf]
    %v691 = vld [vmem:[%s1 + $0xa80] sm:$0xf]
    %v692 = vld [vmem:[%s1 + $0xa84] sm:$0xf]
    %v693 = vld [vmem:[%s1 + $0xa88] sm:$0xf]
    %v694 = vld [vmem:[%s1 + $0xa8c] sm:$0xf]
    %v695 = vld [vmem:[%s1 + $0xa90] sm:$0xf]
    %v696 = vld [vmem:[%s1 + $0xa94] sm:$0xf]
    %v697 = vld [vmem:[%s1 + $0xa98] sm:$0xf]
    %v698 = vld [vmem:[%s1 + $0xa9c] sm:$0xf]
    %v699 = vld [vmem:[%s1 + $0xaa0] sm:$0xf]
    %v700 = vld [vmem:[%s1 + $0xaa4] sm:$0xf]
    %v701 = vld [vmem:[%s1 + $0xaa8] sm:$0xf]
    %v702 = vld [vmem:[%s1 + $0xaac] sm:$0xf]
    %v703 = vld [vmem:[%s1 + $0xab0] sm:$0xf]
    %v704 = vld [vmem:[%s1 + $0xab4] sm:$0xf]
    %v705 = vld [vmem:[%s1 + $0xab8] sm:$0xf]
    %v706 = vld [vmem:[%s1 + $0xabc] sm:$0xf]
    %v707 = vld [vmem:[%s1 + $0xac0] sm:$0xf]
    %v708 = vld [vmem:[%s1 + $0xac4] sm:$0xf]
    %v709 = vld [vmem:[%s1 + $0xac8] sm:$0xf]
    %v710 = vld [vmem:[%s1 + $0xacc] sm:$0xf]
    %v711 = vld [vmem:[%s1 + $0xad0] sm:$0xf]
    %v712 = vld [vmem:[%s1 + $0xad4] sm:$0xf]
    %v713 = vld [vmem:[%s1 + $0xad8] sm:$0xf]
    %v714 = vld [vmem:[%s1 + $0xadc] sm:$0xf]
    %v715 = vld [vmem:[%s1 + $0xae0] sm:$0xf]
    %v716 = vld [vmem:[%s1 + $0xae4] sm:$0xf]
    %v717 = vld [vmem:[%s1 + $0xae8] sm:$0xf]
    %v718 = vld [vmem:[%s1 + $0xaec] sm:$0xf]
    %v719 = vld [vmem:[%s1 + $0xaf0] sm:$0xf]
    %v720 = vld [vmem:[%s1 + $0xaf4] sm:$0xf]
    %v721 = vld [vmem:[%s1 + $0xaf8] sm:$0xf]
    %v722 = vld [vmem:[%s1 + $0xafc] sm:$0xf]
    %v723 = vld [vmem:[%s1 + $0xb00] sm:$0xf]
    %v724 = vld [vmem:[%s1 + $0xb04] sm:$0xf]
    %v725 = vld [vmem:[%s1 + $0xb08] sm:$0xf]
    %v726 = vld [vmem:[%s1 + $0xb0c] sm:$0xf]
    %v727 = vld [vmem:[%s1 + $0xb10] sm:$0xf]
    %v728 = vld [vmem:[%s1 + $0xb14] sm:$0xf]
    %v729 = vld [vmem:[%s1 + $0xb18] sm:$0xf]
    %v730 = vld [vmem:[%s1 + $0xb1c] sm:$0xf]
    %v731 = vld [vmem:[%s1 + $0xb20] sm:$0xf]
    %v732 = vld [vmem:[%s1 + $0xb24] sm:$0xf]
    %v733 = vld [vmem:[%s1 + $0xb28] sm:$0xf]
    %v734 = vld [vmem:[%s1 + $0xb2c] sm:$0xf]
    %v735 = vld [vmem:[%s1 + $0xb30] sm:$0xf]
    %v736 = vld [vmem:[%s1 + $0xb34] sm:$0xf]
    %v737 = vld [vmem:[%s1 + $0xb38] sm:$0xf]
    %v738 = vld [vmem:[%s1 + $0xb3c] sm:$0xf]
    %v739 = vld [vmem:[%s1 + $0xb40] sm:$0xf]
    %v740 = vld [vmem:[%s1 + $0xb44] sm:$0xf]
    %v741 = vld [vmem:[%s1 + $0xb48] sm:$0xf]
    %v742 = vld [vmem:[%s1 + $0xb4c] sm:$0xf]
    %v743 = vld [vmem:[%s1 + $0xb50] sm:$0xf]
    %v744 = vld [vmem:[%s1 + $0xb54] sm:$0xf]
    %v745 = vld [vmem:[%s1 + $0xb58] sm:$0xf]
    %v746 = vld [vmem:[%s1 + $0xb5c] sm:$0xf]
    %v747 = vld [vmem:[%s1 + $0xb60] sm:$0xf]
    %v748 = vld [vmem:[%s1 + $0xb64] sm:$0xf]
    %v749 = vld [vmem:[%s1 + $0xb68] sm:$0xf]
    %v750 = vld [vmem:[%s1 + $0xb6c] sm:$0xf]
    %v751 = vld [vmem:[%s1 + $0xb70] sm:$0xf]
    %v752 = vld [vmem:[%s1 + $0xb74] sm:$0xf]
    %v753 = vld [vmem:[%s1 + $0xb78] sm:$0xf]
    %v754 = vld [vmem:[%s1 + $0xb7c] sm:$0xf]
    %v755 = vld [vmem:[%s1 + $0xb80] sm:$0xf]
    %v756 = vld [vmem:[%s1 + $0xb84] sm:$0xf]
    %v757 = vld [vmem:[%s1 + $0xb88] sm:$0xf]
    %v758 = vld [vmem:[%s1 + $0xb8c] sm:$0xf]
    %v759 = vld [vmem:[%s1 + $0xb90] sm:$0xf]
    %v760 = vld [vmem:[%s1 + $0xb94] sm:$0xf]
    %v761 = vld [vmem:[%s1 + $0xb98] sm:$0xf]
    %v762 = vld [vmem:[%s1 + $0xb9c] sm:$0xf]
    %v763 = vld [vmem:[%s1 + $0xba0] sm:$0xf]
    %v764 = vld [vmem:[%s1 + $0xba4] sm:$0xf]
    %v765 = vld [vmem:[%s1 + $0xba8] sm:$0xf]
    %v766 = vld [vmem:[%s1 + $0xbac] sm:$0xf]
    %v767 = vld [vmem:[%s1 + $0xbb0] sm:$0xf]
    %v768 = vld [vmem:[%s1 + $0xbb4] sm:$0xf]
    %v769 = vld [vmem:[%s1 + $0xbb8] sm:$0xf]
    %v770 = vld [vmem:[%s1 + $0xbbc] sm:$0xf]
    %v771 = vld [vmem:[%s1 + $0xbc0] sm:$0xf]
    %v772 = vld [vmem:[%s1 + $0xbc4] sm:$0xf]
    %v773 = vld [vmem:[%s1 + $0xbc8] sm:$0xf]
    %v774 = vld [vmem:[%s1 + $0xbcc] sm:$0xf]
    %v775 = vld [vmem:[%s1 + $0xbd0] sm:$0xf]
    %v776 = vld [vmem:[%s1 + $0xbd4] sm:$0xf]
    %v777 = vld [vmem:[%s1 + $0xbd8] sm:$0xf]
    %v778 = vld [vmem:[%s1 + $0xbdc] sm:$0xf]
    %v779 = vld [vmem:[%s1 + $0xbe0] sm:$0xf]
    %v780 = vld [vmem:[%s1 + $0xbe4] sm:$0xf]
    %v781 = vld [vmem:[%s1 + $0xbe8] sm:$0xf]
    %v782 = vld [vmem:[%s1 + $0xbec] sm:$0xf]
    %v783 = vld [vmem:[%s1 + $0xbf0] sm:$0xf]
    %v784 = vld [vmem:[%s1 + $0xbf4] sm:$0xf]
    %v785 = vld [vmem:[%s1 + $0xbf8] sm:$0xf]
    %v786 = vld [vmem:[%s1 + $0xbfc] sm:$0xf]
    %v787 = vld [vmem:[%s1 + $0xc00] sm:$0xf]
    %v788 = vld [vmem:[%s1 + $0xc04] sm:$0xf]
    %v789 = vld [vmem:[%s1 + $0xc08] sm:$0xf]
    %v790 = vld [vmem:[%s1 + $0xc0c] sm:$0xf]
    %v791 = vld [vmem:[%s1 + $0xc10] sm:$0xf]
    %v792 = vld [vmem:[%s1 + $0xc14] sm:$0xf]
    %v793 = vld [vmem:[%s1 + $0xc18] sm:$0xf]
    %v794 = vld [vmem:[%s1 + $0xc1c] sm:$0xf]
    %v795 = vld [vmem:[%s1 + $0xc20] sm:$0xf]
    %v796 = vld [vmem:[%s1 + $0xc24] sm:$0xf]
    %v797 = vld [vmem:[%s1 + $0xc28] sm:$0xf]
    %v798 = vld [vmem:[%s1 + $0xc2c] sm:$0xf]
    %v799 = vld [vmem:[%s1 + $0xc30] sm:$0xf]
    %v800 = vld [vmem:[%s1 + $0xc34] sm:$0xf]
    %v801 = vld [vmem:[%s1 + $0xc38] sm:$0xf]
    %v802 = vld [vmem:[%s1 + $0xc3c] sm:$0xf]
    %v803 = vld [vmem:[%s1 + $0xc40] sm:$0xf]
    %v804 = vld [vmem:[%s1 + $0xc44] sm:$0xf]
    %v805 = vld [vmem:[%s1 + $0xc48] sm:$0xf]
    %v806 = vld [vmem:[%s1 + $0xc4c] sm:$0xf]
    %v807 = vld [vmem:[%s1 + $0xc50] sm:$0xf]
    %v808 = vld [vmem:[%s1 + $0xc54] sm:$0xf]
    %v809 = vld [vmem:[%s1 + $0xc58] sm:$0xf]
    %v810 = vld [vmem:[%s1 + $0xc5c] sm:$0xf]
    %v811 = vld [vmem:[%s1 + $0xc60] sm:$0xf]
    %v812 = vld [vmem:[%s1 + $0xc64] sm:$0xf]
    %v813 = vld [vmem:[%s1 + $0xc68] sm:$0xf]
    %v814 = vld [vmem:[%s1 + $0xc6c] sm:$0xf]
    %v815 = vld [vmem:[%s1 + $0xc70] sm:$0xf]
    %v816 = vld [vmem:[%s1 + $0xc74] sm:$0xf]
    %v817 = vld [vmem:[%s1 + $0xc78] sm:$0xf]
    %v818 = vld [vmem:[%s1 + $0xc7c] sm:$0xf]
    %v819 = vld [vmem:[%s1 + $0xc80] sm:$0xf]
    %v820 = vld [vmem:[%s1 + $0xc84] sm:$0xf]
    %v821 = vld [vmem:[%s1 + $0xc88] sm:$0xf]
    %v822 = vld [vmem:[%s1 + $0xc8c] sm:$0xf]
    %v823 = vld [vmem:[%s1 + $0xc90] sm:$0xf]
    %v824 = vld [vmem:[%s1 + $0xc94] sm:$0xf]
    %v825 = vld [vmem:[%s1 + $0xc98] sm:$0xf]
    %v826 = vld [vmem:[%s1 + $0xc9c] sm:$0xf]
    %v827 = vld [vmem:[%s1 + $0xca0] sm:$0xf]
    %v828 = vld [vmem:[%s1 + $0xca4] sm:$0xf]
    %v829 = vld [vmem:[%s1 + $0xca8] sm:$0xf]
    %v830 = vld [vmem:[%s1 + $0xcac] sm:$0xf]
    %v831 = vld [vmem:[%s1 + $0xcb0] sm:$0xf]
    %v832 = vld [vmem:[%s1 + $0xcb4] sm:$0xf]
    %v833 = vld [vmem:[%s1 + $0xcb8] sm:$0xf]
    %v834 = vld [vmem:[%s1 + $0xcbc] sm:$0xf]
    %v835 = vld [vmem:[%s1 + $0xcc0] sm:$0xf]
    %v836 = vld [vmem:[%s1 + $0xcc4] sm:$0xf]
    %v837 = vld [vmem:[%s1 + $0xcc8] sm:$0xf]
    %v838 = vld [vmem:[%s1 + $0xccc] sm:$0xf]
    %v839 = vld [vmem:[%s1 + $0xcd0] sm:$0xf]
    %v840 = vld [vmem:[%s1 + $0xcd4] sm:$0xf]
    %v841 = vld [vmem:[%s1 + $0xcd8] sm:$0xf]
    %v842 = vld [vmem:[%s1 + $0xcdc] sm:$0xf]
    %v843 = vld [vmem:[%s1 + $0xce0] sm:$0xf]
    %v844 = vld [vmem:[%s1 + $0xce4] sm:$0xf]
    %v845 = vld [vmem:[%s1 + $0xce8] sm:$0xf]
    %v846 = vld [vmem:[%s1 + $0xcec] sm:$0xf]
    %v847 = vld [vmem:[%s1 + $0xcf0] sm:$0xf]
    %v848 = vld [vmem:[%s1 + $0xcf4] sm:$0xf]
    %v849 = vld [vmem:[%s1 + $0xcf8] sm:$0xf]
    %v850 = vld [vmem:[%s1 + $0xcfc] sm:$0xf]
    %v851 = vld [vmem:[%s1 + $0xd00] sm:$0xf]
    %v852 = vld [vmem:[%s1 + $0xd04] sm:$0xf]
    %v853 = vld [vmem:[%s1 + $0xd08] sm:$0xf]
    %v854 = vld [vmem:[%s1 + $0xd0c] sm:$0xf]
    %v855 = vld [vmem:[%s1 + $0xd10] sm:$0xf]
    %v856 = vld [vmem:[%s1 + $0xd14] sm:$0xf]
    %v857 = vld [vmem:[%s1 + $0xd18] sm:$0xf]
    %v858 = vld [vmem:[%s1 + $0xd1c] sm:$0xf]
    %v859 = vld [vmem:[%s1 + $0xd20] sm:$0xf]
    %v860 = vld [vmem:[%s1 + $0xd24] sm:$0xf]
    %v861 = vld [vmem:[%s1 + $0xd28] sm:$0xf]
    %v862 = vld [vmem:[%s1 + $0xd2c] sm:$0xf]
    %v863 = vld [vmem:[%s1 + $0xd30] sm:$0xf]
    %v864 = vld [vmem:[%s1 + $0xd34] sm:$0xf]
    %v865 = vld [vmem:[%s1 + $0xd38] sm:$0xf]
    %v866 = vld [vmem:[%s1 + $0xd3c] sm:$0xf]
    %v867 = vld [vmem:[%s1 + $0xd40] sm:$0xf]
    %v868 = vld [vmem:[%s1 + $0xd44] sm:$0xf]
    %v869 = vld [vmem:[%s1 + $0xd48] sm:$0xf]
    %v870 = vld [vmem:[%s1 + $0xd4c] sm:$0xf]
    %v871 = vld [vmem:[%s1 + $0xd50] sm:$0xf]
    %v872 = vld [vmem:[%s1 + $0xd54] sm:$0xf]
    %v873 = vld [vmem:[%s1 + $0xd58] sm:$0xf]
    %v874 = vld [vmem:[%s1 + $0xd5c] sm:$0xf]
    %v875 = vld [vmem:[%s1 + $0xd60] sm:$0xf]
    %v876 = vld [vmem:[%s1 + $0xd64] sm:$0xf]
    %v877 = vld [vmem:[%s1 + $0xd68] sm:$0xf]
    %v878 = vld [vmem:[%s1 + $0xd6c] sm:$0xf]
    %v879 = vld [vmem:[%s1 + $0xd70] sm:$0xf]
    %v880 = vld [vmem:[%s1 + $0xd74] sm:$0xf]
    %v881 = vld [vmem:[%s1 + $0xd78] sm:$0xf]
    %v882 = vld [vmem:[%s1 + $0xd7c] sm:$0xf]
    %v883 = vld [vmem:[%s1 + $0xd80] sm:$0xf]
    %v884 = vld [vmem:[%s1 + $0xd84] sm:$0xf]
    %v885 = vld [vmem:[%s1 + $0xd88] sm:$0xf]
    %v886 = vld [vmem:[%s1 + $0xd8c] sm:$0xf]
    %v887 = vld [vmem:[%s1 + $0xd90] sm:$0xf]
    %v888 = vld [vmem:[%s1 + $0xd94] sm:$0xf]
    %v889 = vld [vmem:[%s1 + $0xd98] sm:$0xf]
    %v890 = vld [vmem:[%s1 + $0xd9c] sm:$0xf]
    %v891 = vld [vmem:[%s1 + $0xda0] sm:$0xf]
    %v892 = vld [vmem:[%s1 + $0xda4] sm:$0xf]
    %v893 = vld [vmem:[%s1 + $0xda8] sm:$0xf]
    %v894 = vld [vmem:[%s1 + $0xdac] sm:$0xf]
    %v895 = vld [vmem:[%s1 + $0xdb0] sm:$0xf]
    %v896 = vld [vmem:[%s1 + $0xdb4] sm:$0xf]
    %v897 = vld [vmem:[%s1 + $0xdb8] sm:$0xf]
    %v898 = vld [vmem:[%s1 + $0xdbc] sm:$0xf]
    %v899 = vld [vmem:[%s0] sm:$0xf]
    %v900 = vld [vmem:[%s0 + $0x4] sm:$0xf]
    %v901 = vld [vmem:[%s0 + $0x8] sm:$0xf]
    %v902 = vld [vmem:[%s0 + $0xc] sm:$0xf]
    %v903 = vld [vmem:[%s0 + $0x10] sm:$0xf]
    %v1784 = vunpack.c.l.b16 %v19
    %v1785 = vunpack.c.l.b16 %v20
    %v1786 = vunpack.c.l.b16 %v21
    %v1787 = vunpack.c.l.b16 %v22
    %v1788 = vunpack.c.l.b16 %v23
    %v1789 = vunpack.c.l.b16 %v24
    %v1790 = vunpack.c.l.b16 %v25
    %v1791 = vunpack.c.l.b16 %v26
    %v1792 = vunpack.c.l.b16 %v27
    %v1793 = vunpack.c.l.b16 %v28
    %v1794 = vunpack.c.l.b16 %v29
    %v1795 = vunpack.c.l.b16 %v30
    %v1796 = vunpack.c.l.b16 %v31
    %v1797 = vunpack.c.l.b16 %v32
    %v1798 = vunpack.c.l.b16 %v33
    %v1799 = vunpack.c.l.b16 %v34
    %v1800 = vunpack.c.l.b16 %v35
    %v1801 = vunpack.c.l.b16 %v36
    %v1802 = vunpack.c.l.b16 %v37
    %v1803 = vunpack.c.l.b16 %v38
    %v1804 = vunpack.c.l.b16 %v39
    %v1805 = vunpack.c.l.b16 %v40
    %v1806 = vunpack.c.l.b16 %v41
    %v1807 = vunpack.c.l.b16 %v42
    %v1808 = vunpack.c.l.b16 %v43
    %v1809 = vunpack.c.l.b16 %v44
    %v1810 = vunpack.c.l.b16 %v45
    %v1811 = vunpack.c.l.b16 %v46
    %v1812 = vunpack.c.l.b16 %v47
    %v1813 = vunpack.c.l.b16 %v48
    %v1814 = vunpack.c.l.b16 %v49
    %v1815 = vunpack.c.l.b16 %v50
    %v1816 = vunpack.c.l.b16 %v51
    %v1817 = vunpack.c.l.b16 %v52
    %v1818 = vunpack.c.l.b16 %v53
    %v1819 = vunpack.c.l.b16 %v54
    %v1820 = vunpack.c.l.b16 %v55
    %v1821 = vunpack.c.l.b16 %v56
    %v1822 = vunpack.c.l.b16 %v57
    %v1823 = vunpack.c.l.b16 %v58
    %v1824 = vunpack.c.l.b16 %v59
    %v1825 = vunpack.c.l.b16 %v60
    %v1826 = vunpack.c.l.b16 %v61
    %v1827 = vunpack.c.l.b16 %v62
    %v1828 = vunpack.c.l.b16 %v63
    %v1829 = vunpack.c.l.b16 %v64
    %v1830 = vunpack.c.l.b16 %v65
    %v1831 = vunpack.c.l.b16 %v66
    %v1832 = vunpack.c.l.b16 %v67
    %v1833 = vunpack.c.l.b16 %v68
    %v1834 = vunpack.c.l.b16 %v69
    %v1835 = vunpack.c.l.b16 %v70
    %v1836 = vunpack.c.l.b16 %v71
    %v1837 = vunpack.c.l.b16 %v72
    %v1838 = vunpack.c.l.b16 %v73
    %v1839 = vunpack.c.l.b16 %v74
    %v1840 = vunpack.c.l.b16 %v75
    %v1841 = vunpack.c.l.b16 %v76
    %v1842 = vunpack.c.l.b16 %v77
    %v1843 = vunpack.c.l.b16 %v78
    %v1844 = vunpack.c.l.b16 %v79
    %v1845 = vunpack.c.l.b16 %v80
    %v1846 = vunpack.c.l.b16 %v81
    %v1847 = vunpack.c.l.b16 %v82
    %v1848 = vunpack.c.l.b16 %v83
    %v1849 = vunpack.c.l.b16 %v84
    %v1850 = vunpack.c.l.b16 %v85
    %v1851 = vunpack.c.l.b16 %v86
    %v1852 = vunpack.c.l.b16 %v87
    %v1853 = vunpack.c.l.b16 %v88
    %v1854 = vunpack.c.l.b16 %v89
    %v1855 = vunpack.c.l.b16 %v90
    %v1856 = vunpack.c.l.b16 %v91
    %v1857 = vunpack.c.l.b16 %v92
    %v1858 = vunpack.c.l.b16 %v93
    %v1859 = vunpack.c.l.b16 %v94
    %v1860 = vunpack.c.l.b16 %v95
    %v1861 = vunpack.c.l.b16 %v96
    %v1862 = vunpack.c.l.b16 %v97
    %v1863 = vunpack.c.l.b16 %v98
    %v1864 = vunpack.c.l.b16 %v99
    %v1865 = vunpack.c.l.b16 %v100
    %v1866 = vunpack.c.l.b16 %v101
    %v1867 = vunpack.c.l.b16 %v102
    %v1868 = vunpack.c.l.b16 %v103
    %v1869 = vunpack.c.l.b16 %v104
    %v1870 = vunpack.c.l.b16 %v105
    %v1871 = vunpack.c.l.b16 %v106
    %v1872 = vunpack.c.l.b16 %v107
    %v1873 = vunpack.c.l.b16 %v108
    %v1874 = vunpack.c.l.b16 %v109
    %v1875 = vunpack.c.l.b16 %v110
    %v1876 = vunpack.c.l.b16 %v111
    %v1877 = vunpack.c.l.b16 %v112
    %v1878 = vunpack.c.l.b16 %v113
    %v1879 = vunpack.c.l.b16 %v114
    %v1880 = vunpack.c.l.b16 %v115
    %v1881 = vunpack.c.l.b16 %v116
    %v1882 = vunpack.c.l.b16 %v117
    %v1883 = vunpack.c.l.b16 %v118
    %v1884 = vunpack.c.l.b16 %v119
    %v1885 = vunpack.c.l.b16 %v120
    %v1886 = vunpack.c.l.b16 %v121
    %v1887 = vunpack.c.l.b16 %v122
    %v1888 = vunpack.c.l.b16 %v123
    %v1889 = vunpack.c.l.b16 %v124
    %v1890 = vunpack.c.l.b16 %v125
    %v1891 = vunpack.c.l.b16 %v126
    %v1892 = vunpack.c.l.b16 %v127
    %v1893 = vunpack.c.l.b16 %v128
    %v1894 = vunpack.c.l.b16 %v129
    %v1895 = vunpack.c.l.b16 %v130
    %v1896 = vunpack.c.l.b16 %v131
    %v1897 = vunpack.c.l.b16 %v132
    %v1898 = vunpack.c.l.b16 %v133
    %v1899 = vunpack.c.l.b16 %v134
    %v1900 = vunpack.c.l.b16 %v135
    %v1901 = vunpack.c.l.b16 %v136
    %v1902 = vunpack.c.l.b16 %v137
    %v1903 = vunpack.c.l.b16 %v138
    %v1904 = vunpack.c.l.b16 %v139
    %v1905 = vunpack.c.l.b16 %v140
    %v1906 = vunpack.c.l.b16 %v141
    %v1907 = vunpack.c.l.b16 %v142
    %v1908 = vunpack.c.l.b16 %v143
    %v1909 = vunpack.c.l.b16 %v144
    %v1910 = vunpack.c.l.b16 %v145
    %v1911 = vunpack.c.l.b16 %v146
    %v1912 = vunpack.c.l.b16 %v147
    %v1913 = vunpack.c.l.b16 %v148
    %v1914 = vunpack.c.l.b16 %v149
    %v1915 = vunpack.c.l.b16 %v150
    %v1916 = vunpack.c.l.b16 %v151
    %v1917 = vunpack.c.l.b16 %v152
    %v1918 = vunpack.c.l.b16 %v153
    %v1919 = vunpack.c.l.b16 %v154
    %v1920 = vunpack.c.l.b16 %v155
    %v1921 = vunpack.c.l.b16 %v156
    %v1922 = vunpack.c.l.b16 %v157
    %v1923 = vunpack.c.l.b16 %v158
    %v1924 = vunpack.c.l.b16 %v159
    %v1925 = vunpack.c.l.b16 %v160
    %v1926 = vunpack.c.l.b16 %v161
    %v1927 = vunpack.c.l.b16 %v162
    %v1928 = vunpack.c.l.b16 %v163
    %v1929 = vunpack.c.l.b16 %v164
    %v1930 = vunpack.c.l.b16 %v165
    %v1931 = vunpack.c.l.b16 %v166
    %v1932 = vunpack.c.l.b16 %v167
    %v1933 = vunpack.c.l.b16 %v168
    %v1934 = vunpack.c.l.b16 %v169
    %v1935 = vunpack.c.l.b16 %v170
    %v1936 = vunpack.c.l.b16 %v171
    %v1937 = vunpack.c.l.b16 %v172
    %v1938 = vunpack.c.l.b16 %v173
    %v1939 = vunpack.c.l.b16 %v174
    %v1940 = vunpack.c.l.b16 %v175
    %v1941 = vunpack.c.l.b16 %v176
    %v1942 = vunpack.c.l.b16 %v177
    %v1943 = vunpack.c.l.b16 %v178
    %v1944 = vunpack.c.l.b16 %v179
    %v1945 = vunpack.c.l.b16 %v180
    %v1946 = vunpack.c.l.b16 %v181
    %v1947 = vunpack.c.l.b16 %v182
    %v1948 = vunpack.c.l.b16 %v183
    %v1949 = vunpack.c.l.b16 %v184
    %v1950 = vunpack.c.l.b16 %v185
    %v1951 = vunpack.c.l.b16 %v186
    %v1952 = vunpack.c.l.b16 %v187
    %v1953 = vunpack.c.l.b16 %v188
    %v1954 = vunpack.c.l.b16 %v189
    %v1955 = vunpack.c.l.b16 %v190
    %v1956 = vunpack.c.l.b16 %v191
    %v1957 = vunpack.c.l.b16 %v192
    %v1958 = vunpack.c.l.b16 %v193
    %v1959 = vunpack.c.l.b16 %v194
    %v1960 = vunpack.c.l.b16 %v195
    %v1961 = vunpack.c.l.b16 %v196
    %v1962 = vunpack.c.l.b16 %v197
    %v1963 = vunpack.c.l.b16 %v198
    %v1964 = vunpack.c.l.b16 %v199
    %v1965 = vunpack.c.l.b16 %v200
    %v1966 = vunpack.c.l.b16 %v201
    %v1967 = vunpack.c.l.b16 %v202
    %v1968 = vunpack.c.l.b16 %v203
    %v1969 = vunpack.c.l.b16 %v204
    %v1970 = vunpack.c.l.b16 %v205
    %v1971 = vunpack.c.l.b16 %v206
    %v1972 = vunpack.c.l.b16 %v207
    %v1973 = vunpack.c.l.b16 %v208
    %v1974 = vunpack.c.l.b16 %v209
    %v1975 = vunpack.c.l.b16 %v210
    %v1976 = vunpack.c.l.b16 %v211
    %v1977 = vunpack.c.l.b16 %v212
    %v1978 = vunpack.c.l.b16 %v213
    %v1979 = vunpack.c.l.b16 %v214
    %v1980 = vunpack.c.l.b16 %v215
    %v1981 = vunpack.c.l.b16 %v216
    %v1982 = vunpack.c.l.b16 %v217
    %v1983 = vunpack.c.l.b16 %v218
    %v1984 = vunpack.c.l.b16 %v219
    %v1985 = vunpack.c.l.b16 %v220
    %v1986 = vunpack.c.l.b16 %v221
    %v1987 = vunpack.c.l.b16 %v222
    %v1988 = vunpack.c.l.b16 %v223
    %v1989 = vunpack.c.l.b16 %v224
    %v1990 = vunpack.c.l.b16 %v225
    %v1991 = vunpack.c.l.b16 %v226
    %v1992 = vunpack.c.l.b16 %v227
    %v1993 = vunpack.c.l.b16 %v228
    %v1994 = vunpack.c.l.b16 %v229
    %v1995 = vunpack.c.l.b16 %v230
    %v1996 = vunpack.c.l.b16 %v231
    %v1997 = vunpack.c.l.b16 %v232
    %v1998 = vunpack.c.l.b16 %v233
    %v1999 = vunpack.c.l.b16 %v234
    %v2000 = vunpack.c.l.b16 %v235
    %v2001 = vunpack.c.l.b16 %v236
    %v2002 = vunpack.c.l.b16 %v237
    %v2003 = vunpack.c.l.b16 %v238
    %v2004 = vunpack.c.l.b16 %v239
    %v2005 = vunpack.c.l.b16 %v240
    %v2006 = vunpack.c.l.b16 %v241
    %v2007 = vunpack.c.l.b16 %v242
    %v2008 = vunpack.c.l.b16 %v243
    %v2009 = vunpack.c.l.b16 %v244
    %v2010 = vunpack.c.l.b16 %v245
    %v2011 = vunpack.c.l.b16 %v246
    %v2012 = vunpack.c.l.b16 %v247
    %v2013 = vunpack.c.l.b16 %v248
    %v2014 = vunpack.c.l.b16 %v249
    %v2015 = vunpack.c.l.b16 %v250
    %v2016 = vunpack.c.l.b16 %v251
    %v2017 = vunpack.c.l.b16 %v252
    %v2018 = vunpack.c.l.b16 %v253
    %v2019 = vunpack.c.l.b16 %v254
    %v2020 = vunpack.c.l.b16 %v255
    %v2021 = vunpack.c.l.b16 %v256
    %v2022 = vunpack.c.l.b16 %v257
    %v2023 = vunpack.c.l.b16 %v258
    %v2024 = vunpack.c.l.b16 %v259
    %v2025 = vunpack.c.l.b16 %v260
    %v2026 = vunpack.c.l.b16 %v261
    %v2027 = vunpack.c.l.b16 %v262
    %v2028 = vunpack.c.l.b16 %v263
    %v2029 = vunpack.c.l.b16 %v264
    %v2030 = vunpack.c.l.b16 %v265
    %v2031 = vunpack.c.l.b16 %v266
    %v2032 = vunpack.c.l.b16 %v267
    %v2033 = vunpack.c.l.b16 %v268
    %v2034 = vunpack.c.l.b16 %v269
    %v2035 = vunpack.c.l.b16 %v270
    %v2036 = vunpack.c.l.b16 %v271
    %v2037 = vunpack.c.l.b16 %v272
    %v2038 = vunpack.c.l.b16 %v273
    %v2039 = vunpack.c.l.b16 %v274
    %v2040 = vunpack.c.l.b16 %v275
    %v2041 = vunpack.c.l.b16 %v276
    %v2042 = vunpack.c.l.b16 %v277
    %v2043 = vunpack.c.l.b16 %v278
    %v2044 = vunpack.c.l.b16 %v279
    %v2045 = vunpack.c.l.b16 %v280
    %v2046 = vunpack.c.l.b16 %v281
    %v2047 = vunpack.c.l.b16 %v282
    %v2048 = vunpack.c.l.b16 %v283
    %v2049 = vunpack.c.l.b16 %v284
    %v2050 = vunpack.c.l.b16 %v285
    %v2051 = vunpack.c.l.b16 %v286
    %v2052 = vunpack.c.l.b16 %v287
    %v2053 = vunpack.c.l.b16 %v288
    %v2054 = vunpack.c.l.b16 %v289
    %v2055 = vunpack.c.l.b16 %v290
    %v2056 = vunpack.c.l.b16 %v291
    %v2057 = vunpack.c.l.b16 %v292
    %v2058 = vunpack.c.l.b16 %v293
    %v2059 = vunpack.c.l.b16 %v294
    %v2060 = vunpack.c.l.b16 %v295
    %v2061 = vunpack.c.l.b16 %v296
    %v2062 = vunpack.c.l.b16 %v297
    %v2063 = vunpack.c.l.b16 %v298
    %v2064 = vunpack.c.l.b16 %v299
    %v2065 = vunpack.c.l.b16 %v300
    %v2066 = vunpack.c.l.b16 %v301
    %v2067 = vunpack.c.l.b16 %v302
    %v2068 = vunpack.c.l.b16 %v303
    %v2069 = vunpack.c.l.b16 %v304
    %v2070 = vunpack.c.l.b16 %v305
    %v2071 = vunpack.c.l.b16 %v306
    %v2072 = vunpack.c.l.b16 %v307
    %v2073 = vunpack.c.l.b16 %v308
    %v2074 = vunpack.c.l.b16 %v309
    %v2075 = vunpack.c.l.b16 %v310
    %v2076 = vunpack.c.l.b16 %v311
    %v2077 = vunpack.c.l.b16 %v312
    %v2078 = vunpack.c.l.b16 %v313
    %v2079 = vunpack.c.l.b16 %v314
    %v2080 = vunpack.c.l.b16 %v315
    %v2081 = vunpack.c.l.b16 %v316
    %v2082 = vunpack.c.l.b16 %v317
    %v2083 = vunpack.c.l.b16 %v318
    %v2084 = vunpack.c.l.b16 %v319
    %v2085 = vunpack.c.l.b16 %v320
    %v2086 = vunpack.c.l.b16 %v321
    %v2087 = vunpack.c.l.b16 %v322
    %v2088 = vunpack.c.l.b16 %v323
    %v2089 = vunpack.c.l.b16 %v324
    %v2090 = vunpack.c.l.b16 %v325
    %v2091 = vunpack.c.l.b16 %v326
    %v2092 = vunpack.c.l.b16 %v327
    %v2093 = vunpack.c.l.b16 %v328
    %v2094 = vunpack.c.l.b16 %v329
    %v2095 = vunpack.c.l.b16 %v330
    %v2096 = vunpack.c.l.b16 %v331
    %v2097 = vunpack.c.l.b16 %v332
    %v2098 = vunpack.c.l.b16 %v333
    %v2099 = vunpack.c.l.b16 %v334
    %v2100 = vunpack.c.l.b16 %v335
    %v2101 = vunpack.c.l.b16 %v336
    %v2102 = vunpack.c.l.b16 %v337
    %v2103 = vunpack.c.l.b16 %v338
    %v2104 = vunpack.c.l.b16 %v339
    %v2105 = vunpack.c.l.b16 %v340
    %v2106 = vunpack.c.l.b16 %v341
    %v2107 = vunpack.c.l.b16 %v342
    %v2108 = vunpack.c.l.b16 %v343
    %v2109 = vunpack.c.l.b16 %v344
    %v2110 = vunpack.c.l.b16 %v345
    %v2111 = vunpack.c.l.b16 %v346
    %v2112 = vunpack.c.l.b16 %v347
    %v2113 = vunpack.c.l.b16 %v348
    %v2114 = vunpack.c.l.b16 %v349
    %v2115 = vunpack.c.l.b16 %v350
    %v2116 = vunpack.c.l.b16 %v351
    %v2117 = vunpack.c.l.b16 %v352
    %v2118 = vunpack.c.l.b16 %v353
    %v2119 = vunpack.c.l.b16 %v354
    %v2120 = vunpack.c.l.b16 %v355
    %v2121 = vunpack.c.l.b16 %v356
    %v2122 = vunpack.c.l.b16 %v357
    %v2123 = vunpack.c.l.b16 %v358
    %v2124 = vunpack.c.l.b16 %v359
    %v2125 = vunpack.c.l.b16 %v360
    %v2126 = vunpack.c.l.b16 %v361
    %v2127 = vunpack.c.l.b16 %v362
    %v2128 = vunpack.c.l.b16 %v363
    %v2129 = vunpack.c.l.b16 %v364
    %v2130 = vunpack.c.l.b16 %v365
    %v2131 = vunpack.c.l.b16 %v366
    %v2132 = vunpack.c.l.b16 %v367
    %v2133 = vunpack.c.l.b16 %v368
    %v2134 = vunpack.c.l.b16 %v369
    %v2135 = vunpack.c.l.b16 %v370
    %v2136 = vunpack.c.l.b16 %v371
    %v2137 = vunpack.c.l.b16 %v372
    %v2138 = vunpack.c.l.b16 %v373
    %v2139 = vunpack.c.l.b16 %v374
    %v2140 = vunpack.c.l.b16 %v375
    %v2141 = vunpack.c.l.b16 %v376
    %v2142 = vunpack.c.l.b16 %v377
    %v2143 = vunpack.c.l.b16 %v378
    %v2144 = vunpack.c.l.b16 %v379
    %v2145 = vunpack.c.l.b16 %v380
    %v2146 = vunpack.c.l.b16 %v381
    %v2147 = vunpack.c.l.b16 %v382
    %v2148 = vunpack.c.l.b16 %v383
    %v2149 = vunpack.c.l.b16 %v384
    %v2150 = vunpack.c.l.b16 %v385
    %v2151 = vunpack.c.l.b16 %v386
    %v2152 = vunpack.c.l.b16 %v387
    %v2153 = vunpack.c.l.b16 %v388
    %v2154 = vunpack.c.l.b16 %v389
    %v2155 = vunpack.c.l.b16 %v390
    %v2156 = vunpack.c.l.b16 %v391
    %v2157 = vunpack.c.l.b16 %v392
    %v2158 = vunpack.c.l.b16 %v393
    %v2159 = vunpack.c.l.b16 %v394
    %v2160 = vunpack.c.l.b16 %v395
    %v2161 = vunpack.c.l.b16 %v396
    %v2162 = vunpack.c.l.b16 %v397
    %v2163 = vunpack.c.l.b16 %v398
    %v2164 = vunpack.c.l.b16 %v399
    %v2165 = vunpack.c.l.b16 %v400
    %v2166 = vunpack.c.l.b16 %v401
    %v2167 = vunpack.c.l.b16 %v402
    %v2168 = vunpack.c.l.b16 %v403
    %v2169 = vunpack.c.l.b16 %v404
    %v2170 = vunpack.c.l.b16 %v405
    %v2171 = vunpack.c.l.b16 %v406
    %v2172 = vunpack.c.l.b16 %v407
    %v2173 = vunpack.c.l.b16 %v408
    %v2174 = vunpack.c.l.b16 %v409
    %v2175 = vunpack.c.l.b16 %v410
    %v2176 = vunpack.c.l.b16 %v411
    %v2177 = vunpack.c.l.b16 %v412
    %v2178 = vunpack.c.l.b16 %v413
    %v2179 = vunpack.c.l.b16 %v414
    %v2180 = vunpack.c.l.b16 %v415
    %v2181 = vunpack.c.l.b16 %v416
    %v2182 = vunpack.c.l.b16 %v417
    %v2183 = vunpack.c.l.b16 %v418
    %v2184 = vunpack.c.l.b16 %v419
    %v2185 = vunpack.c.l.b16 %v420
    %v2186 = vunpack.c.l.b16 %v421
    %v2187 = vunpack.c.l.b16 %v422
    %v2188 = vunpack.c.l.b16 %v423
    %v2189 = vunpack.c.l.b16 %v424
    %v2190 = vunpack.c.l.b16 %v425
    %v2191 = vunpack.c.l.b16 %v426
    %v2192 = vunpack.c.l.b16 %v427
    %v2193 = vunpack.c.l.b16 %v428
    %v2194 = vunpack.c.l.b16 %v429
    %v2195 = vunpack.c.l.b16 %v430
    %v2196 = vunpack.c.l.b16 %v431
    %v2197 = vunpack.c.l.b16 %v432
    %v2198 = vunpack.c.l.b16 %v433
    %v2199 = vunpack.c.l.b16 %v434
    %v2200 = vunpack.c.l.b16 %v435
    %v2201 = vunpack.c.l.b16 %v436
    %v2202 = vunpack.c.l.b16 %v437
    %v2203 = vunpack.c.l.b16 %v438
    %v2204 = vunpack.c.l.b16 %v439
    %v2205 = vunpack.c.l.b16 %v440
    %v2206 = vunpack.c.l.b16 %v441
    %v2207 = vunpack.c.l.b16 %v442
    %v2208 = vunpack.c.l.b16 %v443
    %v2209 = vunpack.c.l.b16 %v444
    %v2210 = vunpack.c.l.b16 %v445
    %v2211 = vunpack.c.l.b16 %v446
    %v2212 = vunpack.c.l.b16 %v447
    %v2213 = vunpack.c.l.b16 %v448
    %v2214 = vunpack.c.l.b16 %v449
    %v2215 = vunpack.c.l.b16 %v450
    %v2216 = vunpack.c.l.b16 %v451
    %v2217 = vunpack.c.l.b16 %v452
    %v2218 = vunpack.c.l.b16 %v453
    %v2219 = vunpack.c.l.b16 %v454
    %v2220 = vunpack.c.l.b16 %v455
    %v2221 = vunpack.c.l.b16 %v456
    %v2222 = vunpack.c.l.b16 %v457
    %v2223 = vunpack.c.l.b16 %v458
    %v2224 = vunpack.c.l.b16 %v459
    %v2225 = vunpack.c.l.b16 %v460
    %v2226 = vunpack.c.l.b16 %v461
    %v2227 = vunpack.c.l.b16 %v462
    %v2228 = vunpack.c.l.b16 %v463
    %v2229 = vunpack.c.l.b16 %v464
    %v2230 = vunpack.c.l.b16 %v465
    %v2231 = vunpack.c.l.b16 %v466
    %v2232 = vunpack.c.l.b16 %v467
    %v2233 = vunpack.c.l.b16 %v468
    %v2234 = vunpack.c.l.b16 %v469
    %v2235 = vunpack.c.l.b16 %v470
    %v2236 = vunpack.c.l.b16 %v471
    %v2237 = vunpack.c.l.b16 %v472
    %v2238 = vunpack.c.l.b16 %v473
    %v2239 = vunpack.c.l.b16 %v474
    %v2240 = vunpack.c.l.b16 %v475
    %v2241 = vunpack.c.l.b16 %v476
    %v2242 = vunpack.c.l.b16 %v477
    %v2243 = vunpack.c.l.b16 %v478
    %v2244 = vunpack.c.l.b16 %v479
    %v2245 = vunpack.c.l.b16 %v480
    %v2246 = vunpack.c.l.b16 %v481
    %v2247 = vunpack.c.l.b16 %v482
    %v2248 = vunpack.c.l.b16 %v483
    %v2249 = vunpack.c.l.b16 %v484
    %v2250 = vunpack.c.l.b16 %v485
    %v2251 = vunpack.c.l.b16 %v486
    %v2252 = vunpack.c.l.b16 %v487
    %v2253 = vunpack.c.l.b16 %v488
    %v2254 = vunpack.c.l.b16 %v489
    %v2255 = vunpack.c.l.b16 %v490
    %v2256 = vunpack.c.l.b16 %v491
    %v2257 = vunpack.c.l.b16 %v492
    %v2258 = vunpack.c.l.b16 %v493
    %v2259 = vunpack.c.l.b16 %v494
    %v2260 = vunpack.c.l.b16 %v495
    %v2261 = vunpack.c.l.b16 %v496
    %v2262 = vunpack.c.l.b16 %v497
    %v2263 = vunpack.c.l.b16 %v498
    %v2264 = vunpack.c.l.b16 %v499
    %v2265 = vunpack.c.l.b16 %v500
    %v2266 = vunpack.c.l.b16 %v501
    %v2267 = vunpack.c.l.b16 %v502
    %v2268 = vunpack.c.l.b16 %v503
    %v2269 = vunpack.c.l.b16 %v504
    %v2270 = vunpack.c.l.b16 %v505
    %v2271 = vunpack.c.l.b16 %v506
    %v2272 = vunpack.c.l.b16 %v507
    %v2273 = vunpack.c.l.b16 %v508
    %v2274 = vunpack.c.l.b16 %v509
    %v2275 = vunpack.c.l.b16 %v510
    %v2276 = vunpack.c.l.b16 %v511
    %v2277 = vunpack.c.l.b16 %v512
    %v2278 = vunpack.c.l.b16 %v513
    %v2279 = vunpack.c.l.b16 %v514
    %v2280 = vunpack.c.l.b16 %v515
    %v2281 = vunpack.c.l.b16 %v516
    %v2282 = vunpack.c.l.b16 %v517
    %v2283 = vunpack.c.l.b16 %v518
    %v2284 = vunpack.c.l.b16 %v519
    %v2285 = vunpack.c.l.b16 %v520
    %v2286 = vunpack.c.l.b16 %v521
    %v2287 = vunpack.c.l.b16 %v522
    %v2288 = vunpack.c.l.b16 %v523
    %v2289 = vunpack.c.l.b16 %v524
    %v2290 = vunpack.c.l.b16 %v525
    %v2291 = vunpack.c.l.b16 %v526
    %v2292 = vunpack.c.l.b16 %v527
    %v2293 = vunpack.c.l.b16 %v528
    %v2294 = vunpack.c.l.b16 %v529
    %v2295 = vunpack.c.l.b16 %v530
    %v2296 = vunpack.c.l.b16 %v531
    %v2297 = vunpack.c.l.b16 %v532
    %v2298 = vunpack.c.l.b16 %v533
    %v2299 = vunpack.c.l.b16 %v534
    %v2300 = vunpack.c.l.b16 %v535
    %v2301 = vunpack.c.l.b16 %v536
    %v2302 = vunpack.c.l.b16 %v537
    %v2303 = vunpack.c.l.b16 %v538
    %v2304 = vunpack.c.l.b16 %v539
    %v2305 = vunpack.c.l.b16 %v540
    %v2306 = vunpack.c.l.b16 %v541
    %v2307 = vunpack.c.l.b16 %v542
    %v2308 = vunpack.c.l.b16 %v543
    %v2309 = vunpack.c.l.b16 %v544
    %v2310 = vunpack.c.l.b16 %v545
    %v2311 = vunpack.c.l.b16 %v546
    %v2312 = vunpack.c.l.b16 %v547
    %v2313 = vunpack.c.l.b16 %v548
    %v2314 = vunpack.c.l.b16 %v549
    %v2315 = vunpack.c.l.b16 %v550
    %v2316 = vunpack.c.l.b16 %v551
    %v2317 = vunpack.c.l.b16 %v552
    %v2318 = vunpack.c.l.b16 %v553
    %v2319 = vunpack.c.l.b16 %v554
    %v2320 = vunpack.c.l.b16 %v555
    %v2321 = vunpack.c.l.b16 %v556
    %v2322 = vunpack.c.l.b16 %v557
    %v2323 = vunpack.c.l.b16 %v558
    %v2324 = vunpack.c.l.b16 %v559
    %v2325 = vunpack.c.l.b16 %v560
    %v2326 = vunpack.c.l.b16 %v561
    %v2327 = vunpack.c.l.b16 %v562
    %v2328 = vunpack.c.l.b16 %v563
    %v2329 = vunpack.c.l.b16 %v564
    %v2330 = vunpack.c.l.b16 %v565
    %v2331 = vunpack.c.l.b16 %v566
    %v2332 = vunpack.c.l.b16 %v567
    %v2333 = vunpack.c.l.b16 %v568
    %v2334 = vunpack.c.l.b16 %v569
    %v2335 = vunpack.c.l.b16 %v570
    %v2336 = vunpack.c.l.b16 %v571
    %v2337 = vunpack.c.l.b16 %v572
    %v2338 = vunpack.c.l.b16 %v573
    %v2339 = vunpack.c.l.b16 %v574
    %v2340 = vunpack.c.l.b16 %v575
    %v2341 = vunpack.c.l.b16 %v576
    %v2342 = vunpack.c.l.b16 %v577
    %v2343 = vunpack.c.l.b16 %v578
    %v2344 = vunpack.c.l.b16 %v579
    %v2345 = vunpack.c.l.b16 %v580
    %v2346 = vunpack.c.l.b16 %v581
    %v2347 = vunpack.c.l.b16 %v582
    %v2348 = vunpack.c.l.b16 %v583
    %v2349 = vunpack.c.l.b16 %v584
    %v2350 = vunpack.c.l.b16 %v585
    %v2351 = vunpack.c.l.b16 %v586
    %v2352 = vunpack.c.l.b16 %v587
    %v2353 = vunpack.c.l.b16 %v588
    %v2354 = vunpack.c.l.b16 %v589
    %v2355 = vunpack.c.l.b16 %v590
    %v2356 = vunpack.c.l.b16 %v591
    %v2357 = vunpack.c.l.b16 %v592
    %v2358 = vunpack.c.l.b16 %v593
    %v2359 = vunpack.c.l.b16 %v594
    %v2360 = vunpack.c.l.b16 %v595
    %v2361 = vunpack.c.l.b16 %v596
    %v2362 = vunpack.c.l.b16 %v597
    %v2363 = vunpack.c.l.b16 %v598
    %v2364 = vunpack.c.l.b16 %v599
    %v2365 = vunpack.c.l.b16 %v600
    %v2366 = vunpack.c.l.b16 %v601
    %v2367 = vunpack.c.l.b16 %v602
    %v2368 = vunpack.c.l.b16 %v603
    %v2369 = vunpack.c.l.b16 %v604
    %v2370 = vunpack.c.l.b16 %v605
    %v2371 = vunpack.c.l.b16 %v606
    %v2372 = vunpack.c.l.b16 %v607
    %v2373 = vunpack.c.l.b16 %v608
    %v2374 = vunpack.c.l.b16 %v609
    %v2375 = vunpack.c.l.b16 %v610
    %v2376 = vunpack.c.l.b16 %v611
    %v2377 = vunpack.c.l.b16 %v612
    %v2378 = vunpack.c.l.b16 %v613
    %v2379 = vunpack.c.l.b16 %v614
    %v2380 = vunpack.c.l.b16 %v615
    %v2381 = vunpack.c.l.b16 %v616
    %v2382 = vunpack.c.l.b16 %v617
    %v2383 = vunpack.c.l.b16 %v618
    %v2384 = vunpack.c.l.b16 %v619
    %v2385 = vunpack.c.l.b16 %v620
    %v2386 = vunpack.c.l.b16 %v621
    %v2387 = vunpack.c.l.b16 %v622
    %v2388 = vunpack.c.l.b16 %v623
    %v2389 = vunpack.c.l.b16 %v624
    %v2390 = vunpack.c.l.b16 %v625
    %v2391 = vunpack.c.l.b16 %v626
    %v2392 = vunpack.c.l.b16 %v627
    %v2393 = vunpack.c.l.b16 %v628
    %v2394 = vunpack.c.l.b16 %v629
    %v2395 = vunpack.c.l.b16 %v630
    %v2396 = vunpack.c.l.b16 %v631
    %v2397 = vunpack.c.l.b16 %v632
    %v2398 = vunpack.c.l.b16 %v633
    %v2399 = vunpack.c.l.b16 %v634
    %v2400 = vunpack.c.l.b16 %v635
    %v2401 = vunpack.c.l.b16 %v636
    %v2402 = vunpack.c.l.b16 %v637
    %v2403 = vunpack.c.l.b16 %v638
    %v2404 = vunpack.c.l.b16 %v639
    %v2405 = vunpack.c.l.b16 %v640
    %v2406 = vunpack.c.l.b16 %v641
    %v2407 = vunpack.c.l.b16 %v642
    %v2408 = vunpack.c.l.b16 %v643
    %v2409 = vunpack.c.l.b16 %v644
    %v2410 = vunpack.c.l.b16 %v645
    %v2411 = vunpack.c.l.b16 %v646
    %v2412 = vunpack.c.l.b16 %v647
    %v2413 = vunpack.c.l.b16 %v648
    %v2414 = vunpack.c.l.b16 %v649
    %v2415 = vunpack.c.l.b16 %v650
    %v2416 = vunpack.c.l.b16 %v651
    %v2417 = vunpack.c.l.b16 %v652
    %v2418 = vunpack.c.l.b16 %v653
    %v2419 = vunpack.c.l.b16 %v654
    %v2420 = vunpack.c.l.b16 %v655
    %v2421 = vunpack.c.l.b16 %v656
    %v2422 = vunpack.c.l.b16 %v657
    %v2423 = vunpack.c.l.b16 %v658
    %v2424 = vunpack.c.l.b16 %v659
    %v2425 = vunpack.c.l.b16 %v660
    %v2426 = vunpack.c.l.b16 %v661
    %v2427 = vunpack.c.l.b16 %v662
    %v2428 = vunpack.c.l.b16 %v663
    %v2429 = vunpack.c.l.b16 %v664
    %v2430 = vunpack.c.l.b16 %v665
    %v2431 = vunpack.c.l.b16 %v666
    %v2432 = vunpack.c.l.b16 %v667
    %v2433 = vunpack.c.l.b16 %v668
    %v2434 = vunpack.c.l.b16 %v669
    %v2435 = vunpack.c.l.b16 %v670
    %v2436 = vunpack.c.l.b16 %v671
    %v2437 = vunpack.c.l.b16 %v672
    %v2438 = vunpack.c.l.b16 %v673
    %v2439 = vunpack.c.l.b16 %v674
    %v2440 = vunpack.c.l.b16 %v675
    %v2441 = vunpack.c.l.b16 %v676
    %v2442 = vunpack.c.l.b16 %v677
    %v2443 = vunpack.c.l.b16 %v678
    %v2444 = vunpack.c.l.b16 %v679
    %v2445 = vunpack.c.l.b16 %v680
    %v2446 = vunpack.c.l.b16 %v681
    %v2447 = vunpack.c.l.b16 %v682
    %v2448 = vunpack.c.l.b16 %v683
    %v2449 = vunpack.c.l.b16 %v684
    %v2450 = vunpack.c.l.b16 %v685
    %v2451 = vunpack.c.l.b16 %v686
    %v2452 = vunpack.c.l.b16 %v687
    %v2453 = vunpack.c.l.b16 %v688
    %v2454 = vunpack.c.l.b16 %v689
    %v2455 = vunpack.c.l.b16 %v690
    %v2456 = vunpack.c.l.b16 %v691
    %v2457 = vunpack.c.l.b16 %v692
    %v2458 = vunpack.c.l.b16 %v693
    %v2459 = vunpack.c.l.b16 %v694
    %v2460 = vunpack.c.l.b16 %v695
    %v2461 = vunpack.c.l.b16 %v696
    %v2462 = vunpack.c.l.b16 %v697
    %v2463 = vunpack.c.l.b16 %v698
    %v2464 = vunpack.c.l.b16 %v699
    %v2465 = vunpack.c.l.b16 %v700
    %v2466 = vunpack.c.l.b16 %v701
    %v2467 = vunpack.c.l.b16 %v702
    %v2468 = vunpack.c.l.b16 %v703
    %v2469 = vunpack.c.l.b16 %v704
    %v2470 = vunpack.c.l.b16 %v705
    %v2471 = vunpack.c.l.b16 %v706
    %v2472 = vunpack.c.l.b16 %v707
    %v2473 = vunpack.c.l.b16 %v708
    %v2474 = vunpack.c.l.b16 %v709
    %v2475 = vunpack.c.l.b16 %v710
    %v2476 = vunpack.c.l.b16 %v711
    %v2477 = vunpack.c.l.b16 %v712
    %v2478 = vunpack.c.l.b16 %v713
    %v2479 = vunpack.c.l.b16 %v714
    %v2480 = vunpack.c.l.b16 %v715
    %v2481 = vunpack.c.l.b16 %v716
    %v2482 = vunpack.c.l.b16 %v717
    %v2483 = vunpack.c.l.b16 %v718
    %v2484 = vunpack.c.l.b16 %v719
    %v2485 = vunpack.c.l.b16 %v720
    %v2486 = vunpack.c.l.b16 %v721
    %v2487 = vunpack.c.l.b16 %v722
    %v2488 = vunpack.c.l.b16 %v723
    %v2489 = vunpack.c.l.b16 %v724
    %v2490 = vunpack.c.l.b16 %v725
    %v2491 = vunpack.c.l.b16 %v726
    %v2492 = vunpack.c.l.b16 %v727
    %v2493 = vunpack.c.l.b16 %v728
    %v2494 = vunpack.c.l.b16 %v729
    %v2495 = vunpack.c.l.b16 %v730
    %v2496 = vunpack.c.l.b16 %v731
    %v2497 = vunpack.c.l.b16 %v732
    %v2498 = vunpack.c.l.b16 %v733
    %v2499 = vunpack.c.l.b16 %v734
    %v2500 = vunpack.c.l.b16 %v735
    %v2501 = vunpack.c.l.b16 %v736
    %v2502 = vunpack.c.l.b16 %v737
    %v2503 = vunpack.c.l.b16 %v738
    %v2504 = vunpack.c.l.b16 %v739
    %v2505 = vunpack.c.l.b16 %v740
    %v2506 = vunpack.c.l.b16 %v741
    %v2507 = vunpack.c.l.b16 %v742
    %v2508 = vunpack.c.l.b16 %v743
    %v2509 = vunpack.c.l.b16 %v744
    %v2510 = vunpack.c.l.b16 %v745
    %v2511 = vunpack.c.l.b16 %v746
    %v2512 = vunpack.c.l.b16 %v747
    %v2513 = vunpack.c.l.b16 %v748
    %v2514 = vunpack.c.l.b16 %v749
    %v2515 = vunpack.c.l.b16 %v750
    %v2516 = vunpack.c.l.b16 %v751
    %v2517 = vunpack.c.l.b16 %v752
    %v2518 = vunpack.c.l.b16 %v753
    %v2519 = vunpack.c.l.b16 %v754
    %v2520 = vunpack.c.l.b16 %v755
    %v2521 = vunpack.c.l.b16 %v756
    %v2522 = vunpack.c.l.b16 %v757
    %v2523 = vunpack.c.l.b16 %v758
    %v2524 = vunpack.c.l.b16 %v759
    %v2525 = vunpack.c.l.b16 %v760
    %v2526 = vunpack.c.l.b16 %v761
    %v2527 = vunpack.c.l.b16 %v762
    %v2528 = vunpack.c.l.b16 %v763
    %v2529 = vunpack.c.l.b16 %v764
    %v2530 = vunpack.c.l.b16 %v765
    %v2531 = vunpack.c.l.b16 %v766
    %v2532 = vunpack.c.l.b16 %v767
    %v2533 = vunpack.c.l.b16 %v768
    %v2534 = vunpack.c.l.b16 %v769
    %v2535 = vunpack.c.l.b16 %v770
    %v2536 = vunpack.c.l.b16 %v771
    %v2537 = vunpack.c.l.b16 %v772
    %v2538 = vunpack.c.l.b16 %v773
    %v2539 = vunpack.c.l.b16 %v774
    %v2540 = vunpack.c.l.b16 %v775
    %v2541 = vunpack.c.l.b16 %v776
    %v2542 = vunpack.c.l.b16 %v777
    %v2543 = vunpack.c.l.b16 %v778
    %v2544 = vunpack.c.l.b16 %v779
    %v2545 = vunpack.c.l.b16 %v780
    %v2546 = vunpack.c.l.b16 %v781
    %v2547 = vunpack.c.l.b16 %v782
    %v2548 = vunpack.c.l.b16 %v783
    %v2549 = vunpack.c.l.b16 %v784
    %v2550 = vunpack.c.l.b16 %v785
    %v2551 = vunpack.c.l.b16 %v786
    %v2552 = vunpack.c.l.b16 %v787
    %v2553 = vunpack.c.l.b16 %v788
    %v2554 = vunpack.c.l.b16 %v789
    %v2555 = vunpack.c.l.b16 %v790
    %v2556 = vunpack.c.l.b16 %v791
    %v2557 = vunpack.c.l.b16 %v792
    %v2558 = vunpack.c.l.b16 %v793
    %v2559 = vunpack.c.l.b16 %v794
    %v2560 = vunpack.c.l.b16 %v795
    %v2561 = vunpack.c.l.b16 %v796
    %v2562 = vunpack.c.l.b16 %v797
    %v2563 = vunpack.c.l.b16 %v798
    %v2564 = vunpack.c.l.b16 %v799
    %v2565 = vunpack.c.l.b16 %v800
    %v2566 = vunpack.c.l.b16 %v801
    %v2567 = vunpack.c.l.b16 %v802
    %v2568 = vunpack.c.l.b16 %v803
    %v2569 = vunpack.c.l.b16 %v804
    %v2570 = vunpack.c.l.b16 %v805
    %v2571 = vunpack.c.l.b16 %v806
    %v2572 = vunpack.c.l.b16 %v807
    %v2573 = vunpack.c.l.b16 %v808
    %v2574 = vunpack.c.l.b16 %v809
    %v2575 = vunpack.c.l.b16 %v810
    %v2576 = vunpack.c.l.b16 %v811
    %v2577 = vunpack.c.l.b16 %v812
    %v2578 = vunpack.c.l.b16 %v813
    %v2579 = vunpack.c.l.b16 %v814
    %v2580 = vunpack.c.l.b16 %v815
    %v2581 = vunpack.c.l.b16 %v816
    %v2582 = vunpack.c.l.b16 %v817
    %v2583 = vunpack.c.l.b16 %v818
    %v2584 = vunpack.c.l.b16 %v819
    %v2585 = vunpack.c.l.b16 %v820
    %v2586 = vunpack.c.l.b16 %v821
    %v2587 = vunpack.c.l.b16 %v822
    %v2588 = vunpack.c.l.b16 %v823
    %v2589 = vunpack.c.l.b16 %v824
    %v2590 = vunpack.c.l.b16 %v825
    %v2591 = vunpack.c.l.b16 %v826
    %v2592 = vunpack.c.l.b16 %v827
    %v2593 = vunpack.c.l.b16 %v828
    %v2594 = vunpack.c.l.b16 %v829
    %v2595 = vunpack.c.l.b16 %v830
    %v2596 = vunpack.c.l.b16 %v831
    %v2597 = vunpack.c.l.b16 %v832
    %v2598 = vunpack.c.l.b16 %v833
    %v2599 = vunpack.c.l.b16 %v834
    %v2600 = vunpack.c.l.b16 %v835
    %v2601 = vunpack.c.l.b16 %v836
    %v2602 = vunpack.c.l.b16 %v837
    %v2603 = vunpack.c.l.b16 %v838
    %v2604 = vunpack.c.l.b16 %v839
    %v2605 = vunpack.c.l.b16 %v840
    %v2606 = vunpack.c.l.b16 %v841
    %v2607 = vunpack.c.l.b16 %v842
    %v2608 = vunpack.c.l.b16 %v843
    %v2609 = vunpack.c.l.b16 %v844
    %v2610 = vunpack.c.l.b16 %v845
    %v2611 = vunpack.c.l.b16 %v846
    %v2612 = vunpack.c.l.b16 %v847
    %v2613 = vunpack.c.l.b16 %v848
    %v2614 = vunpack.c.l.b16 %v849
    %v2615 = vunpack.c.l.b16 %v850
    %v2616 = vunpack.c.l.b16 %v851
    %v2617 = vunpack.c.l.b16 %v852
    %v2618 = vunpack.c.l.b16 %v853
    %v2619 = vunpack.c.l.b16 %v854
    %v2620 = vunpack.c.l.b16 %v855
    %v2621 = vunpack.c.l.b16 %v856
    %v2622 = vunpack.c.l.b16 %v857
    %v2623 = vunpack.c.l.b16 %v858
    %v2624 = vunpack.c.l.b16 %v859
    %v2625 = vunpack.c.l.b16 %v860
    %v2626 = vunpack.c.l.b16 %v861
    %v2627 = vunpack.c.l.b16 %v862
    %v2628 = vunpack.c.l.b16 %v863
    %v2629 = vunpack.c.l.b16 %v864
    %v2630 = vunpack.c.l.b16 %v865
    %v2631 = vunpack.c.l.b16 %v866
    %v2632 = vunpack.c.l.b16 %v867
    %v2633 = vunpack.c.l.b16 %v868
    %v2634 = vunpack.c.l.b16 %v869
    %v2635 = vunpack.c.l.b16 %v870
    %v2636 = vunpack.c.l.b16 %v871
    %v2637 = vunpack.c.l.b16 %v872
    %v2638 = vunpack.c.l.b16 %v873
    %v2639 = vunpack.c.l.b16 %v874
    %v2640 = vunpack.c.l.b16 %v875
    %v2641 = vunpack.c.l.b16 %v876
    %v2642 = vunpack.c.l.b16 %v877
    %v2643 = vunpack.c.l.b16 %v878
    %v2644 = vunpack.c.l.b16 %v879
    %v2645 = vunpack.c.l.b16 %v880
    %v2646 = vunpack.c.l.b16 %v881
    %v2647 = vunpack.c.l.b16 %v882
    %v2648 = vunpack.c.l.b16 %v883
    %v2649 = vunpack.c.l.b16 %v884
    %v2650 = vunpack.c.l.b16 %v885
    %v2651 = vunpack.c.l.b16 %v886
    %v2652 = vunpack.c.l.b16 %v887
    %v2653 = vunpack.c.l.b16 %v888
    %v2654 = vunpack.c.l.b16 %v889
    %v2655 = vunpack.c.l.b16 %v890
    %v2656 = vunpack.c.l.b16 %v891
    %v2657 = vunpack.c.l.b16 %v892
    %v2658 = vunpack.c.l.b16 %v893
    %v2659 = vunpack.c.l.b16 %v894
    %v2660 = vunpack.c.l.b16 %v895
    %v2661 = vunpack.c.l.b16 %v896
    %v2662 = vunpack.c.l.b16 %v897
    %v2663 = vunpack.c.l.b16 %v898
    %v2664 = vpack.c.b16 %v1785, %v1784
    %v2665 = vpack.c.b16 %v1787, %v1786
    %v2666 = vpack.c.b16 %v1789, %v1788
    %v2667 = vpack.c.b16 %v1791, %v1790
    %v2668 = vpack.c.b16 %v1793, %v1792
    %v2669 = vpack.c.b16 %v1795, %v1794
    %v2670 = vpack.c.b16 %v1797, %v1796
    %v2671 = vpack.c.b16 %v1799, %v1798
    %v2672 = vpack.c.b16 %v1801, %v1800
    %v2673 = vpack.c.b16 %v1803, %v1802
    %v2674 = vpack.c.b16 %v1805, %v1804
    %v2675 = vpack.c.b16 %v1807, %v1806
    %v2676 = vpack.c.b16 %v1809, %v1808
    %v2677 = vpack.c.b16 %v1811, %v1810
    %v2678 = vpack.c.b16 %v1813, %v1812
    %v2679 = vpack.c.b16 %v1815, %v1814
    %v2680 = vpack.c.b16 %v1817, %v1816
    %v2681 = vpack.c.b16 %v1819, %v1818
    %v2682 = vpack.c.b16 %v1821, %v1820
    %v2683 = vpack.c.b16 %v1823, %v1822
    %v2684 = vpack.c.b16 %v1825, %v1824
    %v2685 = vpack.c.b16 %v1827, %v1826
    %v2686 = vpack.c.b16 %v1829, %v1828
    %v2687 = vpack.c.b16 %v1831, %v1830
    %v2688 = vpack.c.b16 %v1833, %v1832
    %v2689 = vpack.c.b16 %v1835, %v1834
    %v2690 = vpack.c.b16 %v1837, %v1836
    %v2691 = vpack.c.b16 %v1839, %v1838
    %v2692 = vpack.c.b16 %v1841, %v1840
    %v2693 = vpack.c.b16 %v1843, %v1842
    %v2694 = vpack.c.b16 %v1845, %v1844
    %v2695 = vpack.c.b16 %v1847, %v1846
    %v2696 = vpack.c.b16 %v1849, %v1848
    %v2697 = vpack.c.b16 %v1851, %v1850
    %v2698 = vpack.c.b16 %v1853, %v1852
    %v2699 = vpack.c.b16 %v1855, %v1854
    %v2700 = vpack.c.b16 %v1857, %v1856
    %v2701 = vpack.c.b16 %v1859, %v1858
    %v2702 = vpack.c.b16 %v1861, %v1860
    %v2703 = vpack.c.b16 %v1863, %v1862
    %v2704 = vpack.c.b16 %v1865, %v1864
    %v2705 = vpack.c.b16 %v1867, %v1866
    %v2706 = vpack.c.b16 %v1869, %v1868
    %v2707 = vpack.c.b16 %v1871, %v1870
    %v2708 = vpack.c.b16 %v1873, %v1872
    %v2709 = vpack.c.b16 %v1875, %v1874
    %v2710 = vpack.c.b16 %v1877, %v1876
    %v2711 = vpack.c.b16 %v1879, %v1878
    %v2712 = vpack.c.b16 %v1881, %v1880
    %v2713 = vpack.c.b16 %v1883, %v1882
    %v2714 = vpack.c.b16 %v1885, %v1884
    %v2715 = vpack.c.b16 %v1887, %v1886
    %v2716 = vpack.c.b16 %v1889, %v1888
    %v2717 = vpack.c.b16 %v1891, %v1890
    %v2718 = vpack.c.b16 %v1893, %v1892
    %v2719 = vpack.c.b16 %v1895, %v1894
    %v2720 = vpack.c.b16 %v1897, %v1896
    %v2721 = vpack.c.b16 %v1899, %v1898
    %v2722 = vpack.c.b16 %v1901, %v1900
    %v2723 = vpack.c.b16 %v1903, %v1902
    %v2724 = vpack.c.b16 %v1905, %v1904
    %v2725 = vpack.c.b16 %v1907, %v1906
    %v2726 = vpack.c.b16 %v1909, %v1908
    %v2727 = vpack.c.b16 %v1911, %v1910
    %v2728 = vpack.c.b16 %v1913, %v1912
    %v2729 = vpack.c.b16 %v1915, %v1914
    %v2730 = vpack.c.b16 %v1917, %v1916
    %v2731 = vpack.c.b16 %v1919, %v1918
    %v2732 = vpack.c.b16 %v1921, %v1920
    %v2733 = vpack.c.b16 %v1923, %v1922
    %v2734 = vpack.c.b16 %v1925, %v1924
    %v2735 = vpack.c.b16 %v1927, %v1926
    %v2736 = vpack.c.b16 %v1929, %v1928
    %v2737 = vpack.c.b16 %v1931, %v1930
    %v2738 = vpack.c.b16 %v1933, %v1932
    %v2739 = vpack.c.b16 %v1935, %v1934
    %v2740 = vpack.c.b16 %v1937, %v1936
    %v2741 = vpack.c.b16 %v1939, %v1938
    %v2742 = vpack.c.b16 %v1941, %v1940
    %v2743 = vpack.c.b16 %v1943, %v1942
    %v2744 = vpack.c.b16 %v1945, %v1944
    %v2745 = vpack.c.b16 %v1947, %v1946
    %v2746 = vpack.c.b16 %v1949, %v1948
    %v2747 = vpack.c.b16 %v1951, %v1950
    %v2748 = vpack.c.b16 %v1953, %v1952
    %v2749 = vpack.c.b16 %v1955, %v1954
    %v2750 = vpack.c.b16 %v1957, %v1956
    %v2751 = vpack.c.b16 %v1959, %v1958
    %v2752 = vpack.c.b16 %v1961, %v1960
    %v2753 = vpack.c.b16 %v1963, %v1962
    %v2754 = vpack.c.b16 %v1965, %v1964
    %v2755 = vpack.c.b16 %v1967, %v1966
    %v2756 = vpack.c.b16 %v1969, %v1968
    %v2757 = vpack.c.b16 %v1971, %v1970
    %v2758 = vpack.c.b16 %v1973, %v1972
    %v2759 = vpack.c.b16 %v1975, %v1974
    %v2760 = vpack.c.b16 %v1977, %v1976
    %v2761 = vpack.c.b16 %v1979, %v1978
    %v2762 = vpack.c.b16 %v1981, %v1980
    %v2763 = vpack.c.b16 %v1983, %v1982
    %v2764 = vpack.c.b16 %v1985, %v1984
    %v2765 = vpack.c.b16 %v1987, %v1986
    %v2766 = vpack.c.b16 %v1989, %v1988
    %v2767 = vpack.c.b16 %v1991, %v1990
    %v2768 = vpack.c.b16 %v1993, %v1992
    %v2769 = vpack.c.b16 %v1995, %v1994
    %v2770 = vpack.c.b16 %v1997, %v1996
    %v2771 = vpack.c.b16 %v1999, %v1998
    %v2772 = vpack.c.b16 %v2001, %v2000
    %v2773 = vpack.c.b16 %v2003, %v2002
    %v2774 = vpack.c.b16 %v2005, %v2004
    %v2775 = vpack.c.b16 %v2007, %v2006
    %v2776 = vpack.c.b16 %v2009, %v2008
    %v2777 = vpack.c.b16 %v2011, %v2010
    %v2778 = vpack.c.b16 %v2013, %v2012
    %v2779 = vpack.c.b16 %v2015, %v2014
    %v2780 = vpack.c.b16 %v2017, %v2016
    %v2781 = vpack.c.b16 %v2019, %v2018
    %v2782 = vpack.c.b16 %v2021, %v2020
    %v2783 = vpack.c.b16 %v2023, %v2022
    %v2784 = vpack.c.b16 %v2025, %v2024
    %v2785 = vpack.c.b16 %v2027, %v2026
    %v2786 = vpack.c.b16 %v2029, %v2028
    %v2787 = vpack.c.b16 %v2031, %v2030
    %v2788 = vpack.c.b16 %v2033, %v2032
    %v2789 = vpack.c.b16 %v2035, %v2034
    %v2790 = vpack.c.b16 %v2037, %v2036
    %v2791 = vpack.c.b16 %v2039, %v2038
    %v2792 = vpack.c.b16 %v2041, %v2040
    %v2793 = vpack.c.b16 %v2043, %v2042
    %v2794 = vpack.c.b16 %v2045, %v2044
    %v2795 = vpack.c.b16 %v2047, %v2046
    %v2796 = vpack.c.b16 %v2049, %v2048
    %v2797 = vpack.c.b16 %v2051, %v2050
    %v2798 = vpack.c.b16 %v2053, %v2052
    %v2799 = vpack.c.b16 %v2055, %v2054
    %v2800 = vpack.c.b16 %v2057, %v2056
    %v2801 = vpack.c.b16 %v2059, %v2058
    %v2802 = vpack.c.b16 %v2061, %v2060
    %v2803 = vpack.c.b16 %v2063, %v2062
    %v2804 = vpack.c.b16 %v2065, %v2064
    %v2805 = vpack.c.b16 %v2067, %v2066
    %v2806 = vpack.c.b16 %v2069, %v2068
    %v2807 = vpack.c.b16 %v2071, %v2070
    %v2808 = vpack.c.b16 %v2073, %v2072
    %v2809 = vpack.c.b16 %v2075, %v2074
    %v2810 = vpack.c.b16 %v2077, %v2076
    %v2811 = vpack.c.b16 %v2079, %v2078
    %v2812 = vpack.c.b16 %v2081, %v2080
    %v2813 = vpack.c.b16 %v2083, %v2082
    %v2814 = vpack.c.b16 %v2085, %v2084
    %v2815 = vpack.c.b16 %v2087, %v2086
    %v2816 = vpack.c.b16 %v2089, %v2088
    %v2817 = vpack.c.b16 %v2091, %v2090
    %v2818 = vpack.c.b16 %v2093, %v2092
    %v2819 = vpack.c.b16 %v2095, %v2094
    %v2820 = vpack.c.b16 %v2097, %v2096
    %v2821 = vpack.c.b16 %v2099, %v2098
    %v2822 = vpack.c.b16 %v2101, %v2100
    %v2823 = vpack.c.b16 %v2103, %v2102
    %v2824 = vpack.c.b16 %v2105, %v2104
    %v2825 = vpack.c.b16 %v2107, %v2106
    %v2826 = vpack.c.b16 %v2109, %v2108
    %v2827 = vpack.c.b16 %v2111, %v2110
    %v2828 = vpack.c.b16 %v2113, %v2112
    %v2829 = vpack.c.b16 %v2115, %v2114
    %v2830 = vpack.c.b16 %v2117, %v2116
    %v2831 = vpack.c.b16 %v2119, %v2118
    %v2832 = vpack.c.b16 %v2121, %v2120
    %v2833 = vpack.c.b16 %v2123, %v2122
    %v2834 = vpack.c.b16 %v2125, %v2124
    %v2835 = vpack.c.b16 %v2127, %v2126
    %v2836 = vpack.c.b16 %v2129, %v2128
    %v2837 = vpack.c.b16 %v2131, %v2130
    %v2838 = vpack.c.b16 %v2133, %v2132
    %v2839 = vpack.c.b16 %v2135, %v2134
    %v2840 = vpack.c.b16 %v2137, %v2136
    %v2841 = vpack.c.b16 %v2139, %v2138
    %v2842 = vpack.c.b16 %v2141, %v2140
    %v2843 = vpack.c.b16 %v2143, %v2142
    %v2844 = vpack.c.b16 %v2145, %v2144
    %v2845 = vpack.c.b16 %v2147, %v2146
    %v2846 = vpack.c.b16 %v2149, %v2148
    %v2847 = vpack.c.b16 %v2151, %v2150
    %v2848 = vpack.c.b16 %v2153, %v2152
    %v2849 = vpack.c.b16 %v2155, %v2154
    %v2850 = vpack.c.b16 %v2157, %v2156
    %v2851 = vpack.c.b16 %v2159, %v2158
    %v2852 = vpack.c.b16 %v2161, %v2160
    %v2853 = vpack.c.b16 %v2163, %v2162
    %v2854 = vpack.c.b16 %v2165, %v2164
    %v2855 = vpack.c.b16 %v2167, %v2166
    %v2856 = vpack.c.b16 %v2169, %v2168
    %v2857 = vpack.c.b16 %v2171, %v2170
    %v2858 = vpack.c.b16 %v2173, %v2172
    %v2859 = vpack.c.b16 %v2175, %v2174
    %v2860 = vpack.c.b16 %v2177, %v2176
    %v2861 = vpack.c.b16 %v2179, %v2178
    %v2862 = vpack.c.b16 %v2181, %v2180
    %v2863 = vpack.c.b16 %v2183, %v2182
    %v2864 = vpack.c.b16 %v2185, %v2184
    %v2865 = vpack.c.b16 %v2187, %v2186
    %v2866 = vpack.c.b16 %v2189, %v2188
    %v2867 = vpack.c.b16 %v2191, %v2190
    %v2868 = vpack.c.b16 %v2193, %v2192
    %v2869 = vpack.c.b16 %v2195, %v2194
    %v2870 = vpack.c.b16 %v2197, %v2196
    %v2871 = vpack.c.b16 %v2199, %v2198
    %v2872 = vpack.c.b16 %v2201, %v2200
    %v2873 = vpack.c.b16 %v2203, %v2202
    %v2874 = vpack.c.b16 %v2205, %v2204
    %v2875 = vpack.c.b16 %v2207, %v2206
    %v2876 = vpack.c.b16 %v2209, %v2208
    %v2877 = vpack.c.b16 %v2211, %v2210
    %v2878 = vpack.c.b16 %v2213, %v2212
    %v2879 = vpack.c.b16 %v2215, %v2214
    %v2880 = vpack.c.b16 %v2217, %v2216
    %v2881 = vpack.c.b16 %v2219, %v2218
    %v2882 = vpack.c.b16 %v2221, %v2220
    %v2883 = vpack.c.b16 %v2223, %v2222
    %v2884 = vpack.c.b16 %v2225, %v2224
    %v2885 = vpack.c.b16 %v2227, %v2226
    %v2886 = vpack.c.b16 %v2229, %v2228
    %v2887 = vpack.c.b16 %v2231, %v2230
    %v2888 = vpack.c.b16 %v2233, %v2232
    %v2889 = vpack.c.b16 %v2235, %v2234
    %v2890 = vpack.c.b16 %v2237, %v2236
    %v2891 = vpack.c.b16 %v2239, %v2238
    %v2892 = vpack.c.b16 %v2241, %v2240
    %v2893 = vpack.c.b16 %v2243, %v2242
    %v2894 = vpack.c.b16 %v2245, %v2244
    %v2895 = vpack.c.b16 %v2247, %v2246
    %v2896 = vpack.c.b16 %v2249, %v2248
    %v2897 = vpack.c.b16 %v2251, %v2250
    %v2898 = vpack.c.b16 %v2253, %v2252
    %v2899 = vpack.c.b16 %v2255, %v2254
    %v2900 = vpack.c.b16 %v2257, %v2256
    %v2901 = vpack.c.b16 %v2259, %v2258
    %v2902 = vpack.c.b16 %v2261, %v2260
    %v2903 = vpack.c.b16 %v2263, %v2262
    %v2904 = vpack.c.b16 %v2265, %v2264
    %v2905 = vpack.c.b16 %v2267, %v2266
    %v2906 = vpack.c.b16 %v2269, %v2268
    %v2907 = vpack.c.b16 %v2271, %v2270
    %v2908 = vpack.c.b16 %v2273, %v2272
    %v2909 = vpack.c.b16 %v2275, %v2274
    %v2910 = vpack.c.b16 %v2277, %v2276
    %v2911 = vpack.c.b16 %v2279, %v2278
    %v2912 = vpack.c.b16 %v2281, %v2280
    %v2913 = vpack.c.b16 %v2283, %v2282
    %v2914 = vpack.c.b16 %v2285, %v2284
    %v2915 = vpack.c.b16 %v2287, %v2286
    %v2916 = vpack.c.b16 %v2289, %v2288
    %v2917 = vpack.c.b16 %v2291, %v2290
    %v2918 = vpack.c.b16 %v2293, %v2292
    %v2919 = vpack.c.b16 %v2295, %v2294
    %v2920 = vpack.c.b16 %v2297, %v2296
    %v2921 = vpack.c.b16 %v2299, %v2298
    %v2922 = vpack.c.b16 %v2301, %v2300
    %v2923 = vpack.c.b16 %v2303, %v2302
    %v2924 = vpack.c.b16 %v2305, %v2304
    %v2925 = vpack.c.b16 %v2307, %v2306
    %v2926 = vpack.c.b16 %v2309, %v2308
    %v2927 = vpack.c.b16 %v2311, %v2310
    %v2928 = vpack.c.b16 %v2313, %v2312
    %v2929 = vpack.c.b16 %v2315, %v2314
    %v2930 = vpack.c.b16 %v2317, %v2316
    %v2931 = vpack.c.b16 %v2319, %v2318
    %v2932 = vpack.c.b16 %v2321, %v2320
    %v2933 = vpack.c.b16 %v2323, %v2322
    %v2934 = vpack.c.b16 %v2325, %v2324
    %v2935 = vpack.c.b16 %v2327, %v2326
    %v2936 = vpack.c.b16 %v2329, %v2328
    %v2937 = vpack.c.b16 %v2331, %v2330
    %v2938 = vpack.c.b16 %v2333, %v2332
    %v2939 = vpack.c.b16 %v2335, %v2334
    %v2940 = vpack.c.b16 %v2337, %v2336
    %v2941 = vpack.c.b16 %v2339, %v2338
    %v2942 = vpack.c.b16 %v2341, %v2340
    %v2943 = vpack.c.b16 %v2343, %v2342
    %v2944 = vpack.c.b16 %v2345, %v2344
    %v2945 = vpack.c.b16 %v2347, %v2346
    %v2946 = vpack.c.b16 %v2349, %v2348
    %v2947 = vpack.c.b16 %v2351, %v2350
    %v2948 = vpack.c.b16 %v2353, %v2352
    %v2949 = vpack.c.b16 %v2355, %v2354
    %v2950 = vpack.c.b16 %v2357, %v2356
    %v2951 = vpack.c.b16 %v2359, %v2358
    %v2952 = vpack.c.b16 %v2361, %v2360
    %v2953 = vpack.c.b16 %v2363, %v2362
    %v2954 = vpack.c.b16 %v2365, %v2364
    %v2955 = vpack.c.b16 %v2367, %v2366
    %v2956 = vpack.c.b16 %v2369, %v2368
    %v2957 = vpack.c.b16 %v2371, %v2370
    %v2958 = vpack.c.b16 %v2373, %v2372
    %v2959 = vpack.c.b16 %v2375, %v2374
    %v2960 = vpack.c.b16 %v2377, %v2376
    %v2961 = vpack.c.b16 %v2379, %v2378
    %v2962 = vpack.c.b16 %v2381, %v2380
    %v2963 = vpack.c.b16 %v2383, %v2382
    %v2964 = vpack.c.b16 %v2385, %v2384
    %v2965 = vpack.c.b16 %v2387, %v2386
    %v2966 = vpack.c.b16 %v2389, %v2388
    %v2967 = vpack.c.b16 %v2391, %v2390
    %v2968 = vpack.c.b16 %v2393, %v2392
    %v2969 = vpack.c.b16 %v2395, %v2394
    %v2970 = vpack.c.b16 %v2397, %v2396
    %v2971 = vpack.c.b16 %v2399, %v2398
    %v2972 = vpack.c.b16 %v2401, %v2400
    %v2973 = vpack.c.b16 %v2403, %v2402
    %v2974 = vpack.c.b16 %v2405, %v2404
    %v2975 = vpack.c.b16 %v2407, %v2406
    %v2976 = vpack.c.b16 %v2409, %v2408
    %v2977 = vpack.c.b16 %v2411, %v2410
    %v2978 = vpack.c.b16 %v2413, %v2412
    %v2979 = vpack.c.b16 %v2415, %v2414
    %v2980 = vpack.c.b16 %v2417, %v2416
    %v2981 = vpack.c.b16 %v2419, %v2418
    %v2982 = vpack.c.b16 %v2421, %v2420
    %v2983 = vpack.c.b16 %v2423, %v2422
    %v2984 = vpack.c.b16 %v2425, %v2424
    %v2985 = vpack.c.b16 %v2427, %v2426
    %v2986 = vpack.c.b16 %v2429, %v2428
    %v2987 = vpack.c.b16 %v2431, %v2430
    %v2988 = vpack.c.b16 %v2433, %v2432
    %v2989 = vpack.c.b16 %v2435, %v2434
    %v2990 = vpack.c.b16 %v2437, %v2436
    %v2991 = vpack.c.b16 %v2439, %v2438
    %v2992 = vpack.c.b16 %v2441, %v2440
    %v2993 = vpack.c.b16 %v2443, %v2442
    %v2994 = vpack.c.b16 %v2445, %v2444
    %v2995 = vpack.c.b16 %v2447, %v2446
    %v2996 = vpack.c.b16 %v2449, %v2448
    %v2997 = vpack.c.b16 %v2451, %v2450
    %v2998 = vpack.c.b16 %v2453, %v2452
    %v2999 = vpack.c.b16 %v2455, %v2454
    %v3000 = vpack.c.b16 %v2457, %v2456
    %v3001 = vpack.c.b16 %v2459, %v2458
    %v3002 = vpack.c.b16 %v2461, %v2460
    %v3003 = vpack.c.b16 %v2463, %v2462
    %v3004 = vpack.c.b16 %v2465, %v2464
    %v3005 = vpack.c.b16 %v2467, %v2466
    %v3006 = vpack.c.b16 %v2469, %v2468
    %v3007 = vpack.c.b16 %v2471, %v2470
    %v3008 = vpack.c.b16 %v2473, %v2472
    %v3009 = vpack.c.b16 %v2475, %v2474
    %v3010 = vpack.c.b16 %v2477, %v2476
    %v3011 = vpack.c.b16 %v2479, %v2478
    %v3012 = vpack.c.b16 %v2481, %v2480
    %v3013 = vpack.c.b16 %v2483, %v2482
    %v3014 = vpack.c.b16 %v2485, %v2484
    %v3015 = vpack.c.b16 %v2487, %v2486
    %v3016 = vpack.c.b16 %v2489, %v2488
    %v3017 = vpack.c.b16 %v2491, %v2490
    %v3018 = vpack.c.b16 %v2493, %v2492
    %v3019 = vpack.c.b16 %v2495, %v2494
    %v3020 = vpack.c.b16 %v2497, %v2496
    %v3021 = vpack.c.b16 %v2499, %v2498
    %v3022 = vpack.c.b16 %v2501, %v2500
    %v3023 = vpack.c.b16 %v2503, %v2502
    %v3024 = vpack.c.b16 %v2505, %v2504
    %v3025 = vpack.c.b16 %v2507, %v2506
    %v3026 = vpack.c.b16 %v2509, %v2508
    %v3027 = vpack.c.b16 %v2511, %v2510
    %v3028 = vpack.c.b16 %v2513, %v2512
    %v3029 = vpack.c.b16 %v2515, %v2514
    %v3030 = vpack.c.b16 %v2517, %v2516
    %v3031 = vpack.c.b16 %v2519, %v2518
    %v3032 = vpack.c.b16 %v2521, %v2520
    %v3033 = vpack.c.b16 %v2523, %v2522
    %v3034 = vpack.c.b16 %v2525, %v2524
    %v3035 = vpack.c.b16 %v2527, %v2526
    %v3036 = vpack.c.b16 %v2529, %v2528
    %v3037 = vpack.c.b16 %v2531, %v2530
    %v3038 = vpack.c.b16 %v2533, %v2532
    %v3039 = vpack.c.b16 %v2535, %v2534
    %v3040 = vpack.c.b16 %v2537, %v2536
    %v3041 = vpack.c.b16 %v2539, %v2538
    %v3042 = vpack.c.b16 %v2541, %v2540
    %v3043 = vpack.c.b16 %v2543, %v2542
    %v3044 = vpack.c.b16 %v2545, %v2544
    %v3045 = vpack.c.b16 %v2547, %v2546
    %v3046 = vpack.c.b16 %v2549, %v2548
    %v3047 = vpack.c.b16 %v2551, %v2550
    %v3048 = vpack.c.b16 %v2553, %v2552
    %v3049 = vpack.c.b16 %v2555, %v2554
    %v3050 = vpack.c.b16 %v2557, %v2556
    %v3051 = vpack.c.b16 %v2559, %v2558
    %v3052 = vpack.c.b16 %v2561, %v2560
    %v3053 = vpack.c.b16 %v2563, %v2562
    %v3054 = vpack.c.b16 %v2565, %v2564
    %v3055 = vpack.c.b16 %v2567, %v2566
    %v3056 = vpack.c.b16 %v2569, %v2568
    %v3057 = vpack.c.b16 %v2571, %v2570
    %v3058 = vpack.c.b16 %v2573, %v2572
    %v3059 = vpack.c.b16 %v2575, %v2574
    %v3060 = vpack.c.b16 %v2577, %v2576
    %v3061 = vpack.c.b16 %v2579, %v2578
    %v3062 = vpack.c.b16 %v2581, %v2580
    %v3063 = vpack.c.b16 %v2583, %v2582
    %v3064 = vpack.c.b16 %v2585, %v2584
    %v3065 = vpack.c.b16 %v2587, %v2586
    %v3066 = vpack.c.b16 %v2589, %v2588
    %v3067 = vpack.c.b16 %v2591, %v2590
    %v3068 = vpack.c.b16 %v2593, %v2592
    %v3069 = vpack.c.b16 %v2595, %v2594
    %v3070 = vpack.c.b16 %v2597, %v2596
    %v3071 = vpack.c.b16 %v2599, %v2598
    %v3072 = vpack.c.b16 %v2601, %v2600
    %v3073 = vpack.c.b16 %v2603, %v2602
    %v3074 = vpack.c.b16 %v2605, %v2604
    %v3075 = vpack.c.b16 %v2607, %v2606
    %v3076 = vpack.c.b16 %v2609, %v2608
    %v3077 = vpack.c.b16 %v2611, %v2610
    %v3078 = vpack.c.b16 %v2613, %v2612
    %v3079 = vpack.c.b16 %v2615, %v2614
    %v3080 = vpack.c.b16 %v2617, %v2616
    %v3081 = vpack.c.b16 %v2619, %v2618
    %v3082 = vpack.c.b16 %v2621, %v2620
    %v3083 = vpack.c.b16 %v2623, %v2622
    %v3084 = vpack.c.b16 %v2625, %v2624
    %v3085 = vpack.c.b16 %v2627, %v2626
    %v3086 = vpack.c.b16 %v2629, %v2628
    %v3087 = vpack.c.b16 %v2631, %v2630
    %v3088 = vpack.c.b16 %v2633, %v2632
    %v3089 = vpack.c.b16 %v2635, %v2634
    %v3090 = vpack.c.b16 %v2637, %v2636
    %v3091 = vpack.c.b16 %v2639, %v2638
    %v3092 = vpack.c.b16 %v2641, %v2640
    %v3093 = vpack.c.b16 %v2643, %v2642
    %v3094 = vpack.c.b16 %v2645, %v2644
    %v3095 = vpack.c.b16 %v2647, %v2646
    %v3096 = vpack.c.b16 %v2649, %v2648
    %v3097 = vpack.c.b16 %v2651, %v2650
    %v3098 = vpack.c.b16 %v2653, %v2652
    %v3099 = vpack.c.b16 %v2655, %v2654
    %v3100 = vpack.c.b16 %v2657, %v2656
    %v3101 = vpack.c.b16 %v2659, %v2658
    %v3102 = vpack.c.b16 %v2661, %v2660
    %v3103 = vpack.c.b16 %v2663, %v2662
    %v3109 = vunpack.c.l.b16 %v899
    %v3110 = vunpack.c.l.b16 %v900
    %v3111 = vunpack.c.l.b16 %v901
    %v3112 = vunpack.c.l.b16 %v902
    %v3113 = vunpack.c.l.b16 %v903
    %v3114 = vpack.c.b16 %v3110, %v3109
    %v3115 = vpack.c.b16 %v3112, %v3111
    %v3116 = vpack.c.b16 %v3113, %v3113
    %vm3119 = vcmask 326656
    %v3121 = vsel %vm3119, %v2664, 0
    %v3124 = vsel %vm3119, %v2665, 0
    %v3127 = vsel %vm3119, %v2666, 0
    %v3130 = vsel %vm3119, %v2667, 0
    %v3133 = vsel %vm3119, %v2668, 0
    %v3136 = vsel %vm3119, %v2669, 0
    %v3139 = vsel %vm3119, %v2670, 0
    %v3142 = vsel %vm3119, %v2671, 0
    %v3145 = vsel %vm3119, %v2672, 0
    %v3148 = vsel %vm3119, %v2673, 0
    %v3151 = vsel %vm3119, %v2674, 0
    %v3154 = vsel %vm3119, %v2675, 0
    %v3157 = vsel %vm3119, %v2676, 0
    %v3160 = vsel %vm3119, %v2677, 0
    %v3163 = vsel %vm3119, %v2678, 0
    %v3166 = vsel %vm3119, %v2679, 0
    %v3169 = vsel %vm3119, %v2680, 0
    %v3172 = vsel %vm3119, %v2681, 0
    %v3175 = vsel %vm3119, %v2682, 0
    %v3178 = vsel %vm3119, %v2683, 0
    %v3181 = vsel %vm3119, %v2684, 0
    %v3184 = vsel %vm3119, %v2685, 0
    %v3187 = vsel %vm3119, %v2686, 0
    %v3190 = vsel %vm3119, %v2687, 0
    %v3193 = vsel %vm3119, %v2688, 0
    %v3196 = vsel %vm3119, %v2689, 0
    %v3199 = vsel %vm3119, %v2690, 0
    %v3202 = vsel %vm3119, %v2691, 0
    %v3205 = vsel %vm3119, %v2692, 0
    %v3208 = vsel %vm3119, %v2693, 0
    %v3211 = vsel %vm3119, %v2694, 0
    %v3214 = vsel %vm3119, %v2695, 0
    %v3217 = vsel %vm3119, %v2696, 0
    %v3220 = vsel %vm3119, %v2697, 0
    %v3223 = vsel %vm3119, %v2698, 0
    %v3226 = vsel %vm3119, %v2699, 0
    %v3229 = vsel %vm3119, %v2700, 0
    %v3232 = vsel %vm3119, %v2701, 0
    %v3235 = vsel %vm3119, %v2702, 0
    %v3238 = vsel %vm3119, %v2703, 0
    %v3241 = vsel %vm3119, %v2704, 0
    %v3244 = vsel %vm3119, %v2705, 0
    %v3247 = vsel %vm3119, %v2706, 0
    %v3250 = vsel %vm3119, %v2707, 0
    %v3253 = vsel %vm3119, %v2708, 0
    %v3256 = vsel %vm3119, %v2709, 0
    %v3259 = vsel %vm3119, %v2710, 0
    %v3262 = vsel %vm3119, %v2711, 0
    %v3265 = vsel %vm3119, %v2712, 0
    %v3268 = vsel %vm3119, %v2713, 0
    %v3271 = vsel %vm3119, %v2714, 0
    %v3274 = vsel %vm3119, %v2715, 0
    %v3277 = vsel %vm3119, %v2716, 0
    %v3280 = vsel %vm3119, %v2717, 0
    %v3283 = vsel %vm3119, %v2718, 0
    %v3286 = vsel %vm3119, %v2719, 0
    %v3289 = vsel %vm3119, %v2720, 0
    %v3292 = vsel %vm3119, %v2721, 0
    %v3295 = vsel %vm3119, %v2722, 0
    %v3298 = vsel %vm3119, %v2723, 0
    %v3301 = vsel %vm3119, %v2724, 0
    %v3304 = vsel %vm3119, %v2725, 0
    %v3307 = vsel %vm3119, %v2726, 0
    %v3310 = vsel %vm3119, %v2727, 0
    %v3313 = vsel %vm3119, %v2728, 0
    %v3316 = vsel %vm3119, %v2729, 0
    %v3319 = vsel %vm3119, %v2730, 0
    %v3322 = vsel %vm3119, %v2731, 0
    %v3325 = vsel %vm3119, %v2732, 0
    %v3328 = vsel %vm3119, %v2733, 0
    %v3331 = vsel %vm3119, %v2734, 0
    %v3334 = vsel %vm3119, %v2735, 0
    %v3337 = vsel %vm3119, %v2736, 0
    %v3340 = vsel %vm3119, %v2737, 0
    %v3343 = vsel %vm3119, %v2738, 0
    %v3346 = vsel %vm3119, %v2739, 0
    %v3349 = vsel %vm3119, %v2740, 0
    %v3352 = vsel %vm3119, %v2741, 0
    %v3355 = vsel %vm3119, %v2742, 0
    %v3358 = vsel %vm3119, %v2743, 0
    %v3361 = vsel %vm3119, %v2744, 0
    %v3364 = vsel %vm3119, %v2745, 0
    %v3367 = vsel %vm3119, %v2746, 0
    %v3370 = vsel %vm3119, %v2747, 0
    %v3373 = vsel %vm3119, %v2748, 0
    %v3376 = vsel %vm3119, %v2749, 0
    %v3379 = vsel %vm3119, %v2750, 0
    %v3382 = vsel %vm3119, %v2751, 0
    %v3385 = vsel %vm3119, %v2752, 0
    %v3388 = vsel %vm3119, %v2753, 0
    %v3391 = vsel %vm3119, %v2754, 0
    %v3394 = vsel %vm3119, %v2755, 0
    %v3397 = vsel %vm3119, %v2756, 0
    %v3400 = vsel %vm3119, %v2757, 0
    %v3403 = vsel %vm3119, %v2758, 0
    %v3406 = vsel %vm3119, %v2759, 0
    %v3409 = vsel %vm3119, %v2760, 0
    %v3412 = vsel %vm3119, %v2761, 0
    %v3415 = vsel %vm3119, %v2762, 0
    %v3418 = vsel %vm3119, %v2763, 0
    %v3421 = vsel %vm3119, %v2764, 0
    %v3424 = vsel %vm3119, %v2765, 0
    %v3427 = vsel %vm3119, %v2766, 0
    %v3430 = vsel %vm3119, %v2767, 0
    %v3433 = vsel %vm3119, %v2768, 0
    %v3436 = vsel %vm3119, %v2769, 0
    %v3439 = vsel %vm3119, %v2770, 0
    %v3442 = vsel %vm3119, %v2771, 0
    %v3445 = vsel %vm3119, %v2772, 0
    %v3448 = vsel %vm3119, %v2773, 0
    %v3451 = vsel %vm3119, %v2774, 0
    %v3454 = vsel %vm3119, %v2775, 0
    %v3457 = vsel %vm3119, %v2776, 0
    %v3460 = vsel %vm3119, %v2777, 0
    %v3463 = vsel %vm3119, %v2778, 0
    %v3466 = vsel %vm3119, %v2779, 0
    %v3469 = vsel %vm3119, %v2780, 0
    %v3472 = vsel %vm3119, %v2781, 0
    %v3475 = vsel %vm3119, %v2782, 0
    %v3478 = vsel %vm3119, %v2783, 0
    %v3481 = vsel %vm3119, %v2784, 0
    %v3484 = vsel %vm3119, %v2785, 0
    %v3487 = vsel %vm3119, %v2786, 0
    %v3490 = vsel %vm3119, %v2787, 0
    %v3493 = vsel %vm3119, %v2788, 0
    %v3496 = vsel %vm3119, %v2789, 0
    %v3499 = vsel %vm3119, %v2790, 0
    %v3502 = vsel %vm3119, %v2791, 0
    %v3505 = vsel %vm3119, %v2792, 0
    %v3508 = vsel %vm3119, %v2793, 0
    %v3511 = vsel %vm3119, %v2794, 0
    %v3514 = vsel %vm3119, %v2795, 0
    %v3517 = vsel %vm3119, %v2796, 0
    %v3520 = vsel %vm3119, %v2797, 0
    %v3523 = vsel %vm3119, %v2798, 0
    %v3526 = vsel %vm3119, %v2799, 0
    %v3529 = vsel %vm3119, %v2800, 0
    %v3532 = vsel %vm3119, %v2801, 0
    %v3535 = vsel %vm3119, %v2802, 0
    %v3538 = vsel %vm3119, %v2803, 0
    %v3541 = vsel %vm3119, %v2804, 0
    %v3544 = vsel %vm3119, %v2805, 0
    %v3547 = vsel %vm3119, %v2806, 0
    %v3550 = vsel %vm3119, %v2807, 0
    %v3553 = vsel %vm3119, %v2808, 0
    %v3556 = vsel %vm3119, %v2809, 0
    %v3559 = vsel %vm3119, %v2810, 0
    %v3562 = vsel %vm3119, %v2811, 0
    %v3565 = vsel %vm3119, %v2812, 0
    %v3568 = vsel %vm3119, %v2813, 0
    %v3571 = vsel %vm3119, %v2814, 0
    %v3574 = vsel %vm3119, %v2815, 0
    %v3577 = vsel %vm3119, %v2816, 0
    %v3580 = vsel %vm3119, %v2817, 0
    %v3583 = vsel %vm3119, %v2818, 0
    %v3586 = vsel %vm3119, %v2819, 0
    %v3589 = vsel %vm3119, %v2820, 0
    %v3592 = vsel %vm3119, %v2821, 0
    %v3595 = vsel %vm3119, %v2822, 0
    %v3598 = vsel %vm3119, %v2823, 0
    %v3601 = vsel %vm3119, %v2824, 0
    %v3604 = vsel %vm3119, %v2825, 0
    %v3607 = vsel %vm3119, %v2826, 0
    %v3610 = vsel %vm3119, %v2827, 0
    %v3613 = vsel %vm3119, %v2828, 0
    %v3616 = vsel %vm3119, %v2829, 0
    %v3619 = vsel %vm3119, %v2830, 0
    %v3622 = vsel %vm3119, %v2831, 0
    %v3625 = vsel %vm3119, %v2832, 0
    %v3628 = vsel %vm3119, %v2833, 0
    %v3631 = vsel %vm3119, %v2834, 0
    %v3634 = vsel %vm3119, %v2835, 0
    %v3637 = vsel %vm3119, %v2836, 0
    %v3640 = vsel %vm3119, %v2837, 0
    %v3643 = vsel %vm3119, %v2838, 0
    %v3646 = vsel %vm3119, %v2839, 0
    %v3649 = vsel %vm3119, %v2840, 0
    %v3652 = vsel %vm3119, %v2841, 0
    %v3655 = vsel %vm3119, %v2842, 0
    %v3658 = vsel %vm3119, %v2843, 0
    %v3661 = vsel %vm3119, %v2844, 0
    %v3664 = vsel %vm3119, %v2845, 0
    %v3667 = vsel %vm3119, %v2846, 0
    %v3670 = vsel %vm3119, %v2847, 0
    %v3673 = vsel %vm3119, %v2848, 0
    %v3676 = vsel %vm3119, %v2849, 0
    %v3679 = vsel %vm3119, %v2850, 0
    %v3682 = vsel %vm3119, %v2851, 0
    %v3685 = vsel %vm3119, %v2852, 0
    %v3688 = vsel %vm3119, %v2853, 0
    %v3691 = vsel %vm3119, %v2854, 0
    %v3694 = vsel %vm3119, %v2855, 0
    %v3697 = vsel %vm3119, %v2856, 0
    %v3700 = vsel %vm3119, %v2857, 0
    %v3703 = vsel %vm3119, %v2858, 0
    %v3706 = vsel %vm3119, %v2859, 0
    %v3709 = vsel %vm3119, %v2860, 0
    %v3712 = vsel %vm3119, %v2861, 0
    %v3715 = vsel %vm3119, %v2862, 0
    %v3718 = vsel %vm3119, %v2863, 0
    %v3721 = vsel %vm3119, %v2864, 0
    %v3724 = vsel %vm3119, %v2865, 0
    %v3727 = vsel %vm3119, %v2866, 0
    %v3730 = vsel %vm3119, %v2867, 0
    %v3733 = vsel %vm3119, %v2868, 0
    %v3736 = vsel %vm3119, %v2869, 0
    %v3739 = vsel %vm3119, %v2870, 0
    %v3742 = vsel %vm3119, %v2871, 0
    %v3745 = vsel %vm3119, %v2872, 0
    %v3748 = vsel %vm3119, %v2873, 0
    %v3751 = vsel %vm3119, %v2874, 0
    %v3754 = vsel %vm3119, %v2875, 0
    %v3757 = vsel %vm3119, %v2876, 0
    %v3760 = vsel %vm3119, %v2877, 0
    %v3763 = vsel %vm3119, %v2878, 0
    %v3766 = vsel %vm3119, %v2879, 0
    %v3769 = vsel %vm3119, %v2880, 0
    %v3772 = vsel %vm3119, %v2881, 0
    %v3775 = vsel %vm3119, %v2882, 0
    %v3778 = vsel %vm3119, %v2883, 0
    %v3781 = vsel %vm3119, %v2884, 0
    %v3784 = vsel %vm3119, %v2885, 0
    %v3787 = vsel %vm3119, %v2886, 0
    %v3790 = vsel %vm3119, %v2887, 0
    %v3793 = vsel %vm3119, %v2888, 0
    %v3796 = vsel %vm3119, %v2889, 0
    %v3799 = vsel %vm3119, %v2890, 0
    %v3802 = vsel %vm3119, %v2891, 0
    %v3805 = vsel %vm3119, %v2892, 0
    %v3808 = vsel %vm3119, %v2893, 0
    %v3811 = vsel %vm3119, %v2894, 0
    %v3814 = vsel %vm3119, %v2895, 0
    %v3817 = vsel %vm3119, %v2896, 0
    %v3820 = vsel %vm3119, %v2897, 0
    %v3823 = vsel %vm3119, %v2898, 0
    %v3826 = vsel %vm3119, %v2899, 0
    %v3829 = vsel %vm3119, %v2900, 0
    %v3832 = vsel %vm3119, %v2901, 0
    %v3835 = vsel %vm3119, %v2902, 0
    %v3838 = vsel %vm3119, %v2903, 0
    %v3841 = vsel %vm3119, %v2904, 0
    %v3844 = vsel %vm3119, %v2905, 0
    %v3847 = vsel %vm3119, %v2906, 0
    %v3850 = vsel %vm3119, %v2907, 0
    %v3853 = vsel %vm3119, %v2908, 0
    %v3856 = vsel %vm3119, %v2909, 0
    %v3859 = vsel %vm3119, %v2910, 0
    %v3862 = vsel %vm3119, %v2911, 0
    %v3865 = vsel %vm3119, %v2912, 0
    %v3868 = vsel %vm3119, %v2913, 0
    %v3871 = vsel %vm3119, %v2914, 0
    %v3874 = vsel %vm3119, %v2915, 0
    %v3877 = vsel %vm3119, %v2916, 0
    %v3880 = vsel %vm3119, %v2917, 0
    %v3883 = vsel %vm3119, %v2918, 0
    %v3886 = vsel %vm3119, %v2919, 0
    %v3889 = vsel %vm3119, %v2920, 0
    %v3892 = vsel %vm3119, %v2921, 0
    %v3895 = vsel %vm3119, %v2922, 0
    %v3898 = vsel %vm3119, %v2923, 0
    %v3901 = vsel %vm3119, %v2924, 0
    %v3904 = vsel %vm3119, %v2925, 0
    %v3907 = vsel %vm3119, %v2926, 0
    %v3910 = vsel %vm3119, %v2927, 0
    %v3913 = vsel %vm3119, %v2928, 0
    %v3916 = vsel %vm3119, %v2929, 0
    %v3919 = vsel %vm3119, %v2930, 0
    %v3922 = vsel %vm3119, %v2931, 0
    %v3925 = vsel %vm3119, %v2932, 0
    %v3928 = vsel %vm3119, %v2933, 0
    %v3931 = vsel %vm3119, %v2934, 0
    %v3934 = vsel %vm3119, %v2935, 0
    %v3937 = vsel %vm3119, %v2936, 0
    %v3940 = vsel %vm3119, %v2937, 0
    %v3943 = vsel %vm3119, %v2938, 0
    %v3946 = vsel %vm3119, %v2939, 0
    %v3949 = vsel %vm3119, %v2940, 0
    %v3952 = vsel %vm3119, %v2941, 0
    %v3955 = vsel %vm3119, %v2942, 0
    %v3958 = vsel %vm3119, %v2943, 0
    %v3961 = vsel %vm3119, %v2944, 0
    %v3964 = vsel %vm3119, %v2945, 0
    %v3967 = vsel %vm3119, %v2946, 0
    %v3970 = vsel %vm3119, %v2947, 0
    %v3973 = vsel %vm3119, %v2948, 0
    %v3976 = vsel %vm3119, %v2949, 0
    %v3979 = vsel %vm3119, %v2950, 0
    %v3982 = vsel %vm3119, %v2951, 0
    %v3985 = vsel %vm3119, %v2952, 0
    %v3988 = vsel %vm3119, %v2953, 0
    %v3991 = vsel %vm3119, %v2954, 0
    %v3994 = vsel %vm3119, %v2955, 0
    %v3997 = vsel %vm3119, %v2956, 0
    %v4000 = vsel %vm3119, %v2957, 0
    %v4003 = vsel %vm3119, %v2958, 0
    %v4006 = vsel %vm3119, %v2959, 0
    %v4009 = vsel %vm3119, %v2960, 0
    %v4012 = vsel %vm3119, %v2961, 0
    %v4015 = vsel %vm3119, %v2962, 0
    %v4018 = vsel %vm3119, %v2963, 0
    %v4021 = vsel %vm3119, %v2964, 0
    %v4024 = vsel %vm3119, %v2965, 0
    %v4027 = vsel %vm3119, %v2966, 0
    %v4030 = vsel %vm3119, %v2967, 0
    %v4033 = vsel %vm3119, %v2968, 0
    %v4036 = vsel %vm3119, %v2969, 0
    %v4039 = vsel %vm3119, %v2970, 0
    %v4042 = vsel %vm3119, %v2971, 0
    %v4045 = vsel %vm3119, %v2972, 0
    %v4048 = vsel %vm3119, %v2973, 0
    %v4051 = vsel %vm3119, %v2974, 0
    %v4054 = vsel %vm3119, %v2975, 0
    %v4057 = vsel %vm3119, %v2976, 0
    %v4060 = vsel %vm3119, %v2977, 0
    %v4063 = vsel %vm3119, %v2978, 0
    %v4066 = vsel %vm3119, %v2979, 0
    %v4069 = vsel %vm3119, %v2980, 0
    %v4072 = vsel %vm3119, %v2981, 0
    %v4075 = vsel %vm3119, %v2982, 0
    %v4078 = vsel %vm3119, %v2983, 0
    %v4081 = vsel %vm3119, %v2984, 0
    %v4084 = vsel %vm3119, %v2985, 0
    %v4087 = vsel %vm3119, %v2986, 0
    %v4090 = vsel %vm3119, %v2987, 0
    %v4093 = vsel %vm3119, %v2988, 0
    %v4096 = vsel %vm3119, %v2989, 0
    %v4099 = vsel %vm3119, %v2990, 0
    %v4102 = vsel %vm3119, %v2991, 0
    %v4105 = vsel %vm3119, %v2992, 0
    %v4108 = vsel %vm3119, %v2993, 0
    %v4111 = vsel %vm3119, %v2994, 0
    %v4114 = vsel %vm3119, %v2995, 0
    %v4117 = vsel %vm3119, %v2996, 0
    %v4120 = vsel %vm3119, %v2997, 0
    %v4123 = vsel %vm3119, %v2998, 0
    %v4126 = vsel %vm3119, %v2999, 0
    %v4129 = vsel %vm3119, %v3000, 0
    %v4132 = vsel %vm3119, %v3001, 0
    %v4135 = vsel %vm3119, %v3002, 0
    %v4138 = vsel %vm3119, %v3003, 0
    %v4141 = vsel %vm3119, %v3004, 0
    %v4144 = vsel %vm3119, %v3005, 0
    %v4147 = vsel %vm3119, %v3006, 0
    %v4150 = vsel %vm3119, %v3007, 0
    %v4153 = vsel %vm3119, %v3008, 0
    %v4156 = vsel %vm3119, %v3009, 0
    %v4159 = vsel %vm3119, %v3010, 0
    %v4162 = vsel %vm3119, %v3011, 0
    %v4165 = vsel %vm3119, %v3012, 0
    %v4168 = vsel %vm3119, %v3013, 0
    %v4171 = vsel %vm3119, %v3014, 0
    %v4174 = vsel %vm3119, %v3015, 0
    %v4177 = vsel %vm3119, %v3016, 0
    %v4180 = vsel %vm3119, %v3017, 0
    %v4183 = vsel %vm3119, %v3018, 0
    %v4186 = vsel %vm3119, %v3019, 0
    %v4189 = vsel %vm3119, %v3020, 0
    %v4192 = vsel %vm3119, %v3021, 0
    %v4195 = vsel %vm3119, %v3022, 0
    %v4198 = vsel %vm3119, %v3023, 0
    %v4201 = vsel %vm3119, %v3024, 0
    %v4204 = vsel %vm3119, %v3025, 0
    %v4207 = vsel %vm3119, %v3026, 0
    %v4210 = vsel %vm3119, %v3027, 0
    %v4213 = vsel %vm3119, %v3028, 0
    %v4216 = vsel %vm3119, %v3029, 0
    %v4219 = vsel %vm3119, %v3030, 0
    %v4222 = vsel %vm3119, %v3031, 0
    %v4225 = vsel %vm3119, %v3032, 0
    %v4228 = vsel %vm3119, %v3033, 0
    %v4231 = vsel %vm3119, %v3034, 0
    %v4234 = vsel %vm3119, %v3035, 0
    %v4237 = vsel %vm3119, %v3036, 0
    %v4240 = vsel %vm3119, %v3037, 0
    %v4243 = vsel %vm3119, %v3038, 0
    %v4246 = vsel %vm3119, %v3039, 0
    %v4249 = vsel %vm3119, %v3040, 0
    %v4252 = vsel %vm3119, %v3041, 0
    %v4255 = vsel %vm3119, %v3042, 0
    %v4258 = vsel %vm3119, %v3043, 0
    %v4261 = vsel %vm3119, %v3044, 0
    %v4264 = vsel %vm3119, %v3045, 0
    %v4267 = vsel %vm3119, %v3046, 0
    %v4270 = vsel %vm3119, %v3047, 0
    %v4273 = vsel %vm3119, %v3048, 0
    %v4276 = vsel %vm3119, %v3049, 0
    %v4279 = vsel %vm3119, %v3050, 0
    %v4282 = vsel %vm3119, %v3051, 0
    %v4285 = vsel %vm3119, %v3052, 0
    %v4288 = vsel %vm3119, %v3053, 0
    %v4291 = vsel %vm3119, %v3054, 0
    %v4294 = vsel %vm3119, %v3055, 0
    %v4297 = vsel %vm3119, %v3056, 0
    %v4300 = vsel %vm3119, %v3057, 0
    %v4303 = vsel %vm3119, %v3058, 0
    %v4306 = vsel %vm3119, %v3059, 0
    %v4309 = vsel %vm3119, %v3060, 0
    %v4312 = vsel %vm3119, %v3061, 0
    %v4315 = vsel %vm3119, %v3062, 0
    %v4318 = vsel %vm3119, %v3063, 0
    %v4321 = vsel %vm3119, %v3064, 0
    %v4324 = vsel %vm3119, %v3065, 0
    %v4327 = vsel %vm3119, %v3066, 0
    %v4330 = vsel %vm3119, %v3067, 0
    %v4333 = vsel %vm3119, %v3068, 0
    %v4336 = vsel %vm3119, %v3069, 0
    %v4339 = vsel %vm3119, %v3070, 0
    %v4342 = vsel %vm3119, %v3071, 0
    %v4345 = vsel %vm3119, %v3072, 0
    %v4348 = vsel %vm3119, %v3073, 0
    %v4351 = vsel %vm3119, %v3074, 0
    %v4354 = vsel %vm3119, %v3075, 0
    %v4357 = vsel %vm3119, %v3076, 0
    %v4360 = vsel %vm3119, %v3077, 0
    %v4363 = vsel %vm3119, %v3078, 0
    %v4366 = vsel %vm3119, %v3079, 0
    %v4369 = vsel %vm3119, %v3080, 0
    %v4372 = vsel %vm3119, %v3081, 0
    %v4375 = vsel %vm3119, %v3082, 0
    %v4378 = vsel %vm3119, %v3083, 0
    %v4381 = vsel %vm3119, %v3084, 0
    %v4384 = vsel %vm3119, %v3085, 0
    %v4387 = vsel %vm3119, %v3086, 0
    %v4390 = vsel %vm3119, %v3087, 0
    %v4393 = vsel %vm3119, %v3088, 0
    %v4396 = vsel %vm3119, %v3089, 0
    %v4399 = vsel %vm3119, %v3090, 0
    %v4402 = vsel %vm3119, %v3091, 0
    %v4405 = vsel %vm3119, %v3092, 0
    %v4408 = vsel %vm3119, %v3093, 0
    %v4411 = vsel %vm3119, %v3094, 0
    %v4414 = vsel %vm3119, %v3095, 0
    %v4417 = vsel %vm3119, %v3096, 0
    %v4420 = vsel %vm3119, %v3097, 0
    %v4423 = vsel %vm3119, %v3098, 0
    %v4426 = vsel %vm3119, %v3099, 0
    %v4429 = vsel %vm3119, %v3100, 0
    %v4432 = vsel %vm3119, %v3101, 0
    %v4435 = vsel %vm3119, %v3102, 0
    %v4438 = vsel %vm3119, %v3103, 0
    %vm4440 = vcmask 1043456
    %v4442 = vsel %vm4440, %v3116, 0
    %4444 = vmatpush.bf16.msra.mxu0 0
    %4445 = vmatpush.bf16.msra.mxu0 0
    %4446 = vmatpush.bf16.msra.mxu0 0
    %4447 = vmatpush.bf16.msra.mxu0 0
    %4448 = vmatpush.bf16.msra.mxu0 0
    %4449 = vmatpush.bf16.msra.mxu0 %v4442
    %4450 = vmatpush.bf16.msra.mxu0 %v3115
    %4451 = vmatpush.bf16.msra.mxu0 %v3114
    %4452 = vmatmul.bf16.gmra.mxu0 %v3121
    %v4453 = vpop.f32.mrf.mxu0
    %v4454 = vadd.f32 0.0, %v4453
    %v4455 = vpop.f32.mrf.mxu0
    %v4456 = vadd.f32 0.0, %v4455
    %4457 = vmatmul.bf16.gmra.mxu0 %v3124
    %v4458 = vpop.f32.mrf.mxu0
    %v4459 = vadd.f32 0.0, %v4458
    %v4460 = vpop.f32.mrf.mxu0
    %v4461 = vadd.f32 0.0, %v4460
    %4462 = vmatmul.bf16.gmra.mxu0 %v3127
    %v4463 = vpop.f32.mrf.mxu0
    %v4464 = vadd.f32 0.0, %v4463
    %v4465 = vpop.f32.mrf.mxu0
    %v4466 = vadd.f32 0.0, %v4465
    %4467 = vmatmul.bf16.gmra.mxu0 %v3130
    %v4468 = vpop.f32.mrf.mxu0
    %v4469 = vadd.f32 0.0, %v4468
    %v4470 = vpop.f32.mrf.mxu0
    %v4471 = vadd.f32 0.0, %v4470
    %4472 = vmatmul.bf16.gmra.mxu0 %v3133
    %v4473 = vpop.f32.mrf.mxu0
    %v4474 = vadd.f32 0.0, %v4473
    %v4475 = vpop.f32.mrf.mxu0
    %v4476 = vadd.f32 0.0, %v4475
    %4477 = vmatmul.bf16.gmra.mxu0 %v3136
    %v4478 = vpop.f32.mrf.mxu0
    %v4479 = vadd.f32 0.0, %v4478
    %v4480 = vpop.f32.mrf.mxu0
    %v4481 = vadd.f32 0.0, %v4480
    %4482 = vmatmul.bf16.gmra.mxu0 %v3139
    %v4483 = vpop.f32.mrf.mxu0
    %v4484 = vadd.f32 0.0, %v4483
    %v4485 = vpop.f32.mrf.mxu0
    %v4486 = vadd.f32 0.0, %v4485
    %4487 = vmatmul.bf16.gmra.mxu0 %v3142
    %v4488 = vpop.f32.mrf.mxu0
    %v4489 = vadd.f32 0.0, %v4488
    %v4490 = vpop.f32.mrf.mxu0
    %v4491 = vadd.f32 0.0, %v4490
    %4492 = vmatmul.bf16.gmra.mxu0 %v3145
    %v4493 = vpop.f32.mrf.mxu0
    %v4494 = vadd.f32 0.0, %v4493
    %v4495 = vpop.f32.mrf.mxu0
    %v4496 = vadd.f32 0.0, %v4495
    %4497 = vmatmul.bf16.gmra.mxu0 %v3148
    %v4498 = vpop.f32.mrf.mxu0
    %v4499 = vadd.f32 0.0, %v4498
    %v4500 = vpop.f32.mrf.mxu0
    %v4501 = vadd.f32 0.0, %v4500
    %4502 = vmatmul.bf16.gmra.mxu0 %v3151
    %v4503 = vpop.f32.mrf.mxu0
    %v4504 = vadd.f32 0.0, %v4503
    %v4505 = vpop.f32.mrf.mxu0
    %v4506 = vadd.f32 0.0, %v4505
    %4507 = vmatmul.bf16.gmra.mxu0 %v3154
    %v4508 = vpop.f32.mrf.mxu0
    %v4509 = vadd.f32 0.0, %v4508
    %v4510 = vpop.f32.mrf.mxu0
    %v4511 = vadd.f32 0.0, %v4510
    %4512 = vmatmul.bf16.gmra.mxu0 %v3157
    %v4513 = vpop.f32.mrf.mxu0
    %v4514 = vadd.f32 0.0, %v4513
    %v4515 = vpop.f32.mrf.mxu0
    %v4516 = vadd.f32 0.0, %v4515
    %4517 = vmatmul.bf16.gmra.mxu0 %v3160
    %v4518 = vpop.f32.mrf.mxu0
    %v4519 = vadd.f32 0.0, %v4518
    %v4520 = vpop.f32.mrf.mxu0
    %v4521 = vadd.f32 0.0, %v4520
    %4522 = vmatmul.bf16.gmra.mxu0 %v3163
    %v4523 = vpop.f32.mrf.mxu0
    %v4524 = vadd.f32 0.0, %v4523
    %v4525 = vpop.f32.mrf.mxu0
    %v4526 = vadd.f32 0.0, %v4525
    %4527 = vmatmul.bf16.gmra.mxu0 %v3166
    %v4528 = vpop.f32.mrf.mxu0
    %v4529 = vadd.f32 0.0, %v4528
    %v4530 = vpop.f32.mrf.mxu0
    %v4531 = vadd.f32 0.0, %v4530
    %4532 = vmatmul.bf16.gmra.mxu0 %v3169
    %v4533 = vpop.f32.mrf.mxu0
    %v4534 = vadd.f32 0.0, %v4533
    %v4535 = vpop.f32.mrf.mxu0
    %v4536 = vadd.f32 0.0, %v4535
    %4537 = vmatmul.bf16.gmra.mxu0 %v3172
    %v4538 = vpop.f32.mrf.mxu0
    %v4539 = vadd.f32 0.0, %v4538
    %v4540 = vpop.f32.mrf.mxu0
    %v4541 = vadd.f32 0.0, %v4540
    %4542 = vmatmul.bf16.gmra.mxu0 %v3175
    %v4543 = vpop.f32.mrf.mxu0
    %v4544 = vadd.f32 0.0, %v4543
    %v4545 = vpop.f32.mrf.mxu0
    %v4546 = vadd.f32 0.0, %v4545
    %4547 = vmatmul.bf16.gmra.mxu0 %v3178
    %v4548 = vpop.f32.mrf.mxu0
    %v4549 = vadd.f32 0.0, %v4548
    %v4550 = vpop.f32.mrf.mxu0
    %v4551 = vadd.f32 0.0, %v4550
    %4552 = vmatmul.bf16.gmra.mxu0 %v3181
    %v4553 = vpop.f32.mrf.mxu0
    %v4554 = vadd.f32 0.0, %v4553
    %v4555 = vpop.f32.mrf.mxu0
    %v4556 = vadd.f32 0.0, %v4555
    %4557 = vmatmul.bf16.gmra.mxu0 %v3184
    %v4558 = vpop.f32.mrf.mxu0
    %v4559 = vadd.f32 0.0, %v4558
    %v4560 = vpop.f32.mrf.mxu0
    %v4561 = vadd.f32 0.0, %v4560
    %4562 = vmatmul.bf16.gmra.mxu0 %v3187
    %v4563 = vpop.f32.mrf.mxu0
    %v4564 = vadd.f32 0.0, %v4563
    %v4565 = vpop.f32.mrf.mxu0
    %v4566 = vadd.f32 0.0, %v4565
    %4567 = vmatmul.bf16.gmra.mxu0 %v3190
    %v4568 = vpop.f32.mrf.mxu0
    %v4569 = vadd.f32 0.0, %v4568
    %v4570 = vpop.f32.mrf.mxu0
    %v4571 = vadd.f32 0.0, %v4570
    %4572 = vmatmul.bf16.gmra.mxu0 %v3193
    %v4573 = vpop.f32.mrf.mxu0
    %v4574 = vadd.f32 0.0, %v4573
    %v4575 = vpop.f32.mrf.mxu0
    %v4576 = vadd.f32 0.0, %v4575
    %4577 = vmatmul.bf16.gmra.mxu0 %v3196
    %v4578 = vpop.f32.mrf.mxu0
    %v4579 = vadd.f32 0.0, %v4578
    %v4580 = vpop.f32.mrf.mxu0
    %v4581 = vadd.f32 0.0, %v4580
    %4582 = vmatmul.bf16.gmra.mxu0 %v3199
    %v4583 = vpop.f32.mrf.mxu0
    %v4584 = vadd.f32 0.0, %v4583
    %v4585 = vpop.f32.mrf.mxu0
    %v4586 = vadd.f32 0.0, %v4585
    %4587 = vmatmul.bf16.gmra.mxu0 %v3202
    %v4588 = vpop.f32.mrf.mxu0
    %v4589 = vadd.f32 0.0, %v4588
    %v4590 = vpop.f32.mrf.mxu0
    %v4591 = vadd.f32 0.0, %v4590
    %4592 = vmatmul.bf16.gmra.mxu0 %v3205
    %v4593 = vpop.f32.mrf.mxu0
    %v4594 = vadd.f32 0.0, %v4593
    %v4595 = vpop.f32.mrf.mxu0
    %v4596 = vadd.f32 0.0, %v4595
    %4597 = vmatmul.bf16.gmra.mxu0 %v3208
    %v4598 = vpop.f32.mrf.mxu0
    %v4599 = vadd.f32 0.0, %v4598
    %v4600 = vpop.f32.mrf.mxu0
    %v4601 = vadd.f32 0.0, %v4600
    %4602 = vmatmul.bf16.gmra.mxu0 %v3211
    %v4603 = vpop.f32.mrf.mxu0
    %v4604 = vadd.f32 0.0, %v4603
    %v4605 = vpop.f32.mrf.mxu0
    %v4606 = vadd.f32 0.0, %v4605
    %4607 = vmatmul.bf16.gmra.mxu0 %v3214
    %v4608 = vpop.f32.mrf.mxu0
    %v4609 = vadd.f32 0.0, %v4608
    %v4610 = vpop.f32.mrf.mxu0
    %v4611 = vadd.f32 0.0, %v4610
    %4612 = vmatmul.bf16.gmra.mxu0 %v3217
    %v4613 = vpop.f32.mrf.mxu0
    %v4614 = vadd.f32 0.0, %v4613
    %v4615 = vpop.f32.mrf.mxu0
    %v4616 = vadd.f32 0.0, %v4615
    %4617 = vmatmul.bf16.gmra.mxu0 %v3220
    %v4618 = vpop.f32.mrf.mxu0
    %v4619 = vadd.f32 0.0, %v4618
    %v4620 = vpop.f32.mrf.mxu0
    %v4621 = vadd.f32 0.0, %v4620
    %4622 = vmatmul.bf16.gmra.mxu0 %v3223
    %v4623 = vpop.f32.mrf.mxu0
    %v4624 = vadd.f32 0.0, %v4623
    %v4625 = vpop.f32.mrf.mxu0
    %v4626 = vadd.f32 0.0, %v4625
    %4627 = vmatmul.bf16.gmra.mxu0 %v3226
    %v4628 = vpop.f32.mrf.mxu0
    %v4629 = vadd.f32 0.0, %v4628
    %v4630 = vpop.f32.mrf.mxu0
    %v4631 = vadd.f32 0.0, %v4630
    %4632 = vmatmul.bf16.gmra.mxu0 %v3229
    %v4633 = vpop.f32.mrf.mxu0
    %v4634 = vadd.f32 0.0, %v4633
    %v4635 = vpop.f32.mrf.mxu0
    %v4636 = vadd.f32 0.0, %v4635
    %4637 = vmatmul.bf16.gmra.mxu0 %v3232
    %v4638 = vpop.f32.mrf.mxu0
    %v4639 = vadd.f32 0.0, %v4638
    %v4640 = vpop.f32.mrf.mxu0
    %v4641 = vadd.f32 0.0, %v4640
    %4642 = vmatmul.bf16.gmra.mxu0 %v3235
    %v4643 = vpop.f32.mrf.mxu0
    %v4644 = vadd.f32 0.0, %v4643
    %v4645 = vpop.f32.mrf.mxu0
    %v4646 = vadd.f32 0.0, %v4645
    %4647 = vmatmul.bf16.gmra.mxu0 %v3238
    %v4648 = vpop.f32.mrf.mxu0
    %v4649 = vadd.f32 0.0, %v4648
    %v4650 = vpop.f32.mrf.mxu0
    %v4651 = vadd.f32 0.0, %v4650
    %4652 = vmatmul.bf16.gmra.mxu0 %v3241
    %v4653 = vpop.f32.mrf.mxu0
    %v4654 = vadd.f32 0.0, %v4653
    %v4655 = vpop.f32.mrf.mxu0
    %v4656 = vadd.f32 0.0, %v4655
    %4657 = vmatmul.bf16.gmra.mxu0 %v3244
    %v4658 = vpop.f32.mrf.mxu0
    %v4659 = vadd.f32 0.0, %v4658
    %v4660 = vpop.f32.mrf.mxu0
    %v4661 = vadd.f32 0.0, %v4660
    %4662 = vmatmul.bf16.gmra.mxu0 %v3247
    %v4663 = vpop.f32.mrf.mxu0
    %v4664 = vadd.f32 0.0, %v4663
    %v4665 = vpop.f32.mrf.mxu0
    %v4666 = vadd.f32 0.0, %v4665
    %4667 = vmatmul.bf16.gmra.mxu0 %v3250
    %v4668 = vpop.f32.mrf.mxu0
    %v4669 = vadd.f32 0.0, %v4668
    %v4670 = vpop.f32.mrf.mxu0
    %v4671 = vadd.f32 0.0, %v4670
    %4672 = vmatmul.bf16.gmra.mxu0 %v3253
    %v4673 = vpop.f32.mrf.mxu0
    %v4674 = vadd.f32 0.0, %v4673
    %v4675 = vpop.f32.mrf.mxu0
    %v4676 = vadd.f32 0.0, %v4675
    %4677 = vmatmul.bf16.gmra.mxu0 %v3256
    %v4678 = vpop.f32.mrf.mxu0
    %v4679 = vadd.f32 0.0, %v4678
    %v4680 = vpop.f32.mrf.mxu0
    %v4681 = vadd.f32 0.0, %v4680
    %4682 = vmatmul.bf16.gmra.mxu0 %v3259
    %v4683 = vpop.f32.mrf.mxu0
    %v4684 = vadd.f32 0.0, %v4683
    %v4685 = vpop.f32.mrf.mxu0
    %v4686 = vadd.f32 0.0, %v4685
    %4687 = vmatmul.bf16.gmra.mxu0 %v3262
    %v4688 = vpop.f32.mrf.mxu0
    %v4689 = vadd.f32 0.0, %v4688
    %v4690 = vpop.f32.mrf.mxu0
    %v4691 = vadd.f32 0.0, %v4690
    %4692 = vmatmul.bf16.gmra.mxu0 %v3265
    %v4693 = vpop.f32.mrf.mxu0
    %v4694 = vadd.f32 0.0, %v4693
    %v4695 = vpop.f32.mrf.mxu0
    %v4696 = vadd.f32 0.0, %v4695
    %4697 = vmatmul.bf16.gmra.mxu0 %v3268
    %v4698 = vpop.f32.mrf.mxu0
    %v4699 = vadd.f32 0.0, %v4698
    %v4700 = vpop.f32.mrf.mxu0
    %v4701 = vadd.f32 0.0, %v4700
    %4702 = vmatmul.bf16.gmra.mxu0 %v3271
    %v4703 = vpop.f32.mrf.mxu0
    %v4704 = vadd.f32 0.0, %v4703
    %v4705 = vpop.f32.mrf.mxu0
    %v4706 = vadd.f32 0.0, %v4705
    %4707 = vmatmul.bf16.gmra.mxu0 %v3274
    %v4708 = vpop.f32.mrf.mxu0
    %v4709 = vadd.f32 0.0, %v4708
    %v4710 = vpop.f32.mrf.mxu0
    %v4711 = vadd.f32 0.0, %v4710
    %4712 = vmatmul.bf16.gmra.mxu0 %v3277
    %v4713 = vpop.f32.mrf.mxu0
    %v4714 = vadd.f32 0.0, %v4713
    %v4715 = vpop.f32.mrf.mxu0
    %v4716 = vadd.f32 0.0, %v4715
    %4717 = vmatmul.bf16.gmra.mxu0 %v3280
    %v4718 = vpop.f32.mrf.mxu0
    %v4719 = vadd.f32 0.0, %v4718
    %v4720 = vpop.f32.mrf.mxu0
    %v4721 = vadd.f32 0.0, %v4720
    %4722 = vmatmul.bf16.gmra.mxu0 %v3283
    %v4723 = vpop.f32.mrf.mxu0
    %v4724 = vadd.f32 0.0, %v4723
    %v4725 = vpop.f32.mrf.mxu0
    %v4726 = vadd.f32 0.0, %v4725
    %4727 = vmatmul.bf16.gmra.mxu0 %v3286
    %v4728 = vpop.f32.mrf.mxu0
    %v4729 = vadd.f32 0.0, %v4728
    %v4730 = vpop.f32.mrf.mxu0
    %v4731 = vadd.f32 0.0, %v4730
    %4732 = vmatmul.bf16.gmra.mxu0 %v3289
    %v4733 = vpop.f32.mrf.mxu0
    %v4734 = vadd.f32 0.0, %v4733
    %v4735 = vpop.f32.mrf.mxu0
    %v4736 = vadd.f32 0.0, %v4735
    %4737 = vmatmul.bf16.gmra.mxu0 %v3292
    %v4738 = vpop.f32.mrf.mxu0
    %v4739 = vadd.f32 0.0, %v4738
    %v4740 = vpop.f32.mrf.mxu0
    %v4741 = vadd.f32 0.0, %v4740
    %4742 = vmatmul.bf16.gmra.mxu0 %v3295
    %v4743 = vpop.f32.mrf.mxu0
    %v4744 = vadd.f32 0.0, %v4743
    %v4745 = vpop.f32.mrf.mxu0
    %v4746 = vadd.f32 0.0, %v4745
    %4747 = vmatmul.bf16.gmra.mxu0 %v3298
    %v4748 = vpop.f32.mrf.mxu0
    %v4749 = vadd.f32 0.0, %v4748
    %v4750 = vpop.f32.mrf.mxu0
    %v4751 = vadd.f32 0.0, %v4750
    %4752 = vmatmul.bf16.gmra.mxu0 %v3301
    %v4753 = vpop.f32.mrf.mxu0
    %v4754 = vadd.f32 0.0, %v4753
    %v4755 = vpop.f32.mrf.mxu0
    %v4756 = vadd.f32 0.0, %v4755
    %4757 = vmatmul.bf16.gmra.mxu0 %v3304
    %v4758 = vpop.f32.mrf.mxu0
    %v4759 = vadd.f32 0.0, %v4758
    %v4760 = vpop.f32.mrf.mxu0
    %v4761 = vadd.f32 0.0, %v4760
    %4762 = vmatmul.bf16.gmra.mxu0 %v3307
    %v4763 = vpop.f32.mrf.mxu0
    %v4764 = vadd.f32 0.0, %v4763
    %v4765 = vpop.f32.mrf.mxu0
    %v4766 = vadd.f32 0.0, %v4765
    %4767 = vmatmul.bf16.gmra.mxu0 %v3310
    %v4768 = vpop.f32.mrf.mxu0
    %v4769 = vadd.f32 0.0, %v4768
    %v4770 = vpop.f32.mrf.mxu0
    %v4771 = vadd.f32 0.0, %v4770
    %4772 = vmatmul.bf16.gmra.mxu0 %v3313
    %v4773 = vpop.f32.mrf.mxu0
    %v4774 = vadd.f32 0.0, %v4773
    %v4775 = vpop.f32.mrf.mxu0
    %v4776 = vadd.f32 0.0, %v4775
    %4777 = vmatmul.bf16.gmra.mxu0 %v3316
    %v4778 = vpop.f32.mrf.mxu0
    %v4779 = vadd.f32 0.0, %v4778
    %v4780 = vpop.f32.mrf.mxu0
    %v4781 = vadd.f32 0.0, %v4780
    %4782 = vmatmul.bf16.gmra.mxu0 %v3319
    %v4783 = vpop.f32.mrf.mxu0
    %v4784 = vadd.f32 0.0, %v4783
    %v4785 = vpop.f32.mrf.mxu0
    %v4786 = vadd.f32 0.0, %v4785
    %4787 = vmatmul.bf16.gmra.mxu0 %v3322
    %v4788 = vpop.f32.mrf.mxu0
    %v4789 = vadd.f32 0.0, %v4788
    %v4790 = vpop.f32.mrf.mxu0
    %v4791 = vadd.f32 0.0, %v4790
    %4792 = vmatmul.bf16.gmra.mxu0 %v3325
    %v4793 = vpop.f32.mrf.mxu0
    %v4794 = vadd.f32 0.0, %v4793
    %v4795 = vpop.f32.mrf.mxu0
    %v4796 = vadd.f32 0.0, %v4795
    %4797 = vmatmul.bf16.gmra.mxu0 %v3328
    %v4798 = vpop.f32.mrf.mxu0
    %v4799 = vadd.f32 0.0, %v4798
    %v4800 = vpop.f32.mrf.mxu0
    %v4801 = vadd.f32 0.0, %v4800
    %4802 = vmatmul.bf16.gmra.mxu0 %v3331
    %v4803 = vpop.f32.mrf.mxu0
    %v4804 = vadd.f32 0.0, %v4803
    %v4805 = vpop.f32.mrf.mxu0
    %v4806 = vadd.f32 0.0, %v4805
    %4807 = vmatmul.bf16.gmra.mxu0 %v3334
    %v4808 = vpop.f32.mrf.mxu0
    %v4809 = vadd.f32 0.0, %v4808
    %v4810 = vpop.f32.mrf.mxu0
    %v4811 = vadd.f32 0.0, %v4810
    %4812 = vmatmul.bf16.gmra.mxu0 %v3337
    %v4813 = vpop.f32.mrf.mxu0
    %v4814 = vadd.f32 0.0, %v4813
    %v4815 = vpop.f32.mrf.mxu0
    %v4816 = vadd.f32 0.0, %v4815
    %4817 = vmatmul.bf16.gmra.mxu0 %v3340
    %v4818 = vpop.f32.mrf.mxu0
    %v4819 = vadd.f32 0.0, %v4818
    %v4820 = vpop.f32.mrf.mxu0
    %v4821 = vadd.f32 0.0, %v4820
    %4822 = vmatmul.bf16.gmra.mxu0 %v3343
    %v4823 = vpop.f32.mrf.mxu0
    %v4824 = vadd.f32 0.0, %v4823
    %v4825 = vpop.f32.mrf.mxu0
    %v4826 = vadd.f32 0.0, %v4825
    %4827 = vmatmul.bf16.gmra.mxu0 %v3346
    %v4828 = vpop.f32.mrf.mxu0
    %v4829 = vadd.f32 0.0, %v4828
    %v4830 = vpop.f32.mrf.mxu0
    %v4831 = vadd.f32 0.0, %v4830
    %4832 = vmatmul.bf16.gmra.mxu0 %v3349
    %v4833 = vpop.f32.mrf.mxu0
    %v4834 = vadd.f32 0.0, %v4833
    %v4835 = vpop.f32.mrf.mxu0
    %v4836 = vadd.f32 0.0, %v4835
    %4837 = vmatmul.bf16.gmra.mxu0 %v3352
    %v4838 = vpop.f32.mrf.mxu0
    %v4839 = vadd.f32 0.0, %v4838
    %v4840 = vpop.f32.mrf.mxu0
    %v4841 = vadd.f32 0.0, %v4840
    %4842 = vmatmul.bf16.gmra.mxu0 %v3355
    %v4843 = vpop.f32.mrf.mxu0
    %v4844 = vadd.f32 0.0, %v4843
    %v4845 = vpop.f32.mrf.mxu0
    %v4846 = vadd.f32 0.0, %v4845
    %4847 = vmatmul.bf16.gmra.mxu0 %v3358
    %v4848 = vpop.f32.mrf.mxu0
    %v4849 = vadd.f32 0.0, %v4848
    %v4850 = vpop.f32.mrf.mxu0
    %v4851 = vadd.f32 0.0, %v4850
    %4852 = vmatmul.bf16.gmra.mxu0 %v3361
    %v4853 = vpop.f32.mrf.mxu0
    %v4854 = vadd.f32 0.0, %v4853
    %v4855 = vpop.f32.mrf.mxu0
    %v4856 = vadd.f32 0.0, %v4855
    %4857 = vmatmul.bf16.gmra.mxu0 %v3364
    %v4858 = vpop.f32.mrf.mxu0
    %v4859 = vadd.f32 0.0, %v4858
    %v4860 = vpop.f32.mrf.mxu0
    %v4861 = vadd.f32 0.0, %v4860
    %4862 = vmatmul.bf16.gmra.mxu0 %v3367
    %v4863 = vpop.f32.mrf.mxu0
    %v4864 = vadd.f32 0.0, %v4863
    %v4865 = vpop.f32.mrf.mxu0
    %v4866 = vadd.f32 0.0, %v4865
    %4867 = vmatmul.bf16.gmra.mxu0 %v3370
    %v4868 = vpop.f32.mrf.mxu0
    %v4869 = vadd.f32 0.0, %v4868
    %v4870 = vpop.f32.mrf.mxu0
    %v4871 = vadd.f32 0.0, %v4870
    %4872 = vmatmul.bf16.gmra.mxu0 %v3373
    %v4873 = vpop.f32.mrf.mxu0
    %v4874 = vadd.f32 0.0, %v4873
    %v4875 = vpop.f32.mrf.mxu0
    %v4876 = vadd.f32 0.0, %v4875
    %4877 = vmatmul.bf16.gmra.mxu0 %v3376
    %v4878 = vpop.f32.mrf.mxu0
    %v4879 = vadd.f32 0.0, %v4878
    %v4880 = vpop.f32.mrf.mxu0
    %v4881 = vadd.f32 0.0, %v4880
    %4882 = vmatmul.bf16.gmra.mxu0 %v3379
    %v4883 = vpop.f32.mrf.mxu0
    %v4884 = vadd.f32 0.0, %v4883
    %v4885 = vpop.f32.mrf.mxu0
    %v4886 = vadd.f32 0.0, %v4885
    %4887 = vmatmul.bf16.gmra.mxu0 %v3382
    %v4888 = vpop.f32.mrf.mxu0
    %v4889 = vadd.f32 0.0, %v4888
    %v4890 = vpop.f32.mrf.mxu0
    %v4891 = vadd.f32 0.0, %v4890
    %4892 = vmatmul.bf16.gmra.mxu0 %v3385
    %v4893 = vpop.f32.mrf.mxu0
    %v4894 = vadd.f32 0.0, %v4893
    %v4895 = vpop.f32.mrf.mxu0
    %v4896 = vadd.f32 0.0, %v4895
    %4897 = vmatmul.bf16.gmra.mxu0 %v3388
    %v4898 = vpop.f32.mrf.mxu0
    %v4899 = vadd.f32 0.0, %v4898
    %v4900 = vpop.f32.mrf.mxu0
    %v4901 = vadd.f32 0.0, %v4900
    %4902 = vmatmul.bf16.gmra.mxu0 %v3391
    %v4903 = vpop.f32.mrf.mxu0
    %v4904 = vadd.f32 0.0, %v4903
    %v4905 = vpop.f32.mrf.mxu0
    %v4906 = vadd.f32 0.0, %v4905
    %4907 = vmatmul.bf16.gmra.mxu0 %v3394
    %v4908 = vpop.f32.mrf.mxu0
    %v4909 = vadd.f32 0.0, %v4908
    %v4910 = vpop.f32.mrf.mxu0
    %v4911 = vadd.f32 0.0, %v4910
    %4912 = vmatmul.bf16.gmra.mxu0 %v3397
    %v4913 = vpop.f32.mrf.mxu0
    %v4914 = vadd.f32 0.0, %v4913
    %v4915 = vpop.f32.mrf.mxu0
    %v4916 = vadd.f32 0.0, %v4915
    %4917 = vmatmul.bf16.gmra.mxu0 %v3400
    %v4918 = vpop.f32.mrf.mxu0
    %v4919 = vadd.f32 0.0, %v4918
    %v4920 = vpop.f32.mrf.mxu0
    %v4921 = vadd.f32 0.0, %v4920
    %4922 = vmatmul.bf16.gmra.mxu0 %v3403
    %v4923 = vpop.f32.mrf.mxu0
    %v4924 = vadd.f32 0.0, %v4923
    %v4925 = vpop.f32.mrf.mxu0
    %v4926 = vadd.f32 0.0, %v4925
    %4927 = vmatmul.bf16.gmra.mxu0 %v3406
    %v4928 = vpop.f32.mrf.mxu0
    %v4929 = vadd.f32 0.0, %v4928
    %v4930 = vpop.f32.mrf.mxu0
    %v4931 = vadd.f32 0.0, %v4930
    %4932 = vmatmul.bf16.gmra.mxu0 %v3409
    %v4933 = vpop.f32.mrf.mxu0
    %v4934 = vadd.f32 0.0, %v4933
    %v4935 = vpop.f32.mrf.mxu0
    %v4936 = vadd.f32 0.0, %v4935
    %4937 = vmatmul.bf16.gmra.mxu0 %v3412
    %v4938 = vpop.f32.mrf.mxu0
    %v4939 = vadd.f32 0.0, %v4938
    %v4940 = vpop.f32.mrf.mxu0
    %v4941 = vadd.f32 0.0, %v4940
    %4942 = vmatmul.bf16.gmra.mxu0 %v3415
    %v4943 = vpop.f32.mrf.mxu0
    %v4944 = vadd.f32 0.0, %v4943
    %v4945 = vpop.f32.mrf.mxu0
    %v4946 = vadd.f32 0.0, %v4945
    %4947 = vmatmul.bf16.gmra.mxu0 %v3418
    %v4948 = vpop.f32.mrf.mxu0
    %v4949 = vadd.f32 0.0, %v4948
    %v4950 = vpop.f32.mrf.mxu0
    %v4951 = vadd.f32 0.0, %v4950
    %4952 = vmatmul.bf16.gmra.mxu0 %v3421
    %v4953 = vpop.f32.mrf.mxu0
    %v4954 = vadd.f32 0.0, %v4953
    %v4955 = vpop.f32.mrf.mxu0
    %v4956 = vadd.f32 0.0, %v4955
    %4957 = vmatmul.bf16.gmra.mxu0 %v3424
    %v4958 = vpop.f32.mrf.mxu0
    %v4959 = vadd.f32 0.0, %v4958
    %v4960 = vpop.f32.mrf.mxu0
    %v4961 = vadd.f32 0.0, %v4960
    %4962 = vmatmul.bf16.gmra.mxu0 %v3427
    %v4963 = vpop.f32.mrf.mxu0
    %v4964 = vadd.f32 0.0, %v4963
    %v4965 = vpop.f32.mrf.mxu0
    %v4966 = vadd.f32 0.0, %v4965
    %4967 = vmatmul.bf16.gmra.mxu0 %v3430
    %v4968 = vpop.f32.mrf.mxu0
    %v4969 = vadd.f32 0.0, %v4968
    %v4970 = vpop.f32.mrf.mxu0
    %v4971 = vadd.f32 0.0, %v4970
    %4972 = vmatmul.bf16.gmra.mxu0 %v3433
    %v4973 = vpop.f32.mrf.mxu0
    %v4974 = vadd.f32 0.0, %v4973
    %v4975 = vpop.f32.mrf.mxu0
    %v4976 = vadd.f32 0.0, %v4975
    %4977 = vmatmul.bf16.gmra.mxu0 %v3436
    %v4978 = vpop.f32.mrf.mxu0
    %v4979 = vadd.f32 0.0, %v4978
    %v4980 = vpop.f32.mrf.mxu0
    %v4981 = vadd.f32 0.0, %v4980
    %4982 = vmatmul.bf16.gmra.mxu0 %v3439
    %v4983 = vpop.f32.mrf.mxu0
    %v4984 = vadd.f32 0.0, %v4983
    %v4985 = vpop.f32.mrf.mxu0
    %v4986 = vadd.f32 0.0, %v4985
    %4987 = vmatmul.bf16.gmra.mxu0 %v3442
    %v4988 = vpop.f32.mrf.mxu0
    %v4989 = vadd.f32 0.0, %v4988
    %v4990 = vpop.f32.mrf.mxu0
    %v4991 = vadd.f32 0.0, %v4990
    %4992 = vmatmul.bf16.gmra.mxu0 %v3445
    %v4993 = vpop.f32.mrf.mxu0
    %v4994 = vadd.f32 0.0, %v4993
    %v4995 = vpop.f32.mrf.mxu0
    %v4996 = vadd.f32 0.0, %v4995
    %4997 = vmatmul.bf16.gmra.mxu0 %v3448
    %v4998 = vpop.f32.mrf.mxu0
    %v4999 = vadd.f32 0.0, %v4998
    %v5000 = vpop.f32.mrf.mxu0
    %v5001 = vadd.f32 0.0, %v5000
    %5002 = vmatmul.bf16.gmra.mxu0 %v3451
    %v5003 = vpop.f32.mrf.mxu0
    %v5004 = vadd.f32 0.0, %v5003
    %v5005 = vpop.f32.mrf.mxu0
    %v5006 = vadd.f32 0.0, %v5005
    %5007 = vmatmul.bf16.gmra.mxu0 %v3454
    %v5008 = vpop.f32.mrf.mxu0
    %v5009 = vadd.f32 0.0, %v5008
    %v5010 = vpop.f32.mrf.mxu0
    %v5011 = vadd.f32 0.0, %v5010
    %5012 = vmatmul.bf16.gmra.mxu0 %v3457
    %v5013 = vpop.f32.mrf.mxu0
    %v5014 = vadd.f32 0.0, %v5013
    %v5015 = vpop.f32.mrf.mxu0
    %v5016 = vadd.f32 0.0, %v5015
    %5017 = vmatmul.bf16.gmra.mxu0 %v3460
    %v5018 = vpop.f32.mrf.mxu0
    %v5019 = vadd.f32 0.0, %v5018
    %v5020 = vpop.f32.mrf.mxu0
    %v5021 = vadd.f32 0.0, %v5020
    %5022 = vmatmul.bf16.gmra.mxu0 %v3463
    %v5023 = vpop.f32.mrf.mxu0
    %v5024 = vadd.f32 0.0, %v5023
    %v5025 = vpop.f32.mrf.mxu0
    %v5026 = vadd.f32 0.0, %v5025
    %5027 = vmatmul.bf16.gmra.mxu0 %v3466
    %v5028 = vpop.f32.mrf.mxu0
    %v5029 = vadd.f32 0.0, %v5028
    %v5030 = vpop.f32.mrf.mxu0
    %v5031 = vadd.f32 0.0, %v5030
    %5032 = vmatmul.bf16.gmra.mxu0 %v3469
    %v5033 = vpop.f32.mrf.mxu0
    %v5034 = vadd.f32 0.0, %v5033
    %v5035 = vpop.f32.mrf.mxu0
    %v5036 = vadd.f32 0.0, %v5035
    %5037 = vmatmul.bf16.gmra.mxu0 %v3472
    %v5038 = vpop.f32.mrf.mxu0
    %v5039 = vadd.f32 0.0, %v5038
    %v5040 = vpop.f32.mrf.mxu0
    %v5041 = vadd.f32 0.0, %v5040
    %5042 = vmatmul.bf16.gmra.mxu0 %v3475
    %v5043 = vpop.f32.mrf.mxu0
    %v5044 = vadd.f32 0.0, %v5043
    %v5045 = vpop.f32.mrf.mxu0
    %v5046 = vadd.f32 0.0, %v5045
    %5047 = vmatmul.bf16.gmra.mxu0 %v3478
    %v5048 = vpop.f32.mrf.mxu0
    %v5049 = vadd.f32 0.0, %v5048
    %v5050 = vpop.f32.mrf.mxu0
    %v5051 = vadd.f32 0.0, %v5050
    %5052 = vmatmul.bf16.gmra.mxu0 %v3481
    %v5053 = vpop.f32.mrf.mxu0
    %v5054 = vadd.f32 0.0, %v5053
    %v5055 = vpop.f32.mrf.mxu0
    %v5056 = vadd.f32 0.0, %v5055
    %5057 = vmatmul.bf16.gmra.mxu0 %v3484
    %v5058 = vpop.f32.mrf.mxu0
    %v5059 = vadd.f32 0.0, %v5058
    %v5060 = vpop.f32.mrf.mxu0
    %v5061 = vadd.f32 0.0, %v5060
    %5062 = vmatmul.bf16.gmra.mxu0 %v3487
    %v5063 = vpop.f32.mrf.mxu0
    %v5064 = vadd.f32 0.0, %v5063
    %v5065 = vpop.f32.mrf.mxu0
    %v5066 = vadd.f32 0.0, %v5065
    %5067 = vmatmul.bf16.gmra.mxu0 %v3490
    %v5068 = vpop.f32.mrf.mxu0
    %v5069 = vadd.f32 0.0, %v5068
    %v5070 = vpop.f32.mrf.mxu0
    %v5071 = vadd.f32 0.0, %v5070
    %5072 = vmatmul.bf16.gmra.mxu0 %v3493
    %v5073 = vpop.f32.mrf.mxu0
    %v5074 = vadd.f32 0.0, %v5073
    %v5075 = vpop.f32.mrf.mxu0
    %v5076 = vadd.f32 0.0, %v5075
    %5077 = vmatmul.bf16.gmra.mxu0 %v3496
    %v5078 = vpop.f32.mrf.mxu0
    %v5079 = vadd.f32 0.0, %v5078
    %v5080 = vpop.f32.mrf.mxu0
    %v5081 = vadd.f32 0.0, %v5080
    %5082 = vmatmul.bf16.gmra.mxu0 %v3499
    %v5083 = vpop.f32.mrf.mxu0
    %v5084 = vadd.f32 0.0, %v5083
    %v5085 = vpop.f32.mrf.mxu0
    %v5086 = vadd.f32 0.0, %v5085
    %5087 = vmatmul.bf16.gmra.mxu0 %v3502
    %v5088 = vpop.f32.mrf.mxu0
    %v5089 = vadd.f32 0.0, %v5088
    %v5090 = vpop.f32.mrf.mxu0
    %v5091 = vadd.f32 0.0, %v5090
    %5092 = vmatmul.bf16.gmra.mxu0 %v3505
    %v5093 = vpop.f32.mrf.mxu0
    %v5094 = vadd.f32 0.0, %v5093
    %v5095 = vpop.f32.mrf.mxu0
    %v5096 = vadd.f32 0.0, %v5095
    %5097 = vmatmul.bf16.gmra.mxu0 %v3508
    %v5098 = vpop.f32.mrf.mxu0
    %v5099 = vadd.f32 0.0, %v5098
    %v5100 = vpop.f32.mrf.mxu0
    %v5101 = vadd.f32 0.0, %v5100
    %5102 = vmatmul.bf16.gmra.mxu0 %v3511
    %v5103 = vpop.f32.mrf.mxu0
    %v5104 = vadd.f32 0.0, %v5103
    %v5105 = vpop.f32.mrf.mxu0
    %v5106 = vadd.f32 0.0, %v5105
    %5107 = vmatmul.bf16.gmra.mxu0 %v3514
    %v5108 = vpop.f32.mrf.mxu0
    %v5109 = vadd.f32 0.0, %v5108
    %v5110 = vpop.f32.mrf.mxu0
    %v5111 = vadd.f32 0.0, %v5110
    %5112 = vmatmul.bf16.gmra.mxu0 %v3517
    %v5113 = vpop.f32.mrf.mxu0
    %v5114 = vadd.f32 0.0, %v5113
    %v5115 = vpop.f32.mrf.mxu0
    %v5116 = vadd.f32 0.0, %v5115
    %5117 = vmatmul.bf16.gmra.mxu0 %v3520
    %v5118 = vpop.f32.mrf.mxu0
    %v5119 = vadd.f32 0.0, %v5118
    %v5120 = vpop.f32.mrf.mxu0
    %v5121 = vadd.f32 0.0, %v5120
    %5122 = vmatmul.bf16.gmra.mxu0 %v3523
    %v5123 = vpop.f32.mrf.mxu0
    %v5124 = vadd.f32 0.0, %v5123
    %v5125 = vpop.f32.mrf.mxu0
    %v5126 = vadd.f32 0.0, %v5125
    %5127 = vmatmul.bf16.gmra.mxu0 %v3526
    %v5128 = vpop.f32.mrf.mxu0
    %v5129 = vadd.f32 0.0, %v5128
    %v5130 = vpop.f32.mrf.mxu0
    %v5131 = vadd.f32 0.0, %v5130
    %5132 = vmatmul.bf16.gmra.mxu0 %v3529
    %v5133 = vpop.f32.mrf.mxu0
    %v5134 = vadd.f32 0.0, %v5133
    %v5135 = vpop.f32.mrf.mxu0
    %v5136 = vadd.f32 0.0, %v5135
    %5137 = vmatmul.bf16.gmra.mxu0 %v3532
    %v5138 = vpop.f32.mrf.mxu0
    %v5139 = vadd.f32 0.0, %v5138
    %v5140 = vpop.f32.mrf.mxu0
    %v5141 = vadd.f32 0.0, %v5140
    %5142 = vmatmul.bf16.gmra.mxu0 %v3535
    %v5143 = vpop.f32.mrf.mxu0
    %v5144 = vadd.f32 0.0, %v5143
    %v5145 = vpop.f32.mrf.mxu0
    %v5146 = vadd.f32 0.0, %v5145
    %5147 = vmatmul.bf16.gmra.mxu0 %v3538
    %v5148 = vpop.f32.mrf.mxu0
    %v5149 = vadd.f32 0.0, %v5148
    %v5150 = vpop.f32.mrf.mxu0
    %v5151 = vadd.f32 0.0, %v5150
    %5152 = vmatmul.bf16.gmra.mxu0 %v3541
    %v5153 = vpop.f32.mrf.mxu0
    %v5154 = vadd.f32 0.0, %v5153
    %v5155 = vpop.f32.mrf.mxu0
    %v5156 = vadd.f32 0.0, %v5155
    %5157 = vmatmul.bf16.gmra.mxu0 %v3544
    %v5158 = vpop.f32.mrf.mxu0
    %v5159 = vadd.f32 0.0, %v5158
    %v5160 = vpop.f32.mrf.mxu0
    %v5161 = vadd.f32 0.0, %v5160
    %5162 = vmatmul.bf16.gmra.mxu0 %v3547
    %v5163 = vpop.f32.mrf.mxu0
    %v5164 = vadd.f32 0.0, %v5163
    %v5165 = vpop.f32.mrf.mxu0
    %v5166 = vadd.f32 0.0, %v5165
    %5167 = vmatmul.bf16.gmra.mxu0 %v3550
    %v5168 = vpop.f32.mrf.mxu0
    %v5169 = vadd.f32 0.0, %v5168
    %v5170 = vpop.f32.mrf.mxu0
    %v5171 = vadd.f32 0.0, %v5170
    %5172 = vmatmul.bf16.gmra.mxu0 %v3553
    %v5173 = vpop.f32.mrf.mxu0
    %v5174 = vadd.f32 0.0, %v5173
    %v5175 = vpop.f32.mrf.mxu0
    %v5176 = vadd.f32 0.0, %v5175
    %5177 = vmatmul.bf16.gmra.mxu0 %v3556
    %v5178 = vpop.f32.mrf.mxu0
    %v5179 = vadd.f32 0.0, %v5178
    %v5180 = vpop.f32.mrf.mxu0
    %v5181 = vadd.f32 0.0, %v5180
    %5182 = vmatmul.bf16.gmra.mxu0 %v3559
    %v5183 = vpop.f32.mrf.mxu0
    %v5184 = vadd.f32 0.0, %v5183
    %v5185 = vpop.f32.mrf.mxu0
    %v5186 = vadd.f32 0.0, %v5185
    %5187 = vmatmul.bf16.gmra.mxu0 %v3562
    %v5188 = vpop.f32.mrf.mxu0
    %v5189 = vadd.f32 0.0, %v5188
    %v5190 = vpop.f32.mrf.mxu0
    %v5191 = vadd.f32 0.0, %v5190
    %5192 = vmatmul.bf16.gmra.mxu0 %v3565
    %v5193 = vpop.f32.mrf.mxu0
    %v5194 = vadd.f32 0.0, %v5193
    %v5195 = vpop.f32.mrf.mxu0
    %v5196 = vadd.f32 0.0, %v5195
    %5197 = vmatmul.bf16.gmra.mxu0 %v3568
    %v5198 = vpop.f32.mrf.mxu0
    %v5199 = vadd.f32 0.0, %v5198
    %v5200 = vpop.f32.mrf.mxu0
    %v5201 = vadd.f32 0.0, %v5200
    %5202 = vmatmul.bf16.gmra.mxu0 %v3571
    %v5203 = vpop.f32.mrf.mxu0
    %v5204 = vadd.f32 0.0, %v5203
    %v5205 = vpop.f32.mrf.mxu0
    %v5206 = vadd.f32 0.0, %v5205
    %5207 = vmatmul.bf16.gmra.mxu0 %v3574
    %v5208 = vpop.f32.mrf.mxu0
    %v5209 = vadd.f32 0.0, %v5208
    %v5210 = vpop.f32.mrf.mxu0
    %v5211 = vadd.f32 0.0, %v5210
    %5212 = vmatmul.bf16.gmra.mxu0 %v3577
    %v5213 = vpop.f32.mrf.mxu0
    %v5214 = vadd.f32 0.0, %v5213
    %v5215 = vpop.f32.mrf.mxu0
    %v5216 = vadd.f32 0.0, %v5215
    %5217 = vmatmul.bf16.gmra.mxu0 %v3580
    %v5218 = vpop.f32.mrf.mxu0
    %v5219 = vadd.f32 0.0, %v5218
    %v5220 = vpop.f32.mrf.mxu0
    %v5221 = vadd.f32 0.0, %v5220
    %5222 = vmatmul.bf16.gmra.mxu0 %v3583
    %v5223 = vpop.f32.mrf.mxu0
    %v5224 = vadd.f32 0.0, %v5223
    %v5225 = vpop.f32.mrf.mxu0
    %v5226 = vadd.f32 0.0, %v5225
    %5227 = vmatmul.bf16.gmra.mxu0 %v3586
    %v5228 = vpop.f32.mrf.mxu0
    %v5229 = vadd.f32 0.0, %v5228
    %v5230 = vpop.f32.mrf.mxu0
    %v5231 = vadd.f32 0.0, %v5230
    %5232 = vmatmul.bf16.gmra.mxu0 %v3589
    %v5233 = vpop.f32.mrf.mxu0
    %v5234 = vadd.f32 0.0, %v5233
    %v5235 = vpop.f32.mrf.mxu0
    %v5236 = vadd.f32 0.0, %v5235
    %5237 = vmatmul.bf16.gmra.mxu0 %v3592
    %v5238 = vpop.f32.mrf.mxu0
    %v5239 = vadd.f32 0.0, %v5238
    %v5240 = vpop.f32.mrf.mxu0
    %v5241 = vadd.f32 0.0, %v5240
    %5242 = vmatmul.bf16.gmra.mxu0 %v3595
    %v5243 = vpop.f32.mrf.mxu0
    %v5244 = vadd.f32 0.0, %v5243
    %v5245 = vpop.f32.mrf.mxu0
    %v5246 = vadd.f32 0.0, %v5245
    %5247 = vmatmul.bf16.gmra.mxu0 %v3598
    %v5248 = vpop.f32.mrf.mxu0
    %v5249 = vadd.f32 0.0, %v5248
    %v5250 = vpop.f32.mrf.mxu0
    %v5251 = vadd.f32 0.0, %v5250
    %5252 = vmatmul.bf16.gmra.mxu0 %v3601
    %v5253 = vpop.f32.mrf.mxu0
    %v5254 = vadd.f32 0.0, %v5253
    %v5255 = vpop.f32.mrf.mxu0
    %v5256 = vadd.f32 0.0, %v5255
    %5257 = vmatmul.bf16.gmra.mxu0 %v3604
    %v5258 = vpop.f32.mrf.mxu0
    %v5259 = vadd.f32 0.0, %v5258
    %v5260 = vpop.f32.mrf.mxu0
    %v5261 = vadd.f32 0.0, %v5260
    %5262 = vmatmul.bf16.gmra.mxu0 %v3607
    %v5263 = vpop.f32.mrf.mxu0
    %v5264 = vadd.f32 0.0, %v5263
    %v5265 = vpop.f32.mrf.mxu0
    %v5266 = vadd.f32 0.0, %v5265
    %5267 = vmatmul.bf16.gmra.mxu0 %v3610
    %v5268 = vpop.f32.mrf.mxu0
    %v5269 = vadd.f32 0.0, %v5268
    %v5270 = vpop.f32.mrf.mxu0
    %v5271 = vadd.f32 0.0, %v5270
    %5272 = vmatmul.bf16.gmra.mxu0 %v3613
    %v5273 = vpop.f32.mrf.mxu0
    %v5274 = vadd.f32 0.0, %v5273
    %v5275 = vpop.f32.mrf.mxu0
    %v5276 = vadd.f32 0.0, %v5275
    %5277 = vmatmul.bf16.gmra.mxu0 %v3616
    %v5278 = vpop.f32.mrf.mxu0
    %v5279 = vadd.f32 0.0, %v5278
    %v5280 = vpop.f32.mrf.mxu0
    %v5281 = vadd.f32 0.0, %v5280
    %5282 = vmatmul.bf16.gmra.mxu0 %v3619
    %v5283 = vpop.f32.mrf.mxu0
    %v5284 = vadd.f32 0.0, %v5283
    %v5285 = vpop.f32.mrf.mxu0
    %v5286 = vadd.f32 0.0, %v5285
    %5287 = vmatmul.bf16.gmra.mxu0 %v3622
    %v5288 = vpop.f32.mrf.mxu0
    %v5289 = vadd.f32 0.0, %v5288
    %v5290 = vpop.f32.mrf.mxu0
    %v5291 = vadd.f32 0.0, %v5290
    %5292 = vmatmul.bf16.gmra.mxu0 %v3625
    %v5293 = vpop.f32.mrf.mxu0
    %v5294 = vadd.f32 0.0, %v5293
    %v5295 = vpop.f32.mrf.mxu0
    %v5296 = vadd.f32 0.0, %v5295
    %5297 = vmatmul.bf16.gmra.mxu0 %v3628
    %v5298 = vpop.f32.mrf.mxu0
    %v5299 = vadd.f32 0.0, %v5298
    %v5300 = vpop.f32.mrf.mxu0
    %v5301 = vadd.f32 0.0, %v5300
    %5302 = vmatmul.bf16.gmra.mxu0 %v3631
    %v5303 = vpop.f32.mrf.mxu0
    %v5304 = vadd.f32 0.0, %v5303
    %v5305 = vpop.f32.mrf.mxu0
    %v5306 = vadd.f32 0.0, %v5305
    %5307 = vmatmul.bf16.gmra.mxu0 %v3634
    %v5308 = vpop.f32.mrf.mxu0
    %v5309 = vadd.f32 0.0, %v5308
    %v5310 = vpop.f32.mrf.mxu0
    %v5311 = vadd.f32 0.0, %v5310
    %5312 = vmatmul.bf16.gmra.mxu0 %v3637
    %v5313 = vpop.f32.mrf.mxu0
    %v5314 = vadd.f32 0.0, %v5313
    %v5315 = vpop.f32.mrf.mxu0
    %v5316 = vadd.f32 0.0, %v5315
    %5317 = vmatmul.bf16.gmra.mxu0 %v3640
    %v5318 = vpop.f32.mrf.mxu0
    %v5319 = vadd.f32 0.0, %v5318
    %v5320 = vpop.f32.mrf.mxu0
    %v5321 = vadd.f32 0.0, %v5320
    %5322 = vmatmul.bf16.gmra.mxu0 %v3643
    %v5323 = vpop.f32.mrf.mxu0
    %v5324 = vadd.f32 0.0, %v5323
    %v5325 = vpop.f32.mrf.mxu0
    %v5326 = vadd.f32 0.0, %v5325
    %5327 = vmatmul.bf16.gmra.mxu0 %v3646
    %v5328 = vpop.f32.mrf.mxu0
    %v5329 = vadd.f32 0.0, %v5328
    %v5330 = vpop.f32.mrf.mxu0
    %v5331 = vadd.f32 0.0, %v5330
    %5332 = vmatmul.bf16.gmra.mxu0 %v3649
    %v5333 = vpop.f32.mrf.mxu0
    %v5334 = vadd.f32 0.0, %v5333
    %v5335 = vpop.f32.mrf.mxu0
    %v5336 = vadd.f32 0.0, %v5335
    %5337 = vmatmul.bf16.gmra.mxu0 %v3652
    %v5338 = vpop.f32.mrf.mxu0
    %v5339 = vadd.f32 0.0, %v5338
    %v5340 = vpop.f32.mrf.mxu0
    %v5341 = vadd.f32 0.0, %v5340
    %5342 = vmatmul.bf16.gmra.mxu0 %v3655
    %v5343 = vpop.f32.mrf.mxu0
    %v5344 = vadd.f32 0.0, %v5343
    %v5345 = vpop.f32.mrf.mxu0
    %v5346 = vadd.f32 0.0, %v5345
    %5347 = vmatmul.bf16.gmra.mxu0 %v3658
    %v5348 = vpop.f32.mrf.mxu0
    %v5349 = vadd.f32 0.0, %v5348
    %v5350 = vpop.f32.mrf.mxu0
    %v5351 = vadd.f32 0.0, %v5350
    %5352 = vmatmul.bf16.gmra.mxu0 %v3661
    %v5353 = vpop.f32.mrf.mxu0
    %v5354 = vadd.f32 0.0, %v5353
    %v5355 = vpop.f32.mrf.mxu0
    %v5356 = vadd.f32 0.0, %v5355
    %5357 = vmatmul.bf16.gmra.mxu0 %v3664
    %v5358 = vpop.f32.mrf.mxu0
    %v5359 = vadd.f32 0.0, %v5358
    %v5360 = vpop.f32.mrf.mxu0
    %v5361 = vadd.f32 0.0, %v5360
    %5362 = vmatmul.bf16.gmra.mxu0 %v3667
    %v5363 = vpop.f32.mrf.mxu0
    %v5364 = vadd.f32 0.0, %v5363
    %v5365 = vpop.f32.mrf.mxu0
    %v5366 = vadd.f32 0.0, %v5365
    %5367 = vmatmul.bf16.gmra.mxu0 %v3670
    %v5368 = vpop.f32.mrf.mxu0
    %v5369 = vadd.f32 0.0, %v5368
    %v5370 = vpop.f32.mrf.mxu0
    %v5371 = vadd.f32 0.0, %v5370
    %5372 = vmatmul.bf16.gmra.mxu0 %v3673
    %v5373 = vpop.f32.mrf.mxu0
    %v5374 = vadd.f32 0.0, %v5373
    %v5375 = vpop.f32.mrf.mxu0
    %v5376 = vadd.f32 0.0, %v5375
    %5377 = vmatmul.bf16.gmra.mxu0 %v3676
    %v5378 = vpop.f32.mrf.mxu0
    %v5379 = vadd.f32 0.0, %v5378
    %v5380 = vpop.f32.mrf.mxu0
    %v5381 = vadd.f32 0.0, %v5380
    %5382 = vmatmul.bf16.gmra.mxu0 %v3679
    %v5383 = vpop.f32.mrf.mxu0
    %v5384 = vadd.f32 0.0, %v5383
    %v5385 = vpop.f32.mrf.mxu0
    %v5386 = vadd.f32 0.0, %v5385
    %5387 = vmatmul.bf16.gmra.mxu0 %v3682
    %v5388 = vpop.f32.mrf.mxu0
    %v5389 = vadd.f32 0.0, %v5388
    %v5390 = vpop.f32.mrf.mxu0
    %v5391 = vadd.f32 0.0, %v5390
    %5392 = vmatmul.bf16.gmra.mxu0 %v3685
    %v5393 = vpop.f32.mrf.mxu0
    %v5394 = vadd.f32 0.0, %v5393
    %v5395 = vpop.f32.mrf.mxu0
    %v5396 = vadd.f32 0.0, %v5395
    %5397 = vmatmul.bf16.gmra.mxu0 %v3688
    %v5398 = vpop.f32.mrf.mxu0
    %v5399 = vadd.f32 0.0, %v5398
    %v5400 = vpop.f32.mrf.mxu0
    %v5401 = vadd.f32 0.0, %v5400
    %5402 = vmatmul.bf16.gmra.mxu0 %v3691
    %v5403 = vpop.f32.mrf.mxu0
    %v5404 = vadd.f32 0.0, %v5403
    %v5405 = vpop.f32.mrf.mxu0
    %v5406 = vadd.f32 0.0, %v5405
    %5407 = vmatmul.bf16.gmra.mxu0 %v3694
    %v5408 = vpop.f32.mrf.mxu0
    %v5409 = vadd.f32 0.0, %v5408
    %v5410 = vpop.f32.mrf.mxu0
    %v5411 = vadd.f32 0.0, %v5410
    %5412 = vmatmul.bf16.gmra.mxu0 %v3697
    %v5413 = vpop.f32.mrf.mxu0
    %v5414 = vadd.f32 0.0, %v5413
    %v5415 = vpop.f32.mrf.mxu0
    %v5416 = vadd.f32 0.0, %v5415
    %5417 = vmatmul.bf16.gmra.mxu0 %v3700
    %v5418 = vpop.f32.mrf.mxu0
    %v5419 = vadd.f32 0.0, %v5418
    %v5420 = vpop.f32.mrf.mxu0
    %v5421 = vadd.f32 0.0, %v5420
    %5422 = vmatmul.bf16.gmra.mxu0 %v3703
    %v5423 = vpop.f32.mrf.mxu0
    %v5424 = vadd.f32 0.0, %v5423
    %v5425 = vpop.f32.mrf.mxu0
    %v5426 = vadd.f32 0.0, %v5425
    %5427 = vmatmul.bf16.gmra.mxu0 %v3706
    %v5428 = vpop.f32.mrf.mxu0
    %v5429 = vadd.f32 0.0, %v5428
    %v5430 = vpop.f32.mrf.mxu0
    %v5431 = vadd.f32 0.0, %v5430
    %5432 = vmatmul.bf16.gmra.mxu0 %v3709
    %v5433 = vpop.f32.mrf.mxu0
    %v5434 = vadd.f32 0.0, %v5433
    %v5435 = vpop.f32.mrf.mxu0
    %v5436 = vadd.f32 0.0, %v5435
    %5437 = vmatmul.bf16.gmra.mxu0 %v3712
    %v5438 = vpop.f32.mrf.mxu0
    %v5439 = vadd.f32 0.0, %v5438
    %v5440 = vpop.f32.mrf.mxu0
    %v5441 = vadd.f32 0.0, %v5440
    %5442 = vmatmul.bf16.gmra.mxu0 %v3715
    %v5443 = vpop.f32.mrf.mxu0
    %v5444 = vadd.f32 0.0, %v5443
    %v5445 = vpop.f32.mrf.mxu0
    %v5446 = vadd.f32 0.0, %v5445
    %5447 = vmatmul.bf16.gmra.mxu0 %v3718
    %v5448 = vpop.f32.mrf.mxu0
    %v5449 = vadd.f32 0.0, %v5448
    %v5450 = vpop.f32.mrf.mxu0
    %v5451 = vadd.f32 0.0, %v5450
    %5452 = vmatmul.bf16.gmra.mxu0 %v3721
    %v5453 = vpop.f32.mrf.mxu0
    %v5454 = vadd.f32 0.0, %v5453
    %v5455 = vpop.f32.mrf.mxu0
    %v5456 = vadd.f32 0.0, %v5455
    %5457 = vmatmul.bf16.gmra.mxu0 %v3724
    %v5458 = vpop.f32.mrf.mxu0
    %v5459 = vadd.f32 0.0, %v5458
    %v5460 = vpop.f32.mrf.mxu0
    %v5461 = vadd.f32 0.0, %v5460
    %5462 = vmatmul.bf16.gmra.mxu0 %v3727
    %v5463 = vpop.f32.mrf.mxu0
    %v5464 = vadd.f32 0.0, %v5463
    %v5465 = vpop.f32.mrf.mxu0
    %v5466 = vadd.f32 0.0, %v5465
    %5467 = vmatmul.bf16.gmra.mxu0 %v3730
    %v5468 = vpop.f32.mrf.mxu0
    %v5469 = vadd.f32 0.0, %v5468
    %v5470 = vpop.f32.mrf.mxu0
    %v5471 = vadd.f32 0.0, %v5470
    %5472 = vmatmul.bf16.gmra.mxu0 %v3733
    %v5473 = vpop.f32.mrf.mxu0
    %v5474 = vadd.f32 0.0, %v5473
    %v5475 = vpop.f32.mrf.mxu0
    %v5476 = vadd.f32 0.0, %v5475
    %5477 = vmatmul.bf16.gmra.mxu0 %v3736
    %v5478 = vpop.f32.mrf.mxu0
    %v5479 = vadd.f32 0.0, %v5478
    %v5480 = vpop.f32.mrf.mxu0
    %v5481 = vadd.f32 0.0, %v5480
    %5482 = vmatmul.bf16.gmra.mxu0 %v3739
    %v5483 = vpop.f32.mrf.mxu0
    %v5484 = vadd.f32 0.0, %v5483
    %v5485 = vpop.f32.mrf.mxu0
    %v5486 = vadd.f32 0.0, %v5485
    %5487 = vmatmul.bf16.gmra.mxu0 %v3742
    %v5488 = vpop.f32.mrf.mxu0
    %v5489 = vadd.f32 0.0, %v5488
    %v5490 = vpop.f32.mrf.mxu0
    %v5491 = vadd.f32 0.0, %v5490
    %5492 = vmatmul.bf16.gmra.mxu0 %v3745
    %v5493 = vpop.f32.mrf.mxu0
    %v5494 = vadd.f32 0.0, %v5493
    %v5495 = vpop.f32.mrf.mxu0
    %v5496 = vadd.f32 0.0, %v5495
    %5497 = vmatmul.bf16.gmra.mxu0 %v3748
    %v5498 = vpop.f32.mrf.mxu0
    %v5499 = vadd.f32 0.0, %v5498
    %v5500 = vpop.f32.mrf.mxu0
    %v5501 = vadd.f32 0.0, %v5500
    %5502 = vmatmul.bf16.gmra.mxu0 %v3751
    %v5503 = vpop.f32.mrf.mxu0
    %v5504 = vadd.f32 0.0, %v5503
    %v5505 = vpop.f32.mrf.mxu0
    %v5506 = vadd.f32 0.0, %v5505
    %5507 = vmatmul.bf16.gmra.mxu0 %v3754
    %v5508 = vpop.f32.mrf.mxu0
    %v5509 = vadd.f32 0.0, %v5508
    %v5510 = vpop.f32.mrf.mxu0
    %v5511 = vadd.f32 0.0, %v5510
    %5512 = vmatmul.bf16.gmra.mxu0 %v3757
    %v5513 = vpop.f32.mrf.mxu0
    %v5514 = vadd.f32 0.0, %v5513
    %v5515 = vpop.f32.mrf.mxu0
    %v5516 = vadd.f32 0.0, %v5515
    %5517 = vmatmul.bf16.gmra.mxu0 %v3760
    %v5518 = vpop.f32.mrf.mxu0
    %v5519 = vadd.f32 0.0, %v5518
    %v5520 = vpop.f32.mrf.mxu0
    %v5521 = vadd.f32 0.0, %v5520
    %5522 = vmatmul.bf16.gmra.mxu0 %v3763
    %v5523 = vpop.f32.mrf.mxu0
    %v5524 = vadd.f32 0.0, %v5523
    %v5525 = vpop.f32.mrf.mxu0
    %v5526 = vadd.f32 0.0, %v5525
    %5527 = vmatmul.bf16.gmra.mxu0 %v3766
    %v5528 = vpop.f32.mrf.mxu0
    %v5529 = vadd.f32 0.0, %v5528
    %v5530 = vpop.f32.mrf.mxu0
    %v5531 = vadd.f32 0.0, %v5530
    %5532 = vmatmul.bf16.gmra.mxu0 %v3769
    %v5533 = vpop.f32.mrf.mxu0
    %v5534 = vadd.f32 0.0, %v5533
    %v5535 = vpop.f32.mrf.mxu0
    %v5536 = vadd.f32 0.0, %v5535
    %5537 = vmatmul.bf16.gmra.mxu0 %v3772
    %v5538 = vpop.f32.mrf.mxu0
    %v5539 = vadd.f32 0.0, %v5538
    %v5540 = vpop.f32.mrf.mxu0
    %v5541 = vadd.f32 0.0, %v5540
    %5542 = vmatmul.bf16.gmra.mxu0 %v3775
    %v5543 = vpop.f32.mrf.mxu0
    %v5544 = vadd.f32 0.0, %v5543
    %v5545 = vpop.f32.mrf.mxu0
    %v5546 = vadd.f32 0.0, %v5545
    %5547 = vmatmul.bf16.gmra.mxu0 %v3778
    %v5548 = vpop.f32.mrf.mxu0
    %v5549 = vadd.f32 0.0, %v5548
    %v5550 = vpop.f32.mrf.mxu0
    %v5551 = vadd.f32 0.0, %v5550
    %5552 = vmatmul.bf16.gmra.mxu0 %v3781
    %v5553 = vpop.f32.mrf.mxu0
    %v5554 = vadd.f32 0.0, %v5553
    %v5555 = vpop.f32.mrf.mxu0
    %v5556 = vadd.f32 0.0, %v5555
    %5557 = vmatmul.bf16.gmra.mxu0 %v3784
    %v5558 = vpop.f32.mrf.mxu0
    %v5559 = vadd.f32 0.0, %v5558
    %v5560 = vpop.f32.mrf.mxu0
    %v5561 = vadd.f32 0.0, %v5560
    %5562 = vmatmul.bf16.gmra.mxu0 %v3787
    %v5563 = vpop.f32.mrf.mxu0
    %v5564 = vadd.f32 0.0, %v5563
    %v5565 = vpop.f32.mrf.mxu0
    %v5566 = vadd.f32 0.0, %v5565
    %5567 = vmatmul.bf16.gmra.mxu0 %v3790
    %v5568 = vpop.f32.mrf.mxu0
    %v5569 = vadd.f32 0.0, %v5568
    %v5570 = vpop.f32.mrf.mxu0
    %v5571 = vadd.f32 0.0, %v5570
    %5572 = vmatmul.bf16.gmra.mxu0 %v3793
    %v5573 = vpop.f32.mrf.mxu0
    %v5574 = vadd.f32 0.0, %v5573
    %v5575 = vpop.f32.mrf.mxu0
    %v5576 = vadd.f32 0.0, %v5575
    %5577 = vmatmul.bf16.gmra.mxu0 %v3796
    %v5578 = vpop.f32.mrf.mxu0
    %v5579 = vadd.f32 0.0, %v5578
    %v5580 = vpop.f32.mrf.mxu0
    %v5581 = vadd.f32 0.0, %v5580
    %5582 = vmatmul.bf16.gmra.mxu0 %v3799
    %v5583 = vpop.f32.mrf.mxu0
    %v5584 = vadd.f32 0.0, %v5583
    %v5585 = vpop.f32.mrf.mxu0
    %v5586 = vadd.f32 0.0, %v5585
    %5587 = vmatmul.bf16.gmra.mxu0 %v3802
    %v5588 = vpop.f32.mrf.mxu0
    %v5589 = vadd.f32 0.0, %v5588
    %v5590 = vpop.f32.mrf.mxu0
    %v5591 = vadd.f32 0.0, %v5590
    %5592 = vmatmul.bf16.gmra.mxu0 %v3805
    %v5593 = vpop.f32.mrf.mxu0
    %v5594 = vadd.f32 0.0, %v5593
    %v5595 = vpop.f32.mrf.mxu0
    %v5596 = vadd.f32 0.0, %v5595
    %5597 = vmatmul.bf16.gmra.mxu0 %v3808
    %v5598 = vpop.f32.mrf.mxu0
    %v5599 = vadd.f32 0.0, %v5598
    %v5600 = vpop.f32.mrf.mxu0
    %v5601 = vadd.f32 0.0, %v5600
    %5602 = vmatmul.bf16.gmra.mxu0 %v3811
    %v5603 = vpop.f32.mrf.mxu0
    %v5604 = vadd.f32 0.0, %v5603
    %v5605 = vpop.f32.mrf.mxu0
    %v5606 = vadd.f32 0.0, %v5605
    %5607 = vmatmul.bf16.gmra.mxu0 %v3814
    %v5608 = vpop.f32.mrf.mxu0
    %v5609 = vadd.f32 0.0, %v5608
    %v5610 = vpop.f32.mrf.mxu0
    %v5611 = vadd.f32 0.0, %v5610
    %5612 = vmatmul.bf16.gmra.mxu0 %v3817
    %v5613 = vpop.f32.mrf.mxu0
    %v5614 = vadd.f32 0.0, %v5613
    %v5615 = vpop.f32.mrf.mxu0
    %v5616 = vadd.f32 0.0, %v5615
    %5617 = vmatmul.bf16.gmra.mxu0 %v3820
    %v5618 = vpop.f32.mrf.mxu0
    %v5619 = vadd.f32 0.0, %v5618
    %v5620 = vpop.f32.mrf.mxu0
    %v5621 = vadd.f32 0.0, %v5620
    %5622 = vmatmul.bf16.gmra.mxu0 %v3823
    %v5623 = vpop.f32.mrf.mxu0
    %v5624 = vadd.f32 0.0, %v5623
    %v5625 = vpop.f32.mrf.mxu0
    %v5626 = vadd.f32 0.0, %v5625
    %5627 = vmatmul.bf16.gmra.mxu0 %v3826
    %v5628 = vpop.f32.mrf.mxu0
    %v5629 = vadd.f32 0.0, %v5628
    %v5630 = vpop.f32.mrf.mxu0
    %v5631 = vadd.f32 0.0, %v5630
    %5632 = vmatmul.bf16.gmra.mxu0 %v3829
    %v5633 = vpop.f32.mrf.mxu0
    %v5634 = vadd.f32 0.0, %v5633
    %v5635 = vpop.f32.mrf.mxu0
    %v5636 = vadd.f32 0.0, %v5635
    %5637 = vmatmul.bf16.gmra.mxu0 %v3832
    %v5638 = vpop.f32.mrf.mxu0
    %v5639 = vadd.f32 0.0, %v5638
    %v5640 = vpop.f32.mrf.mxu0
    %v5641 = vadd.f32 0.0, %v5640
    %5642 = vmatmul.bf16.gmra.mxu0 %v3835
    %v5643 = vpop.f32.mrf.mxu0
    %v5644 = vadd.f32 0.0, %v5643
    %v5645 = vpop.f32.mrf.mxu0
    %v5646 = vadd.f32 0.0, %v5645
    %5647 = vmatmul.bf16.gmra.mxu0 %v3838
    %v5648 = vpop.f32.mrf.mxu0
    %v5649 = vadd.f32 0.0, %v5648
    %v5650 = vpop.f32.mrf.mxu0
    %v5651 = vadd.f32 0.0, %v5650
    %5652 = vmatmul.bf16.gmra.mxu0 %v3841
    %v5653 = vpop.f32.mrf.mxu0
    %v5654 = vadd.f32 0.0, %v5653
    %v5655 = vpop.f32.mrf.mxu0
    %v5656 = vadd.f32 0.0, %v5655
    %5657 = vmatmul.bf16.gmra.mxu0 %v3844
    %v5658 = vpop.f32.mrf.mxu0
    %v5659 = vadd.f32 0.0, %v5658
    %v5660 = vpop.f32.mrf.mxu0
    %v5661 = vadd.f32 0.0, %v5660
    %5662 = vmatmul.bf16.gmra.mxu0 %v3847
    %v5663 = vpop.f32.mrf.mxu0
    %v5664 = vadd.f32 0.0, %v5663
    %v5665 = vpop.f32.mrf.mxu0
    %v5666 = vadd.f32 0.0, %v5665
    %5667 = vmatmul.bf16.gmra.mxu0 %v3850
    %v5668 = vpop.f32.mrf.mxu0
    %v5669 = vadd.f32 0.0, %v5668
    %v5670 = vpop.f32.mrf.mxu0
    %v5671 = vadd.f32 0.0, %v5670
    %5672 = vmatmul.bf16.gmra.mxu0 %v3853
    %v5673 = vpop.f32.mrf.mxu0
    %v5674 = vadd.f32 0.0, %v5673
    %v5675 = vpop.f32.mrf.mxu0
    %v5676 = vadd.f32 0.0, %v5675
    %5677 = vmatmul.bf16.gmra.mxu0 %v3856
    %v5678 = vpop.f32.mrf.mxu0
    %v5679 = vadd.f32 0.0, %v5678
    %v5680 = vpop.f32.mrf.mxu0
    %v5681 = vadd.f32 0.0, %v5680
    %5682 = vmatmul.bf16.gmra.mxu0 %v3859
    %v5683 = vpop.f32.mrf.mxu0
    %v5684 = vadd.f32 0.0, %v5683
    %v5685 = vpop.f32.mrf.mxu0
    %v5686 = vadd.f32 0.0, %v5685
    %5687 = vmatmul.bf16.gmra.mxu0 %v3862
    %v5688 = vpop.f32.mrf.mxu0
    %v5689 = vadd.f32 0.0, %v5688
    %v5690 = vpop.f32.mrf.mxu0
    %v5691 = vadd.f32 0.0, %v5690
    %5692 = vmatmul.bf16.gmra.mxu0 %v3865
    %v5693 = vpop.f32.mrf.mxu0
    %v5694 = vadd.f32 0.0, %v5693
    %v5695 = vpop.f32.mrf.mxu0
    %v5696 = vadd.f32 0.0, %v5695
    %5697 = vmatmul.bf16.gmra.mxu0 %v3868
    %v5698 = vpop.f32.mrf.mxu0
    %v5699 = vadd.f32 0.0, %v5698
    %v5700 = vpop.f32.mrf.mxu0
    %v5701 = vadd.f32 0.0, %v5700
    %5702 = vmatmul.bf16.gmra.mxu0 %v3871
    %v5703 = vpop.f32.mrf.mxu0
    %v5704 = vadd.f32 0.0, %v5703
    %v5705 = vpop.f32.mrf.mxu0
    %v5706 = vadd.f32 0.0, %v5705
    %5707 = vmatmul.bf16.gmra.mxu0 %v3874
    %v5708 = vpop.f32.mrf.mxu0
    %v5709 = vadd.f32 0.0, %v5708
    %v5710 = vpop.f32.mrf.mxu0
    %v5711 = vadd.f32 0.0, %v5710
    %5712 = vmatmul.bf16.gmra.mxu0 %v3877
    %v5713 = vpop.f32.mrf.mxu0
    %v5714 = vadd.f32 0.0, %v5713
    %v5715 = vpop.f32.mrf.mxu0
    %v5716 = vadd.f32 0.0, %v5715
    %5717 = vmatmul.bf16.gmra.mxu0 %v3880
    %v5718 = vpop.f32.mrf.mxu0
    %v5719 = vadd.f32 0.0, %v5718
    %v5720 = vpop.f32.mrf.mxu0
    %v5721 = vadd.f32 0.0, %v5720
    %5722 = vmatmul.bf16.gmra.mxu0 %v3883
    %v5723 = vpop.f32.mrf.mxu0
    %v5724 = vadd.f32 0.0, %v5723
    %v5725 = vpop.f32.mrf.mxu0
    %v5726 = vadd.f32 0.0, %v5725
    %5727 = vmatmul.bf16.gmra.mxu0 %v3886
    %v5728 = vpop.f32.mrf.mxu0
    %v5729 = vadd.f32 0.0, %v5728
    %v5730 = vpop.f32.mrf.mxu0
    %v5731 = vadd.f32 0.0, %v5730
    %5732 = vmatmul.bf16.gmra.mxu0 %v3889
    %v5733 = vpop.f32.mrf.mxu0
    %v5734 = vadd.f32 0.0, %v5733
    %v5735 = vpop.f32.mrf.mxu0
    %v5736 = vadd.f32 0.0, %v5735
    %5737 = vmatmul.bf16.gmra.mxu0 %v3892
    %v5738 = vpop.f32.mrf.mxu0
    %v5739 = vadd.f32 0.0, %v5738
    %v5740 = vpop.f32.mrf.mxu0
    %v5741 = vadd.f32 0.0, %v5740
    %5742 = vmatmul.bf16.gmra.mxu0 %v3895
    %v5743 = vpop.f32.mrf.mxu0
    %v5744 = vadd.f32 0.0, %v5743
    %v5745 = vpop.f32.mrf.mxu0
    %v5746 = vadd.f32 0.0, %v5745
    %5747 = vmatmul.bf16.gmra.mxu0 %v3898
    %v5748 = vpop.f32.mrf.mxu0
    %v5749 = vadd.f32 0.0, %v5748
    %v5750 = vpop.f32.mrf.mxu0
    %v5751 = vadd.f32 0.0, %v5750
    %5752 = vmatmul.bf16.gmra.mxu0 %v3901
    %v5753 = vpop.f32.mrf.mxu0
    %v5754 = vadd.f32 0.0, %v5753
    %v5755 = vpop.f32.mrf.mxu0
    %v5756 = vadd.f32 0.0, %v5755
    %5757 = vmatmul.bf16.gmra.mxu0 %v3904
    %v5758 = vpop.f32.mrf.mxu0
    %v5759 = vadd.f32 0.0, %v5758
    %v5760 = vpop.f32.mrf.mxu0
    %v5761 = vadd.f32 0.0, %v5760
    %5762 = vmatmul.bf16.gmra.mxu0 %v3907
    %v5763 = vpop.f32.mrf.mxu0
    %v5764 = vadd.f32 0.0, %v5763
    %v5765 = vpop.f32.mrf.mxu0
    %v5766 = vadd.f32 0.0, %v5765
    %5767 = vmatmul.bf16.gmra.mxu0 %v3910
    %v5768 = vpop.f32.mrf.mxu0
    %v5769 = vadd.f32 0.0, %v5768
    %v5770 = vpop.f32.mrf.mxu0
    %v5771 = vadd.f32 0.0, %v5770
    %5772 = vmatmul.bf16.gmra.mxu0 %v3913
    %v5773 = vpop.f32.mrf.mxu0
    %v5774 = vadd.f32 0.0, %v5773
    %v5775 = vpop.f32.mrf.mxu0
    %v5776 = vadd.f32 0.0, %v5775
    %5777 = vmatmul.bf16.gmra.mxu0 %v3916
    %v5778 = vpop.f32.mrf.mxu0
    %v5779 = vadd.f32 0.0, %v5778
    %v5780 = vpop.f32.mrf.mxu0
    %v5781 = vadd.f32 0.0, %v5780
    %5782 = vmatmul.bf16.gmra.mxu0 %v3919
    %v5783 = vpop.f32.mrf.mxu0
    %v5784 = vadd.f32 0.0, %v5783
    %v5785 = vpop.f32.mrf.mxu0
    %v5786 = vadd.f32 0.0, %v5785
    %5787 = vmatmul.bf16.gmra.mxu0 %v3922
    %v5788 = vpop.f32.mrf.mxu0
    %v5789 = vadd.f32 0.0, %v5788
    %v5790 = vpop.f32.mrf.mxu0
    %v5791 = vadd.f32 0.0, %v5790
    %5792 = vmatmul.bf16.gmra.mxu0 %v3925
    %v5793 = vpop.f32.mrf.mxu0
    %v5794 = vadd.f32 0.0, %v5793
    %v5795 = vpop.f32.mrf.mxu0
    %v5796 = vadd.f32 0.0, %v5795
    %5797 = vmatmul.bf16.gmra.mxu0 %v3928
    %v5798 = vpop.f32.mrf.mxu0
    %v5799 = vadd.f32 0.0, %v5798
    %v5800 = vpop.f32.mrf.mxu0
    %v5801 = vadd.f32 0.0, %v5800
    %5802 = vmatmul.bf16.gmra.mxu0 %v3931
    %v5803 = vpop.f32.mrf.mxu0
    %v5804 = vadd.f32 0.0, %v5803
    %v5805 = vpop.f32.mrf.mxu0
    %v5806 = vadd.f32 0.0, %v5805
    %5807 = vmatmul.bf16.gmra.mxu0 %v3934
    %v5808 = vpop.f32.mrf.mxu0
    %v5809 = vadd.f32 0.0, %v5808
    %v5810 = vpop.f32.mrf.mxu0
    %v5811 = vadd.f32 0.0, %v5810
    %5812 = vmatmul.bf16.gmra.mxu0 %v3937
    %v5813 = vpop.f32.mrf.mxu0
    %v5814 = vadd.f32 0.0, %v5813
    %v5815 = vpop.f32.mrf.mxu0
    %v5816 = vadd.f32 0.0, %v5815
    %5817 = vmatmul.bf16.gmra.mxu0 %v3940
    %v5818 = vpop.f32.mrf.mxu0
    %v5819 = vadd.f32 0.0, %v5818
    %v5820 = vpop.f32.mrf.mxu0
    %v5821 = vadd.f32 0.0, %v5820
    %5822 = vmatmul.bf16.gmra.mxu0 %v3943
    %v5823 = vpop.f32.mrf.mxu0
    %v5824 = vadd.f32 0.0, %v5823
    %v5825 = vpop.f32.mrf.mxu0
    %v5826 = vadd.f32 0.0, %v5825
    %5827 = vmatmul.bf16.gmra.mxu0 %v3946
    %v5828 = vpop.f32.mrf.mxu0
    %v5829 = vadd.f32 0.0, %v5828
    %v5830 = vpop.f32.mrf.mxu0
    %v5831 = vadd.f32 0.0, %v5830
    %5832 = vmatmul.bf16.gmra.mxu0 %v3949
    %v5833 = vpop.f32.mrf.mxu0
    %v5834 = vadd.f32 0.0, %v5833
    %v5835 = vpop.f32.mrf.mxu0
    %v5836 = vadd.f32 0.0, %v5835
    %5837 = vmatmul.bf16.gmra.mxu0 %v3952
    %v5838 = vpop.f32.mrf.mxu0
    %v5839 = vadd.f32 0.0, %v5838
    %v5840 = vpop.f32.mrf.mxu0
    %v5841 = vadd.f32 0.0, %v5840
    %5842 = vmatmul.bf16.gmra.mxu0 %v3955
    %v5843 = vpop.f32.mrf.mxu0
    %v5844 = vadd.f32 0.0, %v5843
    %v5845 = vpop.f32.mrf.mxu0
    %v5846 = vadd.f32 0.0, %v5845
    %5847 = vmatmul.bf16.gmra.mxu0 %v3958
    %v5848 = vpop.f32.mrf.mxu0
    %v5849 = vadd.f32 0.0, %v5848
    %v5850 = vpop.f32.mrf.mxu0
    %v5851 = vadd.f32 0.0, %v5850
    %5852 = vmatmul.bf16.gmra.mxu0 %v3961
    %v5853 = vpop.f32.mrf.mxu0
    %v5854 = vadd.f32 0.0, %v5853
    %v5855 = vpop.f32.mrf.mxu0
    %v5856 = vadd.f32 0.0, %v5855
    %5857 = vmatmul.bf16.gmra.mxu0 %v3964
    %v5858 = vpop.f32.mrf.mxu0
    %v5859 = vadd.f32 0.0, %v5858
    %v5860 = vpop.f32.mrf.mxu0
    %v5861 = vadd.f32 0.0, %v5860
    %5862 = vmatmul.bf16.gmra.mxu0 %v3967
    %v5863 = vpop.f32.mrf.mxu0
    %v5864 = vadd.f32 0.0, %v5863
    %v5865 = vpop.f32.mrf.mxu0
    %v5866 = vadd.f32 0.0, %v5865
    %5867 = vmatmul.bf16.gmra.mxu0 %v3970
    %v5868 = vpop.f32.mrf.mxu0
    %v5869 = vadd.f32 0.0, %v5868
    %v5870 = vpop.f32.mrf.mxu0
    %v5871 = vadd.f32 0.0, %v5870
    %5872 = vmatmul.bf16.gmra.mxu0 %v3973
    %v5873 = vpop.f32.mrf.mxu0
    %v5874 = vadd.f32 0.0, %v5873
    %v5875 = vpop.f32.mrf.mxu0
    %v5876 = vadd.f32 0.0, %v5875
    %5877 = vmatmul.bf16.gmra.mxu0 %v3976
    %v5878 = vpop.f32.mrf.mxu0
    %v5879 = vadd.f32 0.0, %v5878
    %v5880 = vpop.f32.mrf.mxu0
    %v5881 = vadd.f32 0.0, %v5880
    %5882 = vmatmul.bf16.gmra.mxu0 %v3979
    %v5883 = vpop.f32.mrf.mxu0
    %v5884 = vadd.f32 0.0, %v5883
    %v5885 = vpop.f32.mrf.mxu0
    %v5886 = vadd.f32 0.0, %v5885
    %5887 = vmatmul.bf16.gmra.mxu0 %v3982
    %v5888 = vpop.f32.mrf.mxu0
    %v5889 = vadd.f32 0.0, %v5888
    %v5890 = vpop.f32.mrf.mxu0
    %v5891 = vadd.f32 0.0, %v5890
    %5892 = vmatmul.bf16.gmra.mxu0 %v3985
    %v5893 = vpop.f32.mrf.mxu0
    %v5894 = vadd.f32 0.0, %v5893
    %v5895 = vpop.f32.mrf.mxu0
    %v5896 = vadd.f32 0.0, %v5895
    %5897 = vmatmul.bf16.gmra.mxu0 %v3988
    %v5898 = vpop.f32.mrf.mxu0
    %v5899 = vadd.f32 0.0, %v5898
    %v5900 = vpop.f32.mrf.mxu0
    %v5901 = vadd.f32 0.0, %v5900
    %5902 = vmatmul.bf16.gmra.mxu0 %v3991
    %v5903 = vpop.f32.mrf.mxu0
    %v5904 = vadd.f32 0.0, %v5903
    %v5905 = vpop.f32.mrf.mxu0
    %v5906 = vadd.f32 0.0, %v5905
    %5907 = vmatmul.bf16.gmra.mxu0 %v3994
    %v5908 = vpop.f32.mrf.mxu0
    %v5909 = vadd.f32 0.0, %v5908
    %v5910 = vpop.f32.mrf.mxu0
    %v5911 = vadd.f32 0.0, %v5910
    %5912 = vmatmul.bf16.gmra.mxu0 %v3997
    %v5913 = vpop.f32.mrf.mxu0
    %v5914 = vadd.f32 0.0, %v5913
    %v5915 = vpop.f32.mrf.mxu0
    %v5916 = vadd.f32 0.0, %v5915
    %5917 = vmatmul.bf16.gmra.mxu0 %v4000
    %v5918 = vpop.f32.mrf.mxu0
    %v5919 = vadd.f32 0.0, %v5918
    %v5920 = vpop.f32.mrf.mxu0
    %v5921 = vadd.f32 0.0, %v5920
    %5922 = vmatmul.bf16.gmra.mxu0 %v4003
    %v5923 = vpop.f32.mrf.mxu0
    %v5924 = vadd.f32 0.0, %v5923
    %v5925 = vpop.f32.mrf.mxu0
    %v5926 = vadd.f32 0.0, %v5925
    %5927 = vmatmul.bf16.gmra.mxu0 %v4006
    %v5928 = vpop.f32.mrf.mxu0
    %v5929 = vadd.f32 0.0, %v5928
    %v5930 = vpop.f32.mrf.mxu0
    %v5931 = vadd.f32 0.0, %v5930
    %5932 = vmatmul.bf16.gmra.mxu0 %v4009
    %v5933 = vpop.f32.mrf.mxu0
    %v5934 = vadd.f32 0.0, %v5933
    %v5935 = vpop.f32.mrf.mxu0
    %v5936 = vadd.f32 0.0, %v5935
    %5937 = vmatmul.bf16.gmra.mxu0 %v4012
    %v5938 = vpop.f32.mrf.mxu0
    %v5939 = vadd.f32 0.0, %v5938
    %v5940 = vpop.f32.mrf.mxu0
    %v5941 = vadd.f32 0.0, %v5940
    %5942 = vmatmul.bf16.gmra.mxu0 %v4015
    %v5943 = vpop.f32.mrf.mxu0
    %v5944 = vadd.f32 0.0, %v5943
    %v5945 = vpop.f32.mrf.mxu0
    %v5946 = vadd.f32 0.0, %v5945
    %5947 = vmatmul.bf16.gmra.mxu0 %v4018
    %v5948 = vpop.f32.mrf.mxu0
    %v5949 = vadd.f32 0.0, %v5948
    %v5950 = vpop.f32.mrf.mxu0
    %v5951 = vadd.f32 0.0, %v5950
    %5952 = vmatmul.bf16.gmra.mxu0 %v4021
    %v5953 = vpop.f32.mrf.mxu0
    %v5954 = vadd.f32 0.0, %v5953
    %v5955 = vpop.f32.mrf.mxu0
    %v5956 = vadd.f32 0.0, %v5955
    %5957 = vmatmul.bf16.gmra.mxu0 %v4024
    %v5958 = vpop.f32.mrf.mxu0
    %v5959 = vadd.f32 0.0, %v5958
    %v5960 = vpop.f32.mrf.mxu0
    %v5961 = vadd.f32 0.0, %v5960
    %5962 = vmatmul.bf16.gmra.mxu0 %v4027
    %v5963 = vpop.f32.mrf.mxu0
    %v5964 = vadd.f32 0.0, %v5963
    %v5965 = vpop.f32.mrf.mxu0
    %v5966 = vadd.f32 0.0, %v5965
    %5967 = vmatmul.bf16.gmra.mxu0 %v4030
    %v5968 = vpop.f32.mrf.mxu0
    %v5969 = vadd.f32 0.0, %v5968
    %v5970 = vpop.f32.mrf.mxu0
    %v5971 = vadd.f32 0.0, %v5970
    %5972 = vmatmul.bf16.gmra.mxu0 %v4033
    %v5973 = vpop.f32.mrf.mxu0
    %v5974 = vadd.f32 0.0, %v5973
    %v5975 = vpop.f32.mrf.mxu0
    %v5976 = vadd.f32 0.0, %v5975
    %5977 = vmatmul.bf16.gmra.mxu0 %v4036
    %v5978 = vpop.f32.mrf.mxu0
    %v5979 = vadd.f32 0.0, %v5978
    %v5980 = vpop.f32.mrf.mxu0
    %v5981 = vadd.f32 0.0, %v5980
    %5982 = vmatmul.bf16.gmra.mxu0 %v4039
    %v5983 = vpop.f32.mrf.mxu0
    %v5984 = vadd.f32 0.0, %v5983
    %v5985 = vpop.f32.mrf.mxu0
    %v5986 = vadd.f32 0.0, %v5985
    %5987 = vmatmul.bf16.gmra.mxu0 %v4042
    %v5988 = vpop.f32.mrf.mxu0
    %v5989 = vadd.f32 0.0, %v5988
    %v5990 = vpop.f32.mrf.mxu0
    %v5991 = vadd.f32 0.0, %v5990
    %5992 = vmatmul.bf16.gmra.mxu0 %v4045
    %v5993 = vpop.f32.mrf.mxu0
    %v5994 = vadd.f32 0.0, %v5993
    %v5995 = vpop.f32.mrf.mxu0
    %v5996 = vadd.f32 0.0, %v5995
    %5997 = vmatmul.bf16.gmra.mxu0 %v4048
    %v5998 = vpop.f32.mrf.mxu0
    %v5999 = vadd.f32 0.0, %v5998
    %v6000 = vpop.f32.mrf.mxu0
    %v6001 = vadd.f32 0.0, %v6000
    %6002 = vmatmul.bf16.gmra.mxu0 %v4051
    %v6003 = vpop.f32.mrf.mxu0
    %v6004 = vadd.f32 0.0, %v6003
    %v6005 = vpop.f32.mrf.mxu0
    %v6006 = vadd.f32 0.0, %v6005
    %6007 = vmatmul.bf16.gmra.mxu0 %v4054
    %v6008 = vpop.f32.mrf.mxu0
    %v6009 = vadd.f32 0.0, %v6008
    %v6010 = vpop.f32.mrf.mxu0
    %v6011 = vadd.f32 0.0, %v6010
    %6012 = vmatmul.bf16.gmra.mxu0 %v4057
    %v6013 = vpop.f32.mrf.mxu0
    %v6014 = vadd.f32 0.0, %v6013
    %v6015 = vpop.f32.mrf.mxu0
    %v6016 = vadd.f32 0.0, %v6015
    %6017 = vmatmul.bf16.gmra.mxu0 %v4060
    %v6018 = vpop.f32.mrf.mxu0
    %v6019 = vadd.f32 0.0, %v6018
    %v6020 = vpop.f32.mrf.mxu0
    %v6021 = vadd.f32 0.0, %v6020
    %6022 = vmatmul.bf16.gmra.mxu0 %v4063
    %v6023 = vpop.f32.mrf.mxu0
    %v6024 = vadd.f32 0.0, %v6023
    %v6025 = vpop.f32.mrf.mxu0
    %v6026 = vadd.f32 0.0, %v6025
    %6027 = vmatmul.bf16.gmra.mxu0 %v4066
    %v6028 = vpop.f32.mrf.mxu0
    %v6029 = vadd.f32 0.0, %v6028
    %v6030 = vpop.f32.mrf.mxu0
    %v6031 = vadd.f32 0.0, %v6030
    %6032 = vmatmul.bf16.gmra.mxu0 %v4069
    %v6033 = vpop.f32.mrf.mxu0
    %v6034 = vadd.f32 0.0, %v6033
    %v6035 = vpop.f32.mrf.mxu0
    %v6036 = vadd.f32 0.0, %v6035
    %6037 = vmatmul.bf16.gmra.mxu0 %v4072
    %v6038 = vpop.f32.mrf.mxu0
    %v6039 = vadd.f32 0.0, %v6038
    %v6040 = vpop.f32.mrf.mxu0
    %v6041 = vadd.f32 0.0, %v6040
    %6042 = vmatmul.bf16.gmra.mxu0 %v4075
    %v6043 = vpop.f32.mrf.mxu0
    %v6044 = vadd.f32 0.0, %v6043
    %v6045 = vpop.f32.mrf.mxu0
    %v6046 = vadd.f32 0.0, %v6045
    %6047 = vmatmul.bf16.gmra.mxu0 %v4078
    %v6048 = vpop.f32.mrf.mxu0
    %v6049 = vadd.f32 0.0, %v6048
    %v6050 = vpop.f32.mrf.mxu0
    %v6051 = vadd.f32 0.0, %v6050
    %6052 = vmatmul.bf16.gmra.mxu0 %v4081
    %v6053 = vpop.f32.mrf.mxu0
    %v6054 = vadd.f32 0.0, %v6053
    %v6055 = vpop.f32.mrf.mxu0
    %v6056 = vadd.f32 0.0, %v6055
    %6057 = vmatmul.bf16.gmra.mxu0 %v4084
    %v6058 = vpop.f32.mrf.mxu0
    %v6059 = vadd.f32 0.0, %v6058
    %v6060 = vpop.f32.mrf.mxu0
    %v6061 = vadd.f32 0.0, %v6060
    %6062 = vmatmul.bf16.gmra.mxu0 %v4087
    %v6063 = vpop.f32.mrf.mxu0
    %v6064 = vadd.f32 0.0, %v6063
    %v6065 = vpop.f32.mrf.mxu0
    %v6066 = vadd.f32 0.0, %v6065
    %6067 = vmatmul.bf16.gmra.mxu0 %v4090
    %v6068 = vpop.f32.mrf.mxu0
    %v6069 = vadd.f32 0.0, %v6068
    %v6070 = vpop.f32.mrf.mxu0
    %v6071 = vadd.f32 0.0, %v6070
    %6072 = vmatmul.bf16.gmra.mxu0 %v4093
    %v6073 = vpop.f32.mrf.mxu0
    %v6074 = vadd.f32 0.0, %v6073
    %v6075 = vpop.f32.mrf.mxu0
    %v6076 = vadd.f32 0.0, %v6075
    %6077 = vmatmul.bf16.gmra.mxu0 %v4096
    %v6078 = vpop.f32.mrf.mxu0
    %v6079 = vadd.f32 0.0, %v6078
    %v6080 = vpop.f32.mrf.mxu0
    %v6081 = vadd.f32 0.0, %v6080
    %6082 = vmatmul.bf16.gmra.mxu0 %v4099
    %v6083 = vpop.f32.mrf.mxu0
    %v6084 = vadd.f32 0.0, %v6083
    %v6085 = vpop.f32.mrf.mxu0
    %v6086 = vadd.f32 0.0, %v6085
    %6087 = vmatmul.bf16.gmra.mxu0 %v4102
    %v6088 = vpop.f32.mrf.mxu0
    %v6089 = vadd.f32 0.0, %v6088
    %v6090 = vpop.f32.mrf.mxu0
    %v6091 = vadd.f32 0.0, %v6090
    %6092 = vmatmul.bf16.gmra.mxu0 %v4105
    %v6093 = vpop.f32.mrf.mxu0
    %v6094 = vadd.f32 0.0, %v6093
    %v6095 = vpop.f32.mrf.mxu0
    %v6096 = vadd.f32 0.0, %v6095
    %6097 = vmatmul.bf16.gmra.mxu0 %v4108
    %v6098 = vpop.f32.mrf.mxu0
    %v6099 = vadd.f32 0.0, %v6098
    %v6100 = vpop.f32.mrf.mxu0
    %v6101 = vadd.f32 0.0, %v6100
    %6102 = vmatmul.bf16.gmra.mxu0 %v4111
    %v6103 = vpop.f32.mrf.mxu0
    %v6104 = vadd.f32 0.0, %v6103
    %v6105 = vpop.f32.mrf.mxu0
    %v6106 = vadd.f32 0.0, %v6105
    %6107 = vmatmul.bf16.gmra.mxu0 %v4114
    %v6108 = vpop.f32.mrf.mxu0
    %v6109 = vadd.f32 0.0, %v6108
    %v6110 = vpop.f32.mrf.mxu0
    %v6111 = vadd.f32 0.0, %v6110
    %6112 = vmatmul.bf16.gmra.mxu0 %v4117
    %v6113 = vpop.f32.mrf.mxu0
    %v6114 = vadd.f32 0.0, %v6113
    %v6115 = vpop.f32.mrf.mxu0
    %v6116 = vadd.f32 0.0, %v6115
    %6117 = vmatmul.bf16.gmra.mxu0 %v4120
    %v6118 = vpop.f32.mrf.mxu0
    %v6119 = vadd.f32 0.0, %v6118
    %v6120 = vpop.f32.mrf.mxu0
    %v6121 = vadd.f32 0.0, %v6120
    %6122 = vmatmul.bf16.gmra.mxu0 %v4123
    %v6123 = vpop.f32.mrf.mxu0
    %v6124 = vadd.f32 0.0, %v6123
    %v6125 = vpop.f32.mrf.mxu0
    %v6126 = vadd.f32 0.0, %v6125
    %6127 = vmatmul.bf16.gmra.mxu0 %v4126
    %v6128 = vpop.f32.mrf.mxu0
    %v6129 = vadd.f32 0.0, %v6128
    %v6130 = vpop.f32.mrf.mxu0
    %v6131 = vadd.f32 0.0, %v6130
    %6132 = vmatmul.bf16.gmra.mxu0 %v4129
    %v6133 = vpop.f32.mrf.mxu0
    %v6134 = vadd.f32 0.0, %v6133
    %v6135 = vpop.f32.mrf.mxu0
    %v6136 = vadd.f32 0.0, %v6135
    %6137 = vmatmul.bf16.gmra.mxu0 %v4132
    %v6138 = vpop.f32.mrf.mxu0
    %v6139 = vadd.f32 0.0, %v6138
    %v6140 = vpop.f32.mrf.mxu0
    %v6141 = vadd.f32 0.0, %v6140
    %6142 = vmatmul.bf16.gmra.mxu0 %v4135
    %v6143 = vpop.f32.mrf.mxu0
    %v6144 = vadd.f32 0.0, %v6143
    %v6145 = vpop.f32.mrf.mxu0
    %v6146 = vadd.f32 0.0, %v6145
    %6147 = vmatmul.bf16.gmra.mxu0 %v4138
    %v6148 = vpop.f32.mrf.mxu0
    %v6149 = vadd.f32 0.0, %v6148
    %v6150 = vpop.f32.mrf.mxu0
    %v6151 = vadd.f32 0.0, %v6150
    %6152 = vmatmul.bf16.gmra.mxu0 %v4141
    %v6153 = vpop.f32.mrf.mxu0
    %v6154 = vadd.f32 0.0, %v6153
    %v6155 = vpop.f32.mrf.mxu0
    %v6156 = vadd.f32 0.0, %v6155
    %6157 = vmatmul.bf16.gmra.mxu0 %v4144
    %v6158 = vpop.f32.mrf.mxu0
    %v6159 = vadd.f32 0.0, %v6158
    %v6160 = vpop.f32.mrf.mxu0
    %v6161 = vadd.f32 0.0, %v6160
    %6162 = vmatmul.bf16.gmra.mxu0 %v4147
    %v6163 = vpop.f32.mrf.mxu0
    %v6164 = vadd.f32 0.0, %v6163
    %v6165 = vpop.f32.mrf.mxu0
    %v6166 = vadd.f32 0.0, %v6165
    %6167 = vmatmul.bf16.gmra.mxu0 %v4150
    %v6168 = vpop.f32.mrf.mxu0
    %v6169 = vadd.f32 0.0, %v6168
    %v6170 = vpop.f32.mrf.mxu0
    %v6171 = vadd.f32 0.0, %v6170
    %6172 = vmatmul.bf16.gmra.mxu0 %v4153
    %v6173 = vpop.f32.mrf.mxu0
    %v6174 = vadd.f32 0.0, %v6173
    %v6175 = vpop.f32.mrf.mxu0
    %v6176 = vadd.f32 0.0, %v6175
    %6177 = vmatmul.bf16.gmra.mxu0 %v4156
    %v6178 = vpop.f32.mrf.mxu0
    %v6179 = vadd.f32 0.0, %v6178
    %v6180 = vpop.f32.mrf.mxu0
    %v6181 = vadd.f32 0.0, %v6180
    %6182 = vmatmul.bf16.gmra.mxu0 %v4159
    %v6183 = vpop.f32.mrf.mxu0
    %v6184 = vadd.f32 0.0, %v6183
    %v6185 = vpop.f32.mrf.mxu0
    %v6186 = vadd.f32 0.0, %v6185
    %6187 = vmatmul.bf16.gmra.mxu0 %v4162
    %v6188 = vpop.f32.mrf.mxu0
    %v6189 = vadd.f32 0.0, %v6188
    %v6190 = vpop.f32.mrf.mxu0
    %v6191 = vadd.f32 0.0, %v6190
    %6192 = vmatmul.bf16.gmra.mxu0 %v4165
    %v6193 = vpop.f32.mrf.mxu0
    %v6194 = vadd.f32 0.0, %v6193
    %v6195 = vpop.f32.mrf.mxu0
    %v6196 = vadd.f32 0.0, %v6195
    %6197 = vmatmul.bf16.gmra.mxu0 %v4168
    %v6198 = vpop.f32.mrf.mxu0
    %v6199 = vadd.f32 0.0, %v6198
    %v6200 = vpop.f32.mrf.mxu0
    %v6201 = vadd.f32 0.0, %v6200
    %6202 = vmatmul.bf16.gmra.mxu0 %v4171
    %v6203 = vpop.f32.mrf.mxu0
    %v6204 = vadd.f32 0.0, %v6203
    %v6205 = vpop.f32.mrf.mxu0
    %v6206 = vadd.f32 0.0, %v6205
    %6207 = vmatmul.bf16.gmra.mxu0 %v4174
    %v6208 = vpop.f32.mrf.mxu0
    %v6209 = vadd.f32 0.0, %v6208
    %v6210 = vpop.f32.mrf.mxu0
    %v6211 = vadd.f32 0.0, %v6210
    %6212 = vmatmul.bf16.gmra.mxu0 %v4177
    %v6213 = vpop.f32.mrf.mxu0
    %v6214 = vadd.f32 0.0, %v6213
    %v6215 = vpop.f32.mrf.mxu0
    %v6216 = vadd.f32 0.0, %v6215
    %6217 = vmatmul.bf16.gmra.mxu0 %v4180
    %v6218 = vpop.f32.mrf.mxu0
    %v6219 = vadd.f32 0.0, %v6218
    %v6220 = vpop.f32.mrf.mxu0
    %v6221 = vadd.f32 0.0, %v6220
    %6222 = vmatmul.bf16.gmra.mxu0 %v4183
    %v6223 = vpop.f32.mrf.mxu0
    %v6224 = vadd.f32 0.0, %v6223
    %v6225 = vpop.f32.mrf.mxu0
    %v6226 = vadd.f32 0.0, %v6225
    %6227 = vmatmul.bf16.gmra.mxu0 %v4186
    %v6228 = vpop.f32.mrf.mxu0
    %v6229 = vadd.f32 0.0, %v6228
    %v6230 = vpop.f32.mrf.mxu0
    %v6231 = vadd.f32 0.0, %v6230
    %6232 = vmatmul.bf16.gmra.mxu0 %v4189
    %v6233 = vpop.f32.mrf.mxu0
    %v6234 = vadd.f32 0.0, %v6233
    %v6235 = vpop.f32.mrf.mxu0
    %v6236 = vadd.f32 0.0, %v6235
    %6237 = vmatmul.bf16.gmra.mxu0 %v4192
    %v6238 = vpop.f32.mrf.mxu0
    %v6239 = vadd.f32 0.0, %v6238
    %v6240 = vpop.f32.mrf.mxu0
    %v6241 = vadd.f32 0.0, %v6240
    %6242 = vmatmul.bf16.gmra.mxu0 %v4195
    %v6243 = vpop.f32.mrf.mxu0
    %v6244 = vadd.f32 0.0, %v6243
    %v6245 = vpop.f32.mrf.mxu0
    %v6246 = vadd.f32 0.0, %v6245
    %6247 = vmatmul.bf16.gmra.mxu0 %v4198
    %v6248 = vpop.f32.mrf.mxu0
    %v6249 = vadd.f32 0.0, %v6248
    %v6250 = vpop.f32.mrf.mxu0
    %v6251 = vadd.f32 0.0, %v6250
    %6252 = vmatmul.bf16.gmra.mxu0 %v4201
    %v6253 = vpop.f32.mrf.mxu0
    %v6254 = vadd.f32 0.0, %v6253
    %v6255 = vpop.f32.mrf.mxu0
    %v6256 = vadd.f32 0.0, %v6255
    %6257 = vmatmul.bf16.gmra.mxu0 %v4204
    %v6258 = vpop.f32.mrf.mxu0
    %v6259 = vadd.f32 0.0, %v6258
    %v6260 = vpop.f32.mrf.mxu0
    %v6261 = vadd.f32 0.0, %v6260
    %6262 = vmatmul.bf16.gmra.mxu0 %v4207
    %v6263 = vpop.f32.mrf.mxu0
    %v6264 = vadd.f32 0.0, %v6263
    %v6265 = vpop.f32.mrf.mxu0
    %v6266 = vadd.f32 0.0, %v6265
    %6267 = vmatmul.bf16.gmra.mxu0 %v4210
    %v6268 = vpop.f32.mrf.mxu0
    %v6269 = vadd.f32 0.0, %v6268
    %v6270 = vpop.f32.mrf.mxu0
    %v6271 = vadd.f32 0.0, %v6270
    %6272 = vmatmul.bf16.gmra.mxu0 %v4213
    %v6273 = vpop.f32.mrf.mxu0
    %v6274 = vadd.f32 0.0, %v6273
    %v6275 = vpop.f32.mrf.mxu0
    %v6276 = vadd.f32 0.0, %v6275
    %6277 = vmatmul.bf16.gmra.mxu0 %v4216
    %v6278 = vpop.f32.mrf.mxu0
    %v6279 = vadd.f32 0.0, %v6278
    %v6280 = vpop.f32.mrf.mxu0
    %v6281 = vadd.f32 0.0, %v6280
    %6282 = vmatmul.bf16.gmra.mxu0 %v4219
    %v6283 = vpop.f32.mrf.mxu0
    %v6284 = vadd.f32 0.0, %v6283
    %v6285 = vpop.f32.mrf.mxu0
    %v6286 = vadd.f32 0.0, %v6285
    %6287 = vmatmul.bf16.gmra.mxu0 %v4222
    %v6288 = vpop.f32.mrf.mxu0
    %v6289 = vadd.f32 0.0, %v6288
    %v6290 = vpop.f32.mrf.mxu0
    %v6291 = vadd.f32 0.0, %v6290
    %6292 = vmatmul.bf16.gmra.mxu0 %v4225
    %v6293 = vpop.f32.mrf.mxu0
    %v6294 = vadd.f32 0.0, %v6293
    %v6295 = vpop.f32.mrf.mxu0
    %v6296 = vadd.f32 0.0, %v6295
    %6297 = vmatmul.bf16.gmra.mxu0 %v4228
    %v6298 = vpop.f32.mrf.mxu0
    %v6299 = vadd.f32 0.0, %v6298
    %v6300 = vpop.f32.mrf.mxu0
    %v6301 = vadd.f32 0.0, %v6300
    %6302 = vmatmul.bf16.gmra.mxu0 %v4231
    %v6303 = vpop.f32.mrf.mxu0
    %v6304 = vadd.f32 0.0, %v6303
    %v6305 = vpop.f32.mrf.mxu0
    %v6306 = vadd.f32 0.0, %v6305
    %6307 = vmatmul.bf16.gmra.mxu0 %v4234
    %v6308 = vpop.f32.mrf.mxu0
    %v6309 = vadd.f32 0.0, %v6308
    %v6310 = vpop.f32.mrf.mxu0
    %v6311 = vadd.f32 0.0, %v6310
    %6312 = vmatmul.bf16.gmra.mxu0 %v4237
    %v6313 = vpop.f32.mrf.mxu0
    %v6314 = vadd.f32 0.0, %v6313
    %v6315 = vpop.f32.mrf.mxu0
    %v6316 = vadd.f32 0.0, %v6315
    %6317 = vmatmul.bf16.gmra.mxu0 %v4240
    %v6318 = vpop.f32.mrf.mxu0
    %v6319 = vadd.f32 0.0, %v6318
    %v6320 = vpop.f32.mrf.mxu0
    %v6321 = vadd.f32 0.0, %v6320
    %6322 = vmatmul.bf16.gmra.mxu0 %v4243
    %v6323 = vpop.f32.mrf.mxu0
    %v6324 = vadd.f32 0.0, %v6323
    %v6325 = vpop.f32.mrf.mxu0
    %v6326 = vadd.f32 0.0, %v6325
    %6327 = vmatmul.bf16.gmra.mxu0 %v4246
    %v6328 = vpop.f32.mrf.mxu0
    %v6329 = vadd.f32 0.0, %v6328
    %v6330 = vpop.f32.mrf.mxu0
    %v6331 = vadd.f32 0.0, %v6330
    %6332 = vmatmul.bf16.gmra.mxu0 %v4249
    %v6333 = vpop.f32.mrf.mxu0
    %v6334 = vadd.f32 0.0, %v6333
    %v6335 = vpop.f32.mrf.mxu0
    %v6336 = vadd.f32 0.0, %v6335
    %6337 = vmatmul.bf16.gmra.mxu0 %v4252
    %v6338 = vpop.f32.mrf.mxu0
    %v6339 = vadd.f32 0.0, %v6338
    %v6340 = vpop.f32.mrf.mxu0
    %v6341 = vadd.f32 0.0, %v6340
    %6342 = vmatmul.bf16.gmra.mxu0 %v4255
    %v6343 = vpop.f32.mrf.mxu0
    %v6344 = vadd.f32 0.0, %v6343
    %v6345 = vpop.f32.mrf.mxu0
    %v6346 = vadd.f32 0.0, %v6345
    %6347 = vmatmul.bf16.gmra.mxu0 %v4258
    %v6348 = vpop.f32.mrf.mxu0
    %v6349 = vadd.f32 0.0, %v6348
    %v6350 = vpop.f32.mrf.mxu0
    %v6351 = vadd.f32 0.0, %v6350
    %6352 = vmatmul.bf16.gmra.mxu0 %v4261
    %v6353 = vpop.f32.mrf.mxu0
    %v6354 = vadd.f32 0.0, %v6353
    %v6355 = vpop.f32.mrf.mxu0
    %v6356 = vadd.f32 0.0, %v6355
    %6357 = vmatmul.bf16.gmra.mxu0 %v4264
    %v6358 = vpop.f32.mrf.mxu0
    %v6359 = vadd.f32 0.0, %v6358
    %v6360 = vpop.f32.mrf.mxu0
    %v6361 = vadd.f32 0.0, %v6360
    %6362 = vmatmul.bf16.gmra.mxu0 %v4267
    %v6363 = vpop.f32.mrf.mxu0
    %v6364 = vadd.f32 0.0, %v6363
    %v6365 = vpop.f32.mrf.mxu0
    %v6366 = vadd.f32 0.0, %v6365
    %6367 = vmatmul.bf16.gmra.mxu0 %v4270
    %v6368 = vpop.f32.mrf.mxu0
    %v6369 = vadd.f32 0.0, %v6368
    %v6370 = vpop.f32.mrf.mxu0
    %v6371 = vadd.f32 0.0, %v6370
    %6372 = vmatmul.bf16.gmra.mxu0 %v4273
    %v6373 = vpop.f32.mrf.mxu0
    %v6374 = vadd.f32 0.0, %v6373
    %v6375 = vpop.f32.mrf.mxu0
    %v6376 = vadd.f32 0.0, %v6375
    %6377 = vmatmul.bf16.gmra.mxu0 %v4276
    %v6378 = vpop.f32.mrf.mxu0
    %v6379 = vadd.f32 0.0, %v6378
    %v6380 = vpop.f32.mrf.mxu0
    %v6381 = vadd.f32 0.0, %v6380
    %6382 = vmatmul.bf16.gmra.mxu0 %v4279
    %v6383 = vpop.f32.mrf.mxu0
    %v6384 = vadd.f32 0.0, %v6383
    %v6385 = vpop.f32.mrf.mxu0
    %v6386 = vadd.f32 0.0, %v6385
    %6387 = vmatmul.bf16.gmra.mxu0 %v4282
    %v6388 = vpop.f32.mrf.mxu0
    %v6389 = vadd.f32 0.0, %v6388
    %v6390 = vpop.f32.mrf.mxu0
    %v6391 = vadd.f32 0.0, %v6390
    %6392 = vmatmul.bf16.gmra.mxu0 %v4285
    %v6393 = vpop.f32.mrf.mxu0
    %v6394 = vadd.f32 0.0, %v6393
    %v6395 = vpop.f32.mrf.mxu0
    %v6396 = vadd.f32 0.0, %v6395
    %6397 = vmatmul.bf16.gmra.mxu0 %v4288
    %v6398 = vpop.f32.mrf.mxu0
    %v6399 = vadd.f32 0.0, %v6398
    %v6400 = vpop.f32.mrf.mxu0
    %v6401 = vadd.f32 0.0, %v6400
    %6402 = vmatmul.bf16.gmra.mxu0 %v4291
    %v6403 = vpop.f32.mrf.mxu0
    %v6404 = vadd.f32 0.0, %v6403
    %v6405 = vpop.f32.mrf.mxu0
    %v6406 = vadd.f32 0.0, %v6405
    %6407 = vmatmul.bf16.gmra.mxu0 %v4294
    %v6408 = vpop.f32.mrf.mxu0
    %v6409 = vadd.f32 0.0, %v6408
    %v6410 = vpop.f32.mrf.mxu0
    %v6411 = vadd.f32 0.0, %v6410
    %6412 = vmatmul.bf16.gmra.mxu0 %v4297
    %v6413 = vpop.f32.mrf.mxu0
    %v6414 = vadd.f32 0.0, %v6413
    %v6415 = vpop.f32.mrf.mxu0
    %v6416 = vadd.f32 0.0, %v6415
    %6417 = vmatmul.bf16.gmra.mxu0 %v4300
    %v6418 = vpop.f32.mrf.mxu0
    %v6419 = vadd.f32 0.0, %v6418
    %v6420 = vpop.f32.mrf.mxu0
    %v6421 = vadd.f32 0.0, %v6420
    %6422 = vmatmul.bf16.gmra.mxu0 %v4303
    %v6423 = vpop.f32.mrf.mxu0
    %v6424 = vadd.f32 0.0, %v6423
    %v6425 = vpop.f32.mrf.mxu0
    %v6426 = vadd.f32 0.0, %v6425
    %6427 = vmatmul.bf16.gmra.mxu0 %v4306
    %v6428 = vpop.f32.mrf.mxu0
    %v6429 = vadd.f32 0.0, %v6428
    %v6430 = vpop.f32.mrf.mxu0
    %v6431 = vadd.f32 0.0, %v6430
    %6432 = vmatmul.bf16.gmra.mxu0 %v4309
    %v6433 = vpop.f32.mrf.mxu0
    %v6434 = vadd.f32 0.0, %v6433
    %v6435 = vpop.f32.mrf.mxu0
    %v6436 = vadd.f32 0.0, %v6435
    %6437 = vmatmul.bf16.gmra.mxu0 %v4312
    %v6438 = vpop.f32.mrf.mxu0
    %v6439 = vadd.f32 0.0, %v6438
    %v6440 = vpop.f32.mrf.mxu0
    %v6441 = vadd.f32 0.0, %v6440
    %6442 = vmatmul.bf16.gmra.mxu0 %v4315
    %v6443 = vpop.f32.mrf.mxu0
    %v6444 = vadd.f32 0.0, %v6443
    %v6445 = vpop.f32.mrf.mxu0
    %v6446 = vadd.f32 0.0, %v6445
    %6447 = vmatmul.bf16.gmra.mxu0 %v4318
    %v6448 = vpop.f32.mrf.mxu0
    %v6449 = vadd.f32 0.0, %v6448
    %v6450 = vpop.f32.mrf.mxu0
    %v6451 = vadd.f32 0.0, %v6450
    %6452 = vmatmul.bf16.gmra.mxu0 %v4321
    %v6453 = vpop.f32.mrf.mxu0
    %v6454 = vadd.f32 0.0, %v6453
    %v6455 = vpop.f32.mrf.mxu0
    %v6456 = vadd.f32 0.0, %v6455
    %6457 = vmatmul.bf16.gmra.mxu0 %v4324
    %v6458 = vpop.f32.mrf.mxu0
    %v6459 = vadd.f32 0.0, %v6458
    %v6460 = vpop.f32.mrf.mxu0
    %v6461 = vadd.f32 0.0, %v6460
    %6462 = vmatmul.bf16.gmra.mxu0 %v4327
    %v6463 = vpop.f32.mrf.mxu0
    %v6464 = vadd.f32 0.0, %v6463
    %v6465 = vpop.f32.mrf.mxu0
    %v6466 = vadd.f32 0.0, %v6465
    %6467 = vmatmul.bf16.gmra.mxu0 %v4330
    %v6468 = vpop.f32.mrf.mxu0
    %v6469 = vadd.f32 0.0, %v6468
    %v6470 = vpop.f32.mrf.mxu0
    %v6471 = vadd.f32 0.0, %v6470
    %6472 = vmatmul.bf16.gmra.mxu0 %v4333
    %v6473 = vpop.f32.mrf.mxu0
    %v6474 = vadd.f32 0.0, %v6473
    %v6475 = vpop.f32.mrf.mxu0
    %v6476 = vadd.f32 0.0, %v6475
    %6477 = vmatmul.bf16.gmra.mxu0 %v4336
    %v6478 = vpop.f32.mrf.mxu0
    %v6479 = vadd.f32 0.0, %v6478
    %v6480 = vpop.f32.mrf.mxu0
    %v6481 = vadd.f32 0.0, %v6480
    %6482 = vmatmul.bf16.gmra.mxu0 %v4339
    %v6483 = vpop.f32.mrf.mxu0
    %v6484 = vadd.f32 0.0, %v6483
    %v6485 = vpop.f32.mrf.mxu0
    %v6486 = vadd.f32 0.0, %v6485
    %6487 = vmatmul.bf16.gmra.mxu0 %v4342
    %v6488 = vpop.f32.mrf.mxu0
    %v6489 = vadd.f32 0.0, %v6488
    %v6490 = vpop.f32.mrf.mxu0
    %v6491 = vadd.f32 0.0, %v6490
    %6492 = vmatmul.bf16.gmra.mxu0 %v4345
    %v6493 = vpop.f32.mrf.mxu0
    %v6494 = vadd.f32 0.0, %v6493
    %v6495 = vpop.f32.mrf.mxu0
    %v6496 = vadd.f32 0.0, %v6495
    %6497 = vmatmul.bf16.gmra.mxu0 %v4348
    %v6498 = vpop.f32.mrf.mxu0
    %v6499 = vadd.f32 0.0, %v6498
    %v6500 = vpop.f32.mrf.mxu0
    %v6501 = vadd.f32 0.0, %v6500
    %6502 = vmatmul.bf16.gmra.mxu0 %v4351
    %v6503 = vpop.f32.mrf.mxu0
    %v6504 = vadd.f32 0.0, %v6503
    %v6505 = vpop.f32.mrf.mxu0
    %v6506 = vadd.f32 0.0, %v6505
    %6507 = vmatmul.bf16.gmra.mxu0 %v4354
    %v6508 = vpop.f32.mrf.mxu0
    %v6509 = vadd.f32 0.0, %v6508
    %v6510 = vpop.f32.mrf.mxu0
    %v6511 = vadd.f32 0.0, %v6510
    %6512 = vmatmul.bf16.gmra.mxu0 %v4357
    %v6513 = vpop.f32.mrf.mxu0
    %v6514 = vadd.f32 0.0, %v6513
    %v6515 = vpop.f32.mrf.mxu0
    %v6516 = vadd.f32 0.0, %v6515
    %6517 = vmatmul.bf16.gmra.mxu0 %v4360
    %v6518 = vpop.f32.mrf.mxu0
    %v6519 = vadd.f32 0.0, %v6518
    %v6520 = vpop.f32.mrf.mxu0
    %v6521 = vadd.f32 0.0, %v6520
    %6522 = vmatmul.bf16.gmra.mxu0 %v4363
    %v6523 = vpop.f32.mrf.mxu0
    %v6524 = vadd.f32 0.0, %v6523
    %v6525 = vpop.f32.mrf.mxu0
    %v6526 = vadd.f32 0.0, %v6525
    %6527 = vmatmul.bf16.gmra.mxu0 %v4366
    %v6528 = vpop.f32.mrf.mxu0
    %v6529 = vadd.f32 0.0, %v6528
    %v6530 = vpop.f32.mrf.mxu0
    %v6531 = vadd.f32 0.0, %v6530
    %6532 = vmatmul.bf16.gmra.mxu0 %v4369
    %v6533 = vpop.f32.mrf.mxu0
    %v6534 = vadd.f32 0.0, %v6533
    %v6535 = vpop.f32.mrf.mxu0
    %v6536 = vadd.f32 0.0, %v6535
    %6537 = vmatmul.bf16.gmra.mxu0 %v4372
    %v6538 = vpop.f32.mrf.mxu0
    %v6539 = vadd.f32 0.0, %v6538
    %v6540 = vpop.f32.mrf.mxu0
    %v6541 = vadd.f32 0.0, %v6540
    %6542 = vmatmul.bf16.gmra.mxu0 %v4375
    %v6543 = vpop.f32.mrf.mxu0
    %v6544 = vadd.f32 0.0, %v6543
    %v6545 = vpop.f32.mrf.mxu0
    %v6546 = vadd.f32 0.0, %v6545
    %6547 = vmatmul.bf16.gmra.mxu0 %v4378
    %v6548 = vpop.f32.mrf.mxu0
    %v6549 = vadd.f32 0.0, %v6548
    %v6550 = vpop.f32.mrf.mxu0
    %v6551 = vadd.f32 0.0, %v6550
    %6552 = vmatmul.bf16.gmra.mxu0 %v4381
    %v6553 = vpop.f32.mrf.mxu0
    %v6554 = vadd.f32 0.0, %v6553
    %v6555 = vpop.f32.mrf.mxu0
    %v6556 = vadd.f32 0.0, %v6555
    %6557 = vmatmul.bf16.gmra.mxu0 %v4384
    %v6558 = vpop.f32.mrf.mxu0
    %v6559 = vadd.f32 0.0, %v6558
    %v6560 = vpop.f32.mrf.mxu0
    %v6561 = vadd.f32 0.0, %v6560
    %6562 = vmatmul.bf16.gmra.mxu0 %v4387
    %v6563 = vpop.f32.mrf.mxu0
    %v6564 = vadd.f32 0.0, %v6563
    %v6565 = vpop.f32.mrf.mxu0
    %v6566 = vadd.f32 0.0, %v6565
    %6567 = vmatmul.bf16.gmra.mxu0 %v4390
    %v6568 = vpop.f32.mrf.mxu0
    %v6569 = vadd.f32 0.0, %v6568
    %v6570 = vpop.f32.mrf.mxu0
    %v6571 = vadd.f32 0.0, %v6570
    %6572 = vmatmul.bf16.gmra.mxu0 %v4393
    %v6573 = vpop.f32.mrf.mxu0
    %v6574 = vadd.f32 0.0, %v6573
    %v6575 = vpop.f32.mrf.mxu0
    %v6576 = vadd.f32 0.0, %v6575
    %6577 = vmatmul.bf16.gmra.mxu0 %v4396
    %v6578 = vpop.f32.mrf.mxu0
    %v6579 = vadd.f32 0.0, %v6578
    %v6580 = vpop.f32.mrf.mxu0
    %v6581 = vadd.f32 0.0, %v6580
    %6582 = vmatmul.bf16.gmra.mxu0 %v4399
    %v6583 = vpop.f32.mrf.mxu0
    %v6584 = vadd.f32 0.0, %v6583
    %v6585 = vpop.f32.mrf.mxu0
    %v6586 = vadd.f32 0.0, %v6585
    %6587 = vmatmul.bf16.gmra.mxu0 %v4402
    %v6588 = vpop.f32.mrf.mxu0
    %v6589 = vadd.f32 0.0, %v6588
    %v6590 = vpop.f32.mrf.mxu0
    %v6591 = vadd.f32 0.0, %v6590
    %6592 = vmatmul.bf16.gmra.mxu0 %v4405
    %v6593 = vpop.f32.mrf.mxu0
    %v6594 = vadd.f32 0.0, %v6593
    %v6595 = vpop.f32.mrf.mxu0
    %v6596 = vadd.f32 0.0, %v6595
    %6597 = vmatmul.bf16.gmra.mxu0 %v4408
    %v6598 = vpop.f32.mrf.mxu0
    %v6599 = vadd.f32 0.0, %v6598
    %v6600 = vpop.f32.mrf.mxu0
    %v6601 = vadd.f32 0.0, %v6600
    %6602 = vmatmul.bf16.gmra.mxu0 %v4411
    %v6603 = vpop.f32.mrf.mxu0
    %v6604 = vadd.f32 0.0, %v6603
    %v6605 = vpop.f32.mrf.mxu0
    %v6606 = vadd.f32 0.0, %v6605
    %6607 = vmatmul.bf16.gmra.mxu0 %v4414
    %v6608 = vpop.f32.mrf.mxu0
    %v6609 = vadd.f32 0.0, %v6608
    %v6610 = vpop.f32.mrf.mxu0
    %v6611 = vadd.f32 0.0, %v6610
    %6612 = vmatmul.bf16.gmra.mxu0 %v4417
    %v6613 = vpop.f32.mrf.mxu0
    %v6614 = vadd.f32 0.0, %v6613
    %v6615 = vpop.f32.mrf.mxu0
    %v6616 = vadd.f32 0.0, %v6615
    %6617 = vmatmul.bf16.gmra.mxu0 %v4420
    %v6618 = vpop.f32.mrf.mxu0
    %v6619 = vadd.f32 0.0, %v6618
    %v6620 = vpop.f32.mrf.mxu0
    %v6621 = vadd.f32 0.0, %v6620
    %6622 = vmatmul.bf16.gmra.mxu0 %v4423
    %v6623 = vpop.f32.mrf.mxu0
    %v6624 = vadd.f32 0.0, %v6623
    %v6625 = vpop.f32.mrf.mxu0
    %v6626 = vadd.f32 0.0, %v6625
    %6627 = vmatmul.bf16.gmra.mxu0 %v4426
    %v6628 = vpop.f32.mrf.mxu0
    %v6629 = vadd.f32 0.0, %v6628
    %v6630 = vpop.f32.mrf.mxu0
    %v6631 = vadd.f32 0.0, %v6630
    %6632 = vmatmul.bf16.gmra.mxu0 %v4429
    %v6633 = vpop.f32.mrf.mxu0
    %v6634 = vadd.f32 0.0, %v6633
    %v6635 = vpop.f32.mrf.mxu0
    %v6636 = vadd.f32 0.0, %v6635
    %6637 = vmatmul.bf16.gmra.mxu0 %v4432
    %v6638 = vpop.f32.mrf.mxu0
    %v6639 = vadd.f32 0.0, %v6638
    %v6640 = vpop.f32.mrf.mxu0
    %v6641 = vadd.f32 0.0, %v6640
    %6642 = vmatmul.bf16.gmra.mxu0 %v4435
    %v6643 = vpop.f32.mrf.mxu0
    %v6644 = vadd.f32 0.0, %v6643
    %v6645 = vpop.f32.mrf.mxu0
    %v6646 = vadd.f32 0.0, %v6645
    %6647 = vmatmul.bf16.gmra.mxu0 %v4438
    %v6648 = vpop.f32.mrf.mxu0
    %v6649 = vadd.f32 0.0, %v6648
    %v6650 = vpop.f32.mrf.mxu0
    %v6651 = vadd.f32 0.0, %v6650
    %6652 = vdwg.mxu0
    %v6653 = vtanh.pop %v4454
    %v6654 = vtanh.pop %v4456
    %v6655 = vtanh.pop %v4459
    %v6656 = vtanh.pop %v4461
    %v6657 = vtanh.pop %v4464
    %v6658 = vtanh.pop %v4466
    %v6659 = vtanh.pop %v4469
    %v6660 = vtanh.pop %v4471
    %v6661 = vtanh.pop %v4474
    %v6662 = vtanh.pop %v4476
    %v6663 = vtanh.pop %v4479
    %v6664 = vtanh.pop %v4481
    %v6665 = vtanh.pop %v4484
    %v6666 = vtanh.pop %v4486
    %v6667 = vtanh.pop %v4489
    %v6668 = vtanh.pop %v4491
    %v6669 = vtanh.pop %v4494
    %v6670 = vtanh.pop %v4496
    %v6671 = vtanh.pop %v4499
    %v6672 = vtanh.pop %v4501
    %v6673 = vtanh.pop %v4504
    %v6674 = vtanh.pop %v4506
    %v6675 = vtanh.pop %v4509
    %v6676 = vtanh.pop %v4511
    %v6677 = vtanh.pop %v4514
    %v6678 = vtanh.pop %v4516
    %v6679 = vtanh.pop %v4519
    %v6680 = vtanh.pop %v4521
    %v6681 = vtanh.pop %v4524
    %v6682 = vtanh.pop %v4526
    %v6683 = vtanh.pop %v4529
    %v6684 = vtanh.pop %v4531
    %v6685 = vtanh.pop %v4534
    %v6686 = vtanh.pop %v4536
    %v6687 = vtanh.pop %v4539
    %v6688 = vtanh.pop %v4541
    %v6689 = vtanh.pop %v4544
    %v6690 = vtanh.pop %v4546
    %v6691 = vtanh.pop %v4549
    %v6692 = vtanh.pop %v4551
    %v6693 = vtanh.pop %v4554
    %v6694 = vtanh.pop %v4556
    %v6695 = vtanh.pop %v4559
    %v6696 = vtanh.pop %v4561
    %v6697 = vtanh.pop %v4564
    %v6698 = vtanh.pop %v4566
    %v6699 = vtanh.pop %v4569
    %v6700 = vtanh.pop %v4571
    %v6701 = vtanh.pop %v4574
    %v6702 = vtanh.pop %v4576
    %v6703 = vtanh.pop %v4579
    %v6704 = vtanh.pop %v4581
    %v6705 = vtanh.pop %v4584
    %v6706 = vtanh.pop %v4586
    %v6707 = vtanh.pop %v4589
    %v6708 = vtanh.pop %v4591
    %v6709 = vtanh.pop %v4594
    %v6710 = vtanh.pop %v4596
    %v6711 = vtanh.pop %v4599
    %v6712 = vtanh.pop %v4601
    %v6713 = vtanh.pop %v4604
    %v6714 = vtanh.pop %v4606
    %v6715 = vtanh.pop %v4609
    %v6716 = vtanh.pop %v4611
    %v6717 = vtanh.pop %v4614
    %v6718 = vtanh.pop %v4616
    %v6719 = vtanh.pop %v4619
    %v6720 = vtanh.pop %v4621
    %v6721 = vtanh.pop %v4624
    %v6722 = vtanh.pop %v4626
    %v6723 = vtanh.pop %v4629
    %v6724 = vtanh.pop %v4631
    %v6725 = vtanh.pop %v4634
    %v6726 = vtanh.pop %v4636
    %v6727 = vtanh.pop %v4639
    %v6728 = vtanh.pop %v4641
    %v6729 = vtanh.pop %v4644
    %v6730 = vtanh.pop %v4646
    %v6731 = vtanh.pop %v4649
    %v6732 = vtanh.pop %v4651
    %v6733 = vtanh.pop %v4654
    %v6734 = vtanh.pop %v4656
    %v6735 = vtanh.pop %v4659
    %v6736 = vtanh.pop %v4661
    %v6737 = vtanh.pop %v4664
    %v6738 = vtanh.pop %v4666
    %v6739 = vtanh.pop %v4669
    %v6740 = vtanh.pop %v4671
    %v6741 = vtanh.pop %v4674
    %v6742 = vtanh.pop %v4676
    %v6743 = vtanh.pop %v4679
    %v6744 = vtanh.pop %v4681
    %v6745 = vtanh.pop %v4684
    %v6746 = vtanh.pop %v4686
    %v6747 = vtanh.pop %v4689
    %v6748 = vtanh.pop %v4691
    %v6749 = vtanh.pop %v4694
    %v6750 = vtanh.pop %v4696
    %v6751 = vtanh.pop %v4699
    %v6752 = vtanh.pop %v4701
    %v6753 = vtanh.pop %v4704
    %v6754 = vtanh.pop %v4706
    %v6755 = vtanh.pop %v4709
    %v6756 = vtanh.pop %v4711
    %v6757 = vtanh.pop %v4714
    %v6758 = vtanh.pop %v4716
    %v6759 = vtanh.pop %v4719
    %v6760 = vtanh.pop %v4721
    %v6761 = vtanh.pop %v4724
    %v6762 = vtanh.pop %v4726
    %v6763 = vtanh.pop %v4729
    %v6764 = vtanh.pop %v4731
    %v6765 = vtanh.pop %v4734
    %v6766 = vtanh.pop %v4736
    %v6767 = vtanh.pop %v4739
    %v6768 = vtanh.pop %v4741
    %v6769 = vtanh.pop %v4744
    %v6770 = vtanh.pop %v4746
    %v6771 = vtanh.pop %v4749
    %v6772 = vtanh.pop %v4751
    %v6773 = vtanh.pop %v4754
    %v6774 = vtanh.pop %v4756
    %v6775 = vtanh.pop %v4759
    %v6776 = vtanh.pop %v4761
    %v6777 = vtanh.pop %v4764
    %v6778 = vtanh.pop %v4766
    %v6779 = vtanh.pop %v4769
    %v6780 = vtanh.pop %v4771
    %v6781 = vtanh.pop %v4774
    %v6782 = vtanh.pop %v4776
    %v6783 = vtanh.pop %v4779
    %v6784 = vtanh.pop %v4781
    %v6785 = vtanh.pop %v4784
    %v6786 = vtanh.pop %v4786
    %v6787 = vtanh.pop %v4789
    %v6788 = vtanh.pop %v4791
    %v6789 = vtanh.pop %v4794
    %v6790 = vtanh.pop %v4796
    %v6791 = vtanh.pop %v4799
    %v6792 = vtanh.pop %v4801
    %v6793 = vtanh.pop %v4804
    %v6794 = vtanh.pop %v4806
    %v6795 = vtanh.pop %v4809
    %v6796 = vtanh.pop %v4811
    %v6797 = vtanh.pop %v4814
    %v6798 = vtanh.pop %v4816
    %v6799 = vtanh.pop %v4819
    %v6800 = vtanh.pop %v4821
    %v6801 = vtanh.pop %v4824
    %v6802 = vtanh.pop %v4826
    %v6803 = vtanh.pop %v4829
    %v6804 = vtanh.pop %v4831
    %v6805 = vtanh.pop %v4834
    %v6806 = vtanh.pop %v4836
    %v6807 = vtanh.pop %v4839
    %v6808 = vtanh.pop %v4841
    %v6809 = vtanh.pop %v4844
    %v6810 = vtanh.pop %v4846
    %v6811 = vtanh.pop %v4849
    %v6812 = vtanh.pop %v4851
    %v6813 = vtanh.pop %v4854
    %v6814 = vtanh.pop %v4856
    %v6815 = vtanh.pop %v4859
    %v6816 = vtanh.pop %v4861
    %v6817 = vtanh.pop %v4864
    %v6818 = vtanh.pop %v4866
    %v6819 = vtanh.pop %v4869
    %v6820 = vtanh.pop %v4871
    %v6821 = vtanh.pop %v4874
    %v6822 = vtanh.pop %v4876
    %v6823 = vtanh.pop %v4879
    %v6824 = vtanh.pop %v4881
    %v6825 = vtanh.pop %v4884
    %v6826 = vtanh.pop %v4886
    %v6827 = vtanh.pop %v4889
    %v6828 = vtanh.pop %v4891
    %v6829 = vtanh.pop %v4894
    %v6830 = vtanh.pop %v4896
    %v6831 = vtanh.pop %v4899
    %v6832 = vtanh.pop %v4901
    %v6833 = vtanh.pop %v4904
    %v6834 = vtanh.pop %v4906
    %v6835 = vtanh.pop %v4909
    %v6836 = vtanh.pop %v4911
    %v6837 = vtanh.pop %v4914
    %v6838 = vtanh.pop %v4916
    %v6839 = vtanh.pop %v4919
    %v6840 = vtanh.pop %v4921
    %v6841 = vtanh.pop %v4924
    %v6842 = vtanh.pop %v4926
    %v6843 = vtanh.pop %v4929
    %v6844 = vtanh.pop %v4931
    %v6845 = vtanh.pop %v4934
    %v6846 = vtanh.pop %v4936
    %v6847 = vtanh.pop %v4939
    %v6848 = vtanh.pop %v4941
    %v6849 = vtanh.pop %v4944
    %v6850 = vtanh.pop %v4946
    %v6851 = vtanh.pop %v4949
    %v6852 = vtanh.pop %v4951
    %v6853 = vtanh.pop %v4954
    %v6854 = vtanh.pop %v4956
    %v6855 = vtanh.pop %v4959
    %v6856 = vtanh.pop %v4961
    %v6857 = vtanh.pop %v4964
    %v6858 = vtanh.pop %v4966
    %v6859 = vtanh.pop %v4969
    %v6860 = vtanh.pop %v4971
    %v6861 = vtanh.pop %v4974
    %v6862 = vtanh.pop %v4976
    %v6863 = vtanh.pop %v4979
    %v6864 = vtanh.pop %v4981
    %v6865 = vtanh.pop %v4984
    %v6866 = vtanh.pop %v4986
    %v6867 = vtanh.pop %v4989
    %v6868 = vtanh.pop %v4991
    %v6869 = vtanh.pop %v4994
    %v6870 = vtanh.pop %v4996
    %v6871 = vtanh.pop %v4999
    %v6872 = vtanh.pop %v5001
    %v6873 = vtanh.pop %v5004
    %v6874 = vtanh.pop %v5006
    %v6875 = vtanh.pop %v5009
    %v6876 = vtanh.pop %v5011
    %v6877 = vtanh.pop %v5014
    %v6878 = vtanh.pop %v5016
    %v6879 = vtanh.pop %v5019
    %v6880 = vtanh.pop %v5021
    %v6881 = vtanh.pop %v5024
    %v6882 = vtanh.pop %v5026
    %v6883 = vtanh.pop %v5029
    %v6884 = vtanh.pop %v5031
    %v6885 = vtanh.pop %v5034
    %v6886 = vtanh.pop %v5036
    %v6887 = vtanh.pop %v5039
    %v6888 = vtanh.pop %v5041
    %v6889 = vtanh.pop %v5044
    %v6890 = vtanh.pop %v5046
    %v6891 = vtanh.pop %v5049
    %v6892 = vtanh.pop %v5051
    %v6893 = vtanh.pop %v5054
    %v6894 = vtanh.pop %v5056
    %v6895 = vtanh.pop %v5059
    %v6896 = vtanh.pop %v5061
    %v6897 = vtanh.pop %v5064
    %v6898 = vtanh.pop %v5066
    %v6899 = vtanh.pop %v5069
    %v6900 = vtanh.pop %v5071
    %v6901 = vtanh.pop %v5074
    %v6902 = vtanh.pop %v5076
    %v6903 = vtanh.pop %v5079
    %v6904 = vtanh.pop %v5081
    %v6905 = vtanh.pop %v5084
    %v6906 = vtanh.pop %v5086
    %v6907 = vtanh.pop %v5089
    %v6908 = vtanh.pop %v5091
    %v6909 = vtanh.pop %v5094
    %v6910 = vtanh.pop %v5096
    %v6911 = vtanh.pop %v5099
    %v6912 = vtanh.pop %v5101
    %v6913 = vtanh.pop %v5104
    %v6914 = vtanh.pop %v5106
    %v6915 = vtanh.pop %v5109
    %v6916 = vtanh.pop %v5111
    %v6917 = vtanh.pop %v5114
    %v6918 = vtanh.pop %v5116
    %v6919 = vtanh.pop %v5119
    %v6920 = vtanh.pop %v5121
    %v6921 = vtanh.pop %v5124
    %v6922 = vtanh.pop %v5126
    %v6923 = vtanh.pop %v5129
    %v6924 = vtanh.pop %v5131
    %v6925 = vtanh.pop %v5134
    %v6926 = vtanh.pop %v5136
    %v6927 = vtanh.pop %v5139
    %v6928 = vtanh.pop %v5141
    %v6929 = vtanh.pop %v5144
    %v6930 = vtanh.pop %v5146
    %v6931 = vtanh.pop %v5149
    %v6932 = vtanh.pop %v5151
    %v6933 = vtanh.pop %v5154
    %v6934 = vtanh.pop %v5156
    %v6935 = vtanh.pop %v5159
    %v6936 = vtanh.pop %v5161
    %v6937 = vtanh.pop %v5164
    %v6938 = vtanh.pop %v5166
    %v6939 = vtanh.pop %v5169
    %v6940 = vtanh.pop %v5171
    %v6941 = vtanh.pop %v5174
    %v6942 = vtanh.pop %v5176
    %v6943 = vtanh.pop %v5179
    %v6944 = vtanh.pop %v5181
    %v6945 = vtanh.pop %v5184
    %v6946 = vtanh.pop %v5186
    %v6947 = vtanh.pop %v5189
    %v6948 = vtanh.pop %v5191
    %v6949 = vtanh.pop %v5194
    %v6950 = vtanh.pop %v5196
    %v6951 = vtanh.pop %v5199
    %v6952 = vtanh.pop %v5201
    %v6953 = vtanh.pop %v5204
    %v6954 = vtanh.pop %v5206
    %v6955 = vtanh.pop %v5209
    %v6956 = vtanh.pop %v5211
    %v6957 = vtanh.pop %v5214
    %v6958 = vtanh.pop %v5216
    %v6959 = vtanh.pop %v5219
    %v6960 = vtanh.pop %v5221
    %v6961 = vtanh.pop %v5224
    %v6962 = vtanh.pop %v5226
    %v6963 = vtanh.pop %v5229
    %v6964 = vtanh.pop %v5231
    %v6965 = vtanh.pop %v5234
    %v6966 = vtanh.pop %v5236
    %v6967 = vtanh.pop %v5239
    %v6968 = vtanh.pop %v5241
    %v6969 = vtanh.pop %v5244
    %v6970 = vtanh.pop %v5246
    %v6971 = vtanh.pop %v5249
    %v6972 = vtanh.pop %v5251
    %v6973 = vtanh.pop %v5254
    %v6974 = vtanh.pop %v5256
    %v6975 = vtanh.pop %v5259
    %v6976 = vtanh.pop %v5261
    %v6977 = vtanh.pop %v5264
    %v6978 = vtanh.pop %v5266
    %v6979 = vtanh.pop %v5269
    %v6980 = vtanh.pop %v5271
    %v6981 = vtanh.pop %v5274
    %v6982 = vtanh.pop %v5276
    %v6983 = vtanh.pop %v5279
    %v6984 = vtanh.pop %v5281
    %v6985 = vtanh.pop %v5284
    %v6986 = vtanh.pop %v5286
    %v6987 = vtanh.pop %v5289
    %v6988 = vtanh.pop %v5291
    %v6989 = vtanh.pop %v5294
    %v6990 = vtanh.pop %v5296
    %v6991 = vtanh.pop %v5299
    %v6992 = vtanh.pop %v5301
    %v6993 = vtanh.pop %v5304
    %v6994 = vtanh.pop %v5306
    %v6995 = vtanh.pop %v5309
    %v6996 = vtanh.pop %v5311
    %v6997 = vtanh.pop %v5314
    %v6998 = vtanh.pop %v5316
    %v6999 = vtanh.pop %v5319
    %v7000 = vtanh.pop %v5321
    %v7001 = vtanh.pop %v5324
    %v7002 = vtanh.pop %v5326
    %v7003 = vtanh.pop %v5329
    %v7004 = vtanh.pop %v5331
    %v7005 = vtanh.pop %v5334
    %v7006 = vtanh.pop %v5336
    %v7007 = vtanh.pop %v5339
    %v7008 = vtanh.pop %v5341
    %v7009 = vtanh.pop %v5344
    %v7010 = vtanh.pop %v5346
    %v7011 = vtanh.pop %v5349
    %v7012 = vtanh.pop %v5351
    %v7013 = vtanh.pop %v5354
    %v7014 = vtanh.pop %v5356
    %v7015 = vtanh.pop %v5359
    %v7016 = vtanh.pop %v5361
    %v7017 = vtanh.pop %v5364
    %v7018 = vtanh.pop %v5366
    %v7019 = vtanh.pop %v5369
    %v7020 = vtanh.pop %v5371
    %v7021 = vtanh.pop %v5374
    %v7022 = vtanh.pop %v5376
    %v7023 = vtanh.pop %v5379
    %v7024 = vtanh.pop %v5381
    %v7025 = vtanh.pop %v5384
    %v7026 = vtanh.pop %v5386
    %v7027 = vtanh.pop %v5389
    %v7028 = vtanh.pop %v5391
    %v7029 = vtanh.pop %v5394
    %v7030 = vtanh.pop %v5396
    %v7031 = vtanh.pop %v5399
    %v7032 = vtanh.pop %v5401
    %v7033 = vtanh.pop %v5404
    %v7034 = vtanh.pop %v5406
    %v7035 = vtanh.pop %v5409
    %v7036 = vtanh.pop %v5411
    %v7037 = vtanh.pop %v5414
    %v7038 = vtanh.pop %v5416
    %v7039 = vtanh.pop %v5419
    %v7040 = vtanh.pop %v5421
    %v7041 = vtanh.pop %v5424
    %v7042 = vtanh.pop %v5426
    %v7043 = vtanh.pop %v5429
    %v7044 = vtanh.pop %v5431
    %v7045 = vtanh.pop %v5434
    %v7046 = vtanh.pop %v5436
    %v7047 = vtanh.pop %v5439
    %v7048 = vtanh.pop %v5441
    %v7049 = vtanh.pop %v5444
    %v7050 = vtanh.pop %v5446
    %v7051 = vtanh.pop %v5449
    %v7052 = vtanh.pop %v5451
    %v7053 = vtanh.pop %v5454
    %v7054 = vtanh.pop %v5456
    %v7055 = vtanh.pop %v5459
    %v7056 = vtanh.pop %v5461
    %v7057 = vtanh.pop %v5464
    %v7058 = vtanh.pop %v5466
    %v7059 = vtanh.pop %v5469
    %v7060 = vtanh.pop %v5471
    %v7061 = vtanh.pop %v5474
    %v7062 = vtanh.pop %v5476
    %v7063 = vtanh.pop %v5479
    %v7064 = vtanh.pop %v5481
    %v7065 = vtanh.pop %v5484
    %v7066 = vtanh.pop %v5486
    %v7067 = vtanh.pop %v5489
    %v7068 = vtanh.pop %v5491
    %v7069 = vtanh.pop %v5494
    %v7070 = vtanh.pop %v5496
    %v7071 = vtanh.pop %v5499
    %v7072 = vtanh.pop %v5501
    %v7073 = vtanh.pop %v5504
    %v7074 = vtanh.pop %v5506
    %v7075 = vtanh.pop %v5509
    %v7076 = vtanh.pop %v5511
    %v7077 = vtanh.pop %v5514
    %v7078 = vtanh.pop %v5516
    %v7079 = vtanh.pop %v5519
    %v7080 = vtanh.pop %v5521
    %v7081 = vtanh.pop %v5524
    %v7082 = vtanh.pop %v5526
    %v7083 = vtanh.pop %v5529
    %v7084 = vtanh.pop %v5531
    %v7085 = vtanh.pop %v5534
    %v7086 = vtanh.pop %v5536
    %v7087 = vtanh.pop %v5539
    %v7088 = vtanh.pop %v5541
    %v7089 = vtanh.pop %v5544
    %v7090 = vtanh.pop %v5546
    %v7091 = vtanh.pop %v5549
    %v7092 = vtanh.pop %v5551
    %v7093 = vtanh.pop %v5554
    %v7094 = vtanh.pop %v5556
    %v7095 = vtanh.pop %v5559
    %v7096 = vtanh.pop %v5561
    %v7097 = vtanh.pop %v5564
    %v7098 = vtanh.pop %v5566
    %v7099 = vtanh.pop %v5569
    %v7100 = vtanh.pop %v5571
    %v7101 = vtanh.pop %v5574
    %v7102 = vtanh.pop %v5576
    %v7103 = vtanh.pop %v5579
    %v7104 = vtanh.pop %v5581
    %v7105 = vtanh.pop %v5584
    %v7106 = vtanh.pop %v5586
    %v7107 = vtanh.pop %v5589
    %v7108 = vtanh.pop %v5591
    %v7109 = vtanh.pop %v5594
    %v7110 = vtanh.pop %v5596
    %v7111 = vtanh.pop %v5599
    %v7112 = vtanh.pop %v5601
    %v7113 = vtanh.pop %v5604
    %v7114 = vtanh.pop %v5606
    %v7115 = vtanh.pop %v5609
    %v7116 = vtanh.pop %v5611
    %v7117 = vtanh.pop %v5614
    %v7118 = vtanh.pop %v5616
    %v7119 = vtanh.pop %v5619
    %v7120 = vtanh.pop %v5621
    %v7121 = vtanh.pop %v5624
    %v7122 = vtanh.pop %v5626
    %v7123 = vtanh.pop %v5629
    %v7124 = vtanh.pop %v5631
    %v7125 = vtanh.pop %v5634
    %v7126 = vtanh.pop %v5636
    %v7127 = vtanh.pop %v5639
    %v7128 = vtanh.pop %v5641
    %v7129 = vtanh.pop %v5644
    %v7130 = vtanh.pop %v5646
    %v7131 = vtanh.pop %v5649
    %v7132 = vtanh.pop %v5651
    %v7133 = vtanh.pop %v5654
    %v7134 = vtanh.pop %v5656
    %v7135 = vtanh.pop %v5659
    %v7136 = vtanh.pop %v5661
    %v7137 = vtanh.pop %v5664
    %v7138 = vtanh.pop %v5666
    %v7139 = vtanh.pop %v5669
    %v7140 = vtanh.pop %v5671
    %v7141 = vtanh.pop %v5674
    %v7142 = vtanh.pop %v5676
    %v7143 = vtanh.pop %v5679
    %v7144 = vtanh.pop %v5681
    %v7145 = vtanh.pop %v5684
    %v7146 = vtanh.pop %v5686
    %v7147 = vtanh.pop %v5689
    %v7148 = vtanh.pop %v5691
    %v7149 = vtanh.pop %v5694
    %v7150 = vtanh.pop %v5696
    %v7151 = vtanh.pop %v5699
    %v7152 = vtanh.pop %v5701
    %v7153 = vtanh.pop %v5704
    %v7154 = vtanh.pop %v5706
    %v7155 = vtanh.pop %v5709
    %v7156 = vtanh.pop %v5711
    %v7157 = vtanh.pop %v5714
    %v7158 = vtanh.pop %v5716
    %v7159 = vtanh.pop %v5719
    %v7160 = vtanh.pop %v5721
    %v7161 = vtanh.pop %v5724
    %v7162 = vtanh.pop %v5726
    %v7163 = vtanh.pop %v5729
    %v7164 = vtanh.pop %v5731
    %v7165 = vtanh.pop %v5734
    %v7166 = vtanh.pop %v5736
    %v7167 = vtanh.pop %v5739
    %v7168 = vtanh.pop %v5741
    %v7169 = vtanh.pop %v5744
    %v7170 = vtanh.pop %v5746
    %v7171 = vtanh.pop %v5749
    %v7172 = vtanh.pop %v5751
    %v7173 = vtanh.pop %v5754
    %v7174 = vtanh.pop %v5756
    %v7175 = vtanh.pop %v5759
    %v7176 = vtanh.pop %v5761
    %v7177 = vtanh.pop %v5764
    %v7178 = vtanh.pop %v5766
    %v7179 = vtanh.pop %v5769
    %v7180 = vtanh.pop %v5771
    %v7181 = vtanh.pop %v5774
    %v7182 = vtanh.pop %v5776
    %v7183 = vtanh.pop %v5779
    %v7184 = vtanh.pop %v5781
    %v7185 = vtanh.pop %v5784
    %v7186 = vtanh.pop %v5786
    %v7187 = vtanh.pop %v5789
    %v7188 = vtanh.pop %v5791
    %v7189 = vtanh.pop %v5794
    %v7190 = vtanh.pop %v5796
    %v7191 = vtanh.pop %v5799
    %v7192 = vtanh.pop %v5801
    %v7193 = vtanh.pop %v5804
    %v7194 = vtanh.pop %v5806
    %v7195 = vtanh.pop %v5809
    %v7196 = vtanh.pop %v5811
    %v7197 = vtanh.pop %v5814
    %v7198 = vtanh.pop %v5816
    %v7199 = vtanh.pop %v5819
    %v7200 = vtanh.pop %v5821
    %v7201 = vtanh.pop %v5824
    %v7202 = vtanh.pop %v5826
    %v7203 = vtanh.pop %v5829
    %v7204 = vtanh.pop %v5831
    %v7205 = vtanh.pop %v5834
    %v7206 = vtanh.pop %v5836
    %v7207 = vtanh.pop %v5839
    %v7208 = vtanh.pop %v5841
    %v7209 = vtanh.pop %v5844
    %v7210 = vtanh.pop %v5846
    %v7211 = vtanh.pop %v5849
    %v7212 = vtanh.pop %v5851
    %v7213 = vtanh.pop %v5854
    %v7214 = vtanh.pop %v5856
    %v7215 = vtanh.pop %v5859
    %v7216 = vtanh.pop %v5861
    %v7217 = vtanh.pop %v5864
    %v7218 = vtanh.pop %v5866
    %v7219 = vtanh.pop %v5869
    %v7220 = vtanh.pop %v5871
    %v7221 = vtanh.pop %v5874
    %v7222 = vtanh.pop %v5876
    %v7223 = vtanh.pop %v5879
    %v7224 = vtanh.pop %v5881
    %v7225 = vtanh.pop %v5884
    %v7226 = vtanh.pop %v5886
    %v7227 = vtanh.pop %v5889
    %v7228 = vtanh.pop %v5891
    %v7229 = vtanh.pop %v5894
    %v7230 = vtanh.pop %v5896
    %v7231 = vtanh.pop %v5899
    %v7232 = vtanh.pop %v5901
    %v7233 = vtanh.pop %v5904
    %v7234 = vtanh.pop %v5906
    %v7235 = vtanh.pop %v5909
    %v7236 = vtanh.pop %v5911
    %v7237 = vtanh.pop %v5914
    %v7238 = vtanh.pop %v5916
    %v7239 = vtanh.pop %v5919
    %v7240 = vtanh.pop %v5921
    %v7241 = vtanh.pop %v5924
    %v7242 = vtanh.pop %v5926
    %v7243 = vtanh.pop %v5929
    %v7244 = vtanh.pop %v5931
    %v7245 = vtanh.pop %v5934
    %v7246 = vtanh.pop %v5936
    %v7247 = vtanh.pop %v5939
    %v7248 = vtanh.pop %v5941
    %v7249 = vtanh.pop %v5944
    %v7250 = vtanh.pop %v5946
    %v7251 = vtanh.pop %v5949
    %v7252 = vtanh.pop %v5951
    %v7253 = vtanh.pop %v5954
    %v7254 = vtanh.pop %v5956
    %v7255 = vtanh.pop %v5959
    %v7256 = vtanh.pop %v5961
    %v7257 = vtanh.pop %v5964
    %v7258 = vtanh.pop %v5966
    %v7259 = vtanh.pop %v5969
    %v7260 = vtanh.pop %v5971
    %v7261 = vtanh.pop %v5974
    %v7262 = vtanh.pop %v5976
    %v7263 = vtanh.pop %v5979
    %v7264 = vtanh.pop %v5981
    %v7265 = vtanh.pop %v5984
    %v7266 = vtanh.pop %v5986
    %v7267 = vtanh.pop %v5989
    %v7268 = vtanh.pop %v5991
    %v7269 = vtanh.pop %v5994
    %v7270 = vtanh.pop %v5996
    %v7271 = vtanh.pop %v5999
    %v7272 = vtanh.pop %v6001
    %v7273 = vtanh.pop %v6004
    %v7274 = vtanh.pop %v6006
    %v7275 = vtanh.pop %v6009
    %v7276 = vtanh.pop %v6011
    %v7277 = vtanh.pop %v6014
    %v7278 = vtanh.pop %v6016
    %v7279 = vtanh.pop %v6019
    %v7280 = vtanh.pop %v6021
    %v7281 = vtanh.pop %v6024
    %v7282 = vtanh.pop %v6026
    %v7283 = vtanh.pop %v6029
    %v7284 = vtanh.pop %v6031
    %v7285 = vtanh.pop %v6034
    %v7286 = vtanh.pop %v6036
    %v7287 = vtanh.pop %v6039
    %v7288 = vtanh.pop %v6041
    %v7289 = vtanh.pop %v6044
    %v7290 = vtanh.pop %v6046
    %v7291 = vtanh.pop %v6049
    %v7292 = vtanh.pop %v6051
    %v7293 = vtanh.pop %v6054
    %v7294 = vtanh.pop %v6056
    %v7295 = vtanh.pop %v6059
    %v7296 = vtanh.pop %v6061
    %v7297 = vtanh.pop %v6064
    %v7298 = vtanh.pop %v6066
    %v7299 = vtanh.pop %v6069
    %v7300 = vtanh.pop %v6071
    %v7301 = vtanh.pop %v6074
    %v7302 = vtanh.pop %v6076
    %v7303 = vtanh.pop %v6079
    %v7304 = vtanh.pop %v6081
    %v7305 = vtanh.pop %v6084
    %v7306 = vtanh.pop %v6086
    %v7307 = vtanh.pop %v6089
    %v7308 = vtanh.pop %v6091
    %v7309 = vtanh.pop %v6094
    %v7310 = vtanh.pop %v6096
    %v7311 = vtanh.pop %v6099
    %v7312 = vtanh.pop %v6101
    %v7313 = vtanh.pop %v6104
    %v7314 = vtanh.pop %v6106
    %v7315 = vtanh.pop %v6109
    %v7316 = vtanh.pop %v6111
    %v7317 = vtanh.pop %v6114
    %v7318 = vtanh.pop %v6116
    %v7319 = vtanh.pop %v6119
    %v7320 = vtanh.pop %v6121
    %v7321 = vtanh.pop %v6124
    %v7322 = vtanh.pop %v6126
    %v7323 = vtanh.pop %v6129
    %v7324 = vtanh.pop %v6131
    %v7325 = vtanh.pop %v6134
    %v7326 = vtanh.pop %v6136
    %v7327 = vtanh.pop %v6139
    %v7328 = vtanh.pop %v6141
    %v7329 = vtanh.pop %v6144
    %v7330 = vtanh.pop %v6146
    %v7331 = vtanh.pop %v6149
    %v7332 = vtanh.pop %v6151
    %v7333 = vtanh.pop %v6154
    %v7334 = vtanh.pop %v6156
    %v7335 = vtanh.pop %v6159
    %v7336 = vtanh.pop %v6161
    %v7337 = vtanh.pop %v6164
    %v7338 = vtanh.pop %v6166
    %v7339 = vtanh.pop %v6169
    %v7340 = vtanh.pop %v6171
    %v7341 = vtanh.pop %v6174
    %v7342 = vtanh.pop %v6176
    %v7343 = vtanh.pop %v6179
    %v7344 = vtanh.pop %v6181
    %v7345 = vtanh.pop %v6184
    %v7346 = vtanh.pop %v6186
    %v7347 = vtanh.pop %v6189
    %v7348 = vtanh.pop %v6191
    %v7349 = vtanh.pop %v6194
    %v7350 = vtanh.pop %v6196
    %v7351 = vtanh.pop %v6199
    %v7352 = vtanh.pop %v6201
    %v7353 = vtanh.pop %v6204
    %v7354 = vtanh.pop %v6206
    %v7355 = vtanh.pop %v6209
    %v7356 = vtanh.pop %v6211
    %v7357 = vtanh.pop %v6214
    %v7358 = vtanh.pop %v6216
    %v7359 = vtanh.pop %v6219
    %v7360 = vtanh.pop %v6221
    %v7361 = vtanh.pop %v6224
    %v7362 = vtanh.pop %v6226
    %v7363 = vtanh.pop %v6229
    %v7364 = vtanh.pop %v6231
    %v7365 = vtanh.pop %v6234
    %v7366 = vtanh.pop %v6236
    %v7367 = vtanh.pop %v6239
    %v7368 = vtanh.pop %v6241
    %v7369 = vtanh.pop %v6244
    %v7370 = vtanh.pop %v6246
    %v7371 = vtanh.pop %v6249
    %v7372 = vtanh.pop %v6251
    %v7373 = vtanh.pop %v6254
    %v7374 = vtanh.pop %v6256
    %v7375 = vtanh.pop %v6259
    %v7376 = vtanh.pop %v6261
    %v7377 = vtanh.pop %v6264
    %v7378 = vtanh.pop %v6266
    %v7379 = vtanh.pop %v6269
    %v7380 = vtanh.pop %v6271
    %v7381 = vtanh.pop %v6274
    %v7382 = vtanh.pop %v6276
    %v7383 = vtanh.pop %v6279
    %v7384 = vtanh.pop %v6281
    %v7385 = vtanh.pop %v6284
    %v7386 = vtanh.pop %v6286
    %v7387 = vtanh.pop %v6289
    %v7388 = vtanh.pop %v6291
    %v7389 = vtanh.pop %v6294
    %v7390 = vtanh.pop %v6296
    %v7391 = vtanh.pop %v6299
    %v7392 = vtanh.pop %v6301
    %v7393 = vtanh.pop %v6304
    %v7394 = vtanh.pop %v6306
    %v7395 = vtanh.pop %v6309
    %v7396 = vtanh.pop %v6311
    %v7397 = vtanh.pop %v6314
    %v7398 = vtanh.pop %v6316
    %v7399 = vtanh.pop %v6319
    %v7400 = vtanh.pop %v6321
    %v7401 = vtanh.pop %v6324
    %v7402 = vtanh.pop %v6326
    %v7403 = vtanh.pop %v6329
    %v7404 = vtanh.pop %v6331
    %v7405 = vtanh.pop %v6334
    %v7406 = vtanh.pop %v6336
    %v7407 = vtanh.pop %v6339
    %v7408 = vtanh.pop %v6341
    %v7409 = vtanh.pop %v6344
    %v7410 = vtanh.pop %v6346
    %v7411 = vtanh.pop %v6349
    %v7412 = vtanh.pop %v6351
    %v7413 = vtanh.pop %v6354
    %v7414 = vtanh.pop %v6356
    %v7415 = vtanh.pop %v6359
    %v7416 = vtanh.pop %v6361
    %v7417 = vtanh.pop %v6364
    %v7418 = vtanh.pop %v6366
    %v7419 = vtanh.pop %v6369
    %v7420 = vtanh.pop %v6371
    %v7421 = vtanh.pop %v6374
    %v7422 = vtanh.pop %v6376
    %v7423 = vtanh.pop %v6379
    %v7424 = vtanh.pop %v6381
    %v7425 = vtanh.pop %v6384
    %v7426 = vtanh.pop %v6386
    %v7427 = vtanh.pop %v6389
    %v7428 = vtanh.pop %v6391
    %v7429 = vtanh.pop %v6394
    %v7430 = vtanh.pop %v6396
    %v7431 = vtanh.pop %v6399
    %v7432 = vtanh.pop %v6401
    %v7433 = vtanh.pop %v6404
    %v7434 = vtanh.pop %v6406
    %v7435 = vtanh.pop %v6409
    %v7436 = vtanh.pop %v6411
    %v7437 = vtanh.pop %v6414
    %v7438 = vtanh.pop %v6416
    %v7439 = vtanh.pop %v6419
    %v7440 = vtanh.pop %v6421
    %v7441 = vtanh.pop %v6424
    %v7442 = vtanh.pop %v6426
    %v7443 = vtanh.pop %v6429
    %v7444 = vtanh.pop %v6431
    %v7445 = vtanh.pop %v6434
    %v7446 = vtanh.pop %v6436
    %v7447 = vtanh.pop %v6439
    %v7448 = vtanh.pop %v6441
    %v7449 = vtanh.pop %v6444
    %v7450 = vtanh.pop %v6446
    %v7451 = vtanh.pop %v6449
    %v7452 = vtanh.pop %v6451
    %v7453 = vtanh.pop %v6454
    %v7454 = vtanh.pop %v6456
    %v7455 = vtanh.pop %v6459
    %v7456 = vtanh.pop %v6461
    %v7457 = vtanh.pop %v6464
    %v7458 = vtanh.pop %v6466
    %v7459 = vtanh.pop %v6469
    %v7460 = vtanh.pop %v6471
    %v7461 = vtanh.pop %v6474
    %v7462 = vtanh.pop %v6476
    %v7463 = vtanh.pop %v6479
    %v7464 = vtanh.pop %v6481
    %v7465 = vtanh.pop %v6484
    %v7466 = vtanh.pop %v6486
    %v7467 = vtanh.pop %v6489
    %v7468 = vtanh.pop %v6491
    %v7469 = vtanh.pop %v6494
    %v7470 = vtanh.pop %v6496
    %v7471 = vtanh.pop %v6499
    %v7472 = vtanh.pop %v6501
    %v7473 = vtanh.pop %v6504
    %v7474 = vtanh.pop %v6506
    %v7475 = vtanh.pop %v6509
    %v7476 = vtanh.pop %v6511
    %v7477 = vtanh.pop %v6514
    %v7478 = vtanh.pop %v6516
    %v7479 = vtanh.pop %v6519
    %v7480 = vtanh.pop %v6521
    %v7481 = vtanh.pop %v6524
    %v7482 = vtanh.pop %v6526
    %v7483 = vtanh.pop %v6529
    %v7484 = vtanh.pop %v6531
    %v7485 = vtanh.pop %v6534
    %v7486 = vtanh.pop %v6536
    %v7487 = vtanh.pop %v6539
    %v7488 = vtanh.pop %v6541
    %v7489 = vtanh.pop %v6544
    %v7490 = vtanh.pop %v6546
    %v7491 = vtanh.pop %v6549
    %v7492 = vtanh.pop %v6551
    %v7493 = vtanh.pop %v6554
    %v7494 = vtanh.pop %v6556
    %v7495 = vtanh.pop %v6559
    %v7496 = vtanh.pop %v6561
    %v7497 = vtanh.pop %v6564
    %v7498 = vtanh.pop %v6566
    %v7499 = vtanh.pop %v6569
    %v7500 = vtanh.pop %v6571
    %v7501 = vtanh.pop %v6574
    %v7502 = vtanh.pop %v6576
    %v7503 = vtanh.pop %v6579
    %v7504 = vtanh.pop %v6581
    %v7505 = vtanh.pop %v6584
    %v7506 = vtanh.pop %v6586
    %v7507 = vtanh.pop %v6589
    %v7508 = vtanh.pop %v6591
    %v7509 = vtanh.pop %v6594
    %v7510 = vtanh.pop %v6596
    %v7511 = vtanh.pop %v6599
    %v7512 = vtanh.pop %v6601
    %v7513 = vtanh.pop %v6604
    %v7514 = vtanh.pop %v6606
    %v7515 = vtanh.pop %v6609
    %v7516 = vtanh.pop %v6611
    %v7517 = vtanh.pop %v6614
    %v7518 = vtanh.pop %v6616
    %v7519 = vtanh.pop %v6619
    %v7520 = vtanh.pop %v6621
    %v7521 = vtanh.pop %v6624
    %v7522 = vtanh.pop %v6626
    %v7523 = vtanh.pop %v6629
    %v7524 = vtanh.pop %v6631
    %v7525 = vtanh.pop %v6634
    %v7526 = vtanh.pop %v6636
    %v7527 = vtanh.pop %v6639
    %v7528 = vtanh.pop %v6641
    %v7529 = vtanh.pop %v6644
    %v7530 = vtanh.pop %v6646
    %v7531 = vtanh.pop %v6649
    %v7532 = vtanh.pop %v6651
    %v7533 = vpack.c.bf16 %v6654, %v6653
    %v7534 = vpack.c.bf16 %v6656, %v6655
    %v7535 = vpack.c.bf16 %v6658, %v6657
    %v7536 = vpack.c.bf16 %v6660, %v6659
    %v7537 = vpack.c.bf16 %v6662, %v6661
    %v7538 = vpack.c.bf16 %v6664, %v6663
    %v7539 = vpack.c.bf16 %v6666, %v6665
    %v7540 = vpack.c.bf16 %v6668, %v6667
    %v7541 = vpack.c.bf16 %v6670, %v6669
    %v7542 = vpack.c.bf16 %v6672, %v6671
    %v7543 = vpack.c.bf16 %v6674, %v6673
    %v7544 = vpack.c.bf16 %v6676, %v6675
    %v7545 = vpack.c.bf16 %v6678, %v6677
    %v7546 = vpack.c.bf16 %v6680, %v6679
    %v7547 = vpack.c.bf16 %v6682, %v6681
    %v7548 = vpack.c.bf16 %v6684, %v6683
    %v7549 = vpack.c.bf16 %v6686, %v6685
    %v7550 = vpack.c.bf16 %v6688, %v6687
    %v7551 = vpack.c.bf16 %v6690, %v6689
    %v7552 = vpack.c.bf16 %v6692, %v6691
    %v7553 = vpack.c.bf16 %v6694, %v6693
    %v7554 = vpack.c.bf16 %v6696, %v6695
    %v7555 = vpack.c.bf16 %v6698, %v6697
    %v7556 = vpack.c.bf16 %v6700, %v6699
    %v7557 = vpack.c.bf16 %v6702, %v6701
    %v7558 = vpack.c.bf16 %v6704, %v6703
    %v7559 = vpack.c.bf16 %v6706, %v6705
    %v7560 = vpack.c.bf16 %v6708, %v6707
    %v7561 = vpack.c.bf16 %v6710, %v6709
    %v7562 = vpack.c.bf16 %v6712, %v6711
    %v7563 = vpack.c.bf16 %v6714, %v6713
    %v7564 = vpack.c.bf16 %v6716, %v6715
    %v7565 = vpack.c.bf16 %v6718, %v6717
    %v7566 = vpack.c.bf16 %v6720, %v6719
    %v7567 = vpack.c.bf16 %v6722, %v6721
    %v7568 = vpack.c.bf16 %v6724, %v6723
    %v7569 = vpack.c.bf16 %v6726, %v6725
    %v7570 = vpack.c.bf16 %v6728, %v6727
    %v7571 = vpack.c.bf16 %v6730, %v6729
    %v7572 = vpack.c.bf16 %v6732, %v6731
    %v7573 = vpack.c.bf16 %v6734, %v6733
    %v7574 = vpack.c.bf16 %v6736, %v6735
    %v7575 = vpack.c.bf16 %v6738, %v6737
    %v7576 = vpack.c.bf16 %v6740, %v6739
    %v7577 = vpack.c.bf16 %v6742, %v6741
    %v7578 = vpack.c.bf16 %v6744, %v6743
    %v7579 = vpack.c.bf16 %v6746, %v6745
    %v7580 = vpack.c.bf16 %v6748, %v6747
    %v7581 = vpack.c.bf16 %v6750, %v6749
    %v7582 = vpack.c.bf16 %v6752, %v6751
    %v7583 = vpack.c.bf16 %v6754, %v6753
    %v7584 = vpack.c.bf16 %v6756, %v6755
    %v7585 = vpack.c.bf16 %v6758, %v6757
    %v7586 = vpack.c.bf16 %v6760, %v6759
    %v7587 = vpack.c.bf16 %v6762, %v6761
    %v7588 = vpack.c.bf16 %v6764, %v6763
    %v7589 = vpack.c.bf16 %v6766, %v6765
    %v7590 = vpack.c.bf16 %v6768, %v6767
    %v7591 = vpack.c.bf16 %v6770, %v6769
    %v7592 = vpack.c.bf16 %v6772, %v6771
    %v7593 = vpack.c.bf16 %v6774, %v6773
    %v7594 = vpack.c.bf16 %v6776, %v6775
    %v7595 = vpack.c.bf16 %v6778, %v6777
    %v7596 = vpack.c.bf16 %v6780, %v6779
    %v7597 = vpack.c.bf16 %v6782, %v6781
    %v7598 = vpack.c.bf16 %v6784, %v6783
    %v7599 = vpack.c.bf16 %v6786, %v6785
    %v7600 = vpack.c.bf16 %v6788, %v6787
    %v7601 = vpack.c.bf16 %v6790, %v6789
    %v7602 = vpack.c.bf16 %v6792, %v6791
    %v7603 = vpack.c.bf16 %v6794, %v6793
    %v7604 = vpack.c.bf16 %v6796, %v6795
    %v7605 = vpack.c.bf16 %v6798, %v6797
    %v7606 = vpack.c.bf16 %v6800, %v6799
    %v7607 = vpack.c.bf16 %v6802, %v6801
    %v7608 = vpack.c.bf16 %v6804, %v6803
    %v7609 = vpack.c.bf16 %v6806, %v6805
    %v7610 = vpack.c.bf16 %v6808, %v6807
    %v7611 = vpack.c.bf16 %v6810, %v6809
    %v7612 = vpack.c.bf16 %v6812, %v6811
    %v7613 = vpack.c.bf16 %v6814, %v6813
    %v7614 = vpack.c.bf16 %v6816, %v6815
    %v7615 = vpack.c.bf16 %v6818, %v6817
    %v7616 = vpack.c.bf16 %v6820, %v6819
    %v7617 = vpack.c.bf16 %v6822, %v6821
    %v7618 = vpack.c.bf16 %v6824, %v6823
    %v7619 = vpack.c.bf16 %v6826, %v6825
    %v7620 = vpack.c.bf16 %v6828, %v6827
    %v7621 = vpack.c.bf16 %v6830, %v6829
    %v7622 = vpack.c.bf16 %v6832, %v6831
    %v7623 = vpack.c.bf16 %v6834, %v6833
    %v7624 = vpack.c.bf16 %v6836, %v6835
    %v7625 = vpack.c.bf16 %v6838, %v6837
    %v7626 = vpack.c.bf16 %v6840, %v6839
    %v7627 = vpack.c.bf16 %v6842, %v6841
    %v7628 = vpack.c.bf16 %v6844, %v6843
    %v7629 = vpack.c.bf16 %v6846, %v6845
    %v7630 = vpack.c.bf16 %v6848, %v6847
    %v7631 = vpack.c.bf16 %v6850, %v6849
    %v7632 = vpack.c.bf16 %v6852, %v6851
    %v7633 = vpack.c.bf16 %v6854, %v6853
    %v7634 = vpack.c.bf16 %v6856, %v6855
    %v7635 = vpack.c.bf16 %v6858, %v6857
    %v7636 = vpack.c.bf16 %v6860, %v6859
    %v7637 = vpack.c.bf16 %v6862, %v6861
    %v7638 = vpack.c.bf16 %v6864, %v6863
    %v7639 = vpack.c.bf16 %v6866, %v6865
    %v7640 = vpack.c.bf16 %v6868, %v6867
    %v7641 = vpack.c.bf16 %v6870, %v6869
    %v7642 = vpack.c.bf16 %v6872, %v6871
    %v7643 = vpack.c.bf16 %v6874, %v6873
    %v7644 = vpack.c.bf16 %v6876, %v6875
    %v7645 = vpack.c.bf16 %v6878, %v6877
    %v7646 = vpack.c.bf16 %v6880, %v6879
    %v7647 = vpack.c.bf16 %v6882, %v6881
    %v7648 = vpack.c.bf16 %v6884, %v6883
    %v7649 = vpack.c.bf16 %v6886, %v6885
    %v7650 = vpack.c.bf16 %v6888, %v6887
    %v7651 = vpack.c.bf16 %v6890, %v6889
    %v7652 = vpack.c.bf16 %v6892, %v6891
    %v7653 = vpack.c.bf16 %v6894, %v6893
    %v7654 = vpack.c.bf16 %v6896, %v6895
    %v7655 = vpack.c.bf16 %v6898, %v6897
    %v7656 = vpack.c.bf16 %v6900, %v6899
    %v7657 = vpack.c.bf16 %v6902, %v6901
    %v7658 = vpack.c.bf16 %v6904, %v6903
    %v7659 = vpack.c.bf16 %v6906, %v6905
    %v7660 = vpack.c.bf16 %v6908, %v6907
    %v7661 = vpack.c.bf16 %v6910, %v6909
    %v7662 = vpack.c.bf16 %v6912, %v6911
    %v7663 = vpack.c.bf16 %v6914, %v6913
    %v7664 = vpack.c.bf16 %v6916, %v6915
    %v7665 = vpack.c.bf16 %v6918, %v6917
    %v7666 = vpack.c.bf16 %v6920, %v6919
    %v7667 = vpack.c.bf16 %v6922, %v6921
    %v7668 = vpack.c.bf16 %v6924, %v6923
    %v7669 = vpack.c.bf16 %v6926, %v6925
    %v7670 = vpack.c.bf16 %v6928, %v6927
    %v7671 = vpack.c.bf16 %v6930, %v6929
    %v7672 = vpack.c.bf16 %v6932, %v6931
    %v7673 = vpack.c.bf16 %v6934, %v6933
    %v7674 = vpack.c.bf16 %v6936, %v6935
    %v7675 = vpack.c.bf16 %v6938, %v6937
    %v7676 = vpack.c.bf16 %v6940, %v6939
    %v7677 = vpack.c.bf16 %v6942, %v6941
    %v7678 = vpack.c.bf16 %v6944, %v6943
    %v7679 = vpack.c.bf16 %v6946, %v6945
    %v7680 = vpack.c.bf16 %v6948, %v6947
    %v7681 = vpack.c.bf16 %v6950, %v6949
    %v7682 = vpack.c.bf16 %v6952, %v6951
    %v7683 = vpack.c.bf16 %v6954, %v6953
    %v7684 = vpack.c.bf16 %v6956, %v6955
    %v7685 = vpack.c.bf16 %v6958, %v6957
    %v7686 = vpack.c.bf16 %v6960, %v6959
    %v7687 = vpack.c.bf16 %v6962, %v6961
    %v7688 = vpack.c.bf16 %v6964, %v6963
    %v7689 = vpack.c.bf16 %v6966, %v6965
    %v7690 = vpack.c.bf16 %v6968, %v6967
    %v7691 = vpack.c.bf16 %v6970, %v6969
    %v7692 = vpack.c.bf16 %v6972, %v6971
    %v7693 = vpack.c.bf16 %v6974, %v6973
    %v7694 = vpack.c.bf16 %v6976, %v6975
    %v7695 = vpack.c.bf16 %v6978, %v6977
    %v7696 = vpack.c.bf16 %v6980, %v6979
    %v7697 = vpack.c.bf16 %v6982, %v6981
    %v7698 = vpack.c.bf16 %v6984, %v6983
    %v7699 = vpack.c.bf16 %v6986, %v6985
    %v7700 = vpack.c.bf16 %v6988, %v6987
    %v7701 = vpack.c.bf16 %v6990, %v6989
    %v7702 = vpack.c.bf16 %v6992, %v6991
    %v7703 = vpack.c.bf16 %v6994, %v6993
    %v7704 = vpack.c.bf16 %v6996, %v6995
    %v7705 = vpack.c.bf16 %v6998, %v6997
    %v7706 = vpack.c.bf16 %v7000, %v6999
    %v7707 = vpack.c.bf16 %v7002, %v7001
    %v7708 = vpack.c.bf16 %v7004, %v7003
    %v7709 = vpack.c.bf16 %v7006, %v7005
    %v7710 = vpack.c.bf16 %v7008, %v7007
    %v7711 = vpack.c.bf16 %v7010, %v7009
    %v7712 = vpack.c.bf16 %v7012, %v7011
    %v7713 = vpack.c.bf16 %v7014, %v7013
    %v7714 = vpack.c.bf16 %v7016, %v7015
    %v7715 = vpack.c.bf16 %v7018, %v7017
    %v7716 = vpack.c.bf16 %v7020, %v7019
    %v7717 = vpack.c.bf16 %v7022, %v7021
    %v7718 = vpack.c.bf16 %v7024, %v7023
    %v7719 = vpack.c.bf16 %v7026, %v7025
    %v7720 = vpack.c.bf16 %v7028, %v7027
    %v7721 = vpack.c.bf16 %v7030, %v7029
    %v7722 = vpack.c.bf16 %v7032, %v7031
    %v7723 = vpack.c.bf16 %v7034, %v7033
    %v7724 = vpack.c.bf16 %v7036, %v7035
    %v7725 = vpack.c.bf16 %v7038, %v7037
    %v7726 = vpack.c.bf16 %v7040, %v7039
    %v7727 = vpack.c.bf16 %v7042, %v7041
    %v7728 = vpack.c.bf16 %v7044, %v7043
    %v7729 = vpack.c.bf16 %v7046, %v7045
    %v7730 = vpack.c.bf16 %v7048, %v7047
    %v7731 = vpack.c.bf16 %v7050, %v7049
    %v7732 = vpack.c.bf16 %v7052, %v7051
    %v7733 = vpack.c.bf16 %v7054, %v7053
    %v7734 = vpack.c.bf16 %v7056, %v7055
    %v7735 = vpack.c.bf16 %v7058, %v7057
    %v7736 = vpack.c.bf16 %v7060, %v7059
    %v7737 = vpack.c.bf16 %v7062, %v7061
    %v7738 = vpack.c.bf16 %v7064, %v7063
    %v7739 = vpack.c.bf16 %v7066, %v7065
    %v7740 = vpack.c.bf16 %v7068, %v7067
    %v7741 = vpack.c.bf16 %v7070, %v7069
    %v7742 = vpack.c.bf16 %v7072, %v7071
    %v7743 = vpack.c.bf16 %v7074, %v7073
    %v7744 = vpack.c.bf16 %v7076, %v7075
    %v7745 = vpack.c.bf16 %v7078, %v7077
    %v7746 = vpack.c.bf16 %v7080, %v7079
    %v7747 = vpack.c.bf16 %v7082, %v7081
    %v7748 = vpack.c.bf16 %v7084, %v7083
    %v7749 = vpack.c.bf16 %v7086, %v7085
    %v7750 = vpack.c.bf16 %v7088, %v7087
    %v7751 = vpack.c.bf16 %v7090, %v7089
    %v7752 = vpack.c.bf16 %v7092, %v7091
    %v7753 = vpack.c.bf16 %v7094, %v7093
    %v7754 = vpack.c.bf16 %v7096, %v7095
    %v7755 = vpack.c.bf16 %v7098, %v7097
    %v7756 = vpack.c.bf16 %v7100, %v7099
    %v7757 = vpack.c.bf16 %v7102, %v7101
    %v7758 = vpack.c.bf16 %v7104, %v7103
    %v7759 = vpack.c.bf16 %v7106, %v7105
    %v7760 = vpack.c.bf16 %v7108, %v7107
    %v7761 = vpack.c.bf16 %v7110, %v7109
    %v7762 = vpack.c.bf16 %v7112, %v7111
    %v7763 = vpack.c.bf16 %v7114, %v7113
    %v7764 = vpack.c.bf16 %v7116, %v7115
    %v7765 = vpack.c.bf16 %v7118, %v7117
    %v7766 = vpack.c.bf16 %v7120, %v7119
    %v7767 = vpack.c.bf16 %v7122, %v7121
    %v7768 = vpack.c.bf16 %v7124, %v7123
    %v7769 = vpack.c.bf16 %v7126, %v7125
    %v7770 = vpack.c.bf16 %v7128, %v7127
    %v7771 = vpack.c.bf16 %v7130, %v7129
    %v7772 = vpack.c.bf16 %v7132, %v7131
    %v7773 = vpack.c.bf16 %v7134, %v7133
    %v7774 = vpack.c.bf16 %v7136, %v7135
    %v7775 = vpack.c.bf16 %v7138, %v7137
    %v7776 = vpack.c.bf16 %v7140, %v7139
    %v7777 = vpack.c.bf16 %v7142, %v7141
    %v7778 = vpack.c.bf16 %v7144, %v7143
    %v7779 = vpack.c.bf16 %v7146, %v7145
    %v7780 = vpack.c.bf16 %v7148, %v7147
    %v7781 = vpack.c.bf16 %v7150, %v7149
    %v7782 = vpack.c.bf16 %v7152, %v7151
    %v7783 = vpack.c.bf16 %v7154, %v7153
    %v7784 = vpack.c.bf16 %v7156, %v7155
    %v7785 = vpack.c.bf16 %v7158, %v7157
    %v7786 = vpack.c.bf16 %v7160, %v7159
    %v7787 = vpack.c.bf16 %v7162, %v7161
    %v7788 = vpack.c.bf16 %v7164, %v7163
    %v7789 = vpack.c.bf16 %v7166, %v7165
    %v7790 = vpack.c.bf16 %v7168, %v7167
    %v7791 = vpack.c.bf16 %v7170, %v7169
    %v7792 = vpack.c.bf16 %v7172, %v7171
    %v7793 = vpack.c.bf16 %v7174, %v7173
    %v7794 = vpack.c.bf16 %v7176, %v7175
    %v7795 = vpack.c.bf16 %v7178, %v7177
    %v7796 = vpack.c.bf16 %v7180, %v7179
    %v7797 = vpack.c.bf16 %v7182, %v7181
    %v7798 = vpack.c.bf16 %v7184, %v7183
    %v7799 = vpack.c.bf16 %v7186, %v7185
    %v7800 = vpack.c.bf16 %v7188, %v7187
    %v7801 = vpack.c.bf16 %v7190, %v7189
    %v7802 = vpack.c.bf16 %v7192, %v7191
    %v7803 = vpack.c.bf16 %v7194, %v7193
    %v7804 = vpack.c.bf16 %v7196, %v7195
    %v7805 = vpack.c.bf16 %v7198, %v7197
    %v7806 = vpack.c.bf16 %v7200, %v7199
    %v7807 = vpack.c.bf16 %v7202, %v7201
    %v7808 = vpack.c.bf16 %v7204, %v7203
    %v7809 = vpack.c.bf16 %v7206, %v7205
    %v7810 = vpack.c.bf16 %v7208, %v7207
    %v7811 = vpack.c.bf16 %v7210, %v7209
    %v7812 = vpack.c.bf16 %v7212, %v7211
    %v7813 = vpack.c.bf16 %v7214, %v7213
    %v7814 = vpack.c.bf16 %v7216, %v7215
    %v7815 = vpack.c.bf16 %v7218, %v7217
    %v7816 = vpack.c.bf16 %v7220, %v7219
    %v7817 = vpack.c.bf16 %v7222, %v7221
    %v7818 = vpack.c.bf16 %v7224, %v7223
    %v7819 = vpack.c.bf16 %v7226, %v7225
    %v7820 = vpack.c.bf16 %v7228, %v7227
    %v7821 = vpack.c.bf16 %v7230, %v7229
    %v7822 = vpack.c.bf16 %v7232, %v7231
    %v7823 = vpack.c.bf16 %v7234, %v7233
    %v7824 = vpack.c.bf16 %v7236, %v7235
    %v7825 = vpack.c.bf16 %v7238, %v7237
    %v7826 = vpack.c.bf16 %v7240, %v7239
    %v7827 = vpack.c.bf16 %v7242, %v7241
    %v7828 = vpack.c.bf16 %v7244, %v7243
    %v7829 = vpack.c.bf16 %v7246, %v7245
    %v7830 = vpack.c.bf16 %v7248, %v7247
    %v7831 = vpack.c.bf16 %v7250, %v7249
    %v7832 = vpack.c.bf16 %v7252, %v7251
    %v7833 = vpack.c.bf16 %v7254, %v7253
    %v7834 = vpack.c.bf16 %v7256, %v7255
    %v7835 = vpack.c.bf16 %v7258, %v7257
    %v7836 = vpack.c.bf16 %v7260, %v7259
    %v7837 = vpack.c.bf16 %v7262, %v7261
    %v7838 = vpack.c.bf16 %v7264, %v7263
    %v7839 = vpack.c.bf16 %v7266, %v7265
    %v7840 = vpack.c.bf16 %v7268, %v7267
    %v7841 = vpack.c.bf16 %v7270, %v7269
    %v7842 = vpack.c.bf16 %v7272, %v7271
    %v7843 = vpack.c.bf16 %v7274, %v7273
    %v7844 = vpack.c.bf16 %v7276, %v7275
    %v7845 = vpack.c.bf16 %v7278, %v7277
    %v7846 = vpack.c.bf16 %v7280, %v7279
    %v7847 = vpack.c.bf16 %v7282, %v7281
    %v7848 = vpack.c.bf16 %v7284, %v7283
    %v7849 = vpack.c.bf16 %v7286, %v7285
    %v7850 = vpack.c.bf16 %v7288, %v7287
    %v7851 = vpack.c.bf16 %v7290, %v7289
    %v7852 = vpack.c.bf16 %v7292, %v7291
    %v7853 = vpack.c.bf16 %v7294, %v7293
    %v7854 = vpack.c.bf16 %v7296, %v7295
    %v7855 = vpack.c.bf16 %v7298, %v7297
    %v7856 = vpack.c.bf16 %v7300, %v7299
    %v7857 = vpack.c.bf16 %v7302, %v7301
    %v7858 = vpack.c.bf16 %v7304, %v7303
    %v7859 = vpack.c.bf16 %v7306, %v7305
    %v7860 = vpack.c.bf16 %v7308, %v7307
    %v7861 = vpack.c.bf16 %v7310, %v7309
    %v7862 = vpack.c.bf16 %v7312, %v7311
    %v7863 = vpack.c.bf16 %v7314, %v7313
    %v7864 = vpack.c.bf16 %v7316, %v7315
    %v7865 = vpack.c.bf16 %v7318, %v7317
    %v7866 = vpack.c.bf16 %v7320, %v7319
    %v7867 = vpack.c.bf16 %v7322, %v7321
    %v7868 = vpack.c.bf16 %v7324, %v7323
    %v7869 = vpack.c.bf16 %v7326, %v7325
    %v7870 = vpack.c.bf16 %v7328, %v7327
    %v7871 = vpack.c.bf16 %v7330, %v7329
    %v7872 = vpack.c.bf16 %v7332, %v7331
    %v7873 = vpack.c.bf16 %v7334, %v7333
    %v7874 = vpack.c.bf16 %v7336, %v7335
    %v7875 = vpack.c.bf16 %v7338, %v7337
    %v7876 = vpack.c.bf16 %v7340, %v7339
    %v7877 = vpack.c.bf16 %v7342, %v7341
    %v7878 = vpack.c.bf16 %v7344, %v7343
    %v7879 = vpack.c.bf16 %v7346, %v7345
    %v7880 = vpack.c.bf16 %v7348, %v7347
    %v7881 = vpack.c.bf16 %v7350, %v7349
    %v7882 = vpack.c.bf16 %v7352, %v7351
    %v7883 = vpack.c.bf16 %v7354, %v7353
    %v7884 = vpack.c.bf16 %v7356, %v7355
    %v7885 = vpack.c.bf16 %v7358, %v7357
    %v7886 = vpack.c.bf16 %v7360, %v7359
    %v7887 = vpack.c.bf16 %v7362, %v7361
    %v7888 = vpack.c.bf16 %v7364, %v7363
    %v7889 = vpack.c.bf16 %v7366, %v7365
    %v7890 = vpack.c.bf16 %v7368, %v7367
    %v7891 = vpack.c.bf16 %v7370, %v7369
    %v7892 = vpack.c.bf16 %v7372, %v7371
    %v7893 = vpack.c.bf16 %v7374, %v7373
    %v7894 = vpack.c.bf16 %v7376, %v7375
    %v7895 = vpack.c.bf16 %v7378, %v7377
    %v7896 = vpack.c.bf16 %v7380, %v7379
    %v7897 = vpack.c.bf16 %v7382, %v7381
    %v7898 = vpack.c.bf16 %v7384, %v7383
    %v7899 = vpack.c.bf16 %v7386, %v7385
    %v7900 = vpack.c.bf16 %v7388, %v7387
    %v7901 = vpack.c.bf16 %v7390, %v7389
    %v7902 = vpack.c.bf16 %v7392, %v7391
    %v7903 = vpack.c.bf16 %v7394, %v7393
    %v7904 = vpack.c.bf16 %v7396, %v7395
    %v7905 = vpack.c.bf16 %v7398, %v7397
    %v7906 = vpack.c.bf16 %v7400, %v7399
    %v7907 = vpack.c.bf16 %v7402, %v7401
    %v7908 = vpack.c.bf16 %v7404, %v7403
    %v7909 = vpack.c.bf16 %v7406, %v7405
    %v7910 = vpack.c.bf16 %v7408, %v7407
    %v7911 = vpack.c.bf16 %v7410, %v7409
    %v7912 = vpack.c.bf16 %v7412, %v7411
    %v7913 = vpack.c.bf16 %v7414, %v7413
    %v7914 = vpack.c.bf16 %v7416, %v7415
    %v7915 = vpack.c.bf16 %v7418, %v7417
    %v7916 = vpack.c.bf16 %v7420, %v7419
    %v7917 = vpack.c.bf16 %v7422, %v7421
    %v7918 = vpack.c.bf16 %v7424, %v7423
    %v7919 = vpack.c.bf16 %v7426, %v7425
    %v7920 = vpack.c.bf16 %v7428, %v7427
    %v7921 = vpack.c.bf16 %v7430, %v7429
    %v7922 = vpack.c.bf16 %v7432, %v7431
    %v7923 = vpack.c.bf16 %v7434, %v7433
    %v7924 = vpack.c.bf16 %v7436, %v7435
    %v7925 = vpack.c.bf16 %v7438, %v7437
    %v7926 = vpack.c.bf16 %v7440, %v7439
    %v7927 = vpack.c.bf16 %v7442, %v7441
    %v7928 = vpack.c.bf16 %v7444, %v7443
    %v7929 = vpack.c.bf16 %v7446, %v7445
    %v7930 = vpack.c.bf16 %v7448, %v7447
    %v7931 = vpack.c.bf16 %v7450, %v7449
    %v7932 = vpack.c.bf16 %v7452, %v7451
    %v7933 = vpack.c.bf16 %v7454, %v7453
    %v7934 = vpack.c.bf16 %v7456, %v7455
    %v7935 = vpack.c.bf16 %v7458, %v7457
    %v7936 = vpack.c.bf16 %v7460, %v7459
    %v7937 = vpack.c.bf16 %v7462, %v7461
    %v7938 = vpack.c.bf16 %v7464, %v7463
    %v7939 = vpack.c.bf16 %v7466, %v7465
    %v7940 = vpack.c.bf16 %v7468, %v7467
    %v7941 = vpack.c.bf16 %v7470, %v7469
    %v7942 = vpack.c.bf16 %v7472, %v7471
    %v7943 = vpack.c.bf16 %v7474, %v7473
    %v7944 = vpack.c.bf16 %v7476, %v7475
    %v7945 = vpack.c.bf16 %v7478, %v7477
    %v7946 = vpack.c.bf16 %v7480, %v7479
    %v7947 = vpack.c.bf16 %v7482, %v7481
    %v7948 = vpack.c.bf16 %v7484, %v7483
    %v7949 = vpack.c.bf16 %v7486, %v7485
    %v7950 = vpack.c.bf16 %v7488, %v7487
    %v7951 = vpack.c.bf16 %v7490, %v7489
    %v7952 = vpack.c.bf16 %v7492, %v7491
    %v7953 = vpack.c.bf16 %v7494, %v7493
    %v7954 = vpack.c.bf16 %v7496, %v7495
    %v7955 = vpack.c.bf16 %v7498, %v7497
    %v7956 = vpack.c.bf16 %v7500, %v7499
    %v7957 = vpack.c.bf16 %v7502, %v7501
    %v7958 = vpack.c.bf16 %v7504, %v7503
    %v7959 = vpack.c.bf16 %v7506, %v7505
    %v7960 = vpack.c.bf16 %v7508, %v7507
    %v7961 = vpack.c.bf16 %v7510, %v7509
    %v7962 = vpack.c.bf16 %v7512, %v7511
    %v7963 = vpack.c.bf16 %v7514, %v7513
    %v7964 = vpack.c.bf16 %v7516, %v7515
    %v7965 = vpack.c.bf16 %v7518, %v7517
    %v7966 = vpack.c.bf16 %v7520, %v7519
    %v7967 = vpack.c.bf16 %v7522, %v7521
    %v7968 = vpack.c.bf16 %v7524, %v7523
    %v7969 = vpack.c.bf16 %v7526, %v7525
    %v7970 = vpack.c.bf16 %v7528, %v7527
    %v7971 = vpack.c.bf16 %v7530, %v7529
    %v7972 = vpack.c.bf16 %v7532, %v7531
    %v7973 = vld [vmem:[%s2] sm:$0xff]
    %v7974 = vld [vmem:[%s2 + $0x8] sm:$0xff]
    %v7975 = vld [vmem:[%s2 + $0x10] sm:$0xff]
    %v7976 = vld [vmem:[%s2 + $0x18] sm:$0xff]
    %v7977 = vld [vmem:[%s2 + $0x20] sm:$0xff]
    %v7978 = vld [vmem:[%s2 + $0x28] sm:$0xff]
    %v7979 = vld [vmem:[%s2 + $0x30] sm:$0xff]
    %v7980 = vld [vmem:[%s2 + $0x38] sm:$0xff]
    %v7981 = vld [vmem:[%s2 + $0x40] sm:$0xff]
    %v7982 = vld [vmem:[%s2 + $0x48] sm:$0xff]
    %v7983 = vld [vmem:[%s2 + $0x50] sm:$0xff]
    %v7984 = vld [vmem:[%s2 + $0x58] sm:$0xff]
    %v7985 = vld [vmem:[%s2 + $0x60] sm:$0xff]
    %v7986 = vld [vmem:[%s2 + $0x68] sm:$0xff]
    %v7987 = vld [vmem:[%s2 + $0x70] sm:$0xff]
    %v7988 = vld [vmem:[%s2 + $0x78] sm:$0xff]
    %v7989 = vld [vmem:[%s2 + $0x80] sm:$0xff]
    %v7990 = vld [vmem:[%s2 + $0x88] sm:$0xff]
    %v7991 = vld [vmem:[%s2 + $0x90] sm:$0xff]
    %v7992 = vld [vmem:[%s2 + $0x98] sm:$0xff]
    %v7993 = vld [vmem:[%s2 + $0xa0] sm:$0xff]
    %v7994 = vld [vmem:[%s2 + $0xa8] sm:$0xff]
    %v7995 = vld [vmem:[%s2 + $0xb0] sm:$0xff]
    %v7996 = vld [vmem:[%s2 + $0xb8] sm:$0xff]
    %v7997 = vld [vmem:[%s2 + $0xc0] sm:$0xff]
    %v7998 = vld [vmem:[%s2 + $0xc8] sm:$0xff]
    %v7999 = vld [vmem:[%s2 + $0xd0] sm:$0xff]
    %v8000 = vld [vmem:[%s2 + $0xd8] sm:$0xf]
    %v8001 = vld [vmem:[%s3] sm:$0xff]
    %8003 = vset.pattern.permute.xlu0 0
    %8004 = vperm.xlu0 %8003, %v8001
    %v8005 = vpop.permute.xlu0 %8004
    %v8035 = vunpack.c.l.b16 %v7973
    %v8036 = vunpack.c.h.b16 %v7973
    %v8037 = vunpack.c.l.b16 %v7974
    %v8038 = vunpack.c.h.b16 %v7974
    %v8039 = vunpack.c.l.b16 %v7975
    %v8040 = vunpack.c.h.b16 %v7975
    %v8041 = vunpack.c.l.b16 %v7976
    %v8042 = vunpack.c.h.b16 %v7976
    %v8043 = vunpack.c.l.b16 %v7977
    %v8044 = vunpack.c.h.b16 %v7977
    %v8045 = vunpack.c.l.b16 %v7978
    %v8046 = vunpack.c.h.b16 %v7978
    %v8047 = vunpack.c.l.b16 %v7979
    %v8048 = vunpack.c.h.b16 %v7979
    %v8049 = vunpack.c.l.b16 %v7980
    %v8050 = vunpack.c.h.b16 %v7980
    %v8051 = vunpack.c.l.b16 %v7981
    %v8052 = vunpack.c.h.b16 %v7981
    %v8053 = vunpack.c.l.b16 %v7982
    %v8054 = vunpack.c.h.b16 %v7982
    %v8055 = vunpack.c.l.b16 %v7983
    %v8056 = vunpack.c.h.b16 %v7983
    %v8057 = vunpack.c.l.b16 %v7984
    %v8058 = vunpack.c.h.b16 %v7984
    %v8059 = vunpack.c.l.b16 %v7985
    %v8060 = vunpack.c.h.b16 %v7985
    %v8061 = vunpack.c.l.b16 %v7986
    %v8062 = vunpack.c.h.b16 %v7986
    %v8063 = vunpack.c.l.b16 %v7987
    %v8064 = vunpack.c.h.b16 %v7987
    %v8065 = vunpack.c.l.b16 %v7988
    %v8066 = vunpack.c.h.b16 %v7988
    %v8067 = vunpack.c.l.b16 %v7989
    %v8068 = vunpack.c.h.b16 %v7989
    %v8069 = vunpack.c.l.b16 %v7990
    %v8070 = vunpack.c.h.b16 %v7990
    %v8071 = vunpack.c.l.b16 %v7991
    %v8072 = vunpack.c.h.b16 %v7991
    %v8073 = vunpack.c.l.b16 %v7992
    %v8074 = vunpack.c.h.b16 %v7992
    %v8075 = vunpack.c.l.b16 %v7993
    %v8076 = vunpack.c.h.b16 %v7993
    %v8077 = vunpack.c.l.b16 %v7994
    %v8078 = vunpack.c.h.b16 %v7994
    %v8079 = vunpack.c.l.b16 %v7995
    %v8080 = vunpack.c.h.b16 %v7995
    %v8081 = vunpack.c.l.b16 %v7996
    %v8082 = vunpack.c.h.b16 %v7996
    %v8083 = vunpack.c.l.b16 %v7997
    %v8084 = vunpack.c.h.b16 %v7997
    %v8085 = vunpack.c.l.b16 %v7998
    %v8086 = vunpack.c.h.b16 %v7998
    %v8087 = vunpack.c.l.b16 %v7999
    %v8088 = vunpack.c.h.b16 %v7999
    %v8089 = vunpack.c.l.b16 %v8000
    %v8090 = vpack.c.b16 %v8035, %v8035
    %v8091 = vpack.c.b16 %v8036, %v8036
    %v8092 = vpack.c.b16 %v8037, %v8037
    %v8093 = vpack.c.b16 %v8038, %v8038
    %v8094 = vpack.c.b16 %v8039, %v8039
    %v8095 = vpack.c.b16 %v8040, %v8040
    %v8096 = vpack.c.b16 %v8041, %v8041
    %v8097 = vpack.c.b16 %v8042, %v8042
    %v8098 = vpack.c.b16 %v8043, %v8043
    %v8099 = vpack.c.b16 %v8044, %v8044
    %v8100 = vpack.c.b16 %v8045, %v8045
    %v8101 = vpack.c.b16 %v8046, %v8046
    %v8102 = vpack.c.b16 %v8047, %v8047
    %v8103 = vpack.c.b16 %v8048, %v8048
    %v8104 = vpack.c.b16 %v8049, %v8049
    %v8105 = vpack.c.b16 %v8050, %v8050
    %v8106 = vpack.c.b16 %v8051, %v8051
    %v8107 = vpack.c.b16 %v8052, %v8052
    %v8108 = vpack.c.b16 %v8053, %v8053
    %v8109 = vpack.c.b16 %v8054, %v8054
    %v8110 = vpack.c.b16 %v8055, %v8055
    %v8111 = vpack.c.b16 %v8056, %v8056
    %v8112 = vpack.c.b16 %v8057, %v8057
    %v8113 = vpack.c.b16 %v8058, %v8058
    %v8114 = vpack.c.b16 %v8059, %v8059
    %v8115 = vpack.c.b16 %v8060, %v8060
    %v8116 = vpack.c.b16 %v8061, %v8061
    %v8117 = vpack.c.b16 %v8062, %v8062
    %v8118 = vpack.c.b16 %v8063, %v8063
    %v8119 = vpack.c.b16 %v8064, %v8064
    %v8120 = vpack.c.b16 %v8065, %v8065
    %v8121 = vpack.c.b16 %v8066, %v8066
    %v8122 = vpack.c.b16 %v8067, %v8067
    %v8123 = vpack.c.b16 %v8068, %v8068
    %v8124 = vpack.c.b16 %v8069, %v8069
    %v8125 = vpack.c.b16 %v8070, %v8070
    %v8126 = vpack.c.b16 %v8071, %v8071
    %v8127 = vpack.c.b16 %v8072, %v8072
    %v8128 = vpack.c.b16 %v8073, %v8073
    %v8129 = vpack.c.b16 %v8074, %v8074
    %v8130 = vpack.c.b16 %v8075, %v8075
    %v8131 = vpack.c.b16 %v8076, %v8076
    %v8132 = vpack.c.b16 %v8077, %v8077
    %v8133 = vpack.c.b16 %v8078, %v8078
    %v8134 = vpack.c.b16 %v8079, %v8079
    %v8135 = vpack.c.b16 %v8080, %v8080
    %v8136 = vpack.c.b16 %v8081, %v8081
    %v8137 = vpack.c.b16 %v8082, %v8082
    %v8138 = vpack.c.b16 %v8083, %v8083
    %v8139 = vpack.c.b16 %v8084, %v8084
    %v8140 = vpack.c.b16 %v8085, %v8085
    %v8141 = vpack.c.b16 %v8086, %v8086
    %v8142 = vpack.c.b16 %v8087, %v8087
    %v8143 = vpack.c.b16 %v8088, %v8088
    %v8144 = vpack.c.b16 %v8089, %v8089
    %8200 = vmatpush.bf16.msra.mxu0 %v7540
    %8201 = vmatpush.bf16.msra.mxu0 %v7539
    %8202 = vmatpush.bf16.msra.mxu0 %v7538
    %8203 = vmatpush.bf16.msra.mxu0 %v7537
    %8204 = vmatpush.bf16.msra.mxu0 %v7536
    %8205 = vmatpush.bf16.msra.mxu0 %v7535
    %8206 = vmatpush.bf16.msra.mxu0 %v7534
    %8207 = vmatpush.bf16.msra.mxu0 %v7533
    %8208 = vmatmul.bf16.gmra.mxu0 %v8090
    %v8209 = vpop.f32.mrf.mxu0
    %v8210 = vadd.f32 %v8005, %v8209
    %v8211 = vpop.f32.mrf.mxu0
    %8212 = vdwg.mxu0
    %8213 = vmatpush.bf16.msra.mxu0 %v7548
    %8214 = vmatpush.bf16.msra.mxu0 %v7547
    %8215 = vmatpush.bf16.msra.mxu0 %v7546
    %8216 = vmatpush.bf16.msra.mxu0 %v7545
    %8217 = vmatpush.bf16.msra.mxu0 %v7544
    %8218 = vmatpush.bf16.msra.mxu0 %v7543
    %8219 = vmatpush.bf16.msra.mxu0 %v7542
    %8220 = vmatpush.bf16.msra.mxu0 %v7541
    %8221 = vmatmul.bf16.gmra.mxu0 %v8091
    %v8222 = vpop.f32.mrf.mxu0
    %v8223 = vadd.f32 %v8210, %v8222
    %v8224 = vpop.f32.mrf.mxu0
    %8225 = vdwg.mxu0
    %8226 = vmatpush.bf16.msra.mxu0 %v7556
    %8227 = vmatpush.bf16.msra.mxu0 %v7555
    %8228 = vmatpush.bf16.msra.mxu0 %v7554
    %8229 = vmatpush.bf16.msra.mxu0 %v7553
    %8230 = vmatpush.bf16.msra.mxu0 %v7552
    %8231 = vmatpush.bf16.msra.mxu0 %v7551
    %8232 = vmatpush.bf16.msra.mxu0 %v7550
    %8233 = vmatpush.bf16.msra.mxu0 %v7549
    %8234 = vmatmul.bf16.gmra.mxu0 %v8092
    %v8235 = vpop.f32.mrf.mxu0
    %v8236 = vadd.f32 %v8223, %v8235
    %v8237 = vpop.f32.mrf.mxu0
    %8238 = vdwg.mxu0
    %8239 = vmatpush.bf16.msra.mxu0 %v7564
    %8240 = vmatpush.bf16.msra.mxu0 %v7563
    %8241 = vmatpush.bf16.msra.mxu0 %v7562
    %8242 = vmatpush.bf16.msra.mxu0 %v7561
    %8243 = vmatpush.bf16.msra.mxu0 %v7560
    %8244 = vmatpush.bf16.msra.mxu0 %v7559
    %8245 = vmatpush.bf16.msra.mxu0 %v7558
    %8246 = vmatpush.bf16.msra.mxu0 %v7557
    %8247 = vmatmul.bf16.gmra.mxu0 %v8093
    %v8248 = vpop.f32.mrf.mxu0
    %v8249 = vadd.f32 %v8236, %v8248
    %v8250 = vpop.f32.mrf.mxu0
    %8251 = vdwg.mxu0
    %8252 = vmatpush.bf16.msra.mxu0 %v7572
    %8253 = vmatpush.bf16.msra.mxu0 %v7571
    %8254 = vmatpush.bf16.msra.mxu0 %v7570
    %8255 = vmatpush.bf16.msra.mxu0 %v7569
    %8256 = vmatpush.bf16.msra.mxu0 %v7568
    %8257 = vmatpush.bf16.msra.mxu0 %v7567
    %8258 = vmatpush.bf16.msra.mxu0 %v7566
    %8259 = vmatpush.bf16.msra.mxu0 %v7565
    %8260 = vmatmul.bf16.gmra.mxu0 %v8094
    %v8261 = vpop.f32.mrf.mxu0
    %v8262 = vadd.f32 %v8249, %v8261
    %v8263 = vpop.f32.mrf.mxu0
    %8264 = vdwg.mxu0
    %8265 = vmatpush.bf16.msra.mxu0 %v7580
    %8266 = vmatpush.bf16.msra.mxu0 %v7579
    %8267 = vmatpush.bf16.msra.mxu0 %v7578
    %8268 = vmatpush.bf16.msra.mxu0 %v7577
    %8269 = vmatpush.bf16.msra.mxu0 %v7576
    %8270 = vmatpush.bf16.msra.mxu0 %v7575
    %8271 = vmatpush.bf16.msra.mxu0 %v7574
    %8272 = vmatpush.bf16.msra.mxu0 %v7573
    %8273 = vmatmul.bf16.gmra.mxu0 %v8095
    %v8274 = vpop.f32.mrf.mxu0
    %v8275 = vadd.f32 %v8262, %v8274
    %v8276 = vpop.f32.mrf.mxu0
    %8277 = vdwg.mxu0
    %8278 = vmatpush.bf16.msra.mxu0 %v7588
    %8279 = vmatpush.bf16.msra.mxu0 %v7587
    %8280 = vmatpush.bf16.msra.mxu0 %v7586
    %8281 = vmatpush.bf16.msra.mxu0 %v7585
    %8282 = vmatpush.bf16.msra.mxu0 %v7584
    %8283 = vmatpush.bf16.msra.mxu0 %v7583
    %8284 = vmatpush.bf16.msra.mxu0 %v7582
    %8285 = vmatpush.bf16.msra.mxu0 %v7581
    %8286 = vmatmul.bf16.gmra.mxu0 %v8096
    %v8287 = vpop.f32.mrf.mxu0
    %v8288 = vadd.f32 %v8275, %v8287
    %v8289 = vpop.f32.mrf.mxu0
    %8290 = vdwg.mxu0
    %8291 = vmatpush.bf16.msra.mxu0 %v7596
    %8292 = vmatpush.bf16.msra.mxu0 %v7595
    %8293 = vmatpush.bf16.msra.mxu0 %v7594
    %8294 = vmatpush.bf16.msra.mxu0 %v7593
    %8295 = vmatpush.bf16.msra.mxu0 %v7592
    %8296 = vmatpush.bf16.msra.mxu0 %v7591
    %8297 = vmatpush.bf16.msra.mxu0 %v7590
    %8298 = vmatpush.bf16.msra.mxu0 %v7589
    %8299 = vmatmul.bf16.gmra.mxu0 %v8097
    %v8300 = vpop.f32.mrf.mxu0
    %v8301 = vadd.f32 %v8288, %v8300
    %v8302 = vpop.f32.mrf.mxu0
    %8303 = vdwg.mxu0
    %8304 = vmatpush.bf16.msra.mxu0 %v7604
    %8305 = vmatpush.bf16.msra.mxu0 %v7603
    %8306 = vmatpush.bf16.msra.mxu0 %v7602
    %8307 = vmatpush.bf16.msra.mxu0 %v7601
    %8308 = vmatpush.bf16.msra.mxu0 %v7600
    %8309 = vmatpush.bf16.msra.mxu0 %v7599
    %8310 = vmatpush.bf16.msra.mxu0 %v7598
    %8311 = vmatpush.bf16.msra.mxu0 %v7597
    %8312 = vmatmul.bf16.gmra.mxu0 %v8098
    %v8313 = vpop.f32.mrf.mxu0
    %v8314 = vadd.f32 %v8301, %v8313
    %v8315 = vpop.f32.mrf.mxu0
    %8316 = vdwg.mxu0
    %8317 = vmatpush.bf16.msra.mxu0 %v7612
    %8318 = vmatpush.bf16.msra.mxu0 %v7611
    %8319 = vmatpush.bf16.msra.mxu0 %v7610
    %8320 = vmatpush.bf16.msra.mxu0 %v7609
    %8321 = vmatpush.bf16.msra.mxu0 %v7608
    %8322 = vmatpush.bf16.msra.mxu0 %v7607
    %8323 = vmatpush.bf16.msra.mxu0 %v7606
    %8324 = vmatpush.bf16.msra.mxu0 %v7605
    %8325 = vmatmul.bf16.gmra.mxu0 %v8099
    %v8326 = vpop.f32.mrf.mxu0
    %v8327 = vadd.f32 %v8314, %v8326
    %v8328 = vpop.f32.mrf.mxu0
    %8329 = vdwg.mxu0
    %8330 = vmatpush.bf16.msra.mxu0 %v7620
    %8331 = vmatpush.bf16.msra.mxu0 %v7619
    %8332 = vmatpush.bf16.msra.mxu0 %v7618
    %8333 = vmatpush.bf16.msra.mxu0 %v7617
    %8334 = vmatpush.bf16.msra.mxu0 %v7616
    %8335 = vmatpush.bf16.msra.mxu0 %v7615
    %8336 = vmatpush.bf16.msra.mxu0 %v7614
    %8337 = vmatpush.bf16.msra.mxu0 %v7613
    %8338 = vmatmul.bf16.gmra.mxu0 %v8100
    %v8339 = vpop.f32.mrf.mxu0
    %v8340 = vadd.f32 %v8327, %v8339
    %v8341 = vpop.f32.mrf.mxu0
    %8342 = vdwg.mxu0
    %8343 = vmatpush.bf16.msra.mxu0 %v7628
    %8344 = vmatpush.bf16.msra.mxu0 %v7627
    %8345 = vmatpush.bf16.msra.mxu0 %v7626
    %8346 = vmatpush.bf16.msra.mxu0 %v7625
    %8347 = vmatpush.bf16.msra.mxu0 %v7624
    %8348 = vmatpush.bf16.msra.mxu0 %v7623
    %8349 = vmatpush.bf16.msra.mxu0 %v7622
    %8350 = vmatpush.bf16.msra.mxu0 %v7621
    %8351 = vmatmul.bf16.gmra.mxu0 %v8101
    %v8352 = vpop.f32.mrf.mxu0
    %v8353 = vadd.f32 %v8340, %v8352
    %v8354 = vpop.f32.mrf.mxu0
    %8355 = vdwg.mxu0
    %8356 = vmatpush.bf16.msra.mxu0 %v7636
    %8357 = vmatpush.bf16.msra.mxu0 %v7635
    %8358 = vmatpush.bf16.msra.mxu0 %v7634
    %8359 = vmatpush.bf16.msra.mxu0 %v7633
    %8360 = vmatpush.bf16.msra.mxu0 %v7632
    %8361 = vmatpush.bf16.msra.mxu0 %v7631
    %8362 = vmatpush.bf16.msra.mxu0 %v7630
    %8363 = vmatpush.bf16.msra.mxu0 %v7629
    %8364 = vmatmul.bf16.gmra.mxu0 %v8102
    %v8365 = vpop.f32.mrf.mxu0
    %v8366 = vadd.f32 %v8353, %v8365
    %v8367 = vpop.f32.mrf.mxu0
    %8368 = vdwg.mxu0
    %8369 = vmatpush.bf16.msra.mxu0 %v7644
    %8370 = vmatpush.bf16.msra.mxu0 %v7643
    %8371 = vmatpush.bf16.msra.mxu0 %v7642
    %8372 = vmatpush.bf16.msra.mxu0 %v7641
    %8373 = vmatpush.bf16.msra.mxu0 %v7640
    %8374 = vmatpush.bf16.msra.mxu0 %v7639
    %8375 = vmatpush.bf16.msra.mxu0 %v7638
    %8376 = vmatpush.bf16.msra.mxu0 %v7637
    %8377 = vmatmul.bf16.gmra.mxu0 %v8103
    %v8378 = vpop.f32.mrf.mxu0
    %v8379 = vadd.f32 %v8366, %v8378
    %v8380 = vpop.f32.mrf.mxu0
    %8381 = vdwg.mxu0
    %8382 = vmatpush.bf16.msra.mxu0 %v7652
    %8383 = vmatpush.bf16.msra.mxu0 %v7651
    %8384 = vmatpush.bf16.msra.mxu0 %v7650
    %8385 = vmatpush.bf16.msra.mxu0 %v7649
    %8386 = vmatpush.bf16.msra.mxu0 %v7648
    %8387 = vmatpush.bf16.msra.mxu0 %v7647
    %8388 = vmatpush.bf16.msra.mxu0 %v7646
    %8389 = vmatpush.bf16.msra.mxu0 %v7645
    %8390 = vmatmul.bf16.gmra.mxu0 %v8104
    %v8391 = vpop.f32.mrf.mxu0
    %v8392 = vadd.f32 %v8379, %v8391
    %v8393 = vpop.f32.mrf.mxu0
    %8394 = vdwg.mxu0
    %8395 = vmatpush.bf16.msra.mxu0 %v7660
    %8396 = vmatpush.bf16.msra.mxu0 %v7659
    %8397 = vmatpush.bf16.msra.mxu0 %v7658
    %8398 = vmatpush.bf16.msra.mxu0 %v7657
    %8399 = vmatpush.bf16.msra.mxu0 %v7656
    %8400 = vmatpush.bf16.msra.mxu0 %v7655
    %8401 = vmatpush.bf16.msra.mxu0 %v7654
    %8402 = vmatpush.bf16.msra.mxu0 %v7653
    %8403 = vmatmul.bf16.gmra.mxu0 %v8105
    %v8404 = vpop.f32.mrf.mxu0
    %v8405 = vadd.f32 %v8392, %v8404
    %v8406 = vpop.f32.mrf.mxu0
    %8407 = vdwg.mxu0
    %8408 = vmatpush.bf16.msra.mxu0 %v7668
    %8409 = vmatpush.bf16.msra.mxu0 %v7667
    %8410 = vmatpush.bf16.msra.mxu0 %v7666
    %8411 = vmatpush.bf16.msra.mxu0 %v7665
    %8412 = vmatpush.bf16.msra.mxu0 %v7664
    %8413 = vmatpush.bf16.msra.mxu0 %v7663
    %8414 = vmatpush.bf16.msra.mxu0 %v7662
    %8415 = vmatpush.bf16.msra.mxu0 %v7661
    %8416 = vmatmul.bf16.gmra.mxu0 %v8106
    %v8417 = vpop.f32.mrf.mxu0
    %v8418 = vadd.f32 %v8405, %v8417
    %v8419 = vpop.f32.mrf.mxu0
    %8420 = vdwg.mxu0
    %8421 = vmatpush.bf16.msra.mxu0 %v7676
    %8422 = vmatpush.bf16.msra.mxu0 %v7675
    %8423 = vmatpush.bf16.msra.mxu0 %v7674
    %8424 = vmatpush.bf16.msra.mxu0 %v7673
    %8425 = vmatpush.bf16.msra.mxu0 %v7672
    %8426 = vmatpush.bf16.msra.mxu0 %v7671
    %8427 = vmatpush.bf16.msra.mxu0 %v7670
    %8428 = vmatpush.bf16.msra.mxu0 %v7669
    %8429 = vmatmul.bf16.gmra.mxu0 %v8107
    %v8430 = vpop.f32.mrf.mxu0
    %v8431 = vadd.f32 %v8418, %v8430
    %v8432 = vpop.f32.mrf.mxu0
    %8433 = vdwg.mxu0
    %8434 = vmatpush.bf16.msra.mxu0 %v7684
    %8435 = vmatpush.bf16.msra.mxu0 %v7683
    %8436 = vmatpush.bf16.msra.mxu0 %v7682
    %8437 = vmatpush.bf16.msra.mxu0 %v7681
    %8438 = vmatpush.bf16.msra.mxu0 %v7680
    %8439 = vmatpush.bf16.msra.mxu0 %v7679
    %8440 = vmatpush.bf16.msra.mxu0 %v7678
    %8441 = vmatpush.bf16.msra.mxu0 %v7677
    %8442 = vmatmul.bf16.gmra.mxu0 %v8108
    %v8443 = vpop.f32.mrf.mxu0
    %v8444 = vadd.f32 %v8431, %v8443
    %v8445 = vpop.f32.mrf.mxu0
    %8446 = vdwg.mxu0
    %8447 = vmatpush.bf16.msra.mxu0 %v7692
    %8448 = vmatpush.bf16.msra.mxu0 %v7691
    %8449 = vmatpush.bf16.msra.mxu0 %v7690
    %8450 = vmatpush.bf16.msra.mxu0 %v7689
    %8451 = vmatpush.bf16.msra.mxu0 %v7688
    %8452 = vmatpush.bf16.msra.mxu0 %v7687
    %8453 = vmatpush.bf16.msra.mxu0 %v7686
    %8454 = vmatpush.bf16.msra.mxu0 %v7685
    %8455 = vmatmul.bf16.gmra.mxu0 %v8109
    %v8456 = vpop.f32.mrf.mxu0
    %v8457 = vadd.f32 %v8444, %v8456
    %v8458 = vpop.f32.mrf.mxu0
    %8459 = vdwg.mxu0
    %8460 = vmatpush.bf16.msra.mxu0 %v7700
    %8461 = vmatpush.bf16.msra.mxu0 %v7699
    %8462 = vmatpush.bf16.msra.mxu0 %v7698
    %8463 = vmatpush.bf16.msra.mxu0 %v7697
    %8464 = vmatpush.bf16.msra.mxu0 %v7696
    %8465 = vmatpush.bf16.msra.mxu0 %v7695
    %8466 = vmatpush.bf16.msra.mxu0 %v7694
    %8467 = vmatpush.bf16.msra.mxu0 %v7693
    %8468 = vmatmul.bf16.gmra.mxu0 %v8110
    %v8469 = vpop.f32.mrf.mxu0
    %v8470 = vadd.f32 %v8457, %v8469
    %v8471 = vpop.f32.mrf.mxu0
    %8472 = vdwg.mxu0
    %8473 = vmatpush.bf16.msra.mxu0 %v7708
    %8474 = vmatpush.bf16.msra.mxu0 %v7707
    %8475 = vmatpush.bf16.msra.mxu0 %v7706
    %8476 = vmatpush.bf16.msra.mxu0 %v7705
    %8477 = vmatpush.bf16.msra.mxu0 %v7704
    %8478 = vmatpush.bf16.msra.mxu0 %v7703
    %8479 = vmatpush.bf16.msra.mxu0 %v7702
    %8480 = vmatpush.bf16.msra.mxu0 %v7701
    %8481 = vmatmul.bf16.gmra.mxu0 %v8111
    %v8482 = vpop.f32.mrf.mxu0
    %v8483 = vadd.f32 %v8470, %v8482
    %v8484 = vpop.f32.mrf.mxu0
    %8485 = vdwg.mxu0
    %8486 = vmatpush.bf16.msra.mxu0 %v7716
    %8487 = vmatpush.bf16.msra.mxu0 %v7715
    %8488 = vmatpush.bf16.msra.mxu0 %v7714
    %8489 = vmatpush.bf16.msra.mxu0 %v7713
    %8490 = vmatpush.bf16.msra.mxu0 %v7712
    %8491 = vmatpush.bf16.msra.mxu0 %v7711
    %8492 = vmatpush.bf16.msra.mxu0 %v7710
    %8493 = vmatpush.bf16.msra.mxu0 %v7709
    %8494 = vmatmul.bf16.gmra.mxu0 %v8112
    %v8495 = vpop.f32.mrf.mxu0
    %v8496 = vadd.f32 %v8483, %v8495
    %v8497 = vpop.f32.mrf.mxu0
    %8498 = vdwg.mxu0
    %8499 = vmatpush.bf16.msra.mxu0 %v7724
    %8500 = vmatpush.bf16.msra.mxu0 %v7723
    %8501 = vmatpush.bf16.msra.mxu0 %v7722
    %8502 = vmatpush.bf16.msra.mxu0 %v7721
    %8503 = vmatpush.bf16.msra.mxu0 %v7720
    %8504 = vmatpush.bf16.msra.mxu0 %v7719
    %8505 = vmatpush.bf16.msra.mxu0 %v7718
    %8506 = vmatpush.bf16.msra.mxu0 %v7717
    %8507 = vmatmul.bf16.gmra.mxu0 %v8113
    %v8508 = vpop.f32.mrf.mxu0
    %v8509 = vadd.f32 %v8496, %v8508
    %v8510 = vpop.f32.mrf.mxu0
    %8511 = vdwg.mxu0
    %8512 = vmatpush.bf16.msra.mxu0 %v7732
    %8513 = vmatpush.bf16.msra.mxu0 %v7731
    %8514 = vmatpush.bf16.msra.mxu0 %v7730
    %8515 = vmatpush.bf16.msra.mxu0 %v7729
    %8516 = vmatpush.bf16.msra.mxu0 %v7728
    %8517 = vmatpush.bf16.msra.mxu0 %v7727
    %8518 = vmatpush.bf16.msra.mxu0 %v7726
    %8519 = vmatpush.bf16.msra.mxu0 %v7725
    %8520 = vmatmul.bf16.gmra.mxu0 %v8114
    %v8521 = vpop.f32.mrf.mxu0
    %v8522 = vadd.f32 %v8509, %v8521
    %v8523 = vpop.f32.mrf.mxu0
    %8524 = vdwg.mxu0
    %8525 = vmatpush.bf16.msra.mxu0 %v7740
    %8526 = vmatpush.bf16.msra.mxu0 %v7739
    %8527 = vmatpush.bf16.msra.mxu0 %v7738
    %8528 = vmatpush.bf16.msra.mxu0 %v7737
    %8529 = vmatpush.bf16.msra.mxu0 %v7736
    %8530 = vmatpush.bf16.msra.mxu0 %v7735
    %8531 = vmatpush.bf16.msra.mxu0 %v7734
    %8532 = vmatpush.bf16.msra.mxu0 %v7733
    %8533 = vmatmul.bf16.gmra.mxu0 %v8115
    %v8534 = vpop.f32.mrf.mxu0
    %v8535 = vadd.f32 %v8522, %v8534
    %v8536 = vpop.f32.mrf.mxu0
    %8537 = vdwg.mxu0
    %8538 = vmatpush.bf16.msra.mxu0 %v7748
    %8539 = vmatpush.bf16.msra.mxu0 %v7747
    %8540 = vmatpush.bf16.msra.mxu0 %v7746
    %8541 = vmatpush.bf16.msra.mxu0 %v7745
    %8542 = vmatpush.bf16.msra.mxu0 %v7744
    %8543 = vmatpush.bf16.msra.mxu0 %v7743
    %8544 = vmatpush.bf16.msra.mxu0 %v7742
    %8545 = vmatpush.bf16.msra.mxu0 %v7741
    %8546 = vmatmul.bf16.gmra.mxu0 %v8116
    %v8547 = vpop.f32.mrf.mxu0
    %v8548 = vadd.f32 %v8535, %v8547
    %v8549 = vpop.f32.mrf.mxu0
    %8550 = vdwg.mxu0
    %8551 = vmatpush.bf16.msra.mxu0 %v7756
    %8552 = vmatpush.bf16.msra.mxu0 %v7755
    %8553 = vmatpush.bf16.msra.mxu0 %v7754
    %8554 = vmatpush.bf16.msra.mxu0 %v7753
    %8555 = vmatpush.bf16.msra.mxu0 %v7752
    %8556 = vmatpush.bf16.msra.mxu0 %v7751
    %8557 = vmatpush.bf16.msra.mxu0 %v7750
    %8558 = vmatpush.bf16.msra.mxu0 %v7749
    %8559 = vmatmul.bf16.gmra.mxu0 %v8117
    %v8560 = vpop.f32.mrf.mxu0
    %v8561 = vadd.f32 %v8548, %v8560
    %v8562 = vpop.f32.mrf.mxu0
    %8563 = vdwg.mxu0
    %8564 = vmatpush.bf16.msra.mxu0 %v7764
    %8565 = vmatpush.bf16.msra.mxu0 %v7763
    %8566 = vmatpush.bf16.msra.mxu0 %v7762
    %8567 = vmatpush.bf16.msra.mxu0 %v7761
    %8568 = vmatpush.bf16.msra.mxu0 %v7760
    %8569 = vmatpush.bf16.msra.mxu0 %v7759
    %8570 = vmatpush.bf16.msra.mxu0 %v7758
    %8571 = vmatpush.bf16.msra.mxu0 %v7757
    %8572 = vmatmul.bf16.gmra.mxu0 %v8118
    %v8573 = vpop.f32.mrf.mxu0
    %v8574 = vadd.f32 %v8561, %v8573
    %v8575 = vpop.f32.mrf.mxu0
    %8576 = vdwg.mxu0
    %8577 = vmatpush.bf16.msra.mxu0 %v7772
    %8578 = vmatpush.bf16.msra.mxu0 %v7771
    %8579 = vmatpush.bf16.msra.mxu0 %v7770
    %8580 = vmatpush.bf16.msra.mxu0 %v7769
    %8581 = vmatpush.bf16.msra.mxu0 %v7768
    %8582 = vmatpush.bf16.msra.mxu0 %v7767
    %8583 = vmatpush.bf16.msra.mxu0 %v7766
    %8584 = vmatpush.bf16.msra.mxu0 %v7765
    %8585 = vmatmul.bf16.gmra.mxu0 %v8119
    %v8586 = vpop.f32.mrf.mxu0
    %v8587 = vadd.f32 %v8574, %v8586
    %v8588 = vpop.f32.mrf.mxu0
    %8589 = vdwg.mxu0
    %8590 = vmatpush.bf16.msra.mxu0 %v7780
    %8591 = vmatpush.bf16.msra.mxu0 %v7779
    %8592 = vmatpush.bf16.msra.mxu0 %v7778
    %8593 = vmatpush.bf16.msra.mxu0 %v7777
    %8594 = vmatpush.bf16.msra.mxu0 %v7776
    %8595 = vmatpush.bf16.msra.mxu0 %v7775
    %8596 = vmatpush.bf16.msra.mxu0 %v7774
    %8597 = vmatpush.bf16.msra.mxu0 %v7773
    %8598 = vmatmul.bf16.gmra.mxu0 %v8120
    %v8599 = vpop.f32.mrf.mxu0
    %v8600 = vadd.f32 %v8587, %v8599
    %v8601 = vpop.f32.mrf.mxu0
    %8602 = vdwg.mxu0
    %8603 = vmatpush.bf16.msra.mxu0 %v7788
    %8604 = vmatpush.bf16.msra.mxu0 %v7787
    %8605 = vmatpush.bf16.msra.mxu0 %v7786
    %8606 = vmatpush.bf16.msra.mxu0 %v7785
    %8607 = vmatpush.bf16.msra.mxu0 %v7784
    %8608 = vmatpush.bf16.msra.mxu0 %v7783
    %8609 = vmatpush.bf16.msra.mxu0 %v7782
    %8610 = vmatpush.bf16.msra.mxu0 %v7781
    %8611 = vmatmul.bf16.gmra.mxu0 %v8121
    %v8612 = vpop.f32.mrf.mxu0
    %v8613 = vadd.f32 %v8600, %v8612
    %v8614 = vpop.f32.mrf.mxu0
    %8615 = vdwg.mxu0
    %8616 = vmatpush.bf16.msra.mxu0 %v7796
    %8617 = vmatpush.bf16.msra.mxu0 %v7795
    %8618 = vmatpush.bf16.msra.mxu0 %v7794
    %8619 = vmatpush.bf16.msra.mxu0 %v7793
    %8620 = vmatpush.bf16.msra.mxu0 %v7792
    %8621 = vmatpush.bf16.msra.mxu0 %v7791
    %8622 = vmatpush.bf16.msra.mxu0 %v7790
    %8623 = vmatpush.bf16.msra.mxu0 %v7789
    %8624 = vmatmul.bf16.gmra.mxu0 %v8122
    %v8625 = vpop.f32.mrf.mxu0
    %v8626 = vadd.f32 %v8613, %v8625
    %v8627 = vpop.f32.mrf.mxu0
    %8628 = vdwg.mxu0
    %8629 = vmatpush.bf16.msra.mxu0 %v7804
    %8630 = vmatpush.bf16.msra.mxu0 %v7803
    %8631 = vmatpush.bf16.msra.mxu0 %v7802
    %8632 = vmatpush.bf16.msra.mxu0 %v7801
    %8633 = vmatpush.bf16.msra.mxu0 %v7800
    %8634 = vmatpush.bf16.msra.mxu0 %v7799
    %8635 = vmatpush.bf16.msra.mxu0 %v7798
    %8636 = vmatpush.bf16.msra.mxu0 %v7797
    %8637 = vmatmul.bf16.gmra.mxu0 %v8123
    %v8638 = vpop.f32.mrf.mxu0
    %v8639 = vadd.f32 %v8626, %v8638
    %v8640 = vpop.f32.mrf.mxu0
    %8641 = vdwg.mxu0
    %8642 = vmatpush.bf16.msra.mxu0 %v7812
    %8643 = vmatpush.bf16.msra.mxu0 %v7811
    %8644 = vmatpush.bf16.msra.mxu0 %v7810
    %8645 = vmatpush.bf16.msra.mxu0 %v7809
    %8646 = vmatpush.bf16.msra.mxu0 %v7808
    %8647 = vmatpush.bf16.msra.mxu0 %v7807
    %8648 = vmatpush.bf16.msra.mxu0 %v7806
    %8649 = vmatpush.bf16.msra.mxu0 %v7805
    %8650 = vmatmul.bf16.gmra.mxu0 %v8124
    %v8651 = vpop.f32.mrf.mxu0
    %v8652 = vadd.f32 %v8639, %v8651
    %v8653 = vpop.f32.mrf.mxu0
    %8654 = vdwg.mxu0
    %8655 = vmatpush.bf16.msra.mxu0 %v7820
    %8656 = vmatpush.bf16.msra.mxu0 %v7819
    %8657 = vmatpush.bf16.msra.mxu0 %v7818
    %8658 = vmatpush.bf16.msra.mxu0 %v7817
    %8659 = vmatpush.bf16.msra.mxu0 %v7816
    %8660 = vmatpush.bf16.msra.mxu0 %v7815
    %8661 = vmatpush.bf16.msra.mxu0 %v7814
    %8662 = vmatpush.bf16.msra.mxu0 %v7813
    %8663 = vmatmul.bf16.gmra.mxu0 %v8125
    %v8664 = vpop.f32.mrf.mxu0
    %v8665 = vadd.f32 %v8652, %v8664
    %v8666 = vpop.f32.mrf.mxu0
    %8667 = vdwg.mxu0
    %8668 = vmatpush.bf16.msra.mxu0 %v7828
    %8669 = vmatpush.bf16.msra.mxu0 %v7827
    %8670 = vmatpush.bf16.msra.mxu0 %v7826
    %8671 = vmatpush.bf16.msra.mxu0 %v7825
    %8672 = vmatpush.bf16.msra.mxu0 %v7824
    %8673 = vmatpush.bf16.msra.mxu0 %v7823
    %8674 = vmatpush.bf16.msra.mxu0 %v7822
    %8675 = vmatpush.bf16.msra.mxu0 %v7821
    %8676 = vmatmul.bf16.gmra.mxu0 %v8126
    %v8677 = vpop.f32.mrf.mxu0
    %v8678 = vadd.f32 %v8665, %v8677
    %v8679 = vpop.f32.mrf.mxu0
    %8680 = vdwg.mxu0
    %8681 = vmatpush.bf16.msra.mxu0 %v7836
    %8682 = vmatpush.bf16.msra.mxu0 %v7835
    %8683 = vmatpush.bf16.msra.mxu0 %v7834
    %8684 = vmatpush.bf16.msra.mxu0 %v7833
    %8685 = vmatpush.bf16.msra.mxu0 %v7832
    %8686 = vmatpush.bf16.msra.mxu0 %v7831
    %8687 = vmatpush.bf16.msra.mxu0 %v7830
    %8688 = vmatpush.bf16.msra.mxu0 %v7829
    %8689 = vmatmul.bf16.gmra.mxu0 %v8127
    %v8690 = vpop.f32.mrf.mxu0
    %v8691 = vadd.f32 %v8678, %v8690
    %v8692 = vpop.f32.mrf.mxu0
    %8693 = vdwg.mxu0
    %8694 = vmatpush.bf16.msra.mxu0 %v7844
    %8695 = vmatpush.bf16.msra.mxu0 %v7843
    %8696 = vmatpush.bf16.msra.mxu0 %v7842
    %8697 = vmatpush.bf16.msra.mxu0 %v7841
    %8698 = vmatpush.bf16.msra.mxu0 %v7840
    %8699 = vmatpush.bf16.msra.mxu0 %v7839
    %8700 = vmatpush.bf16.msra.mxu0 %v7838
    %8701 = vmatpush.bf16.msra.mxu0 %v7837
    %8702 = vmatmul.bf16.gmra.mxu0 %v8128
    %v8703 = vpop.f32.mrf.mxu0
    %v8704 = vadd.f32 %v8691, %v8703
    %v8705 = vpop.f32.mrf.mxu0
    %8706 = vdwg.mxu0
    %8707 = vmatpush.bf16.msra.mxu0 %v7852
    %8708 = vmatpush.bf16.msra.mxu0 %v7851
    %8709 = vmatpush.bf16.msra.mxu0 %v7850
    %8710 = vmatpush.bf16.msra.mxu0 %v7849
    %8711 = vmatpush.bf16.msra.mxu0 %v7848
    %8712 = vmatpush.bf16.msra.mxu0 %v7847
    %8713 = vmatpush.bf16.msra.mxu0 %v7846
    %8714 = vmatpush.bf16.msra.mxu0 %v7845
    %8715 = vmatmul.bf16.gmra.mxu0 %v8129
    %v8716 = vpop.f32.mrf.mxu0
    %v8717 = vadd.f32 %v8704, %v8716
    %v8718 = vpop.f32.mrf.mxu0
    %8719 = vdwg.mxu0
    %8720 = vmatpush.bf16.msra.mxu0 %v7860
    %8721 = vmatpush.bf16.msra.mxu0 %v7859
    %8722 = vmatpush.bf16.msra.mxu0 %v7858
    %8723 = vmatpush.bf16.msra.mxu0 %v7857
    %8724 = vmatpush.bf16.msra.mxu0 %v7856
    %8725 = vmatpush.bf16.msra.mxu0 %v7855
    %8726 = vmatpush.bf16.msra.mxu0 %v7854
    %8727 = vmatpush.bf16.msra.mxu0 %v7853
    %8728 = vmatmul.bf16.gmra.mxu0 %v8130
    %v8729 = vpop.f32.mrf.mxu0
    %v8730 = vadd.f32 %v8717, %v8729
    %v8731 = vpop.f32.mrf.mxu0
    %8732 = vdwg.mxu0
    %8733 = vmatpush.bf16.msra.mxu0 %v7868
    %8734 = vmatpush.bf16.msra.mxu0 %v7867
    %8735 = vmatpush.bf16.msra.mxu0 %v7866
    %8736 = vmatpush.bf16.msra.mxu0 %v7865
    %8737 = vmatpush.bf16.msra.mxu0 %v7864
    %8738 = vmatpush.bf16.msra.mxu0 %v7863
    %8739 = vmatpush.bf16.msra.mxu0 %v7862
    %8740 = vmatpush.bf16.msra.mxu0 %v7861
    %8741 = vmatmul.bf16.gmra.mxu0 %v8131
    %v8742 = vpop.f32.mrf.mxu0
    %v8743 = vadd.f32 %v8730, %v8742
    %v8744 = vpop.f32.mrf.mxu0
    %8745 = vdwg.mxu0
    %8746 = vmatpush.bf16.msra.mxu0 %v7876
    %8747 = vmatpush.bf16.msra.mxu0 %v7875
    %8748 = vmatpush.bf16.msra.mxu0 %v7874
    %8749 = vmatpush.bf16.msra.mxu0 %v7873
    %8750 = vmatpush.bf16.msra.mxu0 %v7872
    %8751 = vmatpush.bf16.msra.mxu0 %v7871
    %8752 = vmatpush.bf16.msra.mxu0 %v7870
    %8753 = vmatpush.bf16.msra.mxu0 %v7869
    %8754 = vmatmul.bf16.gmra.mxu0 %v8132
    %v8755 = vpop.f32.mrf.mxu0
    %v8756 = vadd.f32 %v8743, %v8755
    %v8757 = vpop.f32.mrf.mxu0
    %8758 = vdwg.mxu0
    %8759 = vmatpush.bf16.msra.mxu0 %v7884
    %8760 = vmatpush.bf16.msra.mxu0 %v7883
    %8761 = vmatpush.bf16.msra.mxu0 %v7882
    %8762 = vmatpush.bf16.msra.mxu0 %v7881
    %8763 = vmatpush.bf16.msra.mxu0 %v7880
    %8764 = vmatpush.bf16.msra.mxu0 %v7879
    %8765 = vmatpush.bf16.msra.mxu0 %v7878
    %8766 = vmatpush.bf16.msra.mxu0 %v7877
    %8767 = vmatmul.bf16.gmra.mxu0 %v8133
    %v8768 = vpop.f32.mrf.mxu0
    %v8769 = vadd.f32 %v8756, %v8768
    %v8770 = vpop.f32.mrf.mxu0
    %8771 = vdwg.mxu0
    %8772 = vmatpush.bf16.msra.mxu0 %v7892
    %8773 = vmatpush.bf16.msra.mxu0 %v7891
    %8774 = vmatpush.bf16.msra.mxu0 %v7890
    %8775 = vmatpush.bf16.msra.mxu0 %v7889
    %8776 = vmatpush.bf16.msra.mxu0 %v7888
    %8777 = vmatpush.bf16.msra.mxu0 %v7887
    %8778 = vmatpush.bf16.msra.mxu0 %v7886
    %8779 = vmatpush.bf16.msra.mxu0 %v7885
    %8780 = vmatmul.bf16.gmra.mxu0 %v8134
    %v8781 = vpop.f32.mrf.mxu0
    %v8782 = vadd.f32 %v8769, %v8781
    %v8783 = vpop.f32.mrf.mxu0
    %8784 = vdwg.mxu0
    %8785 = vmatpush.bf16.msra.mxu0 %v7900
    %8786 = vmatpush.bf16.msra.mxu0 %v7899
    %8787 = vmatpush.bf16.msra.mxu0 %v7898
    %8788 = vmatpush.bf16.msra.mxu0 %v7897
    %8789 = vmatpush.bf16.msra.mxu0 %v7896
    %8790 = vmatpush.bf16.msra.mxu0 %v7895
    %8791 = vmatpush.bf16.msra.mxu0 %v7894
    %8792 = vmatpush.bf16.msra.mxu0 %v7893
    %8793 = vmatmul.bf16.gmra.mxu0 %v8135
    %v8794 = vpop.f32.mrf.mxu0
    %v8795 = vadd.f32 %v8782, %v8794
    %v8796 = vpop.f32.mrf.mxu0
    %8797 = vdwg.mxu0
    %8798 = vmatpush.bf16.msra.mxu0 %v7908
    %8799 = vmatpush.bf16.msra.mxu0 %v7907
    %8800 = vmatpush.bf16.msra.mxu0 %v7906
    %8801 = vmatpush.bf16.msra.mxu0 %v7905
    %8802 = vmatpush.bf16.msra.mxu0 %v7904
    %8803 = vmatpush.bf16.msra.mxu0 %v7903
    %8804 = vmatpush.bf16.msra.mxu0 %v7902
    %8805 = vmatpush.bf16.msra.mxu0 %v7901
    %8806 = vmatmul.bf16.gmra.mxu0 %v8136
    %v8807 = vpop.f32.mrf.mxu0
    %v8808 = vadd.f32 %v8795, %v8807
    %v8809 = vpop.f32.mrf.mxu0
    %8810 = vdwg.mxu0
    %8811 = vmatpush.bf16.msra.mxu0 %v7916
    %8812 = vmatpush.bf16.msra.mxu0 %v7915
    %8813 = vmatpush.bf16.msra.mxu0 %v7914
    %8814 = vmatpush.bf16.msra.mxu0 %v7913
    %8815 = vmatpush.bf16.msra.mxu0 %v7912
    %8816 = vmatpush.bf16.msra.mxu0 %v7911
    %8817 = vmatpush.bf16.msra.mxu0 %v7910
    %8818 = vmatpush.bf16.msra.mxu0 %v7909
    %8819 = vmatmul.bf16.gmra.mxu0 %v8137
    %v8820 = vpop.f32.mrf.mxu0
    %v8821 = vadd.f32 %v8808, %v8820
    %v8822 = vpop.f32.mrf.mxu0
    %8823 = vdwg.mxu0
    %8824 = vmatpush.bf16.msra.mxu0 %v7924
    %8825 = vmatpush.bf16.msra.mxu0 %v7923
    %8826 = vmatpush.bf16.msra.mxu0 %v7922
    %8827 = vmatpush.bf16.msra.mxu0 %v7921
    %8828 = vmatpush.bf16.msra.mxu0 %v7920
    %8829 = vmatpush.bf16.msra.mxu0 %v7919
    %8830 = vmatpush.bf16.msra.mxu0 %v7918
    %8831 = vmatpush.bf16.msra.mxu0 %v7917
    %8832 = vmatmul.bf16.gmra.mxu0 %v8138
    %v8833 = vpop.f32.mrf.mxu0
    %v8834 = vadd.f32 %v8821, %v8833
    %v8835 = vpop.f32.mrf.mxu0
    %8836 = vdwg.mxu0
    %8837 = vmatpush.bf16.msra.mxu0 %v7932
    %8838 = vmatpush.bf16.msra.mxu0 %v7931
    %8839 = vmatpush.bf16.msra.mxu0 %v7930
    %8840 = vmatpush.bf16.msra.mxu0 %v7929
    %8841 = vmatpush.bf16.msra.mxu0 %v7928
    %8842 = vmatpush.bf16.msra.mxu0 %v7927
    %8843 = vmatpush.bf16.msra.mxu0 %v7926
    %8844 = vmatpush.bf16.msra.mxu0 %v7925
    %8845 = vmatmul.bf16.gmra.mxu0 %v8139
    %v8846 = vpop.f32.mrf.mxu0
    %v8847 = vadd.f32 %v8834, %v8846
    %v8848 = vpop.f32.mrf.mxu0
    %8849 = vdwg.mxu0
    %8850 = vmatpush.bf16.msra.mxu0 %v7940
    %8851 = vmatpush.bf16.msra.mxu0 %v7939
    %8852 = vmatpush.bf16.msra.mxu0 %v7938
    %8853 = vmatpush.bf16.msra.mxu0 %v7937
    %8854 = vmatpush.bf16.msra.mxu0 %v7936
    %8855 = vmatpush.bf16.msra.mxu0 %v7935
    %8856 = vmatpush.bf16.msra.mxu0 %v7934
    %8857 = vmatpush.bf16.msra.mxu0 %v7933
    %8858 = vmatmul.bf16.gmra.mxu0 %v8140
    %v8859 = vpop.f32.mrf.mxu0
    %v8860 = vadd.f32 %v8847, %v8859
    %v8861 = vpop.f32.mrf.mxu0
    %8862 = vdwg.mxu0
    %8863 = vmatpush.bf16.msra.mxu0 %v7948
    %8864 = vmatpush.bf16.msra.mxu0 %v7947
    %8865 = vmatpush.bf16.msra.mxu0 %v7946
    %8866 = vmatpush.bf16.msra.mxu0 %v7945
    %8867 = vmatpush.bf16.msra.mxu0 %v7944
    %8868 = vmatpush.bf16.msra.mxu0 %v7943
    %8869 = vmatpush.bf16.msra.mxu0 %v7942
    %8870 = vmatpush.bf16.msra.mxu0 %v7941
    %8871 = vmatmul.bf16.gmra.mxu0 %v8141
    %v8872 = vpop.f32.mrf.mxu0
    %v8873 = vadd.f32 %v8860, %v8872
    %v8874 = vpop.f32.mrf.mxu0
    %8875 = vdwg.mxu0
    %8876 = vmatpush.bf16.msra.mxu0 %v7956
    %8877 = vmatpush.bf16.msra.mxu0 %v7955
    %8878 = vmatpush.bf16.msra.mxu0 %v7954
    %8879 = vmatpush.bf16.msra.mxu0 %v7953
    %8880 = vmatpush.bf16.msra.mxu0 %v7952
    %8881 = vmatpush.bf16.msra.mxu0 %v7951
    %8882 = vmatpush.bf16.msra.mxu0 %v7950
    %8883 = vmatpush.bf16.msra.mxu0 %v7949
    %8884 = vmatmul.bf16.gmra.mxu0 %v8142
    %v8885 = vpop.f32.mrf.mxu0
    %v8886 = vadd.f32 %v8873, %v8885
    %v8887 = vpop.f32.mrf.mxu0
    %8888 = vdwg.mxu0
    %8889 = vmatpush.bf16.msra.mxu0 %v7964
    %8890 = vmatpush.bf16.msra.mxu0 %v7963
    %8891 = vmatpush.bf16.msra.mxu0 %v7962
    %8892 = vmatpush.bf16.msra.mxu0 %v7961
    %8893 = vmatpush.bf16.msra.mxu0 %v7960
    %8894 = vmatpush.bf16.msra.mxu0 %v7959
    %8895 = vmatpush.bf16.msra.mxu0 %v7958
    %8896 = vmatpush.bf16.msra.mxu0 %v7957
    %8897 = vmatmul.bf16.gmra.mxu0 %v8143
    %v8898 = vpop.f32.mrf.mxu0
    %v8899 = vadd.f32 %v8886, %v8898
    %v8900 = vpop.f32.mrf.mxu0
    %8901 = vdwg.mxu0
    %8902 = vmatpush.bf16.msra.mxu0 %v7972
    %8903 = vmatpush.bf16.msra.mxu0 %v7971
    %8904 = vmatpush.bf16.msra.mxu0 %v7970
    %8905 = vmatpush.bf16.msra.mxu0 %v7969
    %8906 = vmatpush.bf16.msra.mxu0 %v7968
    %8907 = vmatpush.bf16.msra.mxu0 %v7967
    %8908 = vmatpush.bf16.msra.mxu0 %v7966
    %8909 = vmatpush.bf16.msra.mxu0 %v7965
    %8910 = vmatmul.bf16.gmra.mxu0 %v8144
    %v8911 = vpop.f32.mrf.mxu0
    %v8912 = vadd.f32 %v8899, %v8911
    %v8913 = vpop.f32.mrf.mxu0
    %8914 = vdwg.mxu0
    %8915 = vst [vmem:[#allocation2] sm:$0xff] %v8912
    // Predicated region
    $region18: #{tpu_custom_call.1} parent=1 // pred_check
      _
    $region19: #{tpu_custom_call.1} parent=1 // pred_check_branch
      %8917 = sbr.rel (0) target = $region21
    $region20: #{tpu_custom_call.1} parent=1 // pred_region
      %8919 = vsyncadd [#allocation3], 0
      %s8921 = sshll.u32 [#allocation2], 4
      %s8922 = int_to_ptr.vmem [resolvable:$true] %s8921
      %s8923 = sshll.u32 %s4, 4
      %s8924 = int_to_ptr.hbm [resolvable:$true] %s8923
      %8926 = dma.vmem_to_hbm [thread:$0]  %s8922, 128, %s8924, [#allocation3]
    $region21: #{tpu_custom_call.1} parent=1 // pred_fallthru
      _
    // Predicated region
    $region22: #{tpu_custom_call.1} parent=1 // pred_check
      _
    $region23: #{tpu_custom_call.1} parent=1 // pred_check_branch
      %8928 = sbr.rel (0) target = $region25
    $region24: #{tpu_custom_call.1} parent=1 // pred_region
      %8930 = dma.done [#allocation3], 128
    $region25: #{tpu_custom_call.1} parent=1 // pred_fallthru
      _
    %8931 = vsyncpa [#allocation3], 1

</llo_original>
